<compile_context>
chip_gen: v7x
topology: tpu7x:2x2x1
jax: 0.10.0
libtpu: 0.0.40
codegen_flags: <defaults>
</compile_context>

<pallas_src>
import numpy as np

import jax
import jax.numpy as jnp
from jax.experimental import pallas as pl
from jax.experimental.pallas import tpu as pltpu

EPS = 1e-5  # PyTorch BatchNorm default eps


# ----------------------- one-time parameter preparation -----------------------

def _bn_fold(prm):
    """Eval-mode BatchNorm as y = x * scale + shift."""
    gamma, beta, mean, var = prm
    scale = gamma / jnp.sqrt(var + EPS)
    shift = beta - mean * scale
    return scale, shift


def _conv_row_mats(w_eff, win, wo_cols):
    """Row-matmul form of a VALID 3x3 conv for activations laid out (H, W*C).

    Returns T of shape (kh, win*cin, len(wo_cols)*cout) with
      T[dy, w_in*cin + ci, j*cout + co] = w_eff[co, ci, dy, w_in - wo_cols[j]]
    so that conv_out[h, j*cout + co] = sum_dy (act[h+dy, :] @ T[dy])[j*cout + co].
    `wo_cols` selects/orders which output columns are produced (used to bake the
    max-pool's even/odd column split directly into the weights).
    """
    w = np.asarray(w_eff, np.float32)
    cout, cin, kh, kw = w.shape
    t = np.zeros((kh, win * cin, len(wo_cols) * cout), np.float32)
    for j, wo in enumerate(wo_cols):
        for dx in range(kw):
            w_in = wo + dx
            t[:, w_in * cin:(w_in + 1) * cin, j * cout:(j + 1) * cout] = (
                np.transpose(w[:, :, :, dx], (2, 1, 0)))
    return t


def _pad_to(a, shape):
    out = np.zeros(shape, np.float32)
    out[tuple(slice(0, s) for s in a.shape)] = a
    return out


def prepare_params(p):
    """Fold all BatchNorms, build padded parity-concatenated conv matrices and the
    fused (conv3 + fc1 + fc2) affine tail.  Matmul weights are stored as bf16."""
    s1, t1 = _bn_fold(p["norm1"])    # (1,)
    s3, t3 = _bn_fold(p["norm3"])    # (20,)
    s2, t2 = _bn_fold(p["norm2"])    # (30,)
    s4, t4 = _bn_fold(p["norm4"])    # (90,)
    s5, t5 = _bn_fold(p["norm5"])    # (30,)

    # conv1 with norm1 folded on its input.
    w1, b1 = p["conv1_w"], p["conv1_b"]
    w1e = w1 * s1.reshape(1, 1, 1, 1)
    b1e = b1 + jnp.sum(w1 * t1.reshape(1, 1, 1, 1), axis=(1, 2, 3))

    # conv2 with norm3 folded on its input and norm2 folded on its output.
    w2, b2 = p["conv2_w"], p["conv2_b"]
    w2i = w2 * s3.reshape(1, -1, 1, 1)
    b2i = b2 + jnp.sum(w2 * t3.reshape(1, -1, 1, 1), axis=(1, 2, 3))
    w2e = w2i * s2.reshape(-1, 1, 1, 1)
    b2e = s2 * b2i + t2

    w3, b3 = p["conv3_w"], p["conv3_b"]

    # fc1 with norm4 folded, fc2 with norm5 folded.
    wf1 = p["fc1_w"] * s4.reshape(1, -1)
    bf1 = p["fc1_b"] + p["fc1_w"] @ t4
    wf2 = p["fc2_w"] * s5.reshape(1, -1)
    bf2 = p["fc2_b"] + p["fc2_w"] @ t5

    # ---- conv1: both pool column parities concatenated, each padded 260 -> 384 ----
    T1e = _conv_row_mats(w1e, 28, range(0, 26, 2))            # (3, 28, 260)
    T1o = _conv_row_mats(w1e, 28, range(1, 26, 2))
    T1 = np.concatenate([_pad_to(T1e, (3, 28, 384)),
                         _pad_to(T1o, (3, 28, 384))], axis=-1)  # (3, 28, 768)

    # ---- conv2: K padded 260 -> 384 (matches padded pool1 columns), N 150 -> 256 ----
    T2e = _conv_row_mats(w2e, 13, range(0, 10, 2))            # (3, 260, 150)
    T2o = _conv_row_mats(w2e, 13, range(1, 10, 2))
    T2 = np.concatenate([_pad_to(T2e, (3, 384, 256)),
                         _pad_to(T2o, (3, 384, 256))], axis=-1)  # (3, 384, 512)

    # ---- conv3 + fc1 + fc2 fused into one affine tail: out = sum_h pool2[h] @ WT[h] + BT
    T3 = _conv_row_mats(w3, 5, range(3))                      # (3, 150, 30), col = w3*10+co
    wf1_np = np.asarray(wf1, np.float32)                      # (30, 90)
    # torch x.view(-1, 90) flattens NCHW as c*9 + h3*3 + w3 -> re-index to (h3, w3*10+c).
    tfi = (np.arange(10)[None, None, :] * 9
           + np.arange(3)[:, None, None] * 3
           + np.arange(3)[None, :, None])                     # [h3, w3, c] -> torch flat idx
    WF1 = np.transpose(wf1_np[:, tfi], (1, 2, 3, 0)).reshape(3, 30, 30)   # [h3, w3*10+c, k]
    wf2_np = np.asarray(wf2, np.float32)                      # (10, 30)
    b3_row = np.tile(np.asarray(b3, np.float32), 3)           # (30,), col = w3*10+co

    M1 = np.zeros((5, 150, 30), np.float32)
    for h3 in range(3):
        for dy in range(3):
            M1[h3 + dy] += T3[dy] @ WF1[h3]
    bf1p = np.asarray(bf1, np.float32) + sum(b3_row @ WF1[h3] for h3 in range(3))
    Wtail = np.einsum("hkn,jn->hkj", M1, wf2_np)              # (5, 150, 10)
    btail = np.asarray(bf2, np.float32) + bf1p @ wf2_np.T     # (10,)

    # Per-channel biases tiled over the pooled output width (channel-minor columns),
    # zero-padded so padded columns stay exactly 0 through max + bias.
    B1 = _pad_to(np.tile(np.asarray(b1e, np.float32), 13)[None, :], (1, 384))
    B2 = _pad_to(np.tile(np.asarray(b2e, np.float32), 5)[None, :], (1, 256))
    BT = _pad_to(btail[None, :], (1, 128))
    WT = _pad_to(Wtail, (5, 256, 128))

    return {"T1": jnp.asarray(T1, jnp.bfloat16), "B1": jnp.asarray(B1, jnp.float32),
            "T2": jnp.asarray(T2, jnp.bfloat16), "B2": jnp.asarray(B2, jnp.float32),
            "WT": jnp.asarray(WT, jnp.bfloat16), "BT": jnp.asarray(BT, jnp.float32)}


# ------------------------------ fused Pallas kernel ------------------------------

def _net_fused_kernel(x_ref, t1_ref, b1_ref, t2_ref, b2_ref, wt_ref, bt_ref, o_ref):
    """Entire Net forward for one tile of `nb` images; activations stay in VMEM/vregs."""
    nb = x_ref.shape[2]                         # images in this batch tile
    bf16 = jnp.bfloat16

    def mm(a, b):                               # MXU matmul, bf16 operands, f32 accumulation
        return jnp.dot(a, b, preferred_element_type=jnp.float32)

    # Residue groups of image rows (row mod 4), flattened so each matmul row is a
    # (row-within-group k, image b) pair: row index = k * nb + b.
    xg = [x_ref[g].astype(bf16).reshape(7 * nb, 28) for g in range(4)]

    # ---- conv1 (norm1 folded in); both pool column parities from one matmul -------
    def conv1_residue(r1, cnt):
        acc = None
        for dy in range(3):
            q = r1 + dy
            g, off = (q, 0) if q < 4 else (q - 4, 1)
            rows = xg[g][off * nb:(off + cnt) * nb]            # (cnt*nb, 28)
            term = mm(rows, t1_ref[dy])                        # (cnt*nb, 768)
            acc = term if acc is None else acc + term
        return jnp.maximum(acc[:, :384], acc[:, 384:])         # pool over w parity

    b1 = b1_ref[...]
    p1e = (jnp.maximum(conv1_residue(0, 7), conv1_residue(1, 7)) + b1).astype(bf16)
    p1o = (jnp.maximum(conv1_residue(2, 6), conv1_residue(3, 6)) + b1).astype(bf16)
    # p1e row k*nb+b == pool1 row 2k ; p1o row k*nb+b == pool1 row 2k+1 ; cols 0..259 valid.

    # ---- conv2 (norm3 + norm2 folded in); both pool column parities per matmul -----
    src = {0: (p1e[:5 * nb], p1o[:5 * nb], p1e[nb:6 * nb]),    # conv2 rows 0,2,4,6,8
           1: (p1o[:5 * nb], p1e[nb:6 * nb], p1o[nb:6 * nb])}  # conv2 rows 1,3,5,7,9

    def conv2_parity(p2):
        a = src[p2]
        acc = mm(a[0], t2_ref[0]) + mm(a[1], t2_ref[1]) + mm(a[2], t2_ref[2])  # (5*nb, 512)
        return jnp.maximum(acc[:, :256], acc[:, 256:])         # pool over w parity

    pool2 = (jnp.maximum(conv2_parity(0), conv2_parity(1)) + b2_ref[...]).astype(bf16)
    # pool2 row m*nb+b == pooled row m (0..4); cols 0..149 valid (w2p*30 + c).

    # conv2_drop (nn.Dropout2d) is the identity in eval mode.
    # TODO(synk): training-mode Dropout2d (random whole-channel zeroing) not implemented.

    # ---- conv3 + fc1 + fc2 folded into one affine tail; lane-dense 128-wide output --
    acc = mm(pool2[:nb], wt_ref[0])
    for m in range(1, 5):
        acc = acc + mm(pool2[m * nb:(m + 1) * nb], wt_ref[m])
    o_ref[...] = acc + bt_ref[...]                             # (nb, 128); cols 0..9 valid


def _round_up(x, m):
    return (x + m - 1) // m * m


def net_forward(x_nchw, prep, *, batch_tile=64):
    n = x_nchw.shape[0]
    tb = max(8, min(batch_tile, _round_up(n, 8)))
    tb = _round_up(tb, 8)                                      # batch-tile, multiple of 8
    n_pad = _round_up(n, tb)

    x = x_nchw[:, 0].astype(jnp.float32)                       # Cin == 1 -> (N, 28, 28)
    if n_pad != n:
        x = jnp.pad(x, ((0, n_pad - n), (0, 0), (0, 0)))
    # Split image rows by (row mod 4) so all conv/pool row selections are contiguous
    # slices in the kernel; layout (residue, row-in-group, batch, width).
    xg = jnp.stack([x[:, r::4, :] for r in range(4)], axis=0)  # (4, n_pad, 7, 28)
    xg = jnp.transpose(xg, (0, 2, 1, 3))                       # (4, 7, n_pad, 28)

    weights = (prep["T1"], prep["B1"], prep["T2"], prep["B2"], prep["WT"], prep["BT"])

    def const_spec(a):
        nd = a.ndim
        return pl.BlockSpec(a.shape, lambda i: (0,) * nd)      # resident weights

    out = pl.pallas_call(
        _net_fused_kernel,
        out_shape=jax.ShapeDtypeStruct((n_pad, 128), jnp.float32),
        grid=(n_pad // tb,),
        in_specs=[pl.BlockSpec((4, 7, tb, 28), lambda i: (0, 0, i, 0))]
                 + [const_spec(w) for w in weights],
        out_specs=pl.BlockSpec((tb, 128), lambda i: (i, 0)),
        compiler_params=pltpu.CompilerParams(
            dimension_semantics=("parallel",),                 # shard tiles across v7x TCs
            vmem_limit_bytes=32 * 1024 * 1024),
    )(xg, *weights)
    return out[:n, :10]


# --------------------------- deterministic parameters ---------------------------

def init_params(key):
    keys = jax.random.split(key, 32)
    it = iter(keys)

    def nrm(shape, s=0.1):
        return s * jax.random.normal(next(it), shape, jnp.float32)

    def uni(shape, lo=0.5, hi=1.5):
        return jax.random.uniform(next(it), shape, jnp.float32, lo, hi)

    def bn(c):  # (gamma, beta, running_mean, running_var)
        return (uni((c,)), nrm((c,)), nrm((c,)), uni((c,)))

    return {
        "conv1_w": nrm((20, 1, 3, 3)),  "conv1_b": nrm((20,)),
        "conv2_w": nrm((30, 20, 3, 3)), "conv2_b": nrm((30,)),
        "conv3_w": nrm((10, 30, 3, 3)), "conv3_b": nrm((10,)),
        "fc1_w": nrm((30, 90)),         "fc1_b": nrm((30,)),
        "fc2_w": nrm((10, 30)),         "fc2_b": nrm((10,)),
        "norm1": bn(1), "norm2": bn(30), "norm3": bn(20),
        "norm4": bn(90), "norm5": bn(30),
    }


# --------------------- pure-JAX reference (module semantics) ---------------------

def ref_forward(x_nchw, p):
    hp = jax.lax.Precision.HIGHEST

    def bn(x, prm, axis=1):
        g, b, m, v = prm
        shp = [1] * x.ndim
        shp[axis] = -1
        return ((x - m.reshape(shp)) / jnp.sqrt(v.reshape(shp) + EPS)
                * g.reshape(shp) + b.reshape(shp))

    def conv(x, w, b):
        y = jax.lax.conv_general_dilated(
            x, w, window_strides=(1, 1), padding="VALID",
            dimension_numbers=("NCHW", "OIHW", "NCHW"), precision=hp)
        return y + b.reshape(1, -1, 1, 1)

    def pool(x):
        return jax.lax.reduce_window(x, -jnp.inf, jax.lax.max,
                                     (1, 1, 2, 2), (1, 1, 2, 2), "VALID")

    x = bn(x_nchw.astype(jnp.float32), p["norm1"])
    x = conv(x, p["conv1_w"], p["conv1_b"])
    x = pool(x)
    x = bn(x, p["norm3"])
    x = conv(x, p["conv2_w"], p["conv2_b"])
    x = bn(x, p["norm2"])
    x = pool(x)
    x = conv(x, p["conv3_w"], p["conv3_b"])
    # conv2_drop: identity in eval mode.
    x = x.reshape(x.shape[0], -1)                       # == torch x.view(-1, 90)
    x = bn(x, p["norm4"])
    x = jnp.dot(x, p["fc1_w"].T, precision=hp) + p["fc1_b"]
    x = bn(x, p["norm5"])
    x = jnp.dot(x, p["fc2_w"].T, precision=hp) + p["fc2_b"]
    return x


# ------------------------------------- main -------------------------------------

if __name__ == "__main__":
    key = jax.random.PRNGKey(0)
    pkey, xkey = jax.random.split(key)
    params = init_params(pkey)
    prep = prepare_params(params)             # one-time BN folding + padded conv matrices

    fwd = jax.jit(net_forward, static_argnames=("batch_tile",))

    # Small correctness check: batch=2 -> padded to one 8-image tile, grid=(1,).
    x_small = jax.random.normal(xkey, (2, 1, 28, 28), jnp.float32)
    out_small = jax.block_until_ready(fwd(x_small, prep))
    assert out_small.shape == (2, 10), out_small.shape
    ref_small = ref_forward(x_small, params)

    # Throughput-shaped check: batch=128 with tile 64 -> grid=(2,), "parallel" axis.
    x_big = jax.random.normal(jax.random.fold_in(xkey, 1), (128, 1, 28, 28), jnp.float32)
    out_big = jax.block_until_ready(fwd(x_big, prep))
    ref_big = ref_forward(x_big, params)

    # bf16 matmul operands (f32 accumulation) -> tolerance loosened vs full-f32 passes.
    err_small = float(jnp.max(jnp.abs(out_small - ref_small)))
    err_big = float(jnp.max(jnp.abs(out_big - ref_big)))
    assert jnp.allclose(out_small, ref_small, rtol=1e-1, atol=1e-1), (
        f"Pallas vs reference mismatch (small batch), max abs err = {err_small}")
    assert jnp.allclose(out_big, ref_big, rtol=1e-1, atol=1e-1), (
        f"Pallas vs reference mismatch (large batch), max abs err = {err_big}")
    print("KERNEL_OK")
</pallas_src>

<mosaic_0001>
module attributes {stable_mosaic.version = 11 : i64} {
  func.func @_net_fused_kernel(%arg0: i32, %arg1: memref<4x7x8x28xf32, #tpu.memory_space<vmem>>, %arg2: memref<3x28x768xbf16, #tpu.memory_space<vmem>>, %arg3: memref<1x384xf32, #tpu.memory_space<vmem>>, %arg4: memref<3x384x512xbf16, #tpu.memory_space<vmem>>, %arg5: memref<1x256xf32, #tpu.memory_space<vmem>>, %arg6: memref<5x256x128xbf16, #tpu.memory_space<vmem>>, %arg7: memref<1x128xf32, #tpu.memory_space<vmem>>, %arg8: memref<8x128xf32, #tpu.memory_space<vmem>>) attributes {dimension_semantics = [#tpu.dimension_semantics<parallel>], iteration_bounds = array<i64: 1>, scalar_prefetch = 0 : i64, scratch_operands = 0 : i64, tpu.core_type = #tpu.core_type<tc>, window_params = [{transform_indices = @transform_0, window_bounds = array<i64: 4, 7, 8, 28>}, {pipeline_mode = #tpu.pipeline_mode<synchronous>, transform_indices = @transform_1, window_bounds = array<i64: 3, 28, 768>}, {pipeline_mode = #tpu.pipeline_mode<synchronous>, transform_indices = @transform_2, window_bounds = array<i64: 1, 384>}, {pipeline_mode = #tpu.pipeline_mode<synchronous>, transform_indices = @transform_3, window_bounds = array<i64: 3, 384, 512>}, {pipeline_mode = #tpu.pipeline_mode<synchronous>, transform_indices = @transform_4, window_bounds = array<i64: 1, 256>}, {pipeline_mode = #tpu.pipeline_mode<synchronous>, transform_indices = @transform_5, window_bounds = array<i64: 5, 256, 128>}, {pipeline_mode = #tpu.pipeline_mode<synchronous>, transform_indices = @transform_6, window_bounds = array<i64: 1, 128>}, {transform_indices = @transform_7, window_bounds = array<i64: 8, 128>}]} {
    %c0 = arith.constant 0 : index
    %c0_0 = arith.constant 0 : index
    %c0_1 = arith.constant 0 : index
    %c0_2 = arith.constant 0 : index
    %0 = vector.load %arg1[%c0, %c0_0, %c0_1, %c0_2] : memref<4x7x8x28xf32, #tpu.memory_space<vmem>>, vector<1x7x8x28xf32>
    %1 = vector.shape_cast %0 : vector<1x7x8x28xf32> to vector<7x8x28xf32>
    %2 = arith.truncf %1 : vector<7x8x28xf32> to vector<7x8x28xbf16>
    %3 = vector.shape_cast %2 : vector<7x8x28xbf16> to vector<56x28xbf16>
    %c1 = arith.constant 1 : index
    %c0_3 = arith.constant 0 : index
    %c0_4 = arith.constant 0 : index
    %c0_5 = arith.constant 0 : index
    %4 = vector.load %arg1[%c1, %c0_3, %c0_4, %c0_5] : memref<4x7x8x28xf32, #tpu.memory_space<vmem>>, vector<1x7x8x28xf32>
    %5 = vector.shape_cast %4 : vector<1x7x8x28xf32> to vector<7x8x28xf32>
    %6 = arith.truncf %5 : vector<7x8x28xf32> to vector<7x8x28xbf16>
    %7 = vector.shape_cast %6 : vector<7x8x28xbf16> to vector<56x28xbf16>
    %c2 = arith.constant 2 : index
    %c0_6 = arith.constant 0 : index
    %c0_7 = arith.constant 0 : index
    %c0_8 = arith.constant 0 : index
    %8 = vector.load %arg1[%c2, %c0_6, %c0_7, %c0_8] : memref<4x7x8x28xf32, #tpu.memory_space<vmem>>, vector<1x7x8x28xf32>
    %9 = vector.shape_cast %8 : vector<1x7x8x28xf32> to vector<7x8x28xf32>
    %10 = arith.truncf %9 : vector<7x8x28xf32> to vector<7x8x28xbf16>
    %11 = vector.shape_cast %10 : vector<7x8x28xbf16> to vector<56x28xbf16>
    %c3 = arith.constant 3 : index
    %c0_9 = arith.constant 0 : index
    %c0_10 = arith.constant 0 : index
    %c0_11 = arith.constant 0 : index
    %12 = vector.load %arg1[%c3, %c0_9, %c0_10, %c0_11] : memref<4x7x8x28xf32, #tpu.memory_space<vmem>>, vector<1x7x8x28xf32>
    %13 = vector.shape_cast %12 : vector<1x7x8x28xf32> to vector<7x8x28xf32>
    %14 = arith.truncf %13 : vector<7x8x28xf32> to vector<7x8x28xbf16>
    %15 = vector.shape_cast %14 : vector<7x8x28xbf16> to vector<56x28xbf16>
    %c0_12 = arith.constant 0 : index
    %c0_13 = arith.constant 0 : index
    %16 = vector.load %arg3[%c0_12, %c0_13] : memref<1x384xf32, #tpu.memory_space<vmem>>, vector<1x384xf32>
    %c0_14 = arith.constant 0 : index
    %c0_15 = arith.constant 0 : index
    %c0_16 = arith.constant 0 : index
    %17 = vector.load %arg2[%c0_14, %c0_15, %c0_16] : memref<3x28x768xbf16, #tpu.memory_space<vmem>>, vector<1x28x768xbf16>
    %18 = vector.shape_cast %17 : vector<1x28x768xbf16> to vector<28x768xbf16>
    %cst = arith.constant dense<0.000000e+00> : vector<56x768xf32>
    %19 = tpu.matmul %3, %18, %cst {dimension_numbers = #tpu.dot_dimension_numbers<[1], [0], [0], [1], [0, 0, 1, 1], [], []>} : vector<56x28xbf16>, vector<28x768xbf16>, vector<56x768xf32> -> vector<56x768xf32>
    %c1_17 = arith.constant 1 : index
    %c0_18 = arith.constant 0 : index
    %c0_19 = arith.constant 0 : index
    %20 = vector.load %arg2[%c1_17, %c0_18, %c0_19] : memref<3x28x768xbf16, #tpu.memory_space<vmem>>, vector<1x28x768xbf16>
    %21 = vector.shape_cast %20 : vector<1x28x768xbf16> to vector<28x768xbf16>
    %cst_20 = arith.constant dense<0.000000e+00> : vector<56x768xf32>
    %22 = tpu.matmul %7, %21, %cst_20 {dimension_numbers = #tpu.dot_dimension_numbers<[1], [0], [0], [1], [0, 0, 1, 1], [], []>} : vector<56x28xbf16>, vector<28x768xbf16>, vector<56x768xf32> -> vector<56x768xf32>
    %23 = arith.addf %19, %22 : vector<56x768xf32>
    %c2_21 = arith.constant 2 : index
    %c0_22 = arith.constant 0 : index
    %c0_23 = arith.constant 0 : index
    %24 = vector.load %arg2[%c2_21, %c0_22, %c0_23] : memref<3x28x768xbf16, #tpu.memory_space<vmem>>, vector<1x28x768xbf16>
    %25 = vector.shape_cast %24 : vector<1x28x768xbf16> to vector<28x768xbf16>
    %cst_24 = arith.constant dense<0.000000e+00> : vector<56x768xf32>
    %26 = tpu.matmul %11, %25, %cst_24 {dimension_numbers = #tpu.dot_dimension_numbers<[1], [0], [0], [1], [0, 0, 1, 1], [], []>} : vector<56x28xbf16>, vector<28x768xbf16>, vector<56x768xf32> -> vector<56x768xf32>
    %27 = arith.addf %23, %26 : vector<56x768xf32>
    %28 = vector.extract_strided_slice %27 {offsets = [0, 0], sizes = [56, 384], strides = [1, 1]} : vector<56x768xf32> to vector<56x384xf32>
    %29 = vector.extract_strided_slice %27 {offsets = [0, 384], sizes = [56, 384], strides = [1, 1]} : vector<56x768xf32> to vector<56x384xf32>
    %30 = arith.maximumf %28, %29 : vector<56x384xf32>
    %c0_25 = arith.constant 0 : index
    %c0_26 = arith.constant 0 : index
    %c0_27 = arith.constant 0 : index
    %31 = vector.load %arg2[%c0_25, %c0_26, %c0_27] : memref<3x28x768xbf16, #tpu.memory_space<vmem>>, vector<1x28x768xbf16>
    %32 = vector.shape_cast %31 : vector<1x28x768xbf16> to vector<28x768xbf16>
    %cst_28 = arith.constant dense<0.000000e+00> : vector<56x768xf32>
    %33 = tpu.matmul %7, %32, %cst_28 {dimension_numbers = #tpu.dot_dimension_numbers<[1], [0], [0], [1], [0, 0, 1, 1], [], []>} : vector<56x28xbf16>, vector<28x768xbf16>, vector<56x768xf32> -> vector<56x768xf32>
    %c1_29 = arith.constant 1 : index
    %c0_30 = arith.constant 0 : index
    %c0_31 = arith.constant 0 : index
    %34 = vector.load %arg2[%c1_29, %c0_30, %c0_31] : memref<3x28x768xbf16, #tpu.memory_space<vmem>>, vector<1x28x768xbf16>
    %35 = vector.shape_cast %34 : vector<1x28x768xbf16> to vector<28x768xbf16>
    %cst_32 = arith.constant dense<0.000000e+00> : vector<56x768xf32>
    %36 = tpu.matmul %11, %35, %cst_32 {dimension_numbers = #tpu.dot_dimension_numbers<[1], [0], [0], [1], [0, 0, 1, 1], [], []>} : vector<56x28xbf16>, vector<28x768xbf16>, vector<56x768xf32> -> vector<56x768xf32>
    %37 = arith.addf %33, %36 : vector<56x768xf32>
    %c2_33 = arith.constant 2 : index
    %c0_34 = arith.constant 0 : index
    %c0_35 = arith.constant 0 : index
    %38 = vector.load %arg2[%c2_33, %c0_34, %c0_35] : memref<3x28x768xbf16, #tpu.memory_space<vmem>>, vector<1x28x768xbf16>
    %39 = vector.shape_cast %38 : vector<1x28x768xbf16> to vector<28x768xbf16>
    %cst_36 = arith.constant dense<0.000000e+00> : vector<56x768xf32>
    %40 = tpu.matmul %15, %39, %cst_36 {dimension_numbers = #tpu.dot_dimension_numbers<[1], [0], [0], [1], [0, 0, 1, 1], [], []>} : vector<56x28xbf16>, vector<28x768xbf16>, vector<56x768xf32> -> vector<56x768xf32>
    %41 = arith.addf %37, %40 : vector<56x768xf32>
    %42 = vector.extract_strided_slice %41 {offsets = [0, 0], sizes = [56, 384], strides = [1, 1]} : vector<56x768xf32> to vector<56x384xf32>
    %43 = vector.extract_strided_slice %41 {offsets = [0, 384], sizes = [56, 384], strides = [1, 1]} : vector<56x768xf32> to vector<56x384xf32>
    %44 = arith.maximumf %42, %43 : vector<56x384xf32>
    %45 = arith.maximumf %30, %44 : vector<56x384xf32>
    %46 = vector.broadcast %16 : vector<1x384xf32> to vector<56x384xf32>
    %47 = arith.addf %45, %46 : vector<56x384xf32>
    %48 = arith.truncf %47 : vector<56x384xf32> to vector<56x384xbf16>
    %49 = vector.extract_strided_slice %11 {offsets = [0, 0], sizes = [48, 28], strides = [1, 1]} : vector<56x28xbf16> to vector<48x28xbf16>
    %c0_37 = arith.constant 0 : index
    %c0_38 = arith.constant 0 : index
    %c0_39 = arith.constant 0 : index
    %50 = vector.load %arg2[%c0_37, %c0_38, %c0_39] : memref<3x28x768xbf16, #tpu.memory_space<vmem>>, vector<1x28x768xbf16>
    %51 = vector.shape_cast %50 : vector<1x28x768xbf16> to vector<28x768xbf16>
    %cst_40 = arith.constant dense<0.000000e+00> : vector<48x768xf32>
    %52 = tpu.matmul %49, %51, %cst_40 {dimension_numbers = #tpu.dot_dimension_numbers<[1], [0], [0], [1], [0, 0, 1, 1], [], []>} : vector<48x28xbf16>, vector<28x768xbf16>, vector<48x768xf32> -> vector<48x768xf32>
    %53 = vector.extract_strided_slice %15 {offsets = [0, 0], sizes = [48, 28], strides = [1, 1]} : vector<56x28xbf16> to vector<48x28xbf16>
    %c1_41 = arith.constant 1 : index
    %c0_42 = arith.constant 0 : index
    %c0_43 = arith.constant 0 : index
    %54 = vector.load %arg2[%c1_41, %c0_42, %c0_43] : memref<3x28x768xbf16, #tpu.memory_space<vmem>>, vector<1x28x768xbf16>
    %55 = vector.shape_cast %54 : vector<1x28x768xbf16> to vector<28x768xbf16>
    %cst_44 = arith.constant dense<0.000000e+00> : vector<48x768xf32>
    %56 = tpu.matmul %53, %55, %cst_44 {dimension_numbers = #tpu.dot_dimension_numbers<[1], [0], [0], [1], [0, 0, 1, 1], [], []>} : vector<48x28xbf16>, vector<28x768xbf16>, vector<48x768xf32> -> vector<48x768xf32>
    %57 = arith.addf %52, %56 : vector<48x768xf32>
    %58 = vector.extract_strided_slice %3 {offsets = [8, 0], sizes = [48, 28], strides = [1, 1]} : vector<56x28xbf16> to vector<48x28xbf16>
    %c2_45 = arith.constant 2 : index
    %c0_46 = arith.constant 0 : index
    %c0_47 = arith.constant 0 : index
    %59 = vector.load %arg2[%c2_45, %c0_46, %c0_47] : memref<3x28x768xbf16, #tpu.memory_space<vmem>>, vector<1x28x768xbf16>
    %60 = vector.shape_cast %59 : vector<1x28x768xbf16> to vector<28x768xbf16>
    %cst_48 = arith.constant dense<0.000000e+00> : vector<48x768xf32>
    %61 = tpu.matmul %58, %60, %cst_48 {dimension_numbers = #tpu.dot_dimension_numbers<[1], [0], [0], [1], [0, 0, 1, 1], [], []>} : vector<48x28xbf16>, vector<28x768xbf16>, vector<48x768xf32> -> vector<48x768xf32>
    %62 = arith.addf %57, %61 : vector<48x768xf32>
    %63 = vector.extract_strided_slice %62 {offsets = [0, 0], sizes = [48, 384], strides = [1, 1]} : vector<48x768xf32> to vector<48x384xf32>
    %64 = vector.extract_strided_slice %62 {offsets = [0, 384], sizes = [48, 384], strides = [1, 1]} : vector<48x768xf32> to vector<48x384xf32>
    %65 = arith.maximumf %63, %64 : vector<48x384xf32>
    %66 = vector.extract_strided_slice %15 {offsets = [0, 0], sizes = [48, 28], strides = [1, 1]} : vector<56x28xbf16> to vector<48x28xbf16>
    %c0_49 = arith.constant 0 : index
    %c0_50 = arith.constant 0 : index
    %c0_51 = arith.constant 0 : index
    %67 = vector.load %arg2[%c0_49, %c0_50, %c0_51] : memref<3x28x768xbf16, #tpu.memory_space<vmem>>, vector<1x28x768xbf16>
    %68 = vector.shape_cast %67 : vector<1x28x768xbf16> to vector<28x768xbf16>
    %cst_52 = arith.constant dense<0.000000e+00> : vector<48x768xf32>
    %69 = tpu.matmul %66, %68, %cst_52 {dimension_numbers = #tpu.dot_dimension_numbers<[1], [0], [0], [1], [0, 0, 1, 1], [], []>} : vector<48x28xbf16>, vector<28x768xbf16>, vector<48x768xf32> -> vector<48x768xf32>
    %70 = vector.extract_strided_slice %3 {offsets = [8, 0], sizes = [48, 28], strides = [1, 1]} : vector<56x28xbf16> to vector<48x28xbf16>
    %c1_53 = arith.constant 1 : index
    %c0_54 = arith.constant 0 : index
    %c0_55 = arith.constant 0 : index
    %71 = vector.load %arg2[%c1_53, %c0_54, %c0_55] : memref<3x28x768xbf16, #tpu.memory_space<vmem>>, vector<1x28x768xbf16>
    %72 = vector.shape_cast %71 : vector<1x28x768xbf16> to vector<28x768xbf16>
    %cst_56 = arith.constant dense<0.000000e+00> : vector<48x768xf32>
    %73 = tpu.matmul %70, %72, %cst_56 {dimension_numbers = #tpu.dot_dimension_numbers<[1], [0], [0], [1], [0, 0, 1, 1], [], []>} : vector<48x28xbf16>, vector<28x768xbf16>, vector<48x768xf32> -> vector<48x768xf32>
    %74 = arith.addf %69, %73 : vector<48x768xf32>
    %75 = vector.extract_strided_slice %7 {offsets = [8, 0], sizes = [48, 28], strides = [1, 1]} : vector<56x28xbf16> to vector<48x28xbf16>
    %c2_57 = arith.constant 2 : index
    %c0_58 = arith.constant 0 : index
    %c0_59 = arith.constant 0 : index
    %76 = vector.load %arg2[%c2_57, %c0_58, %c0_59] : memref<3x28x768xbf16, #tpu.memory_space<vmem>>, vector<1x28x768xbf16>
    %77 = vector.shape_cast %76 : vector<1x28x768xbf16> to vector<28x768xbf16>
    %cst_60 = arith.constant dense<0.000000e+00> : vector<48x768xf32>
    %78 = tpu.matmul %75, %77, %cst_60 {dimension_numbers = #tpu.dot_dimension_numbers<[1], [0], [0], [1], [0, 0, 1, 1], [], []>} : vector<48x28xbf16>, vector<28x768xbf16>, vector<48x768xf32> -> vector<48x768xf32>
    %79 = arith.addf %74, %78 : vector<48x768xf32>
    %80 = vector.extract_strided_slice %79 {offsets = [0, 0], sizes = [48, 384], strides = [1, 1]} : vector<48x768xf32> to vector<48x384xf32>
    %81 = vector.extract_strided_slice %79 {offsets = [0, 384], sizes = [48, 384], strides = [1, 1]} : vector<48x768xf32> to vector<48x384xf32>
    %82 = arith.maximumf %80, %81 : vector<48x384xf32>
    %83 = arith.maximumf %65, %82 : vector<48x384xf32>
    %84 = vector.broadcast %16 : vector<1x384xf32> to vector<48x384xf32>
    %85 = arith.addf %83, %84 : vector<48x384xf32>
    %86 = arith.truncf %85 : vector<48x384xf32> to vector<48x384xbf16>
    %87 = vector.extract_strided_slice %48 {offsets = [0, 0], sizes = [40, 384], strides = [1, 1]} : vector<56x384xbf16> to vector<40x384xbf16>
    %88 = vector.extract_strided_slice %86 {offsets = [0, 0], sizes = [40, 384], strides = [1, 1]} : vector<48x384xbf16> to vector<40x384xbf16>
    %89 = vector.extract_strided_slice %48 {offsets = [8, 0], sizes = [40, 384], strides = [1, 1]} : vector<56x384xbf16> to vector<40x384xbf16>
    %90 = vector.extract_strided_slice %86 {offsets = [0, 0], sizes = [40, 384], strides = [1, 1]} : vector<48x384xbf16> to vector<40x384xbf16>
    %91 = vector.extract_strided_slice %48 {offsets = [8, 0], sizes = [40, 384], strides = [1, 1]} : vector<56x384xbf16> to vector<40x384xbf16>
    %92 = vector.extract_strided_slice %86 {offsets = [8, 0], sizes = [40, 384], strides = [1, 1]} : vector<48x384xbf16> to vector<40x384xbf16>
    %c0_61 = arith.constant 0 : index
    %c0_62 = arith.constant 0 : index
    %c0_63 = arith.constant 0 : index
    %93 = vector.load %arg4[%c0_61, %c0_62, %c0_63] : memref<3x384x512xbf16, #tpu.memory_space<vmem>>, vector<1x384x512xbf16>
    %94 = vector.shape_cast %93 : vector<1x384x512xbf16> to vector<384x512xbf16>
    %cst_64 = arith.constant dense<0.000000e+00> : vector<40x512xf32>
    %95 = tpu.matmul %87, %94, %cst_64 {dimension_numbers = #tpu.dot_dimension_numbers<[1], [0], [0], [1], [0, 0, 1, 1], [], []>} : vector<40x384xbf16>, vector<384x512xbf16>, vector<40x512xf32> -> vector<40x512xf32>
    %c1_65 = arith.constant 1 : index
    %c0_66 = arith.constant 0 : index
    %c0_67 = arith.constant 0 : index
    %96 = vector.load %arg4[%c1_65, %c0_66, %c0_67] : memref<3x384x512xbf16, #tpu.memory_space<vmem>>, vector<1x384x512xbf16>
    %97 = vector.shape_cast %96 : vector<1x384x512xbf16> to vector<384x512xbf16>
    %cst_68 = arith.constant dense<0.000000e+00> : vector<40x512xf32>
    %98 = tpu.matmul %88, %97, %cst_68 {dimension_numbers = #tpu.dot_dimension_numbers<[1], [0], [0], [1], [0, 0, 1, 1], [], []>} : vector<40x384xbf16>, vector<384x512xbf16>, vector<40x512xf32> -> vector<40x512xf32>
    %99 = arith.addf %95, %98 : vector<40x512xf32>
    %c2_69 = arith.constant 2 : index
    %c0_70 = arith.constant 0 : index
    %c0_71 = arith.constant 0 : index
    %100 = vector.load %arg4[%c2_69, %c0_70, %c0_71] : memref<3x384x512xbf16, #tpu.memory_space<vmem>>, vector<1x384x512xbf16>
    %101 = vector.shape_cast %100 : vector<1x384x512xbf16> to vector<384x512xbf16>
    %cst_72 = arith.constant dense<0.000000e+00> : vector<40x512xf32>
    %102 = tpu.matmul %89, %101, %cst_72 {dimension_numbers = #tpu.dot_dimension_numbers<[1], [0], [0], [1], [0, 0, 1, 1], [], []>} : vector<40x384xbf16>, vector<384x512xbf16>, vector<40x512xf32> -> vector<40x512xf32>
    %103 = arith.addf %99, %102 : vector<40x512xf32>
    %104 = vector.extract_strided_slice %103 {offsets = [0, 0], sizes = [40, 256], strides = [1, 1]} : vector<40x512xf32> to vector<40x256xf32>
    %105 = vector.extract_strided_slice %103 {offsets = [0, 256], sizes = [40, 256], strides = [1, 1]} : vector<40x512xf32> to vector<40x256xf32>
    %106 = arith.maximumf %104, %105 : vector<40x256xf32>
    %c0_73 = arith.constant 0 : index
    %c0_74 = arith.constant 0 : index
    %c0_75 = arith.constant 0 : index
    %107 = vector.load %arg4[%c0_73, %c0_74, %c0_75] : memref<3x384x512xbf16, #tpu.memory_space<vmem>>, vector<1x384x512xbf16>
    %108 = vector.shape_cast %107 : vector<1x384x512xbf16> to vector<384x512xbf16>
    %cst_76 = arith.constant dense<0.000000e+00> : vector<40x512xf32>
    %109 = tpu.matmul %90, %108, %cst_76 {dimension_numbers = #tpu.dot_dimension_numbers<[1], [0], [0], [1], [0, 0, 1, 1], [], []>} : vector<40x384xbf16>, vector<384x512xbf16>, vector<40x512xf32> -> vector<40x512xf32>
    %c1_77 = arith.constant 1 : index
    %c0_78 = arith.constant 0 : index
    %c0_79 = arith.constant 0 : index
    %110 = vector.load %arg4[%c1_77, %c0_78, %c0_79] : memref<3x384x512xbf16, #tpu.memory_space<vmem>>, vector<1x384x512xbf16>
    %111 = vector.shape_cast %110 : vector<1x384x512xbf16> to vector<384x512xbf16>
    %cst_80 = arith.constant dense<0.000000e+00> : vector<40x512xf32>
    %112 = tpu.matmul %91, %111, %cst_80 {dimension_numbers = #tpu.dot_dimension_numbers<[1], [0], [0], [1], [0, 0, 1, 1], [], []>} : vector<40x384xbf16>, vector<384x512xbf16>, vector<40x512xf32> -> vector<40x512xf32>
    %113 = arith.addf %109, %112 : vector<40x512xf32>
    %c2_81 = arith.constant 2 : index
    %c0_82 = arith.constant 0 : index
    %c0_83 = arith.constant 0 : index
    %114 = vector.load %arg4[%c2_81, %c0_82, %c0_83] : memref<3x384x512xbf16, #tpu.memory_space<vmem>>, vector<1x384x512xbf16>
    %115 = vector.shape_cast %114 : vector<1x384x512xbf16> to vector<384x512xbf16>
    %cst_84 = arith.constant dense<0.000000e+00> : vector<40x512xf32>
    %116 = tpu.matmul %92, %115, %cst_84 {dimension_numbers = #tpu.dot_dimension_numbers<[1], [0], [0], [1], [0, 0, 1, 1], [], []>} : vector<40x384xbf16>, vector<384x512xbf16>, vector<40x512xf32> -> vector<40x512xf32>
    %117 = arith.addf %113, %116 : vector<40x512xf32>
    %118 = vector.extract_strided_slice %117 {offsets = [0, 0], sizes = [40, 256], strides = [1, 1]} : vector<40x512xf32> to vector<40x256xf32>
    %119 = vector.extract_strided_slice %117 {offsets = [0, 256], sizes = [40, 256], strides = [1, 1]} : vector<40x512xf32> to vector<40x256xf32>
    %120 = arith.maximumf %118, %119 : vector<40x256xf32>
    %121 = arith.maximumf %106, %120 : vector<40x256xf32>
    %c0_85 = arith.constant 0 : index
    %c0_86 = arith.constant 0 : index
    %122 = vector.load %arg5[%c0_85, %c0_86] : memref<1x256xf32, #tpu.memory_space<vmem>>, vector<1x256xf32>
    %123 = vector.broadcast %122 : vector<1x256xf32> to vector<40x256xf32>
    %124 = arith.addf %121, %123 : vector<40x256xf32>
    %125 = arith.truncf %124 : vector<40x256xf32> to vector<40x256xbf16>
    %126 = vector.extract_strided_slice %125 {offsets = [0, 0], sizes = [8, 256], strides = [1, 1]} : vector<40x256xbf16> to vector<8x256xbf16>
    %c0_87 = arith.constant 0 : index
    %c0_88 = arith.constant 0 : index
    %c0_89 = arith.constant 0 : index
    %127 = vector.load %arg6[%c0_87, %c0_88, %c0_89] : memref<5x256x128xbf16, #tpu.memory_space<vmem>>, vector<1x256x128xbf16>
    %128 = vector.shape_cast %127 : vector<1x256x128xbf16> to vector<256x128xbf16>
    %cst_90 = arith.constant dense<0.000000e+00> : vector<8x128xf32>
    %129 = tpu.matmul %126, %128, %cst_90 {dimension_numbers = #tpu.dot_dimension_numbers<[1], [0], [0], [1], [0, 0, 1, 1], [], []>} : vector<8x256xbf16>, vector<256x128xbf16>, vector<8x128xf32> -> vector<8x128xf32>
    %130 = vector.extract_strided_slice %125 {offsets = [8, 0], sizes = [8, 256], strides = [1, 1]} : vector<40x256xbf16> to vector<8x256xbf16>
    %c1_91 = arith.constant 1 : index
    %c0_92 = arith.constant 0 : index
    %c0_93 = arith.constant 0 : index
    %131 = vector.load %arg6[%c1_91, %c0_92, %c0_93] : memref<5x256x128xbf16, #tpu.memory_space<vmem>>, vector<1x256x128xbf16>
    %132 = vector.shape_cast %131 : vector<1x256x128xbf16> to vector<256x128xbf16>
    %cst_94 = arith.constant dense<0.000000e+00> : vector<8x128xf32>
    %133 = tpu.matmul %130, %132, %cst_94 {dimension_numbers = #tpu.dot_dimension_numbers<[1], [0], [0], [1], [0, 0, 1, 1], [], []>} : vector<8x256xbf16>, vector<256x128xbf16>, vector<8x128xf32> -> vector<8x128xf32>
    %134 = arith.addf %129, %133 : vector<8x128xf32>
    %135 = vector.extract_strided_slice %125 {offsets = [16, 0], sizes = [8, 256], strides = [1, 1]} : vector<40x256xbf16> to vector<8x256xbf16>
    %c2_95 = arith.constant 2 : index
    %c0_96 = arith.constant 0 : index
    %c0_97 = arith.constant 0 : index
    %136 = vector.load %arg6[%c2_95, %c0_96, %c0_97] : memref<5x256x128xbf16, #tpu.memory_space<vmem>>, vector<1x256x128xbf16>
    %137 = vector.shape_cast %136 : vector<1x256x128xbf16> to vector<256x128xbf16>
    %cst_98 = arith.constant dense<0.000000e+00> : vector<8x128xf32>
    %138 = tpu.matmul %135, %137, %cst_98 {dimension_numbers = #tpu.dot_dimension_numbers<[1], [0], [0], [1], [0, 0, 1, 1], [], []>} : vector<8x256xbf16>, vector<256x128xbf16>, vector<8x128xf32> -> vector<8x128xf32>
    %139 = arith.addf %134, %138 : vector<8x128xf32>
    %140 = vector.extract_strided_slice %125 {offsets = [24, 0], sizes = [8, 256], strides = [1, 1]} : vector<40x256xbf16> to vector<8x256xbf16>
    %c3_99 = arith.constant 3 : index
    %c0_100 = arith.constant 0 : index
    %c0_101 = arith.constant 0 : index
    %141 = vector.load %arg6[%c3_99, %c0_100, %c0_101] : memref<5x256x128xbf16, #tpu.memory_space<vmem>>, vector<1x256x128xbf16>
    %142 = vector.shape_cast %141 : vector<1x256x128xbf16> to vector<256x128xbf16>
    %cst_102 = arith.constant dense<0.000000e+00> : vector<8x128xf32>
    %143 = tpu.matmul %140, %142, %cst_102 {dimension_numbers = #tpu.dot_dimension_numbers<[1], [0], [0], [1], [0, 0, 1, 1], [], []>} : vector<8x256xbf16>, vector<256x128xbf16>, vector<8x128xf32> -> vector<8x128xf32>
    %144 = arith.addf %139, %143 : vector<8x128xf32>
    %145 = vector.extract_strided_slice %125 {offsets = [32, 0], sizes = [8, 256], strides = [1, 1]} : vector<40x256xbf16> to vector<8x256xbf16>
    %c4 = arith.constant 4 : index
    %c0_103 = arith.constant 0 : index
    %c0_104 = arith.constant 0 : index
    %146 = vector.load %arg6[%c4, %c0_103, %c0_104] : memref<5x256x128xbf16, #tpu.memory_space<vmem>>, vector<1x256x128xbf16>
    %147 = vector.shape_cast %146 : vector<1x256x128xbf16> to vector<256x128xbf16>
    %cst_105 = arith.constant dense<0.000000e+00> : vector<8x128xf32>
    %148 = tpu.matmul %145, %147, %cst_105 {dimension_numbers = #tpu.dot_dimension_numbers<[1], [0], [0], [1], [0, 0, 1, 1], [], []>} : vector<8x256xbf16>, vector<256x128xbf16>, vector<8x128xf32> -> vector<8x128xf32>
    %149 = arith.addf %144, %148 : vector<8x128xf32>
    %c0_106 = arith.constant 0 : index
    %c0_107 = arith.constant 0 : index
    %150 = vector.load %arg7[%c0_106, %c0_107] : memref<1x128xf32, #tpu.memory_space<vmem>>, vector<1x128xf32>
    %151 = vector.broadcast %150 : vector<1x128xf32> to vector<8x128xf32>
    %152 = arith.addf %149, %151 : vector<8x128xf32>
    %c0_108 = arith.constant 0 : index
    %c0_109 = arith.constant 0 : index
    %153 = vector.load %arg8[%c0_108, %c0_109] : memref<8x128xf32, #tpu.memory_space<vmem>>, vector<8x128xf32>
    tpu.vector_store %arg8[%c0_108, %c0_109], %152 {strides = array<i32>} : memref<8x128xf32, #tpu.memory_space<vmem>>, vector<8x128xf32>,
    return
  }
  func.func @transform_0(%arg0: i32) -> (i32, i32, i32, i32) {
    %c0_i32 = arith.constant 0 : i32
    %c0_i32_0 = arith.constant 0 : i32
    %c0_i32_1 = arith.constant 0 : i32
    %c0_i32_2 = arith.constant 0 : i32
    return %c0_i32, %c0_i32_0, %arg0, %c0_i32_1 : i32, i32, i32, i32
  }
  func.func @transform_1(%arg0: i32) -> (i32, i32, i32) {
    %c0_i32 = arith.constant 0 : i32
    %c0_i32_0 = arith.constant 0 : i32
    %c0_i32_1 = arith.constant 0 : i32
    %c0_i32_2 = arith.constant 0 : i32
    return %c0_i32, %c0_i32_0, %c0_i32_1 : i32, i32, i32
  }
  func.func @transform_2(%arg0: i32) -> (i32, i32) {
    %c0_i32 = arith.constant 0 : i32
    %c0_i32_0 = arith.constant 0 : i32
    %c0_i32_1 = arith.constant 0 : i32
    return %c0_i32, %c0_i32_0 : i32, i32
  }
  func.func @transform_3(%arg0: i32) -> (i32, i32, i32) {
    %c0_i32 = arith.constant 0 : i32
    %c0_i32_0 = arith.constant 0 : i32
    %c0_i32_1 = arith.constant 0 : i32
    %c0_i32_2 = arith.constant 0 : i32
    return %c0_i32, %c0_i32_0, %c0_i32_1 : i32, i32, i32
  }
  func.func @transform_4(%arg0: i32) -> (i32, i32) {
    %c0_i32 = arith.constant 0 : i32
    %c0_i32_0 = arith.constant 0 : i32
    %c0_i32_1 = arith.constant 0 : i32
    return %c0_i32, %c0_i32_0 : i32, i32
  }
  func.func @transform_5(%arg0: i32) -> (i32, i32, i32) {
    %c0_i32 = arith.constant 0 : i32
    %c0_i32_0 = arith.constant 0 : i32
    %c0_i32_1 = arith.constant 0 : i32
    %c0_i32_2 = arith.constant 0 : i32
    return %c0_i32, %c0_i32_0, %c0_i32_1 : i32, i32, i32
  }
  func.func @transform_6(%arg0: i32) -> (i32, i32) {
    %c0_i32 = arith.constant 0 : i32
    %c0_i32_0 = arith.constant 0 : i32
    %c0_i32_1 = arith.constant 0 : i32
    return %c0_i32, %c0_i32_0 : i32, i32
  }
  func.func @transform_7(%arg0: i32) -> (i32, i32) {
    %c0_i32 = arith.constant 0 : i32
    %c0_i32_0 = arith.constant 0 : i32
    return %arg0, %c0_i32 : i32, i32
  }
}

</mosaic_0001>

<llo_original>
// kernel: net_forward.1
$region0: #{net_forward.1}
  #allocation0 [shape = 'u32[]', space=smem, size = 0x4, offset = 0x4, fixed_abs, tag = 'smem constant byte address 0x4 - core index']
  #allocation1 [shape = 'u32[144,128]{1,0:T(1,128)}', space=vmem, size = 0x12000, scoped, tag = 'internal scratch']
  %s0 = inlined_call_operand.vmem [shape: f32[4,7,8,28], index: 0, kind: input, shape index: {}]
  %s1 = inlined_call_operand.hbm [shape: bf16[3,28,768], index: 1, kind: input, shape index: {}]
  %s2 = inlined_call_operand.hbm [shape: f32[1,384], index: 2, kind: input, shape index: {}]
  %s3 = inlined_call_operand.hbm [shape: bf16[3,384,512], index: 3, kind: input, shape index: {}]
  %s4 = inlined_call_operand.hbm [shape: f32[1,256], index: 4, kind: input, shape index: {}]
  %s5 = inlined_call_operand.hbm [shape: bf16[5,256,128], index: 5, kind: input, shape index: {}]
  %s6 = inlined_call_operand.hbm [shape: f32[1,128], index: 6, kind: input, shape index: {}]
  %s7 = inlined_call_operand.vmem [shape: f32[8,128], index: 7, kind: output, shape index: {}]
  %s8 = sld [smem:[#allocation0]]
  $region62: #{net_forward.1} parent=0
    _
  %s10 = ssub.s32 1, %s8
  %s11 = scalar_select 0, %s10, %s8
  $region1: #{net_forward.1} parent=0
    #allocation2 [shape = 'u8[147456]{0}', space=vmem, size = 0x24000, scoped, tag = 'input window, operand 1, single buffered']
    #allocation3 [shape = 's32[1]{0}', space=sflag, size = 0x4, scoped, tag = 'scoped memory for net_forward.1']
    #allocation4 [shape = 'u8[1536]{0}', space=vmem, size = 0x800, scoped, tag = 'input window, operand 2, single buffered']
    #allocation5 [shape = 's32[1]{0}', space=sflag, size = 0x4, scoped, tag = 'scoped memory for net_forward.1']
    #allocation6 [shape = 'u8[1179648]{0}', space=vmem, size = 0x120000, scoped, tag = 'input window, operand 3, single buffered']
    #allocation7 [shape = 'u8[1024]{0}', space=vmem, size = 0x400, scoped, tag = 'input window, operand 4, single buffered']
    #allocation8 [shape = 's32[1]{0}', space=sflag, size = 0x4, scoped, tag = 'scoped memory for net_forward.1']
    #allocation9 [shape = 'u8[327680]{0}', space=vmem, size = 0x50000, scoped, tag = 'input window, operand 5, single buffered']
    #allocation10 [shape = 'u8[512]{0}', space=vmem, size = 0x400, scoped, tag = 'input window, operand 6, single buffered']
    #allocation11 [shape = 's32[1]{0}', space=sflag, size = 0x4, scoped, tag = 'scoped memory for net_forward.1']
    %12 = vsyncpa [#allocation3], 0
    %13 = vsyncpa [#allocation5], 0
    %14 = vsyncpa [#allocation8], 0
    %15 = vsyncpa [#allocation11], 0
    // Predicated region
    $region2: #{net_forward.1} parent=1 // pred_check
      _
    $region3: #{net_forward.1} parent=1 // pred_check_branch
      %17 = sbr.rel (0) target = $region5
    $region4: #{net_forward.1} parent=1 // pred_region
      _
    $region5: #{net_forward.1} parent=1 // pred_fallthru
      _
    // Predicated region
    $region6: #{net_forward.1} parent=1 // pred_check
      _
    $region7: #{net_forward.1} parent=1 // pred_check_branch
      %19 = sbr.rel (0) target = $region9
    $region8: #{net_forward.1} parent=1 // pred_region
      %s21 = ssub.s32 4608, 4608
      %22 = vsyncadd [#allocation3], %s21
      %s23 = sshll.u32 [#allocation2], 4
      %s24 = int_to_ptr.vmem [resolvable:$true] %s23
      %29 = dma.hbm_to_vmem [thread:$0]  %s1, 4608, %s24, [#allocation3], 384, 384, 24
    $region9: #{net_forward.1} parent=1 // pred_fallthru
      _
    // Predicated region
    $region10: #{net_forward.1} parent=1 // pred_check
      _
    $region11: #{net_forward.1} parent=1 // pred_check_branch
      %31 = sbr.rel (0) target = $region13
    $region12: #{net_forward.1} parent=1 // pred_region
      %s33 = ssub.s32 48, 48
      %34 = vsyncadd [#allocation5], %s33
      %s36 = sshll.u32 [#allocation4], 4
      %s37 = int_to_ptr.vmem [resolvable:$true] %s36
      %39 = dma.hbm_to_vmem [thread:$0]  %s2, 48, %s37, [#allocation5]
    $region13: #{net_forward.1} parent=1 // pred_fallthru
      _
    // Predicated region
    $region14: #{net_forward.1} parent=1 // pred_check
      _
    $region15: #{net_forward.1} parent=1 // pred_check_branch
      %41 = sbr.rel (0) target = $region17
    $region16: #{net_forward.1} parent=1 // pred_region
      %s43 = ssub.s32 36864, 36864
      %44 = vsyncadd [#allocation5], %s43
      %s45 = sshll.u32 [#allocation6], 4
      %s46 = int_to_ptr.vmem [resolvable:$true] %s45
      %51 = dma.hbm_to_vmem [thread:$0]  %s3, 36864, %s46, [#allocation5], 256, 256, 16
    $region17: #{net_forward.1} parent=1 // pred_fallthru
      _
    // Predicated region
    $region18: #{net_forward.1} parent=1 // pred_check
      _
    $region19: #{net_forward.1} parent=1 // pred_check_branch
      %53 = sbr.rel (0) target = $region21
    $region20: #{net_forward.1} parent=1 // pred_region
      %s55 = ssub.s32 32, 32
      %56 = vsyncadd [#allocation8], %s55
      %s58 = sshll.u32 [#allocation7], 4
      %s59 = int_to_ptr.vmem [resolvable:$true] %s58
      %61 = dma.hbm_to_vmem [thread:$0]  %s4, 32, %s59, [#allocation8]
    $region21: #{net_forward.1} parent=1 // pred_fallthru
      _
    // Predicated region
    $region22: #{net_forward.1} parent=1 // pred_check
      _
    $region23: #{net_forward.1} parent=1 // pred_check_branch
      %63 = sbr.rel (0) target = $region25
    $region24: #{net_forward.1} parent=1 // pred_region
      %s65 = ssub.s32 10240, 10240
      %66 = vsyncadd [#allocation8], %s65
      %s67 = sshll.u32 [#allocation9], 4
      %s68 = int_to_ptr.vmem [resolvable:$true] %s67
      %73 = dma.hbm_to_vmem [thread:$0]  %s5, 10240, %s68, [#allocation8], 64, 64, 4
    $region25: #{net_forward.1} parent=1 // pred_fallthru
      _
    // Predicated region
    $region26: #{net_forward.1} parent=1 // pred_check
      _
    $region27: #{net_forward.1} parent=1 // pred_check_branch
      %75 = sbr.rel (0) target = $region29
    $region28: #{net_forward.1} parent=1 // pred_region
      %s77 = ssub.s32 16, 16
      %78 = vsyncadd [#allocation11], %s77
      %s80 = sshll.u32 [#allocation10], 4
      %s81 = int_to_ptr.vmem [resolvable:$true] %s80
      %83 = dma.hbm_to_vmem [thread:$0]  %s6, 16, %s81, [#allocation11]
    $region29: #{net_forward.1} parent=1 // pred_fallthru
      _
    // Predicated region
    $region30: #{net_forward.1} parent=1 // pred_check
      _
    $region31: #{net_forward.1} parent=1 // pred_check_branch
      %85 = sbr.rel (0) target = $region33
    $region32: #{net_forward.1} parent=1 // pred_region
      %86 = dma.done [#allocation3], 4608
    $region33: #{net_forward.1} parent=1 // pred_fallthru
      _
    // Predicated region
    $region34: #{net_forward.1} parent=1 // pred_check
      _
    $region35: #{net_forward.1} parent=1 // pred_check_branch
      %88 = sbr.rel (0) target = $region37
    $region36: #{net_forward.1} parent=1 // pred_region
      %89 = dma.done [#allocation5], 48
    $region37: #{net_forward.1} parent=1 // pred_fallthru
      _
    // Predicated region
    $region38: #{net_forward.1} parent=1 // pred_check
      _
    $region39: #{net_forward.1} parent=1 // pred_check_branch
      %91 = sbr.rel (0) target = $region41
    $region40: #{net_forward.1} parent=1 // pred_region
      %92 = dma.done [#allocation5], 36864
    $region41: #{net_forward.1} parent=1 // pred_fallthru
      _
    // Predicated region
    $region42: #{net_forward.1} parent=1 // pred_check
      _
    $region43: #{net_forward.1} parent=1 // pred_check_branch
      %94 = sbr.rel (0) target = $region45
    $region44: #{net_forward.1} parent=1 // pred_region
      %95 = dma.done [#allocation8], 32
    $region45: #{net_forward.1} parent=1 // pred_fallthru
      _
    // Predicated region
    $region46: #{net_forward.1} parent=1 // pred_check
      _
    $region47: #{net_forward.1} parent=1 // pred_check_branch
      %97 = sbr.rel (0) target = $region49
    $region48: #{net_forward.1} parent=1 // pred_region
      %98 = dma.done [#allocation8], 10240
    $region49: #{net_forward.1} parent=1 // pred_fallthru
      _
    // Predicated region
    $region50: #{net_forward.1} parent=1 // pred_check
      _
    $region51: #{net_forward.1} parent=1 // pred_check_branch
      %100 = sbr.rel (0) target = $region53
    $region52: #{net_forward.1} parent=1 // pred_region
      %101 = dma.done [#allocation11], 16
    $region53: #{net_forward.1} parent=1 // pred_fallthru
      _
    %v103 = vld [vmem:[%s0] sm:$0xff]
    %v104 = vld [vmem:[%s0 + $0x8] sm:$0xff]
    %v105 = vld [vmem:[%s0 + $0x10] sm:$0xff]
    %v106 = vld [vmem:[%s0 + $0x18] sm:$0xff]
    %v107 = vld [vmem:[%s0 + $0x20] sm:$0xff]
    %v108 = vld [vmem:[%s0 + $0x28] sm:$0xff]
    %v109 = vld [vmem:[%s0 + $0x30] sm:$0xff]
    %v110 = vpack.c.bf16 %v103, %v103
    %v111 = vpack.c.bf16 %v104, %v104
    %v112 = vpack.c.bf16 %v105, %v105
    %v113 = vpack.c.bf16 %v106, %v106
    %v114 = vpack.c.bf16 %v107, %v107
    %v115 = vpack.c.bf16 %v108, %v108
    %v116 = vpack.c.bf16 %v109, %v109
    %s117 = scalar_lea.vmem %s0, 56
    %v118 = vld [vmem:[%s117] sm:$0xff]
    %v119 = vld [vmem:[%s117 + $0x8] sm:$0xff]
    %v120 = vld [vmem:[%s117 + $0x10] sm:$0xff]
    %v121 = vld [vmem:[%s117 + $0x18] sm:$0xff]
    %v122 = vld [vmem:[%s117 + $0x20] sm:$0xff]
    %v123 = vld [vmem:[%s117 + $0x28] sm:$0xff]
    %v124 = vld [vmem:[%s117 + $0x30] sm:$0xff]
    %v125 = vpack.c.bf16 %v118, %v118
    %v126 = vpack.c.bf16 %v119, %v119
    %v127 = vpack.c.bf16 %v120, %v120
    %v128 = vpack.c.bf16 %v121, %v121
    %v129 = vpack.c.bf16 %v122, %v122
    %v130 = vpack.c.bf16 %v123, %v123
    %v131 = vpack.c.bf16 %v124, %v124
    %s132 = scalar_lea.vmem %s0, 112
    %v133 = vld [vmem:[%s132] sm:$0xff]
    %v134 = vld [vmem:[%s132 + $0x8] sm:$0xff]
    %v135 = vld [vmem:[%s132 + $0x10] sm:$0xff]
    %v136 = vld [vmem:[%s132 + $0x18] sm:$0xff]
    %v137 = vld [vmem:[%s132 + $0x20] sm:$0xff]
    %v138 = vld [vmem:[%s132 + $0x28] sm:$0xff]
    %v139 = vld [vmem:[%s132 + $0x30] sm:$0xff]
    %v140 = vpack.c.bf16 %v133, %v133
    %v141 = vpack.c.bf16 %v134, %v134
    %v142 = vpack.c.bf16 %v135, %v135
    %v143 = vpack.c.bf16 %v136, %v136
    %v144 = vpack.c.bf16 %v137, %v137
    %v145 = vpack.c.bf16 %v138, %v138
    %v146 = vpack.c.bf16 %v139, %v139
    %s147 = scalar_lea.vmem %s0, 168
    %v148 = vld [vmem:[%s147] sm:$0xff]
    %v149 = vld [vmem:[%s147 + $0x8] sm:$0xff]
    %v150 = vld [vmem:[%s147 + $0x10] sm:$0xff]
    %v151 = vld [vmem:[%s147 + $0x18] sm:$0xff]
    %v152 = vld [vmem:[%s147 + $0x20] sm:$0xff]
    %v153 = vld [vmem:[%s147 + $0x28] sm:$0xff]
    %v154 = vld [vmem:[%s147 + $0x30] sm:$0xff]
    %v155 = vpack.c.bf16 %v148, %v148
    %v156 = vpack.c.bf16 %v149, %v149
    %v157 = vpack.c.bf16 %v150, %v150
    %v158 = vpack.c.bf16 %v151, %v151
    %v159 = vpack.c.bf16 %v152, %v152
    %v160 = vpack.c.bf16 %v153, %v153
    %v161 = vpack.c.bf16 %v154, %v154
    %v162 = vld [vmem:[#allocation4] sm:$0x7]
    %v163 = vld [vmem:[#allocation2] sm:$0xff]
    %v164 = vld [vmem:[#allocation2 + $0x8] sm:$0xff]
    %v165 = vld [vmem:[#allocation2 + $0x10] sm:$0xff]
    %v166 = vld [vmem:[#allocation2 + $0x18] sm:$0xff]
    %v167 = vld [vmem:[#allocation2 + $0x20] sm:$0xff]
    %v168 = vld [vmem:[#allocation2 + $0x28] sm:$0xff]
    %v169 = vld [vmem:[#allocation2 + $0x30] sm:$0xff]
    %v170 = vld [vmem:[#allocation2 + $0x38] sm:$0xff]
    %v171 = vld [vmem:[#allocation2 + $0x40] sm:$0xff]
    %v172 = vld [vmem:[#allocation2 + $0x48] sm:$0x33]
    %v173 = vld [vmem:[#allocation2 + $0x50] sm:$0x33]
    %v174 = vld [vmem:[#allocation2 + $0x58] sm:$0x33]
    %s175 = scalar_lea.vmem [#allocation2], 96
    %v176 = vld [vmem:[%s175] sm:$0xff]
    %v177 = vld [vmem:[%s175 + $0x8] sm:$0xff]
    %v178 = vld [vmem:[%s175 + $0x10] sm:$0xff]
    %v179 = vld [vmem:[%s175 + $0x18] sm:$0xff]
    %v180 = vld [vmem:[%s175 + $0x20] sm:$0xff]
    %v181 = vld [vmem:[%s175 + $0x28] sm:$0xff]
    %v182 = vld [vmem:[%s175 + $0x30] sm:$0xff]
    %v183 = vld [vmem:[%s175 + $0x38] sm:$0xff]
    %v184 = vld [vmem:[%s175 + $0x40] sm:$0xff]
    %v185 = vld [vmem:[%s175 + $0x48] sm:$0x33]
    %v186 = vld [vmem:[%s175 + $0x50] sm:$0x33]
    %v187 = vld [vmem:[%s175 + $0x58] sm:$0x33]
    %v195 = vunpack.c.l.b16 %v125
    %v196 = vunpack.c.l.b16 %v126
    %v197 = vunpack.c.l.b16 %v127
    %v198 = vunpack.c.l.b16 %v128
    %v199 = vunpack.c.l.b16 %v129
    %v200 = vunpack.c.l.b16 %v130
    %v201 = vunpack.c.l.b16 %v131
    %v202 = vpack.c.b16 %v196, %v195
    %v203 = vpack.c.b16 %v198, %v197
    %v204 = vpack.c.b16 %v200, %v199
    %v205 = vpack.c.b16 %v201, %v201
    %v218 = vunpack.c.l.b16 %v176
    %v219 = vunpack.c.h.b16 %v176
    %v220 = vunpack.c.l.b16 %v177
    %v221 = vunpack.c.h.b16 %v177
    %v222 = vunpack.c.l.b16 %v178
    %v223 = vunpack.c.h.b16 %v178
    %v224 = vunpack.c.l.b16 %v179
    %v225 = vunpack.c.h.b16 %v179
    %v226 = vunpack.c.l.b16 %v180
    %v227 = vunpack.c.h.b16 %v180
    %v228 = vunpack.c.l.b16 %v181
    %v229 = vunpack.c.h.b16 %v181
    %v230 = vunpack.c.l.b16 %v182
    %v231 = vunpack.c.h.b16 %v182
    %v232 = vunpack.c.l.b16 %v183
    %v233 = vunpack.c.h.b16 %v183
    %v234 = vunpack.c.l.b16 %v184
    %v235 = vunpack.c.h.b16 %v184
    %v236 = vunpack.c.l.b16 %v185
    %v237 = vunpack.c.h.b16 %v185
    %v238 = vunpack.c.l.b16 %v186
    %v239 = vunpack.c.h.b16 %v186
    %v240 = vunpack.c.l.b16 %v187
    %v241 = vunpack.c.h.b16 %v187
    %v242 = vpack.c.b16 %v224, %v218
    %v243 = vpack.c.b16 %v225, %v219
    %v244 = vpack.c.b16 %v226, %v220
    %v245 = vpack.c.b16 %v227, %v221
    %v246 = vpack.c.b16 %v228, %v222
    %v247 = vpack.c.b16 %v229, %v223
    %v248 = vpack.c.b16 %v236, %v230
    %v249 = vpack.c.b16 %v237, %v231
    %v250 = vpack.c.b16 %v238, %v232
    %v251 = vpack.c.b16 %v239, %v233
    %v252 = vpack.c.b16 %v240, %v234
    %v253 = vpack.c.b16 %v241, %v235
    %vm260 = vcmask 228352
    %v262 = vsel %vm260, %v202, 0
    %v265 = vsel %vm260, %v203, 0
    %v268 = vsel %vm260, %v204, 0
    %v271 = vsel %vm260, %v205, 0
    %vm273 = vcmask 1045504
    %v275 = vsel %vm273, %v248, 0
    %v278 = vsel %vm273, %v249, 0
    %v281 = vsel %vm273, %v250, 0
    %v284 = vsel %vm273, %v251, 0
    %v287 = vsel %vm273, %v252, 0
    %v290 = vsel %vm273, %v253, 0
    %292 = vmatprep.subr.bf16.mxu0 %v243
    %293 = vmatpush1.bf16.msra.mxu0 %v242
    %294 = vmatprep.subr.bf16.mxu0 %v278
    %295 = vmatpush1.bf16.msra.mxu0 %v275
    %296 = vmatprep.subr.bf16.mxu0 0
    %297 = vmatpush1.bf16.msra.mxu0 0
    %298 = vmatprep.subr.bf16.mxu0 0
    %299 = vmatpush1.bf16.msra.mxu0 0
    %300 = vmatprep.subr.bf16.mxu0 0
    %301 = vmatpush1.bf16.msra.mxu0 0
    %302 = vmatprep.subr.bf16.mxu0 0
    %303 = vmatpush1.bf16.msra.mxu0 0
    %304 = vmatprep.subr.bf16.mxu0 0
    %305 = vmatpush1.bf16.msra.mxu0 0
    %306 = vmatprep.subr.bf16.mxu0 0
    %307 = vmatpush1.bf16.msra.mxu0 0
    %308 = vmatprep.subr.bf16.mxu0 0
    %309 = vmatpush1.bf16.msra.mxu0 0
    %310 = vmatprep.subr.bf16.mxu0 0
    %311 = vmatpush1.bf16.msra.mxu0 0
    %312 = vmatprep.subr.bf16.mxu0 0
    %313 = vmatpush1.bf16.msra.mxu0 0
    %314 = vmatprep.subr.bf16.mxu0 0
    %315 = vmatpush1.bf16.msra.mxu0 0
    %316 = vmatprep.subr.bf16.mxu0 0
    %317 = vmatpush1.bf16.msra.mxu0 0
    %318 = vmatprep.subr.bf16.mxu0 0
    %319 = vmatpush1.bf16.msra.mxu0 0
    %320 = vmatprep.subr.bf16.mxu0 0
    %321 = vmatpush1.bf16.msra.mxu0 0
    %322 = vmatprep.subr.bf16.mxu0 0
    %323 = vmatpush1.bf16.msra.mxu0 0
    %324 = vmatprep.mubr.bf16.mxu0 0
    %325 = vmatmul.mubr.bf16.gmra.mrb[0].mxu0 %v262
    %v326 = vpop.f32.mrb[0].mxu0
    %v327 = vadd.f32 0.0, %v326
    %v328 = vpop.f32.mrb[0].mxu0
    %v329 = vadd.f32 0.0, %v328
    %v330 = vpop.f32.mrb[0].mxu0
    %v331 = vadd.f32 0.0, %v330
    %v332 = vpop.f32.mrb[0].mxu0
    %v333 = vadd.f32 0.0, %v332
    %334 = vmatprep.mubr.bf16.mxu0 0
    %335 = vmatmul.mubr.bf16.gmra.mrb[0].mxu0 %v265
    %v336 = vpop.f32.mrb[0].mxu0
    %v337 = vadd.f32 0.0, %v336
    %v338 = vpop.f32.mrb[0].mxu0
    %v339 = vadd.f32 0.0, %v338
    %v340 = vpop.f32.mrb[0].mxu0
    %v341 = vadd.f32 0.0, %v340
    %v342 = vpop.f32.mrb[0].mxu0
    %v343 = vadd.f32 0.0, %v342
    %344 = vmatprep.mubr.bf16.mxu0 0
    %345 = vmatmul.mubr.bf16.gmra.mrb[0].mxu0 %v268
    %v346 = vpop.f32.mrb[0].mxu0
    %v347 = vadd.f32 0.0, %v346
    %v348 = vpop.f32.mrb[0].mxu0
    %v349 = vadd.f32 0.0, %v348
    %v350 = vpop.f32.mrb[0].mxu0
    %v351 = vadd.f32 0.0, %v350
    %v352 = vpop.f32.mrb[0].mxu0
    %v353 = vadd.f32 0.0, %v352
    %354 = vmatprep.mubr.bf16.mxu0 0
    %355 = vmatmul.mubr.bf16.gmra.mrb[0].mxu0 %v271
    %v356 = vpop.f32.mrb[0].mxu0
    %v357 = vpop.f32.mrb[0].mxu0
    %v358 = vpop.f32.mrb[0].mxu0
    %v359 = vpop.f32.mrb[0].mxu0
    %360 = vdwg.mxu0
    %361 = vmatprep.subr.bf16.mxu0 %v245
    %362 = vmatpush1.bf16.msra.mxu0 %v244
    %363 = vmatprep.subr.bf16.mxu0 %v284
    %364 = vmatpush1.bf16.msra.mxu0 %v281
    %365 = vmatprep.subr.bf16.mxu0 0
    %366 = vmatpush1.bf16.msra.mxu0 0
    %367 = vmatprep.subr.bf16.mxu0 0
    %368 = vmatpush1.bf16.msra.mxu0 0
    %369 = vmatprep.subr.bf16.mxu0 0
    %370 = vmatpush1.bf16.msra.mxu0 0
    %371 = vmatprep.subr.bf16.mxu0 0
    %372 = vmatpush1.bf16.msra.mxu0 0
    %373 = vmatprep.subr.bf16.mxu0 0
    %374 = vmatpush1.bf16.msra.mxu0 0
    %375 = vmatprep.subr.bf16.mxu0 0
    %376 = vmatpush1.bf16.msra.mxu0 0
    %377 = vmatprep.subr.bf16.mxu0 0
    %378 = vmatpush1.bf16.msra.mxu0 0
    %379 = vmatprep.subr.bf16.mxu0 0
    %380 = vmatpush1.bf16.msra.mxu0 0
    %381 = vmatprep.subr.bf16.mxu0 0
    %382 = vmatpush1.bf16.msra.mxu0 0
    %383 = vmatprep.subr.bf16.mxu0 0
    %384 = vmatpush1.bf16.msra.mxu0 0
    %385 = vmatprep.subr.bf16.mxu0 0
    %386 = vmatpush1.bf16.msra.mxu0 0
    %387 = vmatprep.subr.bf16.mxu0 0
    %388 = vmatpush1.bf16.msra.mxu0 0
    %389 = vmatprep.subr.bf16.mxu0 0
    %390 = vmatpush1.bf16.msra.mxu0 0
    %391 = vmatprep.subr.bf16.mxu0 0
    %392 = vmatpush1.bf16.msra.mxu0 0
    %393 = vmatprep.mubr.bf16.mxu0 0
    %394 = vmatmul.mubr.bf16.gmra.mrb[0].mxu0 %v262
    %v395 = vpop.f32.mrb[0].mxu0
    %v396 = vadd.f32 0.0, %v395
    %v397 = vpop.f32.mrb[0].mxu0
    %v398 = vadd.f32 0.0, %v397
    %v399 = vpop.f32.mrb[0].mxu0
    %v400 = vadd.f32 0.0, %v399
    %v401 = vpop.f32.mrb[0].mxu0
    %v402 = vadd.f32 0.0, %v401
    %403 = vmatprep.mubr.bf16.mxu0 0
    %404 = vmatmul.mubr.bf16.gmra.mrb[0].mxu0 %v265
    %v405 = vpop.f32.mrb[0].mxu0
    %v406 = vadd.f32 0.0, %v405
    %v407 = vpop.f32.mrb[0].mxu0
    %v408 = vadd.f32 0.0, %v407
    %v409 = vpop.f32.mrb[0].mxu0
    %v410 = vadd.f32 0.0, %v409
    %v411 = vpop.f32.mrb[0].mxu0
    %v412 = vadd.f32 0.0, %v411
    %413 = vmatprep.mubr.bf16.mxu0 0
    %414 = vmatmul.mubr.bf16.gmra.mrb[0].mxu0 %v268
    %v415 = vpop.f32.mrb[0].mxu0
    %v416 = vadd.f32 0.0, %v415
    %v417 = vpop.f32.mrb[0].mxu0
    %v418 = vadd.f32 0.0, %v417
    %v419 = vpop.f32.mrb[0].mxu0
    %v420 = vadd.f32 0.0, %v419
    %v421 = vpop.f32.mrb[0].mxu0
    %v422 = vadd.f32 0.0, %v421
    %423 = vmatprep.mubr.bf16.mxu0 0
    %424 = vmatmul.mubr.bf16.gmra.mrb[0].mxu0 %v271
    %v425 = vpop.f32.mrb[0].mxu0
    %v426 = vpop.f32.mrb[0].mxu0
    %v427 = vpop.f32.mrb[0].mxu0
    %v428 = vpop.f32.mrb[0].mxu0
    %429 = vdwg.mxu0
    %430 = vmatprep.subr.bf16.mxu0 %v247
    %431 = vmatpush1.bf16.msra.mxu0 %v246
    %432 = vmatprep.subr.bf16.mxu0 %v290
    %433 = vmatpush1.bf16.msra.mxu0 %v287
    %434 = vmatprep.subr.bf16.mxu0 0
    %435 = vmatpush1.bf16.msra.mxu0 0
    %436 = vmatprep.subr.bf16.mxu0 0
    %437 = vmatpush1.bf16.msra.mxu0 0
    %438 = vmatprep.subr.bf16.mxu0 0
    %439 = vmatpush1.bf16.msra.mxu0 0
    %440 = vmatprep.subr.bf16.mxu0 0
    %441 = vmatpush1.bf16.msra.mxu0 0
    %442 = vmatprep.subr.bf16.mxu0 0
    %443 = vmatpush1.bf16.msra.mxu0 0
    %444 = vmatprep.subr.bf16.mxu0 0
    %445 = vmatpush1.bf16.msra.mxu0 0
    %446 = vmatprep.subr.bf16.mxu0 0
    %447 = vmatpush1.bf16.msra.mxu0 0
    %448 = vmatprep.subr.bf16.mxu0 0
    %449 = vmatpush1.bf16.msra.mxu0 0
    %450 = vmatprep.subr.bf16.mxu0 0
    %451 = vmatpush1.bf16.msra.mxu0 0
    %452 = vmatprep.subr.bf16.mxu0 0
    %453 = vmatpush1.bf16.msra.mxu0 0
    %454 = vmatprep.subr.bf16.mxu0 0
    %455 = vmatpush1.bf16.msra.mxu0 0
    %456 = vmatprep.subr.bf16.mxu0 0
    %457 = vmatpush1.bf16.msra.mxu0 0
    %458 = vmatprep.subr.bf16.mxu0 0
    %459 = vmatpush1.bf16.msra.mxu0 0
    %460 = vmatprep.subr.bf16.mxu0 0
    %461 = vmatpush1.bf16.msra.mxu0 0
    %462 = vmatprep.mubr.bf16.mxu0 0
    %463 = vmatmul.mubr.bf16.gmra.mrb[0].mxu0 %v262
    %v464 = vpop.f32.mrb[0].mxu0
    %v465 = vadd.f32 0.0, %v464
    %v466 = vpop.f32.mrb[0].mxu0
    %v467 = vadd.f32 0.0, %v466
    %v468 = vpop.f32.mrb[0].mxu0
    %v469 = vadd.f32 0.0, %v468
    %v470 = vpop.f32.mrb[0].mxu0
    %v471 = vadd.f32 0.0, %v470
    %472 = vmatprep.mubr.bf16.mxu0 0
    %473 = vmatmul.mubr.bf16.gmra.mrb[0].mxu0 %v265
    %v474 = vpop.f32.mrb[0].mxu0
    %v475 = vadd.f32 0.0, %v474
    %v476 = vpop.f32.mrb[0].mxu0
    %v477 = vadd.f32 0.0, %v476
    %v478 = vpop.f32.mrb[0].mxu0
    %v479 = vadd.f32 0.0, %v478
    %v480 = vpop.f32.mrb[0].mxu0
    %v481 = vadd.f32 0.0, %v480
    %482 = vmatprep.mubr.bf16.mxu0 0
    %483 = vmatmul.mubr.bf16.gmra.mrb[0].mxu0 %v268
    %v484 = vpop.f32.mrb[0].mxu0
    %v485 = vadd.f32 0.0, %v484
    %v486 = vpop.f32.mrb[0].mxu0
    %v487 = vadd.f32 0.0, %v486
    %v488 = vpop.f32.mrb[0].mxu0
    %v489 = vadd.f32 0.0, %v488
    %v490 = vpop.f32.mrb[0].mxu0
    %v491 = vadd.f32 0.0, %v490
    %492 = vmatprep.mubr.bf16.mxu0 0
    %493 = vmatmul.mubr.bf16.gmra.mrb[0].mxu0 %v271
    %v494 = vpop.f32.mrb[0].mxu0
    %v495 = vpop.f32.mrb[0].mxu0
    %v496 = vpop.f32.mrb[0].mxu0
    %v497 = vpop.f32.mrb[0].mxu0
    %498 = vdwg.mxu0
    %v506 = vunpack.c.l.b16 %v110
    %v507 = vunpack.c.l.b16 %v111
    %v508 = vunpack.c.l.b16 %v112
    %v509 = vunpack.c.l.b16 %v113
    %v510 = vunpack.c.l.b16 %v114
    %v511 = vunpack.c.l.b16 %v115
    %v512 = vunpack.c.l.b16 %v116
    %v513 = vpack.c.b16 %v507, %v506
    %v514 = vpack.c.b16 %v509, %v508
    %v515 = vpack.c.b16 %v511, %v510
    %v516 = vpack.c.b16 %v512, %v512
    %v529 = vunpack.c.l.b16 %v163
    %v530 = vunpack.c.h.b16 %v163
    %v531 = vunpack.c.l.b16 %v164
    %v532 = vunpack.c.h.b16 %v164
    %v533 = vunpack.c.l.b16 %v165
    %v534 = vunpack.c.h.b16 %v165
    %v535 = vunpack.c.l.b16 %v166
    %v536 = vunpack.c.h.b16 %v166
    %v537 = vunpack.c.l.b16 %v167
    %v538 = vunpack.c.h.b16 %v167
    %v539 = vunpack.c.l.b16 %v168
    %v540 = vunpack.c.h.b16 %v168
    %v541 = vunpack.c.l.b16 %v169
    %v542 = vunpack.c.h.b16 %v169
    %v543 = vunpack.c.l.b16 %v170
    %v544 = vunpack.c.h.b16 %v170
    %v545 = vunpack.c.l.b16 %v171
    %v546 = vunpack.c.h.b16 %v171
    %v547 = vunpack.c.l.b16 %v172
    %v548 = vunpack.c.h.b16 %v172
    %v549 = vunpack.c.l.b16 %v173
    %v550 = vunpack.c.h.b16 %v173
    %v551 = vunpack.c.l.b16 %v174
    %v552 = vunpack.c.h.b16 %v174
    %v553 = vpack.c.b16 %v535, %v529
    %v554 = vpack.c.b16 %v536, %v530
    %v555 = vpack.c.b16 %v537, %v531
    %v556 = vpack.c.b16 %v538, %v532
    %v557 = vpack.c.b16 %v539, %v533
    %v558 = vpack.c.b16 %v540, %v534
    %v559 = vpack.c.b16 %v547, %v541
    %v560 = vpack.c.b16 %v548, %v542
    %v561 = vpack.c.b16 %v549, %v543
    %v562 = vpack.c.b16 %v550, %v544
    %v563 = vpack.c.b16 %v551, %v545
    %v564 = vpack.c.b16 %v552, %v546
    %v572 = vsel %vm260, %v513, 0
    %v575 = vsel %vm260, %v514, 0
    %v578 = vsel %vm260, %v515, 0
    %v581 = vsel %vm260, %v516, 0
    %v584 = vsel %vm273, %v559, 0
    %v587 = vsel %vm273, %v560, 0
    %v590 = vsel %vm273, %v561, 0
    %v593 = vsel %vm273, %v562, 0
    %v596 = vsel %vm273, %v563, 0
    %v599 = vsel %vm273, %v564, 0
    %601 = vmatprep.subr.bf16.mxu0 %v554
    %602 = vmatpush1.bf16.msra.mxu0 %v553
    %603 = vmatprep.subr.bf16.mxu0 %v587
    %604 = vmatpush1.bf16.msra.mxu0 %v584
    %605 = vmatprep.subr.bf16.mxu0 0
    %606 = vmatpush1.bf16.msra.mxu0 0
    %607 = vmatprep.subr.bf16.mxu0 0
    %608 = vmatpush1.bf16.msra.mxu0 0
    %609 = vmatprep.subr.bf16.mxu0 0
    %610 = vmatpush1.bf16.msra.mxu0 0
    %611 = vmatprep.subr.bf16.mxu0 0
    %612 = vmatpush1.bf16.msra.mxu0 0
    %613 = vmatprep.subr.bf16.mxu0 0
    %614 = vmatpush1.bf16.msra.mxu0 0
    %615 = vmatprep.subr.bf16.mxu0 0
    %616 = vmatpush1.bf16.msra.mxu0 0
    %617 = vmatprep.subr.bf16.mxu0 0
    %618 = vmatpush1.bf16.msra.mxu0 0
    %619 = vmatprep.subr.bf16.mxu0 0
    %620 = vmatpush1.bf16.msra.mxu0 0
    %621 = vmatprep.subr.bf16.mxu0 0
    %622 = vmatpush1.bf16.msra.mxu0 0
    %623 = vmatprep.subr.bf16.mxu0 0
    %624 = vmatpush1.bf16.msra.mxu0 0
    %625 = vmatprep.subr.bf16.mxu0 0
    %626 = vmatpush1.bf16.msra.mxu0 0
    %627 = vmatprep.subr.bf16.mxu0 0
    %628 = vmatpush1.bf16.msra.mxu0 0
    %629 = vmatprep.subr.bf16.mxu0 0
    %630 = vmatpush1.bf16.msra.mxu0 0
    %631 = vmatprep.subr.bf16.mxu0 0
    %632 = vmatpush1.bf16.msra.mxu0 0
    %633 = vmatprep.mubr.bf16.mxu0 0
    %634 = vmatmul.mubr.bf16.gmra.mrb[0].mxu0 %v572
    %v635 = vpop.f32.mrb[0].mxu0
    %v636 = vadd.f32 %v327, %v635
    %v637 = vpop.f32.mrb[0].mxu0
    %v638 = vadd.f32 %v329, %v637
    %v639 = vpop.f32.mrb[0].mxu0
    %v640 = vadd.f32 %v331, %v639
    %v641 = vpop.f32.mrb[0].mxu0
    %v642 = vadd.f32 %v333, %v641
    %643 = vmatprep.mubr.bf16.mxu0 0
    %644 = vmatmul.mubr.bf16.gmra.mrb[0].mxu0 %v575
    %v645 = vpop.f32.mrb[0].mxu0
    %v646 = vadd.f32 %v337, %v645
    %v647 = vpop.f32.mrb[0].mxu0
    %v648 = vadd.f32 %v339, %v647
    %v649 = vpop.f32.mrb[0].mxu0
    %v650 = vadd.f32 %v341, %v649
    %v651 = vpop.f32.mrb[0].mxu0
    %v652 = vadd.f32 %v343, %v651
    %653 = vmatprep.mubr.bf16.mxu0 0
    %654 = vmatmul.mubr.bf16.gmra.mrb[0].mxu0 %v578
    %v655 = vpop.f32.mrb[0].mxu0
    %v656 = vadd.f32 %v347, %v655
    %v657 = vpop.f32.mrb[0].mxu0
    %v658 = vadd.f32 %v349, %v657
    %v659 = vpop.f32.mrb[0].mxu0
    %v660 = vadd.f32 %v351, %v659
    %v661 = vpop.f32.mrb[0].mxu0
    %v662 = vadd.f32 %v353, %v661
    %663 = vmatprep.mubr.bf16.mxu0 0
    %664 = vmatmul.mubr.bf16.gmra.mrb[0].mxu0 %v581
    %v665 = vpop.f32.mrb[0].mxu0
    %v666 = vpop.f32.mrb[0].mxu0
    %v667 = vpop.f32.mrb[0].mxu0
    %v668 = vpop.f32.mrb[0].mxu0
    %669 = vdwg.mxu0
    %670 = vmatprep.subr.bf16.mxu0 %v556
    %671 = vmatpush1.bf16.msra.mxu0 %v555
    %672 = vmatprep.subr.bf16.mxu0 %v593
    %673 = vmatpush1.bf16.msra.mxu0 %v590
    %674 = vmatprep.subr.bf16.mxu0 0
    %675 = vmatpush1.bf16.msra.mxu0 0
    %676 = vmatprep.subr.bf16.mxu0 0
    %677 = vmatpush1.bf16.msra.mxu0 0
    %678 = vmatprep.subr.bf16.mxu0 0
    %679 = vmatpush1.bf16.msra.mxu0 0
    %680 = vmatprep.subr.bf16.mxu0 0
    %681 = vmatpush1.bf16.msra.mxu0 0
    %682 = vmatprep.subr.bf16.mxu0 0
    %683 = vmatpush1.bf16.msra.mxu0 0
    %684 = vmatprep.subr.bf16.mxu0 0
    %685 = vmatpush1.bf16.msra.mxu0 0
    %686 = vmatprep.subr.bf16.mxu0 0
    %687 = vmatpush1.bf16.msra.mxu0 0
    %688 = vmatprep.subr.bf16.mxu0 0
    %689 = vmatpush1.bf16.msra.mxu0 0
    %690 = vmatprep.subr.bf16.mxu0 0
    %691 = vmatpush1.bf16.msra.mxu0 0
    %692 = vmatprep.subr.bf16.mxu0 0
    %693 = vmatpush1.bf16.msra.mxu0 0
    %694 = vmatprep.subr.bf16.mxu0 0
    %695 = vmatpush1.bf16.msra.mxu0 0
    %696 = vmatprep.subr.bf16.mxu0 0
    %697 = vmatpush1.bf16.msra.mxu0 0
    %698 = vmatprep.subr.bf16.mxu0 0
    %699 = vmatpush1.bf16.msra.mxu0 0
    %700 = vmatprep.subr.bf16.mxu0 0
    %701 = vmatpush1.bf16.msra.mxu0 0
    %702 = vmatprep.mubr.bf16.mxu0 0
    %703 = vmatmul.mubr.bf16.gmra.mrb[0].mxu0 %v572
    %v704 = vpop.f32.mrb[0].mxu0
    %v705 = vadd.f32 %v396, %v704
    %v706 = vpop.f32.mrb[0].mxu0
    %v707 = vadd.f32 %v398, %v706
    %v708 = vpop.f32.mrb[0].mxu0
    %v709 = vadd.f32 %v400, %v708
    %v710 = vpop.f32.mrb[0].mxu0
    %v711 = vadd.f32 %v402, %v710
    %712 = vmatprep.mubr.bf16.mxu0 0
    %713 = vmatmul.mubr.bf16.gmra.mrb[0].mxu0 %v575
    %v714 = vpop.f32.mrb[0].mxu0
    %v715 = vadd.f32 %v406, %v714
    %v716 = vpop.f32.mrb[0].mxu0
    %v717 = vadd.f32 %v408, %v716
    %v718 = vpop.f32.mrb[0].mxu0
    %v719 = vadd.f32 %v410, %v718
    %v720 = vpop.f32.mrb[0].mxu0
    %v721 = vadd.f32 %v412, %v720
    %722 = vmatprep.mubr.bf16.mxu0 0
    %723 = vmatmul.mubr.bf16.gmra.mrb[0].mxu0 %v578
    %v724 = vpop.f32.mrb[0].mxu0
    %v725 = vadd.f32 %v416, %v724
    %v726 = vpop.f32.mrb[0].mxu0
    %v727 = vadd.f32 %v418, %v726
    %v728 = vpop.f32.mrb[0].mxu0
    %v729 = vadd.f32 %v420, %v728
    %v730 = vpop.f32.mrb[0].mxu0
    %v731 = vadd.f32 %v422, %v730
    %732 = vmatprep.mubr.bf16.mxu0 0
    %733 = vmatmul.mubr.bf16.gmra.mrb[0].mxu0 %v581
    %v734 = vpop.f32.mrb[0].mxu0
    %v735 = vpop.f32.mrb[0].mxu0
    %v736 = vpop.f32.mrb[0].mxu0
    %v737 = vpop.f32.mrb[0].mxu0
    %738 = vdwg.mxu0
    %739 = vmatprep.subr.bf16.mxu0 %v558
    %740 = vmatpush1.bf16.msra.mxu0 %v557
    %741 = vmatprep.subr.bf16.mxu0 %v599
    %742 = vmatpush1.bf16.msra.mxu0 %v596
    %743 = vmatprep.subr.bf16.mxu0 0
    %744 = vmatpush1.bf16.msra.mxu0 0
    %745 = vmatprep.subr.bf16.mxu0 0
    %746 = vmatpush1.bf16.msra.mxu0 0
    %747 = vmatprep.subr.bf16.mxu0 0
    %748 = vmatpush1.bf16.msra.mxu0 0
    %749 = vmatprep.subr.bf16.mxu0 0
    %750 = vmatpush1.bf16.msra.mxu0 0
    %751 = vmatprep.subr.bf16.mxu0 0
    %752 = vmatpush1.bf16.msra.mxu0 0
    %753 = vmatprep.subr.bf16.mxu0 0
    %754 = vmatpush1.bf16.msra.mxu0 0
    %755 = vmatprep.subr.bf16.mxu0 0
    %756 = vmatpush1.bf16.msra.mxu0 0
    %757 = vmatprep.subr.bf16.mxu0 0
    %758 = vmatpush1.bf16.msra.mxu0 0
    %759 = vmatprep.subr.bf16.mxu0 0
    %760 = vmatpush1.bf16.msra.mxu0 0
    %761 = vmatprep.subr.bf16.mxu0 0
    %762 = vmatpush1.bf16.msra.mxu0 0
    %763 = vmatprep.subr.bf16.mxu0 0
    %764 = vmatpush1.bf16.msra.mxu0 0
    %765 = vmatprep.subr.bf16.mxu0 0
    %766 = vmatpush1.bf16.msra.mxu0 0
    %767 = vmatprep.subr.bf16.mxu0 0
    %768 = vmatpush1.bf16.msra.mxu0 0
    %769 = vmatprep.subr.bf16.mxu0 0
    %770 = vmatpush1.bf16.msra.mxu0 0
    %771 = vmatprep.mubr.bf16.mxu0 0
    %772 = vmatmul.mubr.bf16.gmra.mrb[0].mxu0 %v572
    %v773 = vpop.f32.mrb[0].mxu0
    %v774 = vadd.f32 %v465, %v773
    %v775 = vpop.f32.mrb[0].mxu0
    %v776 = vadd.f32 %v467, %v775
    %v777 = vpop.f32.mrb[0].mxu0
    %v778 = vadd.f32 %v469, %v777
    %v779 = vpop.f32.mrb[0].mxu0
    %v780 = vadd.f32 %v471, %v779
    %781 = vmatprep.mubr.bf16.mxu0 0
    %782 = vmatmul.mubr.bf16.gmra.mrb[0].mxu0 %v575
    %v783 = vpop.f32.mrb[0].mxu0
    %v784 = vadd.f32 %v475, %v783
    %v785 = vpop.f32.mrb[0].mxu0
    %v786 = vadd.f32 %v477, %v785
    %v787 = vpop.f32.mrb[0].mxu0
    %v788 = vadd.f32 %v479, %v787
    %v789 = vpop.f32.mrb[0].mxu0
    %v790 = vadd.f32 %v481, %v789
    %791 = vmatprep.mubr.bf16.mxu0 0
    %792 = vmatmul.mubr.bf16.gmra.mrb[0].mxu0 %v578
    %v793 = vpop.f32.mrb[0].mxu0
    %v794 = vadd.f32 %v485, %v793
    %v795 = vpop.f32.mrb[0].mxu0
    %v796 = vadd.f32 %v487, %v795
    %v797 = vpop.f32.mrb[0].mxu0
    %v798 = vadd.f32 %v489, %v797
    %v799 = vpop.f32.mrb[0].mxu0
    %v800 = vadd.f32 %v491, %v799
    %801 = vmatprep.mubr.bf16.mxu0 0
    %802 = vmatmul.mubr.bf16.gmra.mrb[0].mxu0 %v581
    %v803 = vpop.f32.mrb[0].mxu0
    %v804 = vpop.f32.mrb[0].mxu0
    %v805 = vpop.f32.mrb[0].mxu0
    %v806 = vpop.f32.mrb[0].mxu0
    %807 = vdwg.mxu0
    %s808 = scalar_lea.vmem [#allocation2], 192
    %v809 = vld [vmem:[%s808] sm:$0xff]
    %v810 = vld [vmem:[%s808 + $0x8] sm:$0xff]
    %v811 = vld [vmem:[%s808 + $0x10] sm:$0xff]
    %v812 = vld [vmem:[%s808 + $0x18] sm:$0xff]
    %v813 = vld [vmem:[%s808 + $0x20] sm:$0xff]
    %v814 = vld [vmem:[%s808 + $0x28] sm:$0xff]
    %v815 = vld [vmem:[%s808 + $0x30] sm:$0xff]
    %v816 = vld [vmem:[%s808 + $0x38] sm:$0xff]
    %v817 = vld [vmem:[%s808 + $0x40] sm:$0xff]
    %v818 = vld [vmem:[%s808 + $0x48] sm:$0x33]
    %v819 = vld [vmem:[%s808 + $0x50] sm:$0x33]
    %v820 = vld [vmem:[%s808 + $0x58] sm:$0x33]
    %v828 = vunpack.c.l.b16 %v140
    %v829 = vunpack.c.l.b16 %v141
    %v830 = vunpack.c.l.b16 %v142
    %v831 = vunpack.c.l.b16 %v143
    %v832 = vunpack.c.l.b16 %v144
    %v833 = vunpack.c.l.b16 %v145
    %v834 = vunpack.c.l.b16 %v146
    %v835 = vpack.c.b16 %v829, %v828
    %v836 = vpack.c.b16 %v831, %v830
    %v837 = vpack.c.b16 %v833, %v832
    %v838 = vpack.c.b16 %v834, %v834
    %v851 = vunpack.c.l.b16 %v809
    %v852 = vunpack.c.h.b16 %v809
    %v853 = vunpack.c.l.b16 %v810
    %v854 = vunpack.c.h.b16 %v810
    %v855 = vunpack.c.l.b16 %v811
    %v856 = vunpack.c.h.b16 %v811
    %v857 = vunpack.c.l.b16 %v812
    %v858 = vunpack.c.h.b16 %v812
    %v859 = vunpack.c.l.b16 %v813
    %v860 = vunpack.c.h.b16 %v813
    %v861 = vunpack.c.l.b16 %v814
    %v862 = vunpack.c.h.b16 %v814
    %v863 = vunpack.c.l.b16 %v815
    %v864 = vunpack.c.h.b16 %v815
    %v865 = vunpack.c.l.b16 %v816
    %v866 = vunpack.c.h.b16 %v816
    %v867 = vunpack.c.l.b16 %v817
    %v868 = vunpack.c.h.b16 %v817
    %v869 = vunpack.c.l.b16 %v818
    %v870 = vunpack.c.h.b16 %v818
    %v871 = vunpack.c.l.b16 %v819
    %v872 = vunpack.c.h.b16 %v819
    %v873 = vunpack.c.l.b16 %v820
    %v874 = vunpack.c.h.b16 %v820
    %v875 = vpack.c.b16 %v857, %v851
    %v876 = vpack.c.b16 %v858, %v852
    %v877 = vpack.c.b16 %v859, %v853
    %v878 = vpack.c.b16 %v860, %v854
    %v879 = vpack.c.b16 %v861, %v855
    %v880 = vpack.c.b16 %v862, %v856
    %v881 = vpack.c.b16 %v869, %v863
    %v882 = vpack.c.b16 %v870, %v864
    %v883 = vpack.c.b16 %v871, %v865
    %v884 = vpack.c.b16 %v872, %v866
    %v885 = vpack.c.b16 %v873, %v867
    %v886 = vpack.c.b16 %v874, %v868
    %v894 = vsel %vm260, %v835, 0
    %v897 = vsel %vm260, %v836, 0
    %v900 = vsel %vm260, %v837, 0
    %v903 = vsel %vm260, %v838, 0
    %v906 = vsel %vm273, %v881, 0
    %v909 = vsel %vm273, %v882, 0
    %v912 = vsel %vm273, %v883, 0
    %v915 = vsel %vm273, %v884, 0
    %v918 = vsel %vm273, %v885, 0
    %v921 = vsel %vm273, %v886, 0
    %923 = vmatprep.subr.bf16.mxu0 %v876
    %924 = vmatpush1.bf16.msra.mxu0 %v875
    %925 = vmatprep.subr.bf16.mxu0 %v909
    %926 = vmatpush1.bf16.msra.mxu0 %v906
    %927 = vmatprep.subr.bf16.mxu0 0
    %928 = vmatpush1.bf16.msra.mxu0 0
    %929 = vmatprep.subr.bf16.mxu0 0
    %930 = vmatpush1.bf16.msra.mxu0 0
    %931 = vmatprep.subr.bf16.mxu0 0
    %932 = vmatpush1.bf16.msra.mxu0 0
    %933 = vmatprep.subr.bf16.mxu0 0
    %934 = vmatpush1.bf16.msra.mxu0 0
    %935 = vmatprep.subr.bf16.mxu0 0
    %936 = vmatpush1.bf16.msra.mxu0 0
    %937 = vmatprep.subr.bf16.mxu0 0
    %938 = vmatpush1.bf16.msra.mxu0 0
    %939 = vmatprep.subr.bf16.mxu0 0
    %940 = vmatpush1.bf16.msra.mxu0 0
    %941 = vmatprep.subr.bf16.mxu0 0
    %942 = vmatpush1.bf16.msra.mxu0 0
    %943 = vmatprep.subr.bf16.mxu0 0
    %944 = vmatpush1.bf16.msra.mxu0 0
    %945 = vmatprep.subr.bf16.mxu0 0
    %946 = vmatpush1.bf16.msra.mxu0 0
    %947 = vmatprep.subr.bf16.mxu0 0
    %948 = vmatpush1.bf16.msra.mxu0 0
    %949 = vmatprep.subr.bf16.mxu0 0
    %950 = vmatpush1.bf16.msra.mxu0 0
    %951 = vmatprep.subr.bf16.mxu0 0
    %952 = vmatpush1.bf16.msra.mxu0 0
    %953 = vmatprep.subr.bf16.mxu0 0
    %954 = vmatpush1.bf16.msra.mxu0 0
    %955 = vmatprep.mubr.bf16.mxu0 0
    %956 = vmatmul.mubr.bf16.gmra.mrb[0].mxu0 %v894
    %v957 = vpop.f32.mrb[0].mxu0
    %v958 = vadd.f32 0.0, %v957
    %v959 = vpop.f32.mrb[0].mxu0
    %v960 = vadd.f32 0.0, %v959
    %v961 = vpop.f32.mrb[0].mxu0
    %v962 = vadd.f32 0.0, %v961
    %v963 = vpop.f32.mrb[0].mxu0
    %v964 = vadd.f32 0.0, %v963
    %965 = vmatprep.mubr.bf16.mxu0 0
    %966 = vmatmul.mubr.bf16.gmra.mrb[0].mxu0 %v897
    %v967 = vpop.f32.mrb[0].mxu0
    %v968 = vadd.f32 0.0, %v967
    %v969 = vpop.f32.mrb[0].mxu0
    %v970 = vadd.f32 0.0, %v969
    %v971 = vpop.f32.mrb[0].mxu0
    %v972 = vadd.f32 0.0, %v971
    %v973 = vpop.f32.mrb[0].mxu0
    %v974 = vadd.f32 0.0, %v973
    %975 = vmatprep.mubr.bf16.mxu0 0
    %976 = vmatmul.mubr.bf16.gmra.mrb[0].mxu0 %v900
    %v977 = vpop.f32.mrb[0].mxu0
    %v978 = vadd.f32 0.0, %v977
    %v979 = vpop.f32.mrb[0].mxu0
    %v980 = vadd.f32 0.0, %v979
    %v981 = vpop.f32.mrb[0].mxu0
    %v982 = vadd.f32 0.0, %v981
    %v983 = vpop.f32.mrb[0].mxu0
    %v984 = vadd.f32 0.0, %v983
    %985 = vmatprep.mubr.bf16.mxu0 0
    %986 = vmatmul.mubr.bf16.gmra.mrb[0].mxu0 %v903
    %v987 = vpop.f32.mrb[0].mxu0
    %v988 = vpop.f32.mrb[0].mxu0
    %v989 = vpop.f32.mrb[0].mxu0
    %v990 = vpop.f32.mrb[0].mxu0
    %991 = vdwg.mxu0
    %992 = vmatprep.subr.bf16.mxu0 %v878
    %993 = vmatpush1.bf16.msra.mxu0 %v877
    %994 = vmatprep.subr.bf16.mxu0 %v915
    %995 = vmatpush1.bf16.msra.mxu0 %v912
    %996 = vmatprep.subr.bf16.mxu0 0
    %997 = vmatpush1.bf16.msra.mxu0 0
    %998 = vmatprep.subr.bf16.mxu0 0
    %999 = vmatpush1.bf16.msra.mxu0 0
    %1000 = vmatprep.subr.bf16.mxu0 0
    %1001 = vmatpush1.bf16.msra.mxu0 0
    %1002 = vmatprep.subr.bf16.mxu0 0
    %1003 = vmatpush1.bf16.msra.mxu0 0
    %1004 = vmatprep.subr.bf16.mxu0 0
    %1005 = vmatpush1.bf16.msra.mxu0 0
    %1006 = vmatprep.subr.bf16.mxu0 0
    %1007 = vmatpush1.bf16.msra.mxu0 0
    %1008 = vmatprep.subr.bf16.mxu0 0
    %1009 = vmatpush1.bf16.msra.mxu0 0
    %1010 = vmatprep.subr.bf16.mxu0 0
    %1011 = vmatpush1.bf16.msra.mxu0 0
    %1012 = vmatprep.subr.bf16.mxu0 0
    %1013 = vmatpush1.bf16.msra.mxu0 0
    %1014 = vmatprep.subr.bf16.mxu0 0
    %1015 = vmatpush1.bf16.msra.mxu0 0
    %1016 = vmatprep.subr.bf16.mxu0 0
    %1017 = vmatpush1.bf16.msra.mxu0 0
    %1018 = vmatprep.subr.bf16.mxu0 0
    %1019 = vmatpush1.bf16.msra.mxu0 0
    %1020 = vmatprep.subr.bf16.mxu0 0
    %1021 = vmatpush1.bf16.msra.mxu0 0
    %1022 = vmatprep.subr.bf16.mxu0 0
    %1023 = vmatpush1.bf16.msra.mxu0 0
    %1024 = vmatprep.mubr.bf16.mxu0 0
    %1025 = vmatmul.mubr.bf16.gmra.mrb[0].mxu0 %v894
    %v1026 = vpop.f32.mrb[0].mxu0
    %v1027 = vadd.f32 0.0, %v1026
    %v1028 = vpop.f32.mrb[0].mxu0
    %v1029 = vadd.f32 0.0, %v1028
    %v1030 = vpop.f32.mrb[0].mxu0
    %v1031 = vadd.f32 0.0, %v1030
    %v1032 = vpop.f32.mrb[0].mxu0
    %v1033 = vadd.f32 0.0, %v1032
    %1034 = vmatprep.mubr.bf16.mxu0 0
    %1035 = vmatmul.mubr.bf16.gmra.mrb[0].mxu0 %v897
    %v1036 = vpop.f32.mrb[0].mxu0
    %v1037 = vadd.f32 0.0, %v1036
    %v1038 = vpop.f32.mrb[0].mxu0
    %v1039 = vadd.f32 0.0, %v1038
    %v1040 = vpop.f32.mrb[0].mxu0
    %v1041 = vadd.f32 0.0, %v1040
    %v1042 = vpop.f32.mrb[0].mxu0
    %v1043 = vadd.f32 0.0, %v1042
    %1044 = vmatprep.mubr.bf16.mxu0 0
    %1045 = vmatmul.mubr.bf16.gmra.mrb[0].mxu0 %v900
    %v1046 = vpop.f32.mrb[0].mxu0
    %v1047 = vadd.f32 0.0, %v1046
    %v1048 = vpop.f32.mrb[0].mxu0
    %v1049 = vadd.f32 0.0, %v1048
    %v1050 = vpop.f32.mrb[0].mxu0
    %v1051 = vadd.f32 0.0, %v1050
    %v1052 = vpop.f32.mrb[0].mxu0
    %v1053 = vadd.f32 0.0, %v1052
    %1054 = vmatprep.mubr.bf16.mxu0 0
    %1055 = vmatmul.mubr.bf16.gmra.mrb[0].mxu0 %v903
    %v1056 = vpop.f32.mrb[0].mxu0
    %v1057 = vpop.f32.mrb[0].mxu0
    %v1058 = vpop.f32.mrb[0].mxu0
    %v1059 = vpop.f32.mrb[0].mxu0
    %1060 = vdwg.mxu0
    %1061 = vmatprep.subr.bf16.mxu0 %v880
    %1062 = vmatpush1.bf16.msra.mxu0 %v879
    %1063 = vmatprep.subr.bf16.mxu0 %v921
    %1064 = vmatpush1.bf16.msra.mxu0 %v918
    %1065 = vmatprep.subr.bf16.mxu0 0
    %1066 = vmatpush1.bf16.msra.mxu0 0
    %1067 = vmatprep.subr.bf16.mxu0 0
    %1068 = vmatpush1.bf16.msra.mxu0 0
    %1069 = vmatprep.subr.bf16.mxu0 0
    %1070 = vmatpush1.bf16.msra.mxu0 0
    %1071 = vmatprep.subr.bf16.mxu0 0
    %1072 = vmatpush1.bf16.msra.mxu0 0
    %1073 = vmatprep.subr.bf16.mxu0 0
    %1074 = vmatpush1.bf16.msra.mxu0 0
    %1075 = vmatprep.subr.bf16.mxu0 0
    %1076 = vmatpush1.bf16.msra.mxu0 0
    %1077 = vmatprep.subr.bf16.mxu0 0
    %1078 = vmatpush1.bf16.msra.mxu0 0
    %1079 = vmatprep.subr.bf16.mxu0 0
    %1080 = vmatpush1.bf16.msra.mxu0 0
    %1081 = vmatprep.subr.bf16.mxu0 0
    %1082 = vmatpush1.bf16.msra.mxu0 0
    %1083 = vmatprep.subr.bf16.mxu0 0
    %1084 = vmatpush1.bf16.msra.mxu0 0
    %1085 = vmatprep.subr.bf16.mxu0 0
    %1086 = vmatpush1.bf16.msra.mxu0 0
    %1087 = vmatprep.subr.bf16.mxu0 0
    %1088 = vmatpush1.bf16.msra.mxu0 0
    %1089 = vmatprep.subr.bf16.mxu0 0
    %1090 = vmatpush1.bf16.msra.mxu0 0
    %1091 = vmatprep.subr.bf16.mxu0 0
    %1092 = vmatpush1.bf16.msra.mxu0 0
    %1093 = vmatprep.mubr.bf16.mxu0 0
    %1094 = vmatmul.mubr.bf16.gmra.mrb[0].mxu0 %v894
    %v1095 = vpop.f32.mrb[0].mxu0
    %v1096 = vadd.f32 0.0, %v1095
    %v1097 = vpop.f32.mrb[0].mxu0
    %v1098 = vadd.f32 0.0, %v1097
    %v1099 = vpop.f32.mrb[0].mxu0
    %v1100 = vadd.f32 0.0, %v1099
    %v1101 = vpop.f32.mrb[0].mxu0
    %v1102 = vadd.f32 0.0, %v1101
    %1103 = vmatprep.mubr.bf16.mxu0 0
    %1104 = vmatmul.mubr.bf16.gmra.mrb[0].mxu0 %v897
    %v1105 = vpop.f32.mrb[0].mxu0
    %v1106 = vadd.f32 0.0, %v1105
    %v1107 = vpop.f32.mrb[0].mxu0
    %v1108 = vadd.f32 0.0, %v1107
    %v1109 = vpop.f32.mrb[0].mxu0
    %v1110 = vadd.f32 0.0, %v1109
    %v1111 = vpop.f32.mrb[0].mxu0
    %v1112 = vadd.f32 0.0, %v1111
    %1113 = vmatprep.mubr.bf16.mxu0 0
    %1114 = vmatmul.mubr.bf16.gmra.mrb[0].mxu0 %v900
    %v1115 = vpop.f32.mrb[0].mxu0
    %v1116 = vadd.f32 0.0, %v1115
    %v1117 = vpop.f32.mrb[0].mxu0
    %v1118 = vadd.f32 0.0, %v1117
    %v1119 = vpop.f32.mrb[0].mxu0
    %v1120 = vadd.f32 0.0, %v1119
    %v1121 = vpop.f32.mrb[0].mxu0
    %v1122 = vadd.f32 0.0, %v1121
    %1123 = vmatprep.mubr.bf16.mxu0 0
    %1124 = vmatmul.mubr.bf16.gmra.mrb[0].mxu0 %v903
    %v1125 = vpop.f32.mrb[0].mxu0
    %v1126 = vpop.f32.mrb[0].mxu0
    %v1127 = vpop.f32.mrb[0].mxu0
    %v1128 = vpop.f32.mrb[0].mxu0
    %1129 = vdwg.mxu0
    %v1130 = vadd.f32 %v636, %v958
    %v1131 = vadd.f32 %v638, %v960
    %v1132 = vadd.f32 %v705, %v1027
    %v1133 = vadd.f32 %v707, %v1029
    %v1134 = vadd.f32 %v774, %v1096
    %v1135 = vadd.f32 %v776, %v1098
    %v1136 = vadd.f32 %v640, %v962
    %v1137 = vadd.f32 %v642, %v964
    %v1138 = vadd.f32 %v709, %v1031
    %v1139 = vadd.f32 %v711, %v1033
    %v1140 = vadd.f32 %v778, %v1100
    %v1141 = vadd.f32 %v780, %v1102
    %v1142 = vadd.f32 %v646, %v968
    %v1143 = vadd.f32 %v648, %v970
    %v1144 = vadd.f32 %v715, %v1037
    %v1145 = vadd.f32 %v717, %v1039
    %v1146 = vadd.f32 %v784, %v1106
    %v1147 = vadd.f32 %v786, %v1108
    %v1148 = vadd.f32 %v650, %v972
    %v1149 = vadd.f32 %v652, %v974
    %v1150 = vadd.f32 %v719, %v1041
    %v1151 = vadd.f32 %v721, %v1043
    %v1152 = vadd.f32 %v788, %v1110
    %v1153 = vadd.f32 %v790, %v1112
    %v1154 = vadd.f32 %v656, %v978
    %v1155 = vadd.f32 %v658, %v980
    %v1156 = vadd.f32 %v725, %v1047
    %v1157 = vadd.f32 %v727, %v1049
    %v1158 = vadd.f32 %v794, %v1116
    %v1159 = vadd.f32 %v796, %v1118
    %v1160 = vadd.f32 %v660, %v982
    %v1161 = vadd.f32 %v662, %v984
    %v1162 = vadd.f32 %v729, %v1051
    %v1163 = vadd.f32 %v731, %v1053
    %v1164 = vadd.f32 %v798, %v1120
    %v1165 = vadd.f32 %v800, %v1122
    %v1166 = vmax.f32 %v1130, %v1133
    %v1167 = vmax.f32 %v1131, %v1134
    %v1168 = vmax.f32 %v1132, %v1135
    %v1169 = vmax.f32 %v1136, %v1139
    %v1170 = vmax.f32 %v1137, %v1140
    %v1171 = vmax.f32 %v1138, %v1141
    %v1172 = vmax.f32 %v1142, %v1145
    %v1173 = vmax.f32 %v1143, %v1146
    %v1174 = vmax.f32 %v1144, %v1147
    %v1175 = vmax.f32 %v1148, %v1151
    %v1176 = vmax.f32 %v1149, %v1152
    %v1177 = vmax.f32 %v1150, %v1153
    %v1178 = vmax.f32 %v1154, %v1157
    %v1179 = vmax.f32 %v1155, %v1158
    %v1180 = vmax.f32 %v1156, %v1159
    %v1181 = vmax.f32 %v1160, %v1163
    %v1182 = vmax.f32 %v1161, %v1164
    %v1183 = vmax.f32 %v1162, %v1165
    %1184 = vmatprep.subr.bf16.mxu0 %v243
    %1185 = vmatpush1.bf16.msra.mxu0 %v242
    %1186 = vmatprep.subr.bf16.mxu0 %v278
    %1187 = vmatpush1.bf16.msra.mxu0 %v275
    %1188 = vmatprep.subr.bf16.mxu0 0
    %1189 = vmatpush1.bf16.msra.mxu0 0
    %1190 = vmatprep.subr.bf16.mxu0 0
    %1191 = vmatpush1.bf16.msra.mxu0 0
    %1192 = vmatprep.subr.bf16.mxu0 0
    %1193 = vmatpush1.bf16.msra.mxu0 0
    %1194 = vmatprep.subr.bf16.mxu0 0
    %1195 = vmatpush1.bf16.msra.mxu0 0
    %1196 = vmatprep.subr.bf16.mxu0 0
    %1197 = vmatpush1.bf16.msra.mxu0 0
    %1198 = vmatprep.subr.bf16.mxu0 0
    %1199 = vmatpush1.bf16.msra.mxu0 0
    %1200 = vmatprep.subr.bf16.mxu0 0
    %1201 = vmatpush1.bf16.msra.mxu0 0
    %1202 = vmatprep.subr.bf16.mxu0 0
    %1203 = vmatpush1.bf16.msra.mxu0 0
    %1204 = vmatprep.subr.bf16.mxu0 0
    %1205 = vmatpush1.bf16.msra.mxu0 0
    %1206 = vmatprep.subr.bf16.mxu0 0
    %1207 = vmatpush1.bf16.msra.mxu0 0
    %1208 = vmatprep.subr.bf16.mxu0 0
    %1209 = vmatpush1.bf16.msra.mxu0 0
    %1210 = vmatprep.subr.bf16.mxu0 0
    %1211 = vmatpush1.bf16.msra.mxu0 0
    %1212 = vmatprep.subr.bf16.mxu0 0
    %1213 = vmatpush1.bf16.msra.mxu0 0
    %1214 = vmatprep.subr.bf16.mxu0 0
    %1215 = vmatpush1.bf16.msra.mxu0 0
    %1216 = vmatprep.mubr.bf16.mxu0 0
    %1217 = vmatmul.mubr.bf16.gmra.mrb[0].mxu0 %v894
    %v1218 = vpop.f32.mrb[0].mxu0
    %v1219 = vadd.f32 0.0, %v1218
    %v1220 = vpop.f32.mrb[0].mxu0
    %v1221 = vadd.f32 0.0, %v1220
    %v1222 = vpop.f32.mrb[0].mxu0
    %v1223 = vadd.f32 0.0, %v1222
    %v1224 = vpop.f32.mrb[0].mxu0
    %v1225 = vadd.f32 0.0, %v1224
    %1226 = vmatprep.mubr.bf16.mxu0 0
    %1227 = vmatmul.mubr.bf16.gmra.mrb[0].mxu0 %v897
    %v1228 = vpop.f32.mrb[0].mxu0
    %v1229 = vadd.f32 0.0, %v1228
    %v1230 = vpop.f32.mrb[0].mxu0
    %v1231 = vadd.f32 0.0, %v1230
    %v1232 = vpop.f32.mrb[0].mxu0
    %v1233 = vadd.f32 0.0, %v1232
    %v1234 = vpop.f32.mrb[0].mxu0
    %v1235 = vadd.f32 0.0, %v1234
    %1236 = vmatprep.mubr.bf16.mxu0 0
    %1237 = vmatmul.mubr.bf16.gmra.mrb[0].mxu0 %v900
    %v1238 = vpop.f32.mrb[0].mxu0
    %v1239 = vadd.f32 0.0, %v1238
    %v1240 = vpop.f32.mrb[0].mxu0
    %v1241 = vadd.f32 0.0, %v1240
    %v1242 = vpop.f32.mrb[0].mxu0
    %v1243 = vadd.f32 0.0, %v1242
    %v1244 = vpop.f32.mrb[0].mxu0
    %v1245 = vadd.f32 0.0, %v1244
    %1246 = vmatprep.mubr.bf16.mxu0 0
    %1247 = vmatmul.mubr.bf16.gmra.mrb[0].mxu0 %v903
    %v1248 = vpop.f32.mrb[0].mxu0
    %v1249 = vpop.f32.mrb[0].mxu0
    %v1250 = vpop.f32.mrb[0].mxu0
    %v1251 = vpop.f32.mrb[0].mxu0
    %1252 = vdwg.mxu0
    %1253 = vmatprep.subr.bf16.mxu0 %v245
    %1254 = vmatpush1.bf16.msra.mxu0 %v244
    %1255 = vmatprep.subr.bf16.mxu0 %v284
    %1256 = vmatpush1.bf16.msra.mxu0 %v281
    %1257 = vmatprep.subr.bf16.mxu0 0
    %1258 = vmatpush1.bf16.msra.mxu0 0
    %1259 = vmatprep.subr.bf16.mxu0 0
    %1260 = vmatpush1.bf16.msra.mxu0 0
    %1261 = vmatprep.subr.bf16.mxu0 0
    %1262 = vmatpush1.bf16.msra.mxu0 0
    %1263 = vmatprep.subr.bf16.mxu0 0
    %1264 = vmatpush1.bf16.msra.mxu0 0
    %1265 = vmatprep.subr.bf16.mxu0 0
    %1266 = vmatpush1.bf16.msra.mxu0 0
    %1267 = vmatprep.subr.bf16.mxu0 0
    %1268 = vmatpush1.bf16.msra.mxu0 0
    %1269 = vmatprep.subr.bf16.mxu0 0
    %1270 = vmatpush1.bf16.msra.mxu0 0
    %1271 = vmatprep.subr.bf16.mxu0 0
    %1272 = vmatpush1.bf16.msra.mxu0 0
    %1273 = vmatprep.subr.bf16.mxu0 0
    %1274 = vmatpush1.bf16.msra.mxu0 0
    %1275 = vmatprep.subr.bf16.mxu0 0
    %1276 = vmatpush1.bf16.msra.mxu0 0
    %1277 = vmatprep.subr.bf16.mxu0 0
    %1278 = vmatpush1.bf16.msra.mxu0 0
    %1279 = vmatprep.subr.bf16.mxu0 0
    %1280 = vmatpush1.bf16.msra.mxu0 0
    %1281 = vmatprep.subr.bf16.mxu0 0
    %1282 = vmatpush1.bf16.msra.mxu0 0
    %1283 = vmatprep.subr.bf16.mxu0 0
    %1284 = vmatpush1.bf16.msra.mxu0 0
    %1285 = vmatprep.mubr.bf16.mxu0 0
    %1286 = vmatmul.mubr.bf16.gmra.mrb[0].mxu0 %v894
    %v1287 = vpop.f32.mrb[0].mxu0
    %v1288 = vadd.f32 0.0, %v1287
    %v1289 = vpop.f32.mrb[0].mxu0
    %v1290 = vadd.f32 0.0, %v1289
    %v1291 = vpop.f32.mrb[0].mxu0
    %v1292 = vadd.f32 0.0, %v1291
    %v1293 = vpop.f32.mrb[0].mxu0
    %v1294 = vadd.f32 0.0, %v1293
    %1295 = vmatprep.mubr.bf16.mxu0 0
    %1296 = vmatmul.mubr.bf16.gmra.mrb[0].mxu0 %v897
    %v1297 = vpop.f32.mrb[0].mxu0
    %v1298 = vadd.f32 0.0, %v1297
    %v1299 = vpop.f32.mrb[0].mxu0
    %v1300 = vadd.f32 0.0, %v1299
    %v1301 = vpop.f32.mrb[0].mxu0
    %v1302 = vadd.f32 0.0, %v1301
    %v1303 = vpop.f32.mrb[0].mxu0
    %v1304 = vadd.f32 0.0, %v1303
    %1305 = vmatprep.mubr.bf16.mxu0 0
    %1306 = vmatmul.mubr.bf16.gmra.mrb[0].mxu0 %v900
    %v1307 = vpop.f32.mrb[0].mxu0
    %v1308 = vadd.f32 0.0, %v1307
    %v1309 = vpop.f32.mrb[0].mxu0
    %v1310 = vadd.f32 0.0, %v1309
    %v1311 = vpop.f32.mrb[0].mxu0
    %v1312 = vadd.f32 0.0, %v1311
    %v1313 = vpop.f32.mrb[0].mxu0
    %v1314 = vadd.f32 0.0, %v1313
    %1315 = vmatprep.mubr.bf16.mxu0 0
    %1316 = vmatmul.mubr.bf16.gmra.mrb[0].mxu0 %v903
    %v1317 = vpop.f32.mrb[0].mxu0
    %v1318 = vpop.f32.mrb[0].mxu0
    %v1319 = vpop.f32.mrb[0].mxu0
    %v1320 = vpop.f32.mrb[0].mxu0
    %1321 = vdwg.mxu0
    %1322 = vmatprep.subr.bf16.mxu0 %v247
    %1323 = vmatpush1.bf16.msra.mxu0 %v246
    %1324 = vmatprep.subr.bf16.mxu0 %v290
    %1325 = vmatpush1.bf16.msra.mxu0 %v287
    %1326 = vmatprep.subr.bf16.mxu0 0
    %1327 = vmatpush1.bf16.msra.mxu0 0
    %1328 = vmatprep.subr.bf16.mxu0 0
    %1329 = vmatpush1.bf16.msra.mxu0 0
    %1330 = vmatprep.subr.bf16.mxu0 0
    %1331 = vmatpush1.bf16.msra.mxu0 0
    %1332 = vmatprep.subr.bf16.mxu0 0
    %1333 = vmatpush1.bf16.msra.mxu0 0
    %1334 = vmatprep.subr.bf16.mxu0 0
    %1335 = vmatpush1.bf16.msra.mxu0 0
    %1336 = vmatprep.subr.bf16.mxu0 0
    %1337 = vmatpush1.bf16.msra.mxu0 0
    %1338 = vmatprep.subr.bf16.mxu0 0
    %1339 = vmatpush1.bf16.msra.mxu0 0
    %1340 = vmatprep.subr.bf16.mxu0 0
    %1341 = vmatpush1.bf16.msra.mxu0 0
    %1342 = vmatprep.subr.bf16.mxu0 0
    %1343 = vmatpush1.bf16.msra.mxu0 0
    %1344 = vmatprep.subr.bf16.mxu0 0
    %1345 = vmatpush1.bf16.msra.mxu0 0
    %1346 = vmatprep.subr.bf16.mxu0 0
    %1347 = vmatpush1.bf16.msra.mxu0 0
    %1348 = vmatprep.subr.bf16.mxu0 0
    %1349 = vmatpush1.bf16.msra.mxu0 0
    %1350 = vmatprep.subr.bf16.mxu0 0
    %1351 = vmatpush1.bf16.msra.mxu0 0
    %1352 = vmatprep.subr.bf16.mxu0 0
    %1353 = vmatpush1.bf16.msra.mxu0 0
    %1354 = vmatprep.mubr.bf16.mxu0 0
    %1355 = vmatmul.mubr.bf16.gmra.mrb[0].mxu0 %v894
    %v1356 = vpop.f32.mrb[0].mxu0
    %v1357 = vadd.f32 0.0, %v1356
    %v1358 = vpop.f32.mrb[0].mxu0
    %v1359 = vadd.f32 0.0, %v1358
    %v1360 = vpop.f32.mrb[0].mxu0
    %v1361 = vadd.f32 0.0, %v1360
    %v1362 = vpop.f32.mrb[0].mxu0
    %v1363 = vadd.f32 0.0, %v1362
    %1364 = vmatprep.mubr.bf16.mxu0 0
    %1365 = vmatmul.mubr.bf16.gmra.mrb[0].mxu0 %v897
    %v1366 = vpop.f32.mrb[0].mxu0
    %v1367 = vadd.f32 0.0, %v1366
    %v1368 = vpop.f32.mrb[0].mxu0
    %v1369 = vadd.f32 0.0, %v1368
    %v1370 = vpop.f32.mrb[0].mxu0
    %v1371 = vadd.f32 0.0, %v1370
    %v1372 = vpop.f32.mrb[0].mxu0
    %v1373 = vadd.f32 0.0, %v1372
    %1374 = vmatprep.mubr.bf16.mxu0 0
    %1375 = vmatmul.mubr.bf16.gmra.mrb[0].mxu0 %v900
    %v1376 = vpop.f32.mrb[0].mxu0
    %v1377 = vadd.f32 0.0, %v1376
    %v1378 = vpop.f32.mrb[0].mxu0
    %v1379 = vadd.f32 0.0, %v1378
    %v1380 = vpop.f32.mrb[0].mxu0
    %v1381 = vadd.f32 0.0, %v1380
    %v1382 = vpop.f32.mrb[0].mxu0
    %v1383 = vadd.f32 0.0, %v1382
    %1384 = vmatprep.mubr.bf16.mxu0 0
    %1385 = vmatmul.mubr.bf16.gmra.mrb[0].mxu0 %v903
    %v1386 = vpop.f32.mrb[0].mxu0
    %v1387 = vpop.f32.mrb[0].mxu0
    %v1388 = vpop.f32.mrb[0].mxu0
    %v1389 = vpop.f32.mrb[0].mxu0
    %1390 = vdwg.mxu0
    %1391 = vmatprep.subr.bf16.mxu0 %v554
    %1392 = vmatpush1.bf16.msra.mxu0 %v553
    %1393 = vmatprep.subr.bf16.mxu0 %v587
    %1394 = vmatpush1.bf16.msra.mxu0 %v584
    %1395 = vmatprep.subr.bf16.mxu0 0
    %1396 = vmatpush1.bf16.msra.mxu0 0
    %1397 = vmatprep.subr.bf16.mxu0 0
    %1398 = vmatpush1.bf16.msra.mxu0 0
    %1399 = vmatprep.subr.bf16.mxu0 0
    %1400 = vmatpush1.bf16.msra.mxu0 0
    %1401 = vmatprep.subr.bf16.mxu0 0
    %1402 = vmatpush1.bf16.msra.mxu0 0
    %1403 = vmatprep.subr.bf16.mxu0 0
    %1404 = vmatpush1.bf16.msra.mxu0 0
    %1405 = vmatprep.subr.bf16.mxu0 0
    %1406 = vmatpush1.bf16.msra.mxu0 0
    %1407 = vmatprep.subr.bf16.mxu0 0
    %1408 = vmatpush1.bf16.msra.mxu0 0
    %1409 = vmatprep.subr.bf16.mxu0 0
    %1410 = vmatpush1.bf16.msra.mxu0 0
    %1411 = vmatprep.subr.bf16.mxu0 0
    %1412 = vmatpush1.bf16.msra.mxu0 0
    %1413 = vmatprep.subr.bf16.mxu0 0
    %1414 = vmatpush1.bf16.msra.mxu0 0
    %1415 = vmatprep.subr.bf16.mxu0 0
    %1416 = vmatpush1.bf16.msra.mxu0 0
    %1417 = vmatprep.subr.bf16.mxu0 0
    %1418 = vmatpush1.bf16.msra.mxu0 0
    %1419 = vmatprep.subr.bf16.mxu0 0
    %1420 = vmatpush1.bf16.msra.mxu0 0
    %1421 = vmatprep.subr.bf16.mxu0 0
    %1422 = vmatpush1.bf16.msra.mxu0 0
    %1423 = vmatprep.mubr.bf16.mxu0 0
    %1424 = vmatmul.mubr.bf16.gmra.mrb[0].mxu0 %v262
    %v1425 = vpop.f32.mrb[0].mxu0
    %v1426 = vadd.f32 %v1219, %v1425
    %v1427 = vpop.f32.mrb[0].mxu0
    %v1428 = vadd.f32 %v1221, %v1427
    %v1429 = vpop.f32.mrb[0].mxu0
    %v1430 = vadd.f32 %v1223, %v1429
    %v1431 = vpop.f32.mrb[0].mxu0
    %v1432 = vadd.f32 %v1225, %v1431
    %1433 = vmatprep.mubr.bf16.mxu0 0
    %1434 = vmatmul.mubr.bf16.gmra.mrb[0].mxu0 %v265
    %v1435 = vpop.f32.mrb[0].mxu0
    %v1436 = vadd.f32 %v1229, %v1435
    %v1437 = vpop.f32.mrb[0].mxu0
    %v1438 = vadd.f32 %v1231, %v1437
    %v1439 = vpop.f32.mrb[0].mxu0
    %v1440 = vadd.f32 %v1233, %v1439
    %v1441 = vpop.f32.mrb[0].mxu0
    %v1442 = vadd.f32 %v1235, %v1441
    %1443 = vmatprep.mubr.bf16.mxu0 0
    %1444 = vmatmul.mubr.bf16.gmra.mrb[0].mxu0 %v268
    %v1445 = vpop.f32.mrb[0].mxu0
    %v1446 = vadd.f32 %v1239, %v1445
    %v1447 = vpop.f32.mrb[0].mxu0
    %v1448 = vadd.f32 %v1241, %v1447
    %v1449 = vpop.f32.mrb[0].mxu0
    %v1450 = vadd.f32 %v1243, %v1449
    %v1451 = vpop.f32.mrb[0].mxu0
    %v1452 = vadd.f32 %v1245, %v1451
    %1453 = vmatprep.mubr.bf16.mxu0 0
    %1454 = vmatmul.mubr.bf16.gmra.mrb[0].mxu0 %v271
    %v1455 = vpop.f32.mrb[0].mxu0
    %v1456 = vpop.f32.mrb[0].mxu0
    %v1457 = vpop.f32.mrb[0].mxu0
    %v1458 = vpop.f32.mrb[0].mxu0
    %1459 = vdwg.mxu0
    %1460 = vmatprep.subr.bf16.mxu0 %v556
    %1461 = vmatpush1.bf16.msra.mxu0 %v555
    %1462 = vmatprep.subr.bf16.mxu0 %v593
    %1463 = vmatpush1.bf16.msra.mxu0 %v590
    %1464 = vmatprep.subr.bf16.mxu0 0
    %1465 = vmatpush1.bf16.msra.mxu0 0
    %1466 = vmatprep.subr.bf16.mxu0 0
    %1467 = vmatpush1.bf16.msra.mxu0 0
    %1468 = vmatprep.subr.bf16.mxu0 0
    %1469 = vmatpush1.bf16.msra.mxu0 0
    %1470 = vmatprep.subr.bf16.mxu0 0
    %1471 = vmatpush1.bf16.msra.mxu0 0
    %1472 = vmatprep.subr.bf16.mxu0 0
    %1473 = vmatpush1.bf16.msra.mxu0 0
    %1474 = vmatprep.subr.bf16.mxu0 0
    %1475 = vmatpush1.bf16.msra.mxu0 0
    %1476 = vmatprep.subr.bf16.mxu0 0
    %1477 = vmatpush1.bf16.msra.mxu0 0
    %1478 = vmatprep.subr.bf16.mxu0 0
    %1479 = vmatpush1.bf16.msra.mxu0 0
    %1480 = vmatprep.subr.bf16.mxu0 0
    %1481 = vmatpush1.bf16.msra.mxu0 0
    %1482 = vmatprep.subr.bf16.mxu0 0
    %1483 = vmatpush1.bf16.msra.mxu0 0
    %1484 = vmatprep.subr.bf16.mxu0 0
    %1485 = vmatpush1.bf16.msra.mxu0 0
    %1486 = vmatprep.subr.bf16.mxu0 0
    %1487 = vmatpush1.bf16.msra.mxu0 0
    %1488 = vmatprep.subr.bf16.mxu0 0
    %1489 = vmatpush1.bf16.msra.mxu0 0
    %1490 = vmatprep.subr.bf16.mxu0 0
    %1491 = vmatpush1.bf16.msra.mxu0 0
    %1492 = vmatprep.mubr.bf16.mxu0 0
    %1493 = vmatmul.mubr.bf16.gmra.mrb[0].mxu0 %v262
    %v1494 = vpop.f32.mrb[0].mxu0
    %v1495 = vadd.f32 %v1288, %v1494
    %v1496 = vpop.f32.mrb[0].mxu0
    %v1497 = vadd.f32 %v1290, %v1496
    %v1498 = vpop.f32.mrb[0].mxu0
    %v1499 = vadd.f32 %v1292, %v1498
    %v1500 = vpop.f32.mrb[0].mxu0
    %v1501 = vadd.f32 %v1294, %v1500
    %1502 = vmatprep.mubr.bf16.mxu0 0
    %1503 = vmatmul.mubr.bf16.gmra.mrb[0].mxu0 %v265
    %v1504 = vpop.f32.mrb[0].mxu0
    %v1505 = vadd.f32 %v1298, %v1504
    %v1506 = vpop.f32.mrb[0].mxu0
    %v1507 = vadd.f32 %v1300, %v1506
    %v1508 = vpop.f32.mrb[0].mxu0
    %v1509 = vadd.f32 %v1302, %v1508
    %v1510 = vpop.f32.mrb[0].mxu0
    %v1511 = vadd.f32 %v1304, %v1510
    %1512 = vmatprep.mubr.bf16.mxu0 0
    %1513 = vmatmul.mubr.bf16.gmra.mrb[0].mxu0 %v268
    %v1514 = vpop.f32.mrb[0].mxu0
    %v1515 = vadd.f32 %v1308, %v1514
    %v1516 = vpop.f32.mrb[0].mxu0
    %v1517 = vadd.f32 %v1310, %v1516
    %v1518 = vpop.f32.mrb[0].mxu0
    %v1519 = vadd.f32 %v1312, %v1518
    %v1520 = vpop.f32.mrb[0].mxu0
    %v1521 = vadd.f32 %v1314, %v1520
    %1522 = vmatprep.mubr.bf16.mxu0 0
    %1523 = vmatmul.mubr.bf16.gmra.mrb[0].mxu0 %v271
    %v1524 = vpop.f32.mrb[0].mxu0
    %v1525 = vpop.f32.mrb[0].mxu0
    %v1526 = vpop.f32.mrb[0].mxu0
    %v1527 = vpop.f32.mrb[0].mxu0
    %1528 = vdwg.mxu0
    %1529 = vmatprep.subr.bf16.mxu0 %v558
    %1530 = vmatpush1.bf16.msra.mxu0 %v557
    %1531 = vmatprep.subr.bf16.mxu0 %v599
    %1532 = vmatpush1.bf16.msra.mxu0 %v596
    %1533 = vmatprep.subr.bf16.mxu0 0
    %1534 = vmatpush1.bf16.msra.mxu0 0
    %1535 = vmatprep.subr.bf16.mxu0 0
    %1536 = vmatpush1.bf16.msra.mxu0 0
    %1537 = vmatprep.subr.bf16.mxu0 0
    %1538 = vmatpush1.bf16.msra.mxu0 0
    %1539 = vmatprep.subr.bf16.mxu0 0
    %1540 = vmatpush1.bf16.msra.mxu0 0
    %1541 = vmatprep.subr.bf16.mxu0 0
    %1542 = vmatpush1.bf16.msra.mxu0 0
    %1543 = vmatprep.subr.bf16.mxu0 0
    %1544 = vmatpush1.bf16.msra.mxu0 0
    %1545 = vmatprep.subr.bf16.mxu0 0
    %1546 = vmatpush1.bf16.msra.mxu0 0
    %1547 = vmatprep.subr.bf16.mxu0 0
    %1548 = vmatpush1.bf16.msra.mxu0 0
    %1549 = vmatprep.subr.bf16.mxu0 0
    %1550 = vmatpush1.bf16.msra.mxu0 0
    %1551 = vmatprep.subr.bf16.mxu0 0
    %1552 = vmatpush1.bf16.msra.mxu0 0
    %1553 = vmatprep.subr.bf16.mxu0 0
    %1554 = vmatpush1.bf16.msra.mxu0 0
    %1555 = vmatprep.subr.bf16.mxu0 0
    %1556 = vmatpush1.bf16.msra.mxu0 0
    %1557 = vmatprep.subr.bf16.mxu0 0
    %1558 = vmatpush1.bf16.msra.mxu0 0
    %1559 = vmatprep.subr.bf16.mxu0 0
    %1560 = vmatpush1.bf16.msra.mxu0 0
    %1561 = vmatprep.mubr.bf16.mxu0 0
    %1562 = vmatmul.mubr.bf16.gmra.mrb[0].mxu0 %v262
    %v1563 = vpop.f32.mrb[0].mxu0
    %v1564 = vadd.f32 %v1357, %v1563
    %v1565 = vpop.f32.mrb[0].mxu0
    %v1566 = vadd.f32 %v1359, %v1565
    %v1567 = vpop.f32.mrb[0].mxu0
    %v1568 = vadd.f32 %v1361, %v1567
    %v1569 = vpop.f32.mrb[0].mxu0
    %v1570 = vadd.f32 %v1363, %v1569
    %1571 = vmatprep.mubr.bf16.mxu0 0
    %1572 = vmatmul.mubr.bf16.gmra.mrb[0].mxu0 %v265
    %v1573 = vpop.f32.mrb[0].mxu0
    %v1574 = vadd.f32 %v1367, %v1573
    %v1575 = vpop.f32.mrb[0].mxu0
    %v1576 = vadd.f32 %v1369, %v1575
    %v1577 = vpop.f32.mrb[0].mxu0
    %v1578 = vadd.f32 %v1371, %v1577
    %v1579 = vpop.f32.mrb[0].mxu0
    %v1580 = vadd.f32 %v1373, %v1579
    %1581 = vmatprep.mubr.bf16.mxu0 0
    %1582 = vmatmul.mubr.bf16.gmra.mrb[0].mxu0 %v268
    %v1583 = vpop.f32.mrb[0].mxu0
    %v1584 = vadd.f32 %v1377, %v1583
    %v1585 = vpop.f32.mrb[0].mxu0
    %v1586 = vadd.f32 %v1379, %v1585
    %v1587 = vpop.f32.mrb[0].mxu0
    %v1588 = vadd.f32 %v1381, %v1587
    %v1589 = vpop.f32.mrb[0].mxu0
    %v1590 = vadd.f32 %v1383, %v1589
    %1591 = vmatprep.mubr.bf16.mxu0 0
    %1592 = vmatmul.mubr.bf16.gmra.mrb[0].mxu0 %v271
    %v1593 = vpop.f32.mrb[0].mxu0
    %v1594 = vpop.f32.mrb[0].mxu0
    %v1595 = vpop.f32.mrb[0].mxu0
    %v1596 = vpop.f32.mrb[0].mxu0
    %1597 = vdwg.mxu0
    %v1605 = vunpack.c.l.b16 %v155
    %v1606 = vunpack.c.l.b16 %v156
    %v1607 = vunpack.c.l.b16 %v157
    %v1608 = vunpack.c.l.b16 %v158
    %v1609 = vunpack.c.l.b16 %v159
    %v1610 = vunpack.c.l.b16 %v160
    %v1611 = vunpack.c.l.b16 %v161
    %v1612 = vpack.c.b16 %v1606, %v1605
    %v1613 = vpack.c.b16 %v1608, %v1607
    %v1614 = vpack.c.b16 %v1610, %v1609
    %v1615 = vpack.c.b16 %v1611, %v1611
    %v1617 = vsel %vm260, %v1612, 0
    %v1620 = vsel %vm260, %v1613, 0
    %v1623 = vsel %vm260, %v1614, 0
    %v1626 = vsel %vm260, %v1615, 0
    %1628 = vmatprep.subr.bf16.mxu0 %v876
    %1629 = vmatpush1.bf16.msra.mxu0 %v875
    %1630 = vmatprep.subr.bf16.mxu0 %v909
    %1631 = vmatpush1.bf16.msra.mxu0 %v906
    %1632 = vmatprep.subr.bf16.mxu0 0
    %1633 = vmatpush1.bf16.msra.mxu0 0
    %1634 = vmatprep.subr.bf16.mxu0 0
    %1635 = vmatpush1.bf16.msra.mxu0 0
    %1636 = vmatprep.subr.bf16.mxu0 0
    %1637 = vmatpush1.bf16.msra.mxu0 0
    %1638 = vmatprep.subr.bf16.mxu0 0
    %1639 = vmatpush1.bf16.msra.mxu0 0
    %1640 = vmatprep.subr.bf16.mxu0 0
    %1641 = vmatpush1.bf16.msra.mxu0 0
    %1642 = vmatprep.subr.bf16.mxu0 0
    %1643 = vmatpush1.bf16.msra.mxu0 0
    %1644 = vmatprep.subr.bf16.mxu0 0
    %1645 = vmatpush1.bf16.msra.mxu0 0
    %1646 = vmatprep.subr.bf16.mxu0 0
    %1647 = vmatpush1.bf16.msra.mxu0 0
    %1648 = vmatprep.subr.bf16.mxu0 0
    %1649 = vmatpush1.bf16.msra.mxu0 0
    %1650 = vmatprep.subr.bf16.mxu0 0
    %1651 = vmatpush1.bf16.msra.mxu0 0
    %1652 = vmatprep.subr.bf16.mxu0 0
    %1653 = vmatpush1.bf16.msra.mxu0 0
    %1654 = vmatprep.subr.bf16.mxu0 0
    %1655 = vmatpush1.bf16.msra.mxu0 0
    %1656 = vmatprep.subr.bf16.mxu0 0
    %1657 = vmatpush1.bf16.msra.mxu0 0
    %1658 = vmatprep.subr.bf16.mxu0 0
    %1659 = vmatpush1.bf16.msra.mxu0 0
    %1660 = vmatprep.mubr.bf16.mxu0 0
    %1661 = vmatmul.mubr.bf16.gmra.mrb[0].mxu0 %v1617
    %v1662 = vpop.f32.mrb[0].mxu0
    %v1663 = vadd.f32 0.0, %v1662
    %v1664 = vpop.f32.mrb[0].mxu0
    %v1665 = vadd.f32 0.0, %v1664
    %v1666 = vpop.f32.mrb[0].mxu0
    %v1667 = vadd.f32 0.0, %v1666
    %v1668 = vpop.f32.mrb[0].mxu0
    %v1669 = vadd.f32 0.0, %v1668
    %1670 = vmatprep.mubr.bf16.mxu0 0
    %1671 = vmatmul.mubr.bf16.gmra.mrb[0].mxu0 %v1620
    %v1672 = vpop.f32.mrb[0].mxu0
    %v1673 = vadd.f32 0.0, %v1672
    %v1674 = vpop.f32.mrb[0].mxu0
    %v1675 = vadd.f32 0.0, %v1674
    %v1676 = vpop.f32.mrb[0].mxu0
    %v1677 = vadd.f32 0.0, %v1676
    %v1678 = vpop.f32.mrb[0].mxu0
    %v1679 = vadd.f32 0.0, %v1678
    %1680 = vmatprep.mubr.bf16.mxu0 0
    %1681 = vmatmul.mubr.bf16.gmra.mrb[0].mxu0 %v1623
    %v1682 = vpop.f32.mrb[0].mxu0
    %v1683 = vadd.f32 0.0, %v1682
    %v1684 = vpop.f32.mrb[0].mxu0
    %v1685 = vadd.f32 0.0, %v1684
    %v1686 = vpop.f32.mrb[0].mxu0
    %v1687 = vadd.f32 0.0, %v1686
    %v1688 = vpop.f32.mrb[0].mxu0
    %v1689 = vadd.f32 0.0, %v1688
    %1690 = vmatprep.mubr.bf16.mxu0 0
    %1691 = vmatmul.mubr.bf16.gmra.mrb[0].mxu0 %v1626
    %v1692 = vpop.f32.mrb[0].mxu0
    %v1693 = vpop.f32.mrb[0].mxu0
    %v1694 = vpop.f32.mrb[0].mxu0
    %v1695 = vpop.f32.mrb[0].mxu0
    %1696 = vdwg.mxu0
    %1697 = vmatprep.subr.bf16.mxu0 %v878
    %1698 = vmatpush1.bf16.msra.mxu0 %v877
    %1699 = vmatprep.subr.bf16.mxu0 %v915
    %1700 = vmatpush1.bf16.msra.mxu0 %v912
    %1701 = vmatprep.subr.bf16.mxu0 0
    %1702 = vmatpush1.bf16.msra.mxu0 0
    %1703 = vmatprep.subr.bf16.mxu0 0
    %1704 = vmatpush1.bf16.msra.mxu0 0
    %1705 = vmatprep.subr.bf16.mxu0 0
    %1706 = vmatpush1.bf16.msra.mxu0 0
    %1707 = vmatprep.subr.bf16.mxu0 0
    %1708 = vmatpush1.bf16.msra.mxu0 0
    %1709 = vmatprep.subr.bf16.mxu0 0
    %1710 = vmatpush1.bf16.msra.mxu0 0
    %1711 = vmatprep.subr.bf16.mxu0 0
    %1712 = vmatpush1.bf16.msra.mxu0 0
    %1713 = vmatprep.subr.bf16.mxu0 0
    %1714 = vmatpush1.bf16.msra.mxu0 0
    %1715 = vmatprep.subr.bf16.mxu0 0
    %1716 = vmatpush1.bf16.msra.mxu0 0
    %1717 = vmatprep.subr.bf16.mxu0 0
    %1718 = vmatpush1.bf16.msra.mxu0 0
    %1719 = vmatprep.subr.bf16.mxu0 0
    %1720 = vmatpush1.bf16.msra.mxu0 0
    %1721 = vmatprep.subr.bf16.mxu0 0
    %1722 = vmatpush1.bf16.msra.mxu0 0
    %1723 = vmatprep.subr.bf16.mxu0 0
    %1724 = vmatpush1.bf16.msra.mxu0 0
    %1725 = vmatprep.subr.bf16.mxu0 0
    %1726 = vmatpush1.bf16.msra.mxu0 0
    %1727 = vmatprep.subr.bf16.mxu0 0
    %1728 = vmatpush1.bf16.msra.mxu0 0
    %1729 = vmatprep.mubr.bf16.mxu0 0
    %1730 = vmatmul.mubr.bf16.gmra.mrb[0].mxu0 %v1617
    %v1731 = vpop.f32.mrb[0].mxu0
    %v1732 = vadd.f32 0.0, %v1731
    %v1733 = vpop.f32.mrb[0].mxu0
    %v1734 = vadd.f32 0.0, %v1733
    %v1735 = vpop.f32.mrb[0].mxu0
    %v1736 = vadd.f32 0.0, %v1735
    %v1737 = vpop.f32.mrb[0].mxu0
    %v1738 = vadd.f32 0.0, %v1737
    %1739 = vmatprep.mubr.bf16.mxu0 0
    %1740 = vmatmul.mubr.bf16.gmra.mrb[0].mxu0 %v1620
    %v1741 = vpop.f32.mrb[0].mxu0
    %v1742 = vadd.f32 0.0, %v1741
    %v1743 = vpop.f32.mrb[0].mxu0
    %v1744 = vadd.f32 0.0, %v1743
    %v1745 = vpop.f32.mrb[0].mxu0
    %v1746 = vadd.f32 0.0, %v1745
    %v1747 = vpop.f32.mrb[0].mxu0
    %v1748 = vadd.f32 0.0, %v1747
    %1749 = vmatprep.mubr.bf16.mxu0 0
    %1750 = vmatmul.mubr.bf16.gmra.mrb[0].mxu0 %v1623
    %v1751 = vpop.f32.mrb[0].mxu0
    %v1752 = vadd.f32 0.0, %v1751
    %v1753 = vpop.f32.mrb[0].mxu0
    %v1754 = vadd.f32 0.0, %v1753
    %v1755 = vpop.f32.mrb[0].mxu0
    %v1756 = vadd.f32 0.0, %v1755
    %v1757 = vpop.f32.mrb[0].mxu0
    %v1758 = vadd.f32 0.0, %v1757
    %1759 = vmatprep.mubr.bf16.mxu0 0
    %1760 = vmatmul.mubr.bf16.gmra.mrb[0].mxu0 %v1626
    %v1761 = vpop.f32.mrb[0].mxu0
    %v1762 = vpop.f32.mrb[0].mxu0
    %v1763 = vpop.f32.mrb[0].mxu0
    %v1764 = vpop.f32.mrb[0].mxu0
    %1765 = vdwg.mxu0
    %1766 = vmatprep.subr.bf16.mxu0 %v880
    %1767 = vmatpush1.bf16.msra.mxu0 %v879
    %1768 = vmatprep.subr.bf16.mxu0 %v921
    %1769 = vmatpush1.bf16.msra.mxu0 %v918
    %1770 = vmatprep.subr.bf16.mxu0 0
    %1771 = vmatpush1.bf16.msra.mxu0 0
    %1772 = vmatprep.subr.bf16.mxu0 0
    %1773 = vmatpush1.bf16.msra.mxu0 0
    %1774 = vmatprep.subr.bf16.mxu0 0
    %1775 = vmatpush1.bf16.msra.mxu0 0
    %1776 = vmatprep.subr.bf16.mxu0 0
    %1777 = vmatpush1.bf16.msra.mxu0 0
    %1778 = vmatprep.subr.bf16.mxu0 0
    %1779 = vmatpush1.bf16.msra.mxu0 0
    %1780 = vmatprep.subr.bf16.mxu0 0
    %1781 = vmatpush1.bf16.msra.mxu0 0
    %1782 = vmatprep.subr.bf16.mxu0 0
    %1783 = vmatpush1.bf16.msra.mxu0 0
    %1784 = vmatprep.subr.bf16.mxu0 0
    %1785 = vmatpush1.bf16.msra.mxu0 0
    %1786 = vmatprep.subr.bf16.mxu0 0
    %1787 = vmatpush1.bf16.msra.mxu0 0
    %1788 = vmatprep.subr.bf16.mxu0 0
    %1789 = vmatpush1.bf16.msra.mxu0 0
    %1790 = vmatprep.subr.bf16.mxu0 0
    %1791 = vmatpush1.bf16.msra.mxu0 0
    %1792 = vmatprep.subr.bf16.mxu0 0
    %1793 = vmatpush1.bf16.msra.mxu0 0
    %1794 = vmatprep.subr.bf16.mxu0 0
    %1795 = vmatpush1.bf16.msra.mxu0 0
    %1796 = vmatprep.subr.bf16.mxu0 0
    %1797 = vmatpush1.bf16.msra.mxu0 0
    %1798 = vmatprep.mubr.bf16.mxu0 0
    %1799 = vmatmul.mubr.bf16.gmra.mrb[0].mxu0 %v1617
    %v1800 = vpop.f32.mrb[0].mxu0
    %v1801 = vadd.f32 0.0, %v1800
    %v1802 = vpop.f32.mrb[0].mxu0
    %v1803 = vadd.f32 0.0, %v1802
    %v1804 = vpop.f32.mrb[0].mxu0
    %v1805 = vadd.f32 0.0, %v1804
    %v1806 = vpop.f32.mrb[0].mxu0
    %v1807 = vadd.f32 0.0, %v1806
    %1808 = vmatprep.mubr.bf16.mxu0 0
    %1809 = vmatmul.mubr.bf16.gmra.mrb[0].mxu0 %v1620
    %v1810 = vpop.f32.mrb[0].mxu0
    %v1811 = vadd.f32 0.0, %v1810
    %v1812 = vpop.f32.mrb[0].mxu0
    %v1813 = vadd.f32 0.0, %v1812
    %v1814 = vpop.f32.mrb[0].mxu0
    %v1815 = vadd.f32 0.0, %v1814
    %v1816 = vpop.f32.mrb[0].mxu0
    %v1817 = vadd.f32 0.0, %v1816
    %1818 = vmatprep.mubr.bf16.mxu0 0
    %1819 = vmatmul.mubr.bf16.gmra.mrb[0].mxu0 %v1623
    %v1820 = vpop.f32.mrb[0].mxu0
    %v1821 = vadd.f32 0.0, %v1820
    %v1822 = vpop.f32.mrb[0].mxu0
    %v1823 = vadd.f32 0.0, %v1822
    %v1824 = vpop.f32.mrb[0].mxu0
    %v1825 = vadd.f32 0.0, %v1824
    %v1826 = vpop.f32.mrb[0].mxu0
    %v1827 = vadd.f32 0.0, %v1826
    %1828 = vmatprep.mubr.bf16.mxu0 0
    %1829 = vmatmul.mubr.bf16.gmra.mrb[0].mxu0 %v1626
    %v1830 = vpop.f32.mrb[0].mxu0
    %v1831 = vpop.f32.mrb[0].mxu0
    %v1832 = vpop.f32.mrb[0].mxu0
    %v1833 = vpop.f32.mrb[0].mxu0
    %1834 = vdwg.mxu0
    %v1835 = vadd.f32 %v1426, %v1663
    %v1836 = vadd.f32 %v1428, %v1665
    %v1837 = vadd.f32 %v1495, %v1732
    %v1838 = vadd.f32 %v1497, %v1734
    %v1839 = vadd.f32 %v1564, %v1801
    %v1840 = vadd.f32 %v1566, %v1803
    %v1841 = vadd.f32 %v1430, %v1667
    %v1842 = vadd.f32 %v1432, %v1669
    %v1843 = vadd.f32 %v1499, %v1736
    %v1844 = vadd.f32 %v1501, %v1738
    %v1845 = vadd.f32 %v1568, %v1805
    %v1846 = vadd.f32 %v1570, %v1807
    %v1847 = vadd.f32 %v1436, %v1673
    %v1848 = vadd.f32 %v1438, %v1675
    %v1849 = vadd.f32 %v1505, %v1742
    %v1850 = vadd.f32 %v1507, %v1744
    %v1851 = vadd.f32 %v1574, %v1811
    %v1852 = vadd.f32 %v1576, %v1813
    %v1853 = vadd.f32 %v1440, %v1677
    %v1854 = vadd.f32 %v1442, %v1679
    %v1855 = vadd.f32 %v1509, %v1746
    %v1856 = vadd.f32 %v1511, %v1748
    %v1857 = vadd.f32 %v1578, %v1815
    %v1858 = vadd.f32 %v1580, %v1817
    %v1859 = vadd.f32 %v1446, %v1683
    %v1860 = vadd.f32 %v1448, %v1685
    %v1861 = vadd.f32 %v1515, %v1752
    %v1862 = vadd.f32 %v1517, %v1754
    %v1863 = vadd.f32 %v1584, %v1821
    %v1864 = vadd.f32 %v1586, %v1823
    %v1865 = vadd.f32 %v1450, %v1687
    %v1866 = vadd.f32 %v1452, %v1689
    %v1867 = vadd.f32 %v1519, %v1756
    %v1868 = vadd.f32 %v1521, %v1758
    %v1869 = vadd.f32 %v1588, %v1825
    %v1870 = vadd.f32 %v1590, %v1827
    %v1871 = vmax.f32 %v1835, %v1838
    %v1872 = vmax.f32 %v1836, %v1839
    %v1873 = vmax.f32 %v1837, %v1840
    %v1874 = vmax.f32 %v1841, %v1844
    %v1875 = vmax.f32 %v1842, %v1845
    %v1876 = vmax.f32 %v1843, %v1846
    %v1877 = vmax.f32 %v1847, %v1850
    %v1878 = vmax.f32 %v1848, %v1851
    %v1879 = vmax.f32 %v1849, %v1852
    %v1880 = vmax.f32 %v1853, %v1856
    %v1881 = vmax.f32 %v1854, %v1857
    %v1882 = vmax.f32 %v1855, %v1858
    %v1883 = vmax.f32 %v1859, %v1862
    %v1884 = vmax.f32 %v1860, %v1863
    %v1885 = vmax.f32 %v1861, %v1864
    %v1886 = vmax.f32 %v1865, %v1868
    %v1887 = vmax.f32 %v1866, %v1869
    %v1888 = vmax.f32 %v1867, %v1870
    %v1889 = vmax.f32 %v1166, %v1871
    %v1890 = vmax.f32 %v1167, %v1872
    %v1891 = vmax.f32 %v1168, %v1873
    %v1892 = vmax.f32 %v1169, %v1874
    %v1893 = vmax.f32 %v1170, %v1875
    %v1894 = vmax.f32 %v1171, %v1876
    %v1895 = vmax.f32 %v1172, %v1877
    %v1896 = vmax.f32 %v1173, %v1878
    %v1897 = vmax.f32 %v1174, %v1879
    %v1898 = vmax.f32 %v1175, %v1880
    %v1899 = vmax.f32 %v1176, %v1881
    %v1900 = vmax.f32 %v1177, %v1882
    %v1901 = vmax.f32 %v1178, %v1883
    %v1902 = vmax.f32 %v1179, %v1884
    %v1903 = vmax.f32 %v1180, %v1885
    %v1904 = vmax.f32 %v1181, %v1886
    %v1905 = vmax.f32 %v1182, %v1887
    %v1906 = vmax.f32 %v1183, %v1888
    %v1908 = vlaneseq
    %v1909 = vshrl.u32 %v1908, 7
    %v1910 = vsub.s32 0, %v1909
    %v1911 = vrot.slane %v162, %v1910
    %v1912 = vlaneseq
    %v1913 = vshrl.u32 %v1912, 7
    %v1914 = vsub.s32 1, %v1913
    %v1915 = vrot.slane %v162, %v1914
    %v1916 = vlaneseq
    %v1917 = vshrl.u32 %v1916, 7
    %v1918 = vsub.s32 2, %v1917
    %v1919 = vrot.slane %v162, %v1918
    %v1923 = vadd.f32 %v1889, %v1911
    %v1924 = vadd.f32 %v1890, %v1915
    %v1925 = vadd.f32 %v1891, %v1919
    %v1926 = vadd.f32 %v1892, %v1911
    %v1927 = vadd.f32 %v1893, %v1915
    %v1928 = vadd.f32 %v1894, %v1919
    %v1929 = vadd.f32 %v1895, %v1911
    %v1930 = vadd.f32 %v1896, %v1915
    %v1931 = vadd.f32 %v1897, %v1919
    %v1932 = vadd.f32 %v1898, %v1911
    %v1933 = vadd.f32 %v1899, %v1915
    %v1934 = vadd.f32 %v1900, %v1919
    %v1935 = vadd.f32 %v1901, %v1911
    %v1936 = vadd.f32 %v1902, %v1915
    %v1937 = vadd.f32 %v1903, %v1919
    %v1938 = vadd.f32 %v1904, %v1911
    %v1939 = vadd.f32 %v1905, %v1915
    %v1940 = vadd.f32 %v1906, %v1919
    %v1941 = vpack.c.bf16 %v1926, %v1923
    %v1942 = vpack.c.bf16 %v1927, %v1924
    %v1943 = vpack.c.bf16 %v1928, %v1925
    %v1944 = vpack.c.bf16 %v1932, %v1929
    %v1945 = vpack.c.bf16 %v1933, %v1930
    %v1946 = vpack.c.bf16 %v1934, %v1931
    %v1947 = vpack.c.bf16 %v1938, %v1935
    %v1948 = vpack.c.bf16 %v1939, %v1936
    %v1949 = vpack.c.bf16 %v1940, %v1937
    %1950 = vmatprep.subr.bf16.mxu0 %v243
    %1951 = vmatpush1.bf16.msra.mxu0 %v242
    %1952 = vmatprep.subr.bf16.mxu0 %v278
    %1953 = vmatpush1.bf16.msra.mxu0 %v275
    %1954 = vmatprep.subr.bf16.mxu0 0
    %1955 = vmatpush1.bf16.msra.mxu0 0
    %1956 = vmatprep.subr.bf16.mxu0 0
    %1957 = vmatpush1.bf16.msra.mxu0 0
    %1958 = vmatprep.subr.bf16.mxu0 0
    %1959 = vmatpush1.bf16.msra.mxu0 0
    %1960 = vmatprep.subr.bf16.mxu0 0
    %1961 = vmatpush1.bf16.msra.mxu0 0
    %1962 = vmatprep.subr.bf16.mxu0 0
    %1963 = vmatpush1.bf16.msra.mxu0 0
    %1964 = vmatprep.subr.bf16.mxu0 0
    %1965 = vmatpush1.bf16.msra.mxu0 0
    %1966 = vmatprep.subr.bf16.mxu0 0
    %1967 = vmatpush1.bf16.msra.mxu0 0
    %1968 = vmatprep.subr.bf16.mxu0 0
    %1969 = vmatpush1.bf16.msra.mxu0 0
    %1970 = vmatprep.subr.bf16.mxu0 0
    %1971 = vmatpush1.bf16.msra.mxu0 0
    %1972 = vmatprep.subr.bf16.mxu0 0
    %1973 = vmatpush1.bf16.msra.mxu0 0
    %1974 = vmatprep.subr.bf16.mxu0 0
    %1975 = vmatpush1.bf16.msra.mxu0 0
    %1976 = vmatprep.subr.bf16.mxu0 0
    %1977 = vmatpush1.bf16.msra.mxu0 0
    %1978 = vmatprep.subr.bf16.mxu0 0
    %1979 = vmatpush1.bf16.msra.mxu0 0
    %1980 = vmatprep.subr.bf16.mxu0 0
    %1981 = vmatpush1.bf16.msra.mxu0 0
    %1982 = vmatprep.mubr.bf16.mxu0 0
    %1983 = vmatmul.mubr.bf16.gmra.mrb[0].mxu0 %v1617
    %v1984 = vpop.f32.mrb[0].mxu0
    %v1985 = vadd.f32 0.0, %v1984
    %v1986 = vpop.f32.mrb[0].mxu0
    %v1987 = vadd.f32 0.0, %v1986
    %v1988 = vpop.f32.mrb[0].mxu0
    %v1989 = vadd.f32 0.0, %v1988
    %v1990 = vpop.f32.mrb[0].mxu0
    %v1991 = vadd.f32 0.0, %v1990
    %1992 = vmatprep.mubr.bf16.mxu0 0
    %1993 = vmatmul.mubr.bf16.gmra.mrb[0].mxu0 %v1620
    %v1994 = vpop.f32.mrb[0].mxu0
    %v1995 = vadd.f32 0.0, %v1994
    %v1996 = vpop.f32.mrb[0].mxu0
    %v1997 = vadd.f32 0.0, %v1996
    %v1998 = vpop.f32.mrb[0].mxu0
    %v1999 = vadd.f32 0.0, %v1998
    %v2000 = vpop.f32.mrb[0].mxu0
    %v2001 = vadd.f32 0.0, %v2000
    %2002 = vmatprep.mubr.bf16.mxu0 0
    %2003 = vmatmul.mubr.bf16.gmra.mrb[0].mxu0 %v1623
    %v2004 = vpop.f32.mrb[0].mxu0
    %v2005 = vadd.f32 0.0, %v2004
    %v2006 = vpop.f32.mrb[0].mxu0
    %v2007 = vadd.f32 0.0, %v2006
    %v2008 = vpop.f32.mrb[0].mxu0
    %v2009 = vadd.f32 0.0, %v2008
    %v2010 = vpop.f32.mrb[0].mxu0
    %v2011 = vadd.f32 0.0, %v2010
    %2012 = vdwg.mxu0
    %2013 = vmatprep.subr.bf16.mxu0 %v245
    %2014 = vmatpush1.bf16.msra.mxu0 %v244
    %2015 = vmatprep.subr.bf16.mxu0 %v284
    %2016 = vmatpush1.bf16.msra.mxu0 %v281
    %2017 = vmatprep.subr.bf16.mxu0 0
    %2018 = vmatpush1.bf16.msra.mxu0 0
    %2019 = vmatprep.subr.bf16.mxu0 0
    %2020 = vmatpush1.bf16.msra.mxu0 0
    %2021 = vmatprep.subr.bf16.mxu0 0
    %2022 = vmatpush1.bf16.msra.mxu0 0
    %2023 = vmatprep.subr.bf16.mxu0 0
    %2024 = vmatpush1.bf16.msra.mxu0 0
    %2025 = vmatprep.subr.bf16.mxu0 0
    %2026 = vmatpush1.bf16.msra.mxu0 0
    %2027 = vmatprep.subr.bf16.mxu0 0
    %2028 = vmatpush1.bf16.msra.mxu0 0
    %2029 = vmatprep.subr.bf16.mxu0 0
    %2030 = vmatpush1.bf16.msra.mxu0 0
    %2031 = vmatprep.subr.bf16.mxu0 0
    %2032 = vmatpush1.bf16.msra.mxu0 0
    %2033 = vmatprep.subr.bf16.mxu0 0
    %2034 = vmatpush1.bf16.msra.mxu0 0
    %2035 = vmatprep.subr.bf16.mxu0 0
    %2036 = vmatpush1.bf16.msra.mxu0 0
    %2037 = vmatprep.subr.bf16.mxu0 0
    %2038 = vmatpush1.bf16.msra.mxu0 0
    %2039 = vmatprep.subr.bf16.mxu0 0
    %2040 = vmatpush1.bf16.msra.mxu0 0
    %2041 = vmatprep.subr.bf16.mxu0 0
    %2042 = vmatpush1.bf16.msra.mxu0 0
    %2043 = vmatprep.subr.bf16.mxu0 0
    %2044 = vmatpush1.bf16.msra.mxu0 0
    %2045 = vmatprep.mubr.bf16.mxu0 0
    %2046 = vmatmul.mubr.bf16.gmra.mrb[0].mxu0 %v1617
    %v2047 = vpop.f32.mrb[0].mxu0
    %v2048 = vadd.f32 0.0, %v2047
    %v2049 = vpop.f32.mrb[0].mxu0
    %v2050 = vadd.f32 0.0, %v2049
    %v2051 = vpop.f32.mrb[0].mxu0
    %v2052 = vadd.f32 0.0, %v2051
    %v2053 = vpop.f32.mrb[0].mxu0
    %v2054 = vadd.f32 0.0, %v2053
    %2055 = vmatprep.mubr.bf16.mxu0 0
    %2056 = vmatmul.mubr.bf16.gmra.mrb[0].mxu0 %v1620
    %v2057 = vpop.f32.mrb[0].mxu0
    %v2058 = vadd.f32 0.0, %v2057
    %v2059 = vpop.f32.mrb[0].mxu0
    %v2060 = vadd.f32 0.0, %v2059
    %v2061 = vpop.f32.mrb[0].mxu0
    %v2062 = vadd.f32 0.0, %v2061
    %v2063 = vpop.f32.mrb[0].mxu0
    %v2064 = vadd.f32 0.0, %v2063
    %2065 = vmatprep.mubr.bf16.mxu0 0
    %2066 = vmatmul.mubr.bf16.gmra.mrb[0].mxu0 %v1623
    %v2067 = vpop.f32.mrb[0].mxu0
    %v2068 = vadd.f32 0.0, %v2067
    %v2069 = vpop.f32.mrb[0].mxu0
    %v2070 = vadd.f32 0.0, %v2069
    %v2071 = vpop.f32.mrb[0].mxu0
    %v2072 = vadd.f32 0.0, %v2071
    %v2073 = vpop.f32.mrb[0].mxu0
    %v2074 = vadd.f32 0.0, %v2073
    %2075 = vdwg.mxu0
    %2076 = vmatprep.subr.bf16.mxu0 %v247
    %2077 = vmatpush1.bf16.msra.mxu0 %v246
    %2078 = vmatprep.subr.bf16.mxu0 %v290
    %2079 = vmatpush1.bf16.msra.mxu0 %v287
    %2080 = vmatprep.subr.bf16.mxu0 0
    %2081 = vmatpush1.bf16.msra.mxu0 0
    %2082 = vmatprep.subr.bf16.mxu0 0
    %2083 = vmatpush1.bf16.msra.mxu0 0
    %2084 = vmatprep.subr.bf16.mxu0 0
    %2085 = vmatpush1.bf16.msra.mxu0 0
    %2086 = vmatprep.subr.bf16.mxu0 0
    %2087 = vmatpush1.bf16.msra.mxu0 0
    %2088 = vmatprep.subr.bf16.mxu0 0
    %2089 = vmatpush1.bf16.msra.mxu0 0
    %2090 = vmatprep.subr.bf16.mxu0 0
    %2091 = vmatpush1.bf16.msra.mxu0 0
    %2092 = vmatprep.subr.bf16.mxu0 0
    %2093 = vmatpush1.bf16.msra.mxu0 0
    %2094 = vmatprep.subr.bf16.mxu0 0
    %2095 = vmatpush1.bf16.msra.mxu0 0
    %2096 = vmatprep.subr.bf16.mxu0 0
    %2097 = vmatpush1.bf16.msra.mxu0 0
    %2098 = vmatprep.subr.bf16.mxu0 0
    %2099 = vmatpush1.bf16.msra.mxu0 0
    %2100 = vmatprep.subr.bf16.mxu0 0
    %2101 = vmatpush1.bf16.msra.mxu0 0
    %2102 = vmatprep.subr.bf16.mxu0 0
    %2103 = vmatpush1.bf16.msra.mxu0 0
    %2104 = vmatprep.subr.bf16.mxu0 0
    %2105 = vmatpush1.bf16.msra.mxu0 0
    %2106 = vmatprep.subr.bf16.mxu0 0
    %2107 = vmatpush1.bf16.msra.mxu0 0
    %2108 = vmatprep.mubr.bf16.mxu0 0
    %2109 = vmatmul.mubr.bf16.gmra.mrb[0].mxu0 %v1617
    %v2110 = vpop.f32.mrb[0].mxu0
    %v2111 = vadd.f32 0.0, %v2110
    %v2112 = vpop.f32.mrb[0].mxu0
    %v2113 = vadd.f32 0.0, %v2112
    %v2114 = vpop.f32.mrb[0].mxu0
    %v2115 = vadd.f32 0.0, %v2114
    %v2116 = vpop.f32.mrb[0].mxu0
    %v2117 = vadd.f32 0.0, %v2116
    %2118 = vmatprep.mubr.bf16.mxu0 0
    %2119 = vmatmul.mubr.bf16.gmra.mrb[0].mxu0 %v1620
    %v2120 = vpop.f32.mrb[0].mxu0
    %v2121 = vadd.f32 0.0, %v2120
    %v2122 = vpop.f32.mrb[0].mxu0
    %v2123 = vadd.f32 0.0, %v2122
    %v2124 = vpop.f32.mrb[0].mxu0
    %v2125 = vadd.f32 0.0, %v2124
    %v2126 = vpop.f32.mrb[0].mxu0
    %v2127 = vadd.f32 0.0, %v2126
    %2128 = vmatprep.mubr.bf16.mxu0 0
    %2129 = vmatmul.mubr.bf16.gmra.mrb[0].mxu0 %v1623
    %v2130 = vpop.f32.mrb[0].mxu0
    %v2131 = vadd.f32 0.0, %v2130
    %v2132 = vpop.f32.mrb[0].mxu0
    %v2133 = vadd.f32 0.0, %v2132
    %v2134 = vpop.f32.mrb[0].mxu0
    %v2135 = vadd.f32 0.0, %v2134
    %v2136 = vpop.f32.mrb[0].mxu0
    %v2137 = vadd.f32 0.0, %v2136
    %2138 = vdwg.mxu0
    %2139 = vmatprep.subr.bf16.mxu0 %v554
    %2140 = vmatpush1.bf16.msra.mxu0 %v553
    %2141 = vmatprep.subr.bf16.mxu0 %v587
    %2142 = vmatpush1.bf16.msra.mxu0 %v584
    %2143 = vmatprep.subr.bf16.mxu0 0
    %2144 = vmatpush1.bf16.msra.mxu0 0
    %2145 = vmatprep.subr.bf16.mxu0 0
    %2146 = vmatpush1.bf16.msra.mxu0 0
    %2147 = vmatprep.subr.bf16.mxu0 0
    %2148 = vmatpush1.bf16.msra.mxu0 0
    %2149 = vmatprep.subr.bf16.mxu0 0
    %2150 = vmatpush1.bf16.msra.mxu0 0
    %2151 = vmatprep.subr.bf16.mxu0 0
    %2152 = vmatpush1.bf16.msra.mxu0 0
    %2153 = vmatprep.subr.bf16.mxu0 0
    %2154 = vmatpush1.bf16.msra.mxu0 0
    %2155 = vmatprep.subr.bf16.mxu0 0
    %2156 = vmatpush1.bf16.msra.mxu0 0
    %2157 = vmatprep.subr.bf16.mxu0 0
    %2158 = vmatpush1.bf16.msra.mxu0 0
    %2159 = vmatprep.subr.bf16.mxu0 0
    %2160 = vmatpush1.bf16.msra.mxu0 0
    %2161 = vmatprep.subr.bf16.mxu0 0
    %2162 = vmatpush1.bf16.msra.mxu0 0
    %2163 = vmatprep.subr.bf16.mxu0 0
    %2164 = vmatpush1.bf16.msra.mxu0 0
    %2165 = vmatprep.subr.bf16.mxu0 0
    %2166 = vmatpush1.bf16.msra.mxu0 0
    %2167 = vmatprep.subr.bf16.mxu0 0
    %2168 = vmatpush1.bf16.msra.mxu0 0
    %2169 = vmatprep.subr.bf16.mxu0 0
    %2170 = vmatpush1.bf16.msra.mxu0 0
    %2171 = vmatprep.mubr.bf16.mxu0 0
    %2172 = vmatmul.mubr.bf16.gmra.mrb[0].mxu0 %v894
    %v2173 = vpop.f32.mrb[0].mxu0
    %v2174 = vadd.f32 %v1985, %v2173
    %v2175 = vpop.f32.mrb[0].mxu0
    %v2176 = vadd.f32 %v1987, %v2175
    %v2177 = vpop.f32.mrb[0].mxu0
    %v2178 = vadd.f32 %v1989, %v2177
    %v2179 = vpop.f32.mrb[0].mxu0
    %v2180 = vadd.f32 %v1991, %v2179
    %2181 = vmatprep.mubr.bf16.mxu0 0
    %2182 = vmatmul.mubr.bf16.gmra.mrb[0].mxu0 %v897
    %v2183 = vpop.f32.mrb[0].mxu0
    %v2184 = vadd.f32 %v1995, %v2183
    %v2185 = vpop.f32.mrb[0].mxu0
    %v2186 = vadd.f32 %v1997, %v2185
    %v2187 = vpop.f32.mrb[0].mxu0
    %v2188 = vadd.f32 %v1999, %v2187
    %v2189 = vpop.f32.mrb[0].mxu0
    %v2190 = vadd.f32 %v2001, %v2189
    %2191 = vmatprep.mubr.bf16.mxu0 0
    %2192 = vmatmul.mubr.bf16.gmra.mrb[0].mxu0 %v900
    %v2193 = vpop.f32.mrb[0].mxu0
    %v2194 = vadd.f32 %v2005, %v2193
    %v2195 = vpop.f32.mrb[0].mxu0
    %v2196 = vadd.f32 %v2007, %v2195
    %v2197 = vpop.f32.mrb[0].mxu0
    %v2198 = vadd.f32 %v2009, %v2197
    %v2199 = vpop.f32.mrb[0].mxu0
    %v2200 = vadd.f32 %v2011, %v2199
    %2201 = vdwg.mxu0
    %2202 = vmatprep.subr.bf16.mxu0 %v556
    %2203 = vmatpush1.bf16.msra.mxu0 %v555
    %2204 = vmatprep.subr.bf16.mxu0 %v593
    %2205 = vmatpush1.bf16.msra.mxu0 %v590
    %2206 = vmatprep.subr.bf16.mxu0 0
    %2207 = vmatpush1.bf16.msra.mxu0 0
    %2208 = vmatprep.subr.bf16.mxu0 0
    %2209 = vmatpush1.bf16.msra.mxu0 0
    %2210 = vmatprep.subr.bf16.mxu0 0
    %2211 = vmatpush1.bf16.msra.mxu0 0
    %2212 = vmatprep.subr.bf16.mxu0 0
    %2213 = vmatpush1.bf16.msra.mxu0 0
    %2214 = vmatprep.subr.bf16.mxu0 0
    %2215 = vmatpush1.bf16.msra.mxu0 0
    %2216 = vmatprep.subr.bf16.mxu0 0
    %2217 = vmatpush1.bf16.msra.mxu0 0
    %2218 = vmatprep.subr.bf16.mxu0 0
    %2219 = vmatpush1.bf16.msra.mxu0 0
    %2220 = vmatprep.subr.bf16.mxu0 0
    %2221 = vmatpush1.bf16.msra.mxu0 0
    %2222 = vmatprep.subr.bf16.mxu0 0
    %2223 = vmatpush1.bf16.msra.mxu0 0
    %2224 = vmatprep.subr.bf16.mxu0 0
    %2225 = vmatpush1.bf16.msra.mxu0 0
    %2226 = vmatprep.subr.bf16.mxu0 0
    %2227 = vmatpush1.bf16.msra.mxu0 0
    %2228 = vmatprep.subr.bf16.mxu0 0
    %2229 = vmatpush1.bf16.msra.mxu0 0
    %2230 = vmatprep.subr.bf16.mxu0 0
    %2231 = vmatpush1.bf16.msra.mxu0 0
    %2232 = vmatprep.subr.bf16.mxu0 0
    %2233 = vmatpush1.bf16.msra.mxu0 0
    %2234 = vmatprep.mubr.bf16.mxu0 0
    %2235 = vmatmul.mubr.bf16.gmra.mrb[0].mxu0 %v894
    %v2236 = vpop.f32.mrb[0].mxu0
    %v2237 = vadd.f32 %v2048, %v2236
    %v2238 = vpop.f32.mrb[0].mxu0
    %v2239 = vadd.f32 %v2050, %v2238
    %v2240 = vpop.f32.mrb[0].mxu0
    %v2241 = vadd.f32 %v2052, %v2240
    %v2242 = vpop.f32.mrb[0].mxu0
    %v2243 = vadd.f32 %v2054, %v2242
    %2244 = vmatprep.mubr.bf16.mxu0 0
    %2245 = vmatmul.mubr.bf16.gmra.mrb[0].mxu0 %v897
    %v2246 = vpop.f32.mrb[0].mxu0
    %v2247 = vadd.f32 %v2058, %v2246
    %v2248 = vpop.f32.mrb[0].mxu0
    %v2249 = vadd.f32 %v2060, %v2248
    %v2250 = vpop.f32.mrb[0].mxu0
    %v2251 = vadd.f32 %v2062, %v2250
    %v2252 = vpop.f32.mrb[0].mxu0
    %v2253 = vadd.f32 %v2064, %v2252
    %2254 = vmatprep.mubr.bf16.mxu0 0
    %2255 = vmatmul.mubr.bf16.gmra.mrb[0].mxu0 %v900
    %v2256 = vpop.f32.mrb[0].mxu0
    %v2257 = vadd.f32 %v2068, %v2256
    %v2258 = vpop.f32.mrb[0].mxu0
    %v2259 = vadd.f32 %v2070, %v2258
    %v2260 = vpop.f32.mrb[0].mxu0
    %v2261 = vadd.f32 %v2072, %v2260
    %v2262 = vpop.f32.mrb[0].mxu0
    %v2263 = vadd.f32 %v2074, %v2262
    %2264 = vdwg.mxu0
    %2265 = vmatprep.subr.bf16.mxu0 %v558
    %2266 = vmatpush1.bf16.msra.mxu0 %v557
    %2267 = vmatprep.subr.bf16.mxu0 %v599
    %2268 = vmatpush1.bf16.msra.mxu0 %v596
    %2269 = vmatprep.subr.bf16.mxu0 0
    %2270 = vmatpush1.bf16.msra.mxu0 0
    %2271 = vmatprep.subr.bf16.mxu0 0
    %2272 = vmatpush1.bf16.msra.mxu0 0
    %2273 = vmatprep.subr.bf16.mxu0 0
    %2274 = vmatpush1.bf16.msra.mxu0 0
    %2275 = vmatprep.subr.bf16.mxu0 0
    %2276 = vmatpush1.bf16.msra.mxu0 0
    %2277 = vmatprep.subr.bf16.mxu0 0
    %2278 = vmatpush1.bf16.msra.mxu0 0
    %2279 = vmatprep.subr.bf16.mxu0 0
    %2280 = vmatpush1.bf16.msra.mxu0 0
    %2281 = vmatprep.subr.bf16.mxu0 0
    %2282 = vmatpush1.bf16.msra.mxu0 0
    %2283 = vmatprep.subr.bf16.mxu0 0
    %2284 = vmatpush1.bf16.msra.mxu0 0
    %2285 = vmatprep.subr.bf16.mxu0 0
    %2286 = vmatpush1.bf16.msra.mxu0 0
    %2287 = vmatprep.subr.bf16.mxu0 0
    %2288 = vmatpush1.bf16.msra.mxu0 0
    %2289 = vmatprep.subr.bf16.mxu0 0
    %2290 = vmatpush1.bf16.msra.mxu0 0
    %2291 = vmatprep.subr.bf16.mxu0 0
    %2292 = vmatpush1.bf16.msra.mxu0 0
    %2293 = vmatprep.subr.bf16.mxu0 0
    %2294 = vmatpush1.bf16.msra.mxu0 0
    %2295 = vmatprep.subr.bf16.mxu0 0
    %2296 = vmatpush1.bf16.msra.mxu0 0
    %2297 = vmatprep.mubr.bf16.mxu0 0
    %2298 = vmatmul.mubr.bf16.gmra.mrb[0].mxu0 %v894
    %v2299 = vpop.f32.mrb[0].mxu0
    %v2300 = vadd.f32 %v2111, %v2299
    %v2301 = vpop.f32.mrb[0].mxu0
    %v2302 = vadd.f32 %v2113, %v2301
    %v2303 = vpop.f32.mrb[0].mxu0
    %v2304 = vadd.f32 %v2115, %v2303
    %v2305 = vpop.f32.mrb[0].mxu0
    %v2306 = vadd.f32 %v2117, %v2305
    %2307 = vmatprep.mubr.bf16.mxu0 0
    %2308 = vmatmul.mubr.bf16.gmra.mrb[0].mxu0 %v897
    %v2309 = vpop.f32.mrb[0].mxu0
    %v2310 = vadd.f32 %v2121, %v2309
    %v2311 = vpop.f32.mrb[0].mxu0
    %v2312 = vadd.f32 %v2123, %v2311
    %v2313 = vpop.f32.mrb[0].mxu0
    %v2314 = vadd.f32 %v2125, %v2313
    %v2315 = vpop.f32.mrb[0].mxu0
    %v2316 = vadd.f32 %v2127, %v2315
    %2317 = vmatprep.mubr.bf16.mxu0 0
    %2318 = vmatmul.mubr.bf16.gmra.mrb[0].mxu0 %v900
    %v2319 = vpop.f32.mrb[0].mxu0
    %v2320 = vadd.f32 %v2131, %v2319
    %v2321 = vpop.f32.mrb[0].mxu0
    %v2322 = vadd.f32 %v2133, %v2321
    %v2323 = vpop.f32.mrb[0].mxu0
    %v2324 = vadd.f32 %v2135, %v2323
    %v2325 = vpop.f32.mrb[0].mxu0
    %v2326 = vadd.f32 %v2137, %v2325
    %2327 = vdwg.mxu0
    %v2328 = vpack.c.b16 %v508, %v507
    %v2329 = vpack.c.b16 %v510, %v509
    %v2330 = vpack.c.b16 %v512, %v511
    %v2332 = vsel %vm260, %v2328, 0
    %v2335 = vsel %vm260, %v2329, 0
    %v2338 = vsel %vm260, %v2330, 0
    %2340 = vmatprep.subr.bf16.mxu0 %v876
    %2341 = vmatpush1.bf16.msra.mxu0 %v875
    %2342 = vmatprep.subr.bf16.mxu0 %v909
    %2343 = vmatpush1.bf16.msra.mxu0 %v906
    %2344 = vmatprep.subr.bf16.mxu0 0
    %2345 = vmatpush1.bf16.msra.mxu0 0
    %2346 = vmatprep.subr.bf16.mxu0 0
    %2347 = vmatpush1.bf16.msra.mxu0 0
    %2348 = vmatprep.subr.bf16.mxu0 0
    %2349 = vmatpush1.bf16.msra.mxu0 0
    %2350 = vmatprep.subr.bf16.mxu0 0
    %2351 = vmatpush1.bf16.msra.mxu0 0
    %2352 = vmatprep.subr.bf16.mxu0 0
    %2353 = vmatpush1.bf16.msra.mxu0 0
    %2354 = vmatprep.subr.bf16.mxu0 0
    %2355 = vmatpush1.bf16.msra.mxu0 0
    %2356 = vmatprep.subr.bf16.mxu0 0
    %2357 = vmatpush1.bf16.msra.mxu0 0
    %2358 = vmatprep.subr.bf16.mxu0 0
    %2359 = vmatpush1.bf16.msra.mxu0 0
    %2360 = vmatprep.subr.bf16.mxu0 0
    %2361 = vmatpush1.bf16.msra.mxu0 0
    %2362 = vmatprep.subr.bf16.mxu0 0
    %2363 = vmatpush1.bf16.msra.mxu0 0
    %2364 = vmatprep.subr.bf16.mxu0 0
    %2365 = vmatpush1.bf16.msra.mxu0 0
    %2366 = vmatprep.subr.bf16.mxu0 0
    %2367 = vmatpush1.bf16.msra.mxu0 0
    %2368 = vmatprep.subr.bf16.mxu0 0
    %2369 = vmatpush1.bf16.msra.mxu0 0
    %2370 = vmatprep.subr.bf16.mxu0 0
    %2371 = vmatpush1.bf16.msra.mxu0 0
    %2372 = vmatprep.mubr.bf16.mxu0 0
    %2373 = vmatmul.mubr.bf16.gmra.mrb[0].mxu0 %v2332
    %v2374 = vpop.f32.mrb[0].mxu0
    %v2375 = vadd.f32 0.0, %v2374
    %v2376 = vpop.f32.mrb[0].mxu0
    %v2377 = vadd.f32 0.0, %v2376
    %v2378 = vpop.f32.mrb[0].mxu0
    %v2379 = vadd.f32 0.0, %v2378
    %v2380 = vpop.f32.mrb[0].mxu0
    %v2381 = vadd.f32 0.0, %v2380
    %2382 = vmatprep.mubr.bf16.mxu0 0
    %2383 = vmatmul.mubr.bf16.gmra.mrb[0].mxu0 %v2335
    %v2384 = vpop.f32.mrb[0].mxu0
    %v2385 = vadd.f32 0.0, %v2384
    %v2386 = vpop.f32.mrb[0].mxu0
    %v2387 = vadd.f32 0.0, %v2386
    %v2388 = vpop.f32.mrb[0].mxu0
    %v2389 = vadd.f32 0.0, %v2388
    %v2390 = vpop.f32.mrb[0].mxu0
    %v2391 = vadd.f32 0.0, %v2390
    %2392 = vmatprep.mubr.bf16.mxu0 0
    %2393 = vmatmul.mubr.bf16.gmra.mrb[0].mxu0 %v2338
    %v2394 = vpop.f32.mrb[0].mxu0
    %v2395 = vadd.f32 0.0, %v2394
    %v2396 = vpop.f32.mrb[0].mxu0
    %v2397 = vadd.f32 0.0, %v2396
    %v2398 = vpop.f32.mrb[0].mxu0
    %v2399 = vadd.f32 0.0, %v2398
    %v2400 = vpop.f32.mrb[0].mxu0
    %v2401 = vadd.f32 0.0, %v2400
    %2402 = vdwg.mxu0
    %2403 = vmatprep.subr.bf16.mxu0 %v878
    %2404 = vmatpush1.bf16.msra.mxu0 %v877
    %2405 = vmatprep.subr.bf16.mxu0 %v915
    %2406 = vmatpush1.bf16.msra.mxu0 %v912
    %2407 = vmatprep.subr.bf16.mxu0 0
    %2408 = vmatpush1.bf16.msra.mxu0 0
    %2409 = vmatprep.subr.bf16.mxu0 0
    %2410 = vmatpush1.bf16.msra.mxu0 0
    %2411 = vmatprep.subr.bf16.mxu0 0
    %2412 = vmatpush1.bf16.msra.mxu0 0
    %2413 = vmatprep.subr.bf16.mxu0 0
    %2414 = vmatpush1.bf16.msra.mxu0 0
    %2415 = vmatprep.subr.bf16.mxu0 0
    %2416 = vmatpush1.bf16.msra.mxu0 0
    %2417 = vmatprep.subr.bf16.mxu0 0
    %2418 = vmatpush1.bf16.msra.mxu0 0
    %2419 = vmatprep.subr.bf16.mxu0 0
    %2420 = vmatpush1.bf16.msra.mxu0 0
    %2421 = vmatprep.subr.bf16.mxu0 0
    %2422 = vmatpush1.bf16.msra.mxu0 0
    %2423 = vmatprep.subr.bf16.mxu0 0
    %2424 = vmatpush1.bf16.msra.mxu0 0
    %2425 = vmatprep.subr.bf16.mxu0 0
    %2426 = vmatpush1.bf16.msra.mxu0 0
    %2427 = vmatprep.subr.bf16.mxu0 0
    %2428 = vmatpush1.bf16.msra.mxu0 0
    %2429 = vmatprep.subr.bf16.mxu0 0
    %2430 = vmatpush1.bf16.msra.mxu0 0
    %2431 = vmatprep.subr.bf16.mxu0 0
    %2432 = vmatpush1.bf16.msra.mxu0 0
    %2433 = vmatprep.subr.bf16.mxu0 0
    %2434 = vmatpush1.bf16.msra.mxu0 0
    %2435 = vmatprep.mubr.bf16.mxu0 0
    %2436 = vmatmul.mubr.bf16.gmra.mrb[0].mxu0 %v2332
    %v2437 = vpop.f32.mrb[0].mxu0
    %v2438 = vadd.f32 0.0, %v2437
    %v2439 = vpop.f32.mrb[0].mxu0
    %v2440 = vadd.f32 0.0, %v2439
    %v2441 = vpop.f32.mrb[0].mxu0
    %v2442 = vadd.f32 0.0, %v2441
    %v2443 = vpop.f32.mrb[0].mxu0
    %v2444 = vadd.f32 0.0, %v2443
    %2445 = vmatprep.mubr.bf16.mxu0 0
    %2446 = vmatmul.mubr.bf16.gmra.mrb[0].mxu0 %v2335
    %v2447 = vpop.f32.mrb[0].mxu0
    %v2448 = vadd.f32 0.0, %v2447
    %v2449 = vpop.f32.mrb[0].mxu0
    %v2450 = vadd.f32 0.0, %v2449
    %v2451 = vpop.f32.mrb[0].mxu0
    %v2452 = vadd.f32 0.0, %v2451
    %v2453 = vpop.f32.mrb[0].mxu0
    %v2454 = vadd.f32 0.0, %v2453
    %2455 = vmatprep.mubr.bf16.mxu0 0
    %2456 = vmatmul.mubr.bf16.gmra.mrb[0].mxu0 %v2338
    %v2457 = vpop.f32.mrb[0].mxu0
    %v2458 = vadd.f32 0.0, %v2457
    %v2459 = vpop.f32.mrb[0].mxu0
    %v2460 = vadd.f32 0.0, %v2459
    %v2461 = vpop.f32.mrb[0].mxu0
    %v2462 = vadd.f32 0.0, %v2461
    %v2463 = vpop.f32.mrb[0].mxu0
    %v2464 = vadd.f32 0.0, %v2463
    %2465 = vdwg.mxu0
    %2466 = vmatprep.subr.bf16.mxu0 %v880
    %2467 = vmatpush1.bf16.msra.mxu0 %v879
    %2468 = vmatprep.subr.bf16.mxu0 %v921
    %2469 = vmatpush1.bf16.msra.mxu0 %v918
    %2470 = vmatprep.subr.bf16.mxu0 0
    %2471 = vmatpush1.bf16.msra.mxu0 0
    %2472 = vmatprep.subr.bf16.mxu0 0
    %2473 = vmatpush1.bf16.msra.mxu0 0
    %2474 = vmatprep.subr.bf16.mxu0 0
    %2475 = vmatpush1.bf16.msra.mxu0 0
    %2476 = vmatprep.subr.bf16.mxu0 0
    %2477 = vmatpush1.bf16.msra.mxu0 0
    %2478 = vmatprep.subr.bf16.mxu0 0
    %2479 = vmatpush1.bf16.msra.mxu0 0
    %2480 = vmatprep.subr.bf16.mxu0 0
    %2481 = vmatpush1.bf16.msra.mxu0 0
    %2482 = vmatprep.subr.bf16.mxu0 0
    %2483 = vmatpush1.bf16.msra.mxu0 0
    %2484 = vmatprep.subr.bf16.mxu0 0
    %2485 = vmatpush1.bf16.msra.mxu0 0
    %2486 = vmatprep.subr.bf16.mxu0 0
    %2487 = vmatpush1.bf16.msra.mxu0 0
    %2488 = vmatprep.subr.bf16.mxu0 0
    %2489 = vmatpush1.bf16.msra.mxu0 0
    %2490 = vmatprep.subr.bf16.mxu0 0
    %2491 = vmatpush1.bf16.msra.mxu0 0
    %2492 = vmatprep.subr.bf16.mxu0 0
    %2493 = vmatpush1.bf16.msra.mxu0 0
    %2494 = vmatprep.subr.bf16.mxu0 0
    %2495 = vmatpush1.bf16.msra.mxu0 0
    %2496 = vmatprep.subr.bf16.mxu0 0
    %2497 = vmatpush1.bf16.msra.mxu0 0
    %2498 = vmatprep.mubr.bf16.mxu0 0
    %2499 = vmatmul.mubr.bf16.gmra.mrb[0].mxu0 %v2332
    %v2500 = vpop.f32.mrb[0].mxu0
    %v2501 = vadd.f32 0.0, %v2500
    %v2502 = vpop.f32.mrb[0].mxu0
    %v2503 = vadd.f32 0.0, %v2502
    %v2504 = vpop.f32.mrb[0].mxu0
    %v2505 = vadd.f32 0.0, %v2504
    %v2506 = vpop.f32.mrb[0].mxu0
    %v2507 = vadd.f32 0.0, %v2506
    %2508 = vmatprep.mubr.bf16.mxu0 0
    %2509 = vmatmul.mubr.bf16.gmra.mrb[0].mxu0 %v2335
    %v2510 = vpop.f32.mrb[0].mxu0
    %v2511 = vadd.f32 0.0, %v2510
    %v2512 = vpop.f32.mrb[0].mxu0
    %v2513 = vadd.f32 0.0, %v2512
    %v2514 = vpop.f32.mrb[0].mxu0
    %v2515 = vadd.f32 0.0, %v2514
    %v2516 = vpop.f32.mrb[0].mxu0
    %v2517 = vadd.f32 0.0, %v2516
    %2518 = vmatprep.mubr.bf16.mxu0 0
    %2519 = vmatmul.mubr.bf16.gmra.mrb[0].mxu0 %v2338
    %v2520 = vpop.f32.mrb[0].mxu0
    %v2521 = vadd.f32 0.0, %v2520
    %v2522 = vpop.f32.mrb[0].mxu0
    %v2523 = vadd.f32 0.0, %v2522
    %v2524 = vpop.f32.mrb[0].mxu0
    %v2525 = vadd.f32 0.0, %v2524
    %v2526 = vpop.f32.mrb[0].mxu0
    %v2527 = vadd.f32 0.0, %v2526
    %2528 = vdwg.mxu0
    %v2529 = vadd.f32 %v2174, %v2375
    %v2530 = vadd.f32 %v2176, %v2377
    %v2531 = vadd.f32 %v2237, %v2438
    %v2532 = vadd.f32 %v2239, %v2440
    %v2533 = vadd.f32 %v2300, %v2501
    %v2534 = vadd.f32 %v2302, %v2503
    %v2535 = vadd.f32 %v2178, %v2379
    %v2536 = vadd.f32 %v2180, %v2381
    %v2537 = vadd.f32 %v2241, %v2442
    %v2538 = vadd.f32 %v2243, %v2444
    %v2539 = vadd.f32 %v2304, %v2505
    %v2540 = vadd.f32 %v2306, %v2507
    %v2541 = vadd.f32 %v2184, %v2385
    %v2542 = vadd.f32 %v2186, %v2387
    %v2543 = vadd.f32 %v2247, %v2448
    %v2544 = vadd.f32 %v2249, %v2450
    %v2545 = vadd.f32 %v2310, %v2511
    %v2546 = vadd.f32 %v2312, %v2513
    %v2547 = vadd.f32 %v2188, %v2389
    %v2548 = vadd.f32 %v2190, %v2391
    %v2549 = vadd.f32 %v2251, %v2452
    %v2550 = vadd.f32 %v2253, %v2454
    %v2551 = vadd.f32 %v2314, %v2515
    %v2552 = vadd.f32 %v2316, %v2517
    %v2553 = vadd.f32 %v2194, %v2395
    %v2554 = vadd.f32 %v2196, %v2397
    %v2555 = vadd.f32 %v2257, %v2458
    %v2556 = vadd.f32 %v2259, %v2460
    %v2557 = vadd.f32 %v2320, %v2521
    %v2558 = vadd.f32 %v2322, %v2523
    %v2559 = vadd.f32 %v2198, %v2399
    %v2560 = vadd.f32 %v2200, %v2401
    %v2561 = vadd.f32 %v2261, %v2462
    %v2562 = vadd.f32 %v2263, %v2464
    %v2563 = vadd.f32 %v2324, %v2525
    %v2564 = vadd.f32 %v2326, %v2527
    %v2565 = vmax.f32 %v2529, %v2532
    %v2566 = vmax.f32 %v2530, %v2533
    %v2567 = vmax.f32 %v2531, %v2534
    %v2568 = vmax.f32 %v2535, %v2538
    %v2569 = vmax.f32 %v2536, %v2539
    %v2570 = vmax.f32 %v2537, %v2540
    %v2571 = vmax.f32 %v2541, %v2544
    %v2572 = vmax.f32 %v2542, %v2545
    %v2573 = vmax.f32 %v2543, %v2546
    %v2574 = vmax.f32 %v2547, %v2550
    %v2575 = vmax.f32 %v2548, %v2551
    %v2576 = vmax.f32 %v2549, %v2552
    %v2577 = vmax.f32 %v2553, %v2556
    %v2578 = vmax.f32 %v2554, %v2557
    %v2579 = vmax.f32 %v2555, %v2558
    %v2580 = vmax.f32 %v2559, %v2562
    %v2581 = vmax.f32 %v2560, %v2563
    %v2582 = vmax.f32 %v2561, %v2564
    %2583 = vmatprep.subr.bf16.mxu0 %v243
    %2584 = vmatpush1.bf16.msra.mxu0 %v242
    %2585 = vmatprep.subr.bf16.mxu0 %v278
    %2586 = vmatpush1.bf16.msra.mxu0 %v275
    %2587 = vmatprep.subr.bf16.mxu0 0
    %2588 = vmatpush1.bf16.msra.mxu0 0
    %2589 = vmatprep.subr.bf16.mxu0 0
    %2590 = vmatpush1.bf16.msra.mxu0 0
    %2591 = vmatprep.subr.bf16.mxu0 0
    %2592 = vmatpush1.bf16.msra.mxu0 0
    %2593 = vmatprep.subr.bf16.mxu0 0
    %2594 = vmatpush1.bf16.msra.mxu0 0
    %2595 = vmatprep.subr.bf16.mxu0 0
    %2596 = vmatpush1.bf16.msra.mxu0 0
    %2597 = vmatprep.subr.bf16.mxu0 0
    %2598 = vmatpush1.bf16.msra.mxu0 0
    %2599 = vmatprep.subr.bf16.mxu0 0
    %2600 = vmatpush1.bf16.msra.mxu0 0
    %2601 = vmatprep.subr.bf16.mxu0 0
    %2602 = vmatpush1.bf16.msra.mxu0 0
    %2603 = vmatprep.subr.bf16.mxu0 0
    %2604 = vmatpush1.bf16.msra.mxu0 0
    %2605 = vmatprep.subr.bf16.mxu0 0
    %2606 = vmatpush1.bf16.msra.mxu0 0
    %2607 = vmatprep.subr.bf16.mxu0 0
    %2608 = vmatpush1.bf16.msra.mxu0 0
    %2609 = vmatprep.subr.bf16.mxu0 0
    %2610 = vmatpush1.bf16.msra.mxu0 0
    %2611 = vmatprep.subr.bf16.mxu0 0
    %2612 = vmatpush1.bf16.msra.mxu0 0
    %2613 = vmatprep.subr.bf16.mxu0 0
    %2614 = vmatpush1.bf16.msra.mxu0 0
    %2615 = vmatprep.mubr.bf16.mxu0 0
    %2616 = vmatmul.mubr.bf16.gmra.mrb[0].mxu0 %v2332
    %v2617 = vpop.f32.mrb[0].mxu0
    %v2618 = vadd.f32 0.0, %v2617
    %v2619 = vpop.f32.mrb[0].mxu0
    %v2620 = vadd.f32 0.0, %v2619
    %v2621 = vpop.f32.mrb[0].mxu0
    %v2622 = vadd.f32 0.0, %v2621
    %v2623 = vpop.f32.mrb[0].mxu0
    %v2624 = vadd.f32 0.0, %v2623
    %2625 = vmatprep.mubr.bf16.mxu0 0
    %2626 = vmatmul.mubr.bf16.gmra.mrb[0].mxu0 %v2335
    %v2627 = vpop.f32.mrb[0].mxu0
    %v2628 = vadd.f32 0.0, %v2627
    %v2629 = vpop.f32.mrb[0].mxu0
    %v2630 = vadd.f32 0.0, %v2629
    %v2631 = vpop.f32.mrb[0].mxu0
    %v2632 = vadd.f32 0.0, %v2631
    %v2633 = vpop.f32.mrb[0].mxu0
    %v2634 = vadd.f32 0.0, %v2633
    %2635 = vmatprep.mubr.bf16.mxu0 0
    %2636 = vmatmul.mubr.bf16.gmra.mrb[0].mxu0 %v2338
    %v2637 = vpop.f32.mrb[0].mxu0
    %v2638 = vadd.f32 0.0, %v2637
    %v2639 = vpop.f32.mrb[0].mxu0
    %v2640 = vadd.f32 0.0, %v2639
    %v2641 = vpop.f32.mrb[0].mxu0
    %v2642 = vadd.f32 0.0, %v2641
    %v2643 = vpop.f32.mrb[0].mxu0
    %v2644 = vadd.f32 0.0, %v2643
    %2645 = vdwg.mxu0
    %2646 = vmatprep.subr.bf16.mxu0 %v245
    %2647 = vmatpush1.bf16.msra.mxu0 %v244
    %2648 = vmatprep.subr.bf16.mxu0 %v284
    %2649 = vmatpush1.bf16.msra.mxu0 %v281
    %2650 = vmatprep.subr.bf16.mxu0 0
    %2651 = vmatpush1.bf16.msra.mxu0 0
    %2652 = vmatprep.subr.bf16.mxu0 0
    %2653 = vmatpush1.bf16.msra.mxu0 0
    %2654 = vmatprep.subr.bf16.mxu0 0
    %2655 = vmatpush1.bf16.msra.mxu0 0
    %2656 = vmatprep.subr.bf16.mxu0 0
    %2657 = vmatpush1.bf16.msra.mxu0 0
    %2658 = vmatprep.subr.bf16.mxu0 0
    %2659 = vmatpush1.bf16.msra.mxu0 0
    %2660 = vmatprep.subr.bf16.mxu0 0
    %2661 = vmatpush1.bf16.msra.mxu0 0
    %2662 = vmatprep.subr.bf16.mxu0 0
    %2663 = vmatpush1.bf16.msra.mxu0 0
    %2664 = vmatprep.subr.bf16.mxu0 0
    %2665 = vmatpush1.bf16.msra.mxu0 0
    %2666 = vmatprep.subr.bf16.mxu0 0
    %2667 = vmatpush1.bf16.msra.mxu0 0
    %2668 = vmatprep.subr.bf16.mxu0 0
    %2669 = vmatpush1.bf16.msra.mxu0 0
    %2670 = vmatprep.subr.bf16.mxu0 0
    %2671 = vmatpush1.bf16.msra.mxu0 0
    %2672 = vmatprep.subr.bf16.mxu0 0
    %2673 = vmatpush1.bf16.msra.mxu0 0
    %2674 = vmatprep.subr.bf16.mxu0 0
    %2675 = vmatpush1.bf16.msra.mxu0 0
    %2676 = vmatprep.subr.bf16.mxu0 0
    %2677 = vmatpush1.bf16.msra.mxu0 0
    %2678 = vmatprep.mubr.bf16.mxu0 0
    %2679 = vmatmul.mubr.bf16.gmra.mrb[0].mxu0 %v2332
    %v2680 = vpop.f32.mrb[0].mxu0
    %v2681 = vadd.f32 0.0, %v2680
    %v2682 = vpop.f32.mrb[0].mxu0
    %v2683 = vadd.f32 0.0, %v2682
    %v2684 = vpop.f32.mrb[0].mxu0
    %v2685 = vadd.f32 0.0, %v2684
    %v2686 = vpop.f32.mrb[0].mxu0
    %v2687 = vadd.f32 0.0, %v2686
    %2688 = vmatprep.mubr.bf16.mxu0 0
    %2689 = vmatmul.mubr.bf16.gmra.mrb[0].mxu0 %v2335
    %v2690 = vpop.f32.mrb[0].mxu0
    %v2691 = vadd.f32 0.0, %v2690
    %v2692 = vpop.f32.mrb[0].mxu0
    %v2693 = vadd.f32 0.0, %v2692
    %v2694 = vpop.f32.mrb[0].mxu0
    %v2695 = vadd.f32 0.0, %v2694
    %v2696 = vpop.f32.mrb[0].mxu0
    %v2697 = vadd.f32 0.0, %v2696
    %2698 = vmatprep.mubr.bf16.mxu0 0
    %2699 = vmatmul.mubr.bf16.gmra.mrb[0].mxu0 %v2338
    %v2700 = vpop.f32.mrb[0].mxu0
    %v2701 = vadd.f32 0.0, %v2700
    %v2702 = vpop.f32.mrb[0].mxu0
    %v2703 = vadd.f32 0.0, %v2702
    %v2704 = vpop.f32.mrb[0].mxu0
    %v2705 = vadd.f32 0.0, %v2704
    %v2706 = vpop.f32.mrb[0].mxu0
    %v2707 = vadd.f32 0.0, %v2706
    %2708 = vdwg.mxu0
    %2709 = vmatprep.subr.bf16.mxu0 %v247
    %2710 = vmatpush1.bf16.msra.mxu0 %v246
    %2711 = vmatprep.subr.bf16.mxu0 %v290
    %2712 = vmatpush1.bf16.msra.mxu0 %v287
    %2713 = vmatprep.subr.bf16.mxu0 0
    %2714 = vmatpush1.bf16.msra.mxu0 0
    %2715 = vmatprep.subr.bf16.mxu0 0
    %2716 = vmatpush1.bf16.msra.mxu0 0
    %2717 = vmatprep.subr.bf16.mxu0 0
    %2718 = vmatpush1.bf16.msra.mxu0 0
    %2719 = vmatprep.subr.bf16.mxu0 0
    %2720 = vmatpush1.bf16.msra.mxu0 0
    %2721 = vmatprep.subr.bf16.mxu0 0
    %2722 = vmatpush1.bf16.msra.mxu0 0
    %2723 = vmatprep.subr.bf16.mxu0 0
    %2724 = vmatpush1.bf16.msra.mxu0 0
    %2725 = vmatprep.subr.bf16.mxu0 0
    %2726 = vmatpush1.bf16.msra.mxu0 0
    %2727 = vmatprep.subr.bf16.mxu0 0
    %2728 = vmatpush1.bf16.msra.mxu0 0
    %2729 = vmatprep.subr.bf16.mxu0 0
    %2730 = vmatpush1.bf16.msra.mxu0 0
    %2731 = vmatprep.subr.bf16.mxu0 0
    %2732 = vmatpush1.bf16.msra.mxu0 0
    %2733 = vmatprep.subr.bf16.mxu0 0
    %2734 = vmatpush1.bf16.msra.mxu0 0
    %2735 = vmatprep.subr.bf16.mxu0 0
    %2736 = vmatpush1.bf16.msra.mxu0 0
    %2737 = vmatprep.subr.bf16.mxu0 0
    %2738 = vmatpush1.bf16.msra.mxu0 0
    %2739 = vmatprep.subr.bf16.mxu0 0
    %2740 = vmatpush1.bf16.msra.mxu0 0
    %2741 = vmatprep.mubr.bf16.mxu0 0
    %2742 = vmatmul.mubr.bf16.gmra.mrb[0].mxu0 %v2332
    %v2743 = vpop.f32.mrb[0].mxu0
    %v2744 = vadd.f32 0.0, %v2743
    %v2745 = vpop.f32.mrb[0].mxu0
    %v2746 = vadd.f32 0.0, %v2745
    %v2747 = vpop.f32.mrb[0].mxu0
    %v2748 = vadd.f32 0.0, %v2747
    %v2749 = vpop.f32.mrb[0].mxu0
    %v2750 = vadd.f32 0.0, %v2749
    %2751 = vmatprep.mubr.bf16.mxu0 0
    %2752 = vmatmul.mubr.bf16.gmra.mrb[0].mxu0 %v2335
    %v2753 = vpop.f32.mrb[0].mxu0
    %v2754 = vadd.f32 0.0, %v2753
    %v2755 = vpop.f32.mrb[0].mxu0
    %v2756 = vadd.f32 0.0, %v2755
    %v2757 = vpop.f32.mrb[0].mxu0
    %v2758 = vadd.f32 0.0, %v2757
    %v2759 = vpop.f32.mrb[0].mxu0
    %v2760 = vadd.f32 0.0, %v2759
    %2761 = vmatprep.mubr.bf16.mxu0 0
    %2762 = vmatmul.mubr.bf16.gmra.mrb[0].mxu0 %v2338
    %v2763 = vpop.f32.mrb[0].mxu0
    %v2764 = vadd.f32 0.0, %v2763
    %v2765 = vpop.f32.mrb[0].mxu0
    %v2766 = vadd.f32 0.0, %v2765
    %v2767 = vpop.f32.mrb[0].mxu0
    %v2768 = vadd.f32 0.0, %v2767
    %v2769 = vpop.f32.mrb[0].mxu0
    %v2770 = vadd.f32 0.0, %v2769
    %2771 = vdwg.mxu0
    %2772 = vmatprep.subr.bf16.mxu0 %v554
    %2773 = vmatpush1.bf16.msra.mxu0 %v553
    %2774 = vmatprep.subr.bf16.mxu0 %v587
    %2775 = vmatpush1.bf16.msra.mxu0 %v584
    %2776 = vmatprep.subr.bf16.mxu0 0
    %2777 = vmatpush1.bf16.msra.mxu0 0
    %2778 = vmatprep.subr.bf16.mxu0 0
    %2779 = vmatpush1.bf16.msra.mxu0 0
    %2780 = vmatprep.subr.bf16.mxu0 0
    %2781 = vmatpush1.bf16.msra.mxu0 0
    %2782 = vmatprep.subr.bf16.mxu0 0
    %2783 = vmatpush1.bf16.msra.mxu0 0
    %2784 = vmatprep.subr.bf16.mxu0 0
    %2785 = vmatpush1.bf16.msra.mxu0 0
    %2786 = vmatprep.subr.bf16.mxu0 0
    %2787 = vmatpush1.bf16.msra.mxu0 0
    %2788 = vmatprep.subr.bf16.mxu0 0
    %2789 = vmatpush1.bf16.msra.mxu0 0
    %2790 = vmatprep.subr.bf16.mxu0 0
    %2791 = vmatpush1.bf16.msra.mxu0 0
    %2792 = vmatprep.subr.bf16.mxu0 0
    %2793 = vmatpush1.bf16.msra.mxu0 0
    %2794 = vmatprep.subr.bf16.mxu0 0
    %2795 = vmatpush1.bf16.msra.mxu0 0
    %2796 = vmatprep.subr.bf16.mxu0 0
    %2797 = vmatpush1.bf16.msra.mxu0 0
    %2798 = vmatprep.subr.bf16.mxu0 0
    %2799 = vmatpush1.bf16.msra.mxu0 0
    %2800 = vmatprep.subr.bf16.mxu0 0
    %2801 = vmatpush1.bf16.msra.mxu0 0
    %2802 = vmatprep.subr.bf16.mxu0 0
    %2803 = vmatpush1.bf16.msra.mxu0 0
    %2804 = vmatprep.mubr.bf16.mxu0 0
    %2805 = vmatmul.mubr.bf16.gmra.mrb[0].mxu0 %v1617
    %v2806 = vpop.f32.mrb[0].mxu0
    %v2807 = vadd.f32 %v2618, %v2806
    %v2808 = vpop.f32.mrb[0].mxu0
    %v2809 = vadd.f32 %v2620, %v2808
    %v2810 = vpop.f32.mrb[0].mxu0
    %v2811 = vadd.f32 %v2622, %v2810
    %v2812 = vpop.f32.mrb[0].mxu0
    %v2813 = vadd.f32 %v2624, %v2812
    %2814 = vmatprep.mubr.bf16.mxu0 0
    %2815 = vmatmul.mubr.bf16.gmra.mrb[0].mxu0 %v1620
    %v2816 = vpop.f32.mrb[0].mxu0
    %v2817 = vadd.f32 %v2628, %v2816
    %v2818 = vpop.f32.mrb[0].mxu0
    %v2819 = vadd.f32 %v2630, %v2818
    %v2820 = vpop.f32.mrb[0].mxu0
    %v2821 = vadd.f32 %v2632, %v2820
    %v2822 = vpop.f32.mrb[0].mxu0
    %v2823 = vadd.f32 %v2634, %v2822
    %2824 = vmatprep.mubr.bf16.mxu0 0
    %2825 = vmatmul.mubr.bf16.gmra.mrb[0].mxu0 %v1623
    %v2826 = vpop.f32.mrb[0].mxu0
    %v2827 = vadd.f32 %v2638, %v2826
    %v2828 = vpop.f32.mrb[0].mxu0
    %v2829 = vadd.f32 %v2640, %v2828
    %v2830 = vpop.f32.mrb[0].mxu0
    %v2831 = vadd.f32 %v2642, %v2830
    %v2832 = vpop.f32.mrb[0].mxu0
    %v2833 = vadd.f32 %v2644, %v2832
    %2834 = vdwg.mxu0
    %2835 = vmatprep.subr.bf16.mxu0 %v556
    %2836 = vmatpush1.bf16.msra.mxu0 %v555
    %2837 = vmatprep.subr.bf16.mxu0 %v593
    %2838 = vmatpush1.bf16.msra.mxu0 %v590
    %2839 = vmatprep.subr.bf16.mxu0 0
    %2840 = vmatpush1.bf16.msra.mxu0 0
    %2841 = vmatprep.subr.bf16.mxu0 0
    %2842 = vmatpush1.bf16.msra.mxu0 0
    %2843 = vmatprep.subr.bf16.mxu0 0
    %2844 = vmatpush1.bf16.msra.mxu0 0
    %2845 = vmatprep.subr.bf16.mxu0 0
    %2846 = vmatpush1.bf16.msra.mxu0 0
    %2847 = vmatprep.subr.bf16.mxu0 0
    %2848 = vmatpush1.bf16.msra.mxu0 0
    %2849 = vmatprep.subr.bf16.mxu0 0
    %2850 = vmatpush1.bf16.msra.mxu0 0
    %2851 = vmatprep.subr.bf16.mxu0 0
    %2852 = vmatpush1.bf16.msra.mxu0 0
    %2853 = vmatprep.subr.bf16.mxu0 0
    %2854 = vmatpush1.bf16.msra.mxu0 0
    %2855 = vmatprep.subr.bf16.mxu0 0
    %2856 = vmatpush1.bf16.msra.mxu0 0
    %2857 = vmatprep.subr.bf16.mxu0 0
    %2858 = vmatpush1.bf16.msra.mxu0 0
    %2859 = vmatprep.subr.bf16.mxu0 0
    %2860 = vmatpush1.bf16.msra.mxu0 0
    %2861 = vmatprep.subr.bf16.mxu0 0
    %2862 = vmatpush1.bf16.msra.mxu0 0
    %2863 = vmatprep.subr.bf16.mxu0 0
    %2864 = vmatpush1.bf16.msra.mxu0 0
    %2865 = vmatprep.subr.bf16.mxu0 0
    %2866 = vmatpush1.bf16.msra.mxu0 0
    %2867 = vmatprep.mubr.bf16.mxu0 0
    %2868 = vmatmul.mubr.bf16.gmra.mrb[0].mxu0 %v1617
    %v2869 = vpop.f32.mrb[0].mxu0
    %v2870 = vadd.f32 %v2681, %v2869
    %v2871 = vpop.f32.mrb[0].mxu0
    %v2872 = vadd.f32 %v2683, %v2871
    %v2873 = vpop.f32.mrb[0].mxu0
    %v2874 = vadd.f32 %v2685, %v2873
    %v2875 = vpop.f32.mrb[0].mxu0
    %v2876 = vadd.f32 %v2687, %v2875
    %2877 = vmatprep.mubr.bf16.mxu0 0
    %2878 = vmatmul.mubr.bf16.gmra.mrb[0].mxu0 %v1620
    %v2879 = vpop.f32.mrb[0].mxu0
    %v2880 = vadd.f32 %v2691, %v2879
    %v2881 = vpop.f32.mrb[0].mxu0
    %v2882 = vadd.f32 %v2693, %v2881
    %v2883 = vpop.f32.mrb[0].mxu0
    %v2884 = vadd.f32 %v2695, %v2883
    %v2885 = vpop.f32.mrb[0].mxu0
    %v2886 = vadd.f32 %v2697, %v2885
    %2887 = vmatprep.mubr.bf16.mxu0 0
    %2888 = vmatmul.mubr.bf16.gmra.mrb[0].mxu0 %v1623
    %v2889 = vpop.f32.mrb[0].mxu0
    %v2890 = vadd.f32 %v2701, %v2889
    %v2891 = vpop.f32.mrb[0].mxu0
    %v2892 = vadd.f32 %v2703, %v2891
    %v2893 = vpop.f32.mrb[0].mxu0
    %v2894 = vadd.f32 %v2705, %v2893
    %v2895 = vpop.f32.mrb[0].mxu0
    %v2896 = vadd.f32 %v2707, %v2895
    %2897 = vdwg.mxu0
    %2898 = vmatprep.subr.bf16.mxu0 %v558
    %2899 = vmatpush1.bf16.msra.mxu0 %v557
    %2900 = vmatprep.subr.bf16.mxu0 %v599
    %2901 = vmatpush1.bf16.msra.mxu0 %v596
    %2902 = vmatprep.subr.bf16.mxu0 0
    %2903 = vmatpush1.bf16.msra.mxu0 0
    %2904 = vmatprep.subr.bf16.mxu0 0
    %2905 = vmatpush1.bf16.msra.mxu0 0
    %2906 = vmatprep.subr.bf16.mxu0 0
    %2907 = vmatpush1.bf16.msra.mxu0 0
    %2908 = vmatprep.subr.bf16.mxu0 0
    %2909 = vmatpush1.bf16.msra.mxu0 0
    %2910 = vmatprep.subr.bf16.mxu0 0
    %2911 = vmatpush1.bf16.msra.mxu0 0
    %2912 = vmatprep.subr.bf16.mxu0 0
    %2913 = vmatpush1.bf16.msra.mxu0 0
    %2914 = vmatprep.subr.bf16.mxu0 0
    %2915 = vmatpush1.bf16.msra.mxu0 0
    %2916 = vmatprep.subr.bf16.mxu0 0
    %2917 = vmatpush1.bf16.msra.mxu0 0
    %2918 = vmatprep.subr.bf16.mxu0 0
    %2919 = vmatpush1.bf16.msra.mxu0 0
    %2920 = vmatprep.subr.bf16.mxu0 0
    %2921 = vmatpush1.bf16.msra.mxu0 0
    %2922 = vmatprep.subr.bf16.mxu0 0
    %2923 = vmatpush1.bf16.msra.mxu0 0
    %2924 = vmatprep.subr.bf16.mxu0 0
    %2925 = vmatpush1.bf16.msra.mxu0 0
    %2926 = vmatprep.subr.bf16.mxu0 0
    %2927 = vmatpush1.bf16.msra.mxu0 0
    %2928 = vmatprep.subr.bf16.mxu0 0
    %2929 = vmatpush1.bf16.msra.mxu0 0
    %2930 = vmatprep.mubr.bf16.mxu0 0
    %2931 = vmatmul.mubr.bf16.gmra.mrb[0].mxu0 %v1617
    %v2932 = vpop.f32.mrb[0].mxu0
    %v2933 = vadd.f32 %v2744, %v2932
    %v2934 = vpop.f32.mrb[0].mxu0
    %v2935 = vadd.f32 %v2746, %v2934
    %v2936 = vpop.f32.mrb[0].mxu0
    %v2937 = vadd.f32 %v2748, %v2936
    %v2938 = vpop.f32.mrb[0].mxu0
    %v2939 = vadd.f32 %v2750, %v2938
    %2940 = vmatprep.mubr.bf16.mxu0 0
    %2941 = vmatmul.mubr.bf16.gmra.mrb[0].mxu0 %v1620
    %v2942 = vpop.f32.mrb[0].mxu0
    %v2943 = vadd.f32 %v2754, %v2942
    %v2944 = vpop.f32.mrb[0].mxu0
    %v2945 = vadd.f32 %v2756, %v2944
    %v2946 = vpop.f32.mrb[0].mxu0
    %v2947 = vadd.f32 %v2758, %v2946
    %v2948 = vpop.f32.mrb[0].mxu0
    %v2949 = vadd.f32 %v2760, %v2948
    %2950 = vmatprep.mubr.bf16.mxu0 0
    %2951 = vmatmul.mubr.bf16.gmra.mrb[0].mxu0 %v1623
    %v2952 = vpop.f32.mrb[0].mxu0
    %v2953 = vadd.f32 %v2764, %v2952
    %v2954 = vpop.f32.mrb[0].mxu0
    %v2955 = vadd.f32 %v2766, %v2954
    %v2956 = vpop.f32.mrb[0].mxu0
    %v2957 = vadd.f32 %v2768, %v2956
    %v2958 = vpop.f32.mrb[0].mxu0
    %v2959 = vadd.f32 %v2770, %v2958
    %2960 = vdwg.mxu0
    %v2961 = vpack.c.b16 %v197, %v196
    %v2962 = vpack.c.b16 %v199, %v198
    %v2963 = vpack.c.b16 %v201, %v200
    %v2965 = vsel %vm260, %v2961, 0
    %v2968 = vsel %vm260, %v2962, 0
    %v2971 = vsel %vm260, %v2963, 0
    %2973 = vmatprep.subr.bf16.mxu0 %v876
    %2974 = vmatpush1.bf16.msra.mxu0 %v875
    %2975 = vmatprep.subr.bf16.mxu0 %v909
    %2976 = vmatpush1.bf16.msra.mxu0 %v906
    %2977 = vmatprep.subr.bf16.mxu0 0
    %2978 = vmatpush1.bf16.msra.mxu0 0
    %2979 = vmatprep.subr.bf16.mxu0 0
    %2980 = vmatpush1.bf16.msra.mxu0 0
    %2981 = vmatprep.subr.bf16.mxu0 0
    %2982 = vmatpush1.bf16.msra.mxu0 0
    %2983 = vmatprep.subr.bf16.mxu0 0
    %2984 = vmatpush1.bf16.msra.mxu0 0
    %2985 = vmatprep.subr.bf16.mxu0 0
    %2986 = vmatpush1.bf16.msra.mxu0 0
    %2987 = vmatprep.subr.bf16.mxu0 0
    %2988 = vmatpush1.bf16.msra.mxu0 0
    %2989 = vmatprep.subr.bf16.mxu0 0
    %2990 = vmatpush1.bf16.msra.mxu0 0
    %2991 = vmatprep.subr.bf16.mxu0 0
    %2992 = vmatpush1.bf16.msra.mxu0 0
    %2993 = vmatprep.subr.bf16.mxu0 0
    %2994 = vmatpush1.bf16.msra.mxu0 0
    %2995 = vmatprep.subr.bf16.mxu0 0
    %2996 = vmatpush1.bf16.msra.mxu0 0
    %2997 = vmatprep.subr.bf16.mxu0 0
    %2998 = vmatpush1.bf16.msra.mxu0 0
    %2999 = vmatprep.subr.bf16.mxu0 0
    %3000 = vmatpush1.bf16.msra.mxu0 0
    %3001 = vmatprep.subr.bf16.mxu0 0
    %3002 = vmatpush1.bf16.msra.mxu0 0
    %3003 = vmatprep.subr.bf16.mxu0 0
    %3004 = vmatpush1.bf16.msra.mxu0 0
    %3005 = vmatprep.mubr.bf16.mxu0 0
    %3006 = vmatmul.mubr.bf16.gmra.mrb[0].mxu0 %v2965
    %v3007 = vpop.f32.mrb[0].mxu0
    %v3008 = vadd.f32 0.0, %v3007
    %v3009 = vpop.f32.mrb[0].mxu0
    %v3010 = vadd.f32 0.0, %v3009
    %v3011 = vpop.f32.mrb[0].mxu0
    %v3012 = vadd.f32 0.0, %v3011
    %v3013 = vpop.f32.mrb[0].mxu0
    %v3014 = vadd.f32 0.0, %v3013
    %3015 = vmatprep.mubr.bf16.mxu0 0
    %3016 = vmatmul.mubr.bf16.gmra.mrb[0].mxu0 %v2968
    %v3017 = vpop.f32.mrb[0].mxu0
    %v3018 = vadd.f32 0.0, %v3017
    %v3019 = vpop.f32.mrb[0].mxu0
    %v3020 = vadd.f32 0.0, %v3019
    %v3021 = vpop.f32.mrb[0].mxu0
    %v3022 = vadd.f32 0.0, %v3021
    %v3023 = vpop.f32.mrb[0].mxu0
    %v3024 = vadd.f32 0.0, %v3023
    %3025 = vmatprep.mubr.bf16.mxu0 0
    %3026 = vmatmul.mubr.bf16.gmra.mrb[0].mxu0 %v2971
    %v3027 = vpop.f32.mrb[0].mxu0
    %v3028 = vadd.f32 0.0, %v3027
    %v3029 = vpop.f32.mrb[0].mxu0
    %v3030 = vadd.f32 0.0, %v3029
    %v3031 = vpop.f32.mrb[0].mxu0
    %v3032 = vadd.f32 0.0, %v3031
    %v3033 = vpop.f32.mrb[0].mxu0
    %v3034 = vadd.f32 0.0, %v3033
    %3035 = vdwg.mxu0
    %3036 = vmatprep.subr.bf16.mxu0 %v878
    %3037 = vmatpush1.bf16.msra.mxu0 %v877
    %3038 = vmatprep.subr.bf16.mxu0 %v915
    %3039 = vmatpush1.bf16.msra.mxu0 %v912
    %3040 = vmatprep.subr.bf16.mxu0 0
    %3041 = vmatpush1.bf16.msra.mxu0 0
    %3042 = vmatprep.subr.bf16.mxu0 0
    %3043 = vmatpush1.bf16.msra.mxu0 0
    %3044 = vmatprep.subr.bf16.mxu0 0
    %3045 = vmatpush1.bf16.msra.mxu0 0
    %3046 = vmatprep.subr.bf16.mxu0 0
    %3047 = vmatpush1.bf16.msra.mxu0 0
    %3048 = vmatprep.subr.bf16.mxu0 0
    %3049 = vmatpush1.bf16.msra.mxu0 0
    %3050 = vmatprep.subr.bf16.mxu0 0
    %3051 = vmatpush1.bf16.msra.mxu0 0
    %3052 = vmatprep.subr.bf16.mxu0 0
    %3053 = vmatpush1.bf16.msra.mxu0 0
    %3054 = vmatprep.subr.bf16.mxu0 0
    %3055 = vmatpush1.bf16.msra.mxu0 0
    %3056 = vmatprep.subr.bf16.mxu0 0
    %3057 = vmatpush1.bf16.msra.mxu0 0
    %3058 = vmatprep.subr.bf16.mxu0 0
    %3059 = vmatpush1.bf16.msra.mxu0 0
    %3060 = vmatprep.subr.bf16.mxu0 0
    %3061 = vmatpush1.bf16.msra.mxu0 0
    %3062 = vmatprep.subr.bf16.mxu0 0
    %3063 = vmatpush1.bf16.msra.mxu0 0
    %3064 = vmatprep.subr.bf16.mxu0 0
    %3065 = vmatpush1.bf16.msra.mxu0 0
    %3066 = vmatprep.subr.bf16.mxu0 0
    %3067 = vmatpush1.bf16.msra.mxu0 0
    %3068 = vmatprep.mubr.bf16.mxu0 0
    %3069 = vmatmul.mubr.bf16.gmra.mrb[0].mxu0 %v2965
    %v3070 = vpop.f32.mrb[0].mxu0
    %v3071 = vadd.f32 0.0, %v3070
    %v3072 = vpop.f32.mrb[0].mxu0
    %v3073 = vadd.f32 0.0, %v3072
    %v3074 = vpop.f32.mrb[0].mxu0
    %v3075 = vadd.f32 0.0, %v3074
    %v3076 = vpop.f32.mrb[0].mxu0
    %v3077 = vadd.f32 0.0, %v3076
    %3078 = vmatprep.mubr.bf16.mxu0 0
    %3079 = vmatmul.mubr.bf16.gmra.mrb[0].mxu0 %v2968
    %v3080 = vpop.f32.mrb[0].mxu0
    %v3081 = vadd.f32 0.0, %v3080
    %v3082 = vpop.f32.mrb[0].mxu0
    %v3083 = vadd.f32 0.0, %v3082
    %v3084 = vpop.f32.mrb[0].mxu0
    %v3085 = vadd.f32 0.0, %v3084
    %v3086 = vpop.f32.mrb[0].mxu0
    %v3087 = vadd.f32 0.0, %v3086
    %3088 = vmatprep.mubr.bf16.mxu0 0
    %3089 = vmatmul.mubr.bf16.gmra.mrb[0].mxu0 %v2971
    %v3090 = vpop.f32.mrb[0].mxu0
    %v3091 = vadd.f32 0.0, %v3090
    %v3092 = vpop.f32.mrb[0].mxu0
    %v3093 = vadd.f32 0.0, %v3092
    %v3094 = vpop.f32.mrb[0].mxu0
    %v3095 = vadd.f32 0.0, %v3094
    %v3096 = vpop.f32.mrb[0].mxu0
    %v3097 = vadd.f32 0.0, %v3096
    %3098 = vdwg.mxu0
    %3099 = vmatprep.subr.bf16.mxu0 %v880
    %3100 = vmatpush1.bf16.msra.mxu0 %v879
    %3101 = vmatprep.subr.bf16.mxu0 %v921
    %3102 = vmatpush1.bf16.msra.mxu0 %v918
    %3103 = vmatprep.subr.bf16.mxu0 0
    %3104 = vmatpush1.bf16.msra.mxu0 0
    %3105 = vmatprep.subr.bf16.mxu0 0
    %3106 = vmatpush1.bf16.msra.mxu0 0
    %3107 = vmatprep.subr.bf16.mxu0 0
    %3108 = vmatpush1.bf16.msra.mxu0 0
    %3109 = vmatprep.subr.bf16.mxu0 0
    %3110 = vmatpush1.bf16.msra.mxu0 0
    %3111 = vmatprep.subr.bf16.mxu0 0
    %3112 = vmatpush1.bf16.msra.mxu0 0
    %3113 = vmatprep.subr.bf16.mxu0 0
    %3114 = vmatpush1.bf16.msra.mxu0 0
    %3115 = vmatprep.subr.bf16.mxu0 0
    %3116 = vmatpush1.bf16.msra.mxu0 0
    %3117 = vmatprep.subr.bf16.mxu0 0
    %3118 = vmatpush1.bf16.msra.mxu0 0
    %3119 = vmatprep.subr.bf16.mxu0 0
    %3120 = vmatpush1.bf16.msra.mxu0 0
    %3121 = vmatprep.subr.bf16.mxu0 0
    %3122 = vmatpush1.bf16.msra.mxu0 0
    %3123 = vmatprep.subr.bf16.mxu0 0
    %3124 = vmatpush1.bf16.msra.mxu0 0
    %3125 = vmatprep.subr.bf16.mxu0 0
    %3126 = vmatpush1.bf16.msra.mxu0 0
    %3127 = vmatprep.subr.bf16.mxu0 0
    %3128 = vmatpush1.bf16.msra.mxu0 0
    %3129 = vmatprep.subr.bf16.mxu0 0
    %3130 = vmatpush1.bf16.msra.mxu0 0
    %3131 = vmatprep.mubr.bf16.mxu0 0
    %3132 = vmatmul.mubr.bf16.gmra.mrb[0].mxu0 %v2965
    %v3133 = vpop.f32.mrb[0].mxu0
    %v3134 = vadd.f32 0.0, %v3133
    %v3135 = vpop.f32.mrb[0].mxu0
    %v3136 = vadd.f32 0.0, %v3135
    %v3137 = vpop.f32.mrb[0].mxu0
    %v3138 = vadd.f32 0.0, %v3137
    %v3139 = vpop.f32.mrb[0].mxu0
    %v3140 = vadd.f32 0.0, %v3139
    %3141 = vmatprep.mubr.bf16.mxu0 0
    %3142 = vmatmul.mubr.bf16.gmra.mrb[0].mxu0 %v2968
    %v3143 = vpop.f32.mrb[0].mxu0
    %v3144 = vadd.f32 0.0, %v3143
    %v3145 = vpop.f32.mrb[0].mxu0
    %v3146 = vadd.f32 0.0, %v3145
    %v3147 = vpop.f32.mrb[0].mxu0
    %v3148 = vadd.f32 0.0, %v3147
    %v3149 = vpop.f32.mrb[0].mxu0
    %v3150 = vadd.f32 0.0, %v3149
    %3151 = vmatprep.mubr.bf16.mxu0 0
    %3152 = vmatmul.mubr.bf16.gmra.mrb[0].mxu0 %v2971
    %v3153 = vpop.f32.mrb[0].mxu0
    %v3154 = vadd.f32 0.0, %v3153
    %v3155 = vpop.f32.mrb[0].mxu0
    %v3156 = vadd.f32 0.0, %v3155
    %v3157 = vpop.f32.mrb[0].mxu0
    %v3158 = vadd.f32 0.0, %v3157
    %v3159 = vpop.f32.mrb[0].mxu0
    %v3160 = vadd.f32 0.0, %v3159
    %3161 = vdwg.mxu0
    %v3162 = vadd.f32 %v2807, %v3008
    %v3163 = vadd.f32 %v2809, %v3010
    %v3164 = vadd.f32 %v2870, %v3071
    %v3165 = vadd.f32 %v2872, %v3073
    %v3166 = vadd.f32 %v2933, %v3134
    %v3167 = vadd.f32 %v2935, %v3136
    %v3168 = vadd.f32 %v2811, %v3012
    %v3169 = vadd.f32 %v2813, %v3014
    %v3170 = vadd.f32 %v2874, %v3075
    %v3171 = vadd.f32 %v2876, %v3077
    %v3172 = vadd.f32 %v2937, %v3138
    %v3173 = vadd.f32 %v2939, %v3140
    %v3174 = vadd.f32 %v2817, %v3018
    %v3175 = vadd.f32 %v2819, %v3020
    %v3176 = vadd.f32 %v2880, %v3081
    %v3177 = vadd.f32 %v2882, %v3083
    %v3178 = vadd.f32 %v2943, %v3144
    %v3179 = vadd.f32 %v2945, %v3146
    %v3180 = vadd.f32 %v2821, %v3022
    %v3181 = vadd.f32 %v2823, %v3024
    %v3182 = vadd.f32 %v2884, %v3085
    %v3183 = vadd.f32 %v2886, %v3087
    %v3184 = vadd.f32 %v2947, %v3148
    %v3185 = vadd.f32 %v2949, %v3150
    %v3186 = vadd.f32 %v2827, %v3028
    %v3187 = vadd.f32 %v2829, %v3030
    %v3188 = vadd.f32 %v2890, %v3091
    %v3189 = vadd.f32 %v2892, %v3093
    %v3190 = vadd.f32 %v2953, %v3154
    %v3191 = vadd.f32 %v2955, %v3156
    %v3192 = vadd.f32 %v2831, %v3032
    %v3193 = vadd.f32 %v2833, %v3034
    %v3194 = vadd.f32 %v2894, %v3095
    %v3195 = vadd.f32 %v2896, %v3097
    %v3196 = vadd.f32 %v2957, %v3158
    %v3197 = vadd.f32 %v2959, %v3160
    %v3198 = vmax.f32 %v3162, %v3165
    %v3199 = vmax.f32 %v3163, %v3166
    %v3200 = vmax.f32 %v3164, %v3167
    %v3201 = vmax.f32 %v3168, %v3171
    %v3202 = vmax.f32 %v3169, %v3172
    %v3203 = vmax.f32 %v3170, %v3173
    %v3204 = vmax.f32 %v3174, %v3177
    %v3205 = vmax.f32 %v3175, %v3178
    %v3206 = vmax.f32 %v3176, %v3179
    %v3207 = vmax.f32 %v3180, %v3183
    %v3208 = vmax.f32 %v3181, %v3184
    %v3209 = vmax.f32 %v3182, %v3185
    %v3210 = vmax.f32 %v3186, %v3189
    %v3211 = vmax.f32 %v3187, %v3190
    %v3212 = vmax.f32 %v3188, %v3191
    %v3213 = vmax.f32 %v3192, %v3195
    %v3214 = vmax.f32 %v3193, %v3196
    %v3215 = vmax.f32 %v3194, %v3197
    %v3216 = vmax.f32 %v2565, %v3198
    %v3217 = vmax.f32 %v2566, %v3199
    %v3218 = vmax.f32 %v2567, %v3200
    %v3219 = vmax.f32 %v2568, %v3201
    %v3220 = vmax.f32 %v2569, %v3202
    %v3221 = vmax.f32 %v2570, %v3203
    %v3222 = vmax.f32 %v2571, %v3204
    %v3223 = vmax.f32 %v2572, %v3205
    %v3224 = vmax.f32 %v2573, %v3206
    %v3225 = vmax.f32 %v2574, %v3207
    %v3226 = vmax.f32 %v2575, %v3208
    %v3227 = vmax.f32 %v2576, %v3209
    %v3228 = vmax.f32 %v2577, %v3210
    %v3229 = vmax.f32 %v2578, %v3211
    %v3230 = vmax.f32 %v2579, %v3212
    %v3231 = vmax.f32 %v2580, %v3213
    %v3232 = vmax.f32 %v2581, %v3214
    %v3233 = vmax.f32 %v2582, %v3215
    %v3234 = vadd.f32 %v3216, %v1911
    %v3235 = vadd.f32 %v3217, %v1915
    %v3236 = vadd.f32 %v3218, %v1919
    %v3237 = vadd.f32 %v3219, %v1911
    %v3238 = vadd.f32 %v3220, %v1915
    %v3239 = vadd.f32 %v3221, %v1919
    %v3240 = vadd.f32 %v3222, %v1911
    %v3241 = vadd.f32 %v3223, %v1915
    %v3242 = vadd.f32 %v3224, %v1919
    %v3243 = vadd.f32 %v3225, %v1911
    %v3244 = vadd.f32 %v3226, %v1915
    %v3245 = vadd.f32 %v3227, %v1919
    %v3246 = vadd.f32 %v3228, %v1911
    %v3247 = vadd.f32 %v3229, %v1915
    %v3248 = vadd.f32 %v3230, %v1919
    %v3249 = vadd.f32 %v3231, %v1911
    %v3250 = vadd.f32 %v3232, %v1915
    %v3251 = vadd.f32 %v3233, %v1919
    %v3252 = vpack.c.bf16 %v3237, %v3234
    %v3253 = vpack.c.bf16 %v3238, %v3235
    %v3254 = vpack.c.bf16 %v3239, %v3236
    %v3255 = vpack.c.bf16 %v3243, %v3240
    %v3256 = vpack.c.bf16 %v3244, %v3241
    %v3257 = vpack.c.bf16 %v3245, %v3242
    %v3258 = vpack.c.bf16 %v3249, %v3246
    %v3259 = vpack.c.bf16 %v3250, %v3247
    %v3260 = vpack.c.bf16 %v3251, %v3248
    %v3261 = vld [vmem:[#allocation6] sm:$0xff]
    %v3262 = vld [vmem:[#allocation6 + $0x8] sm:$0xff]
    %v3263 = vld [vmem:[#allocation6 + $0x10] sm:$0xff]
    %v3264 = vld [vmem:[#allocation6 + $0x18] sm:$0xff]
    %v3265 = vld [vmem:[#allocation6 + $0x20] sm:$0xff]
    %v3266 = vld [vmem:[#allocation6 + $0x28] sm:$0xff]
    %v3267 = vld [vmem:[#allocation6 + $0x30] sm:$0xff]
    %v3268 = vld [vmem:[#allocation6 + $0x38] sm:$0xff]
    %v3269 = vld [vmem:[#allocation6 + $0x40] sm:$0xff]
    %v3270 = vld [vmem:[#allocation6 + $0x48] sm:$0xff]
    %v3271 = vld [vmem:[#allocation6 + $0x50] sm:$0xff]
    %v3272 = vld [vmem:[#allocation6 + $0x58] sm:$0xff]
    %v3273 = vld [vmem:[#allocation6 + $0x60] sm:$0xff]
    %v3274 = vld [vmem:[#allocation6 + $0x68] sm:$0xff]
    %v3275 = vld [vmem:[#allocation6 + $0x70] sm:$0xff]
    %v3276 = vld [vmem:[#allocation6 + $0x78] sm:$0xff]
    %v3277 = vld [vmem:[#allocation6 + $0x80] sm:$0xff]
    %v3278 = vld [vmem:[#allocation6 + $0x88] sm:$0xff]
    %v3279 = vld [vmem:[#allocation6 + $0x90] sm:$0xff]
    %v3280 = vld [vmem:[#allocation6 + $0x98] sm:$0xff]
    %v3281 = vld [vmem:[#allocation6 + $0xa0] sm:$0xff]
    %v3282 = vld [vmem:[#allocation6 + $0xa8] sm:$0xff]
    %v3283 = vld [vmem:[#allocation6 + $0xb0] sm:$0xff]
    %v3284 = vld [vmem:[#allocation6 + $0xb8] sm:$0xff]
    %v3285 = vld [vmem:[#allocation6 + $0xc0] sm:$0xff]
    %v3286 = vld [vmem:[#allocation6 + $0xc8] sm:$0xff]
    %v3287 = vld [vmem:[#allocation6 + $0xd0] sm:$0xff]
    %v3288 = vld [vmem:[#allocation6 + $0xd8] sm:$0xff]
    %v3289 = vld [vmem:[#allocation6 + $0xe0] sm:$0xff]
    %v3290 = vld [vmem:[#allocation6 + $0xe8] sm:$0xff]
    %v3291 = vld [vmem:[#allocation6 + $0xf0] sm:$0xff]
    %v3292 = vld [vmem:[#allocation6 + $0xf8] sm:$0xff]
    %v3293 = vld [vmem:[#allocation6 + $0x100] sm:$0xff]
    %v3294 = vld [vmem:[#allocation6 + $0x108] sm:$0xff]
    %v3295 = vld [vmem:[#allocation6 + $0x110] sm:$0xff]
    %v3296 = vld [vmem:[#allocation6 + $0x118] sm:$0xff]
    %v3297 = vld [vmem:[#allocation6 + $0x120] sm:$0xff]
    %v3298 = vld [vmem:[#allocation6 + $0x128] sm:$0xff]
    %v3299 = vld [vmem:[#allocation6 + $0x130] sm:$0xff]
    %v3300 = vld [vmem:[#allocation6 + $0x138] sm:$0xff]
    %v3301 = vld [vmem:[#allocation6 + $0x140] sm:$0xff]
    %v3302 = vld [vmem:[#allocation6 + $0x148] sm:$0xff]
    %v3303 = vld [vmem:[#allocation6 + $0x150] sm:$0xff]
    %v3304 = vld [vmem:[#allocation6 + $0x158] sm:$0xff]
    %v3305 = vld [vmem:[#allocation6 + $0x160] sm:$0xff]
    %v3306 = vld [vmem:[#allocation6 + $0x168] sm:$0xff]
    %v3307 = vld [vmem:[#allocation6 + $0x170] sm:$0xff]
    %v3308 = vld [vmem:[#allocation6 + $0x178] sm:$0xff]
    %v3309 = vld [vmem:[#allocation6 + $0x180] sm:$0xff]
    %v3310 = vld [vmem:[#allocation6 + $0x188] sm:$0xff]
    %v3311 = vld [vmem:[#allocation6 + $0x190] sm:$0xff]
    %v3312 = vld [vmem:[#allocation6 + $0x198] sm:$0xff]
    %v3313 = vld [vmem:[#allocation6 + $0x1a0] sm:$0xff]
    %v3314 = vld [vmem:[#allocation6 + $0x1a8] sm:$0xff]
    %v3315 = vld [vmem:[#allocation6 + $0x1b0] sm:$0xff]
    %v3316 = vld [vmem:[#allocation6 + $0x1b8] sm:$0xff]
    %v3317 = vld [vmem:[#allocation6 + $0x1c0] sm:$0xff]
    %v3318 = vld [vmem:[#allocation6 + $0x1c8] sm:$0xff]
    %v3319 = vld [vmem:[#allocation6 + $0x1d0] sm:$0xff]
    %v3320 = vld [vmem:[#allocation6 + $0x1d8] sm:$0xff]
    %v3321 = vld [vmem:[#allocation6 + $0x1e0] sm:$0xff]
    %v3322 = vld [vmem:[#allocation6 + $0x1e8] sm:$0xff]
    %v3323 = vld [vmem:[#allocation6 + $0x1f0] sm:$0xff]
    %v3324 = vld [vmem:[#allocation6 + $0x1f8] sm:$0xff]
    %v3325 = vld [vmem:[#allocation6 + $0x200] sm:$0xff]
    %v3326 = vld [vmem:[#allocation6 + $0x208] sm:$0xff]
    %v3327 = vld [vmem:[#allocation6 + $0x210] sm:$0xff]
    %v3328 = vld [vmem:[#allocation6 + $0x218] sm:$0xff]
    %v3329 = vld [vmem:[#allocation6 + $0x220] sm:$0xff]
    %v3330 = vld [vmem:[#allocation6 + $0x228] sm:$0xff]
    %v3331 = vld [vmem:[#allocation6 + $0x230] sm:$0xff]
    %v3332 = vld [vmem:[#allocation6 + $0x238] sm:$0xff]
    %v3333 = vld [vmem:[#allocation6 + $0x240] sm:$0xff]
    %v3334 = vld [vmem:[#allocation6 + $0x248] sm:$0xff]
    %v3335 = vld [vmem:[#allocation6 + $0x250] sm:$0xff]
    %v3336 = vld [vmem:[#allocation6 + $0x258] sm:$0xff]
    %v3337 = vld [vmem:[#allocation6 + $0x260] sm:$0xff]
    %v3338 = vld [vmem:[#allocation6 + $0x268] sm:$0xff]
    %v3339 = vld [vmem:[#allocation6 + $0x270] sm:$0xff]
    %v3340 = vld [vmem:[#allocation6 + $0x278] sm:$0xff]
    %v3341 = vld [vmem:[#allocation6 + $0x280] sm:$0xff]
    %v3342 = vld [vmem:[#allocation6 + $0x288] sm:$0xff]
    %v3343 = vld [vmem:[#allocation6 + $0x290] sm:$0xff]
    %v3344 = vld [vmem:[#allocation6 + $0x298] sm:$0xff]
    %v3345 = vld [vmem:[#allocation6 + $0x2a0] sm:$0xff]
    %v3346 = vld [vmem:[#allocation6 + $0x2a8] sm:$0xff]
    %v3347 = vld [vmem:[#allocation6 + $0x2b0] sm:$0xff]
    %v3348 = vld [vmem:[#allocation6 + $0x2b8] sm:$0xff]
    %v3349 = vld [vmem:[#allocation6 + $0x2c0] sm:$0xff]
    %v3350 = vld [vmem:[#allocation6 + $0x2c8] sm:$0xff]
    %v3351 = vld [vmem:[#allocation6 + $0x2d0] sm:$0xff]
    %v3352 = vld [vmem:[#allocation6 + $0x2d8] sm:$0xff]
    %v3353 = vld [vmem:[#allocation6 + $0x2e0] sm:$0xff]
    %v3354 = vld [vmem:[#allocation6 + $0x2e8] sm:$0xff]
    %v3355 = vld [vmem:[#allocation6 + $0x2f0] sm:$0xff]
    %v3356 = vld [vmem:[#allocation6 + $0x2f8] sm:$0xff]
    %s3357 = scalar_lea.vmem [#allocation6], 768
    %v3358 = vld [vmem:[%s3357] sm:$0xff]
    %v3359 = vld [vmem:[%s3357 + $0x8] sm:$0xff]
    %v3360 = vld [vmem:[%s3357 + $0x10] sm:$0xff]
    %v3361 = vld [vmem:[%s3357 + $0x18] sm:$0xff]
    %v3362 = vld [vmem:[%s3357 + $0x20] sm:$0xff]
    %v3363 = vld [vmem:[%s3357 + $0x28] sm:$0xff]
    %v3364 = vld [vmem:[%s3357 + $0x30] sm:$0xff]
    %v3365 = vld [vmem:[%s3357 + $0x38] sm:$0xff]
    %v3366 = vld [vmem:[%s3357 + $0x40] sm:$0xff]
    %v3367 = vld [vmem:[%s3357 + $0x48] sm:$0xff]
    %v3368 = vld [vmem:[%s3357 + $0x50] sm:$0xff]
    %v3369 = vld [vmem:[%s3357 + $0x58] sm:$0xff]
    %v3370 = vld [vmem:[%s3357 + $0x60] sm:$0xff]
    %v3371 = vld [vmem:[%s3357 + $0x68] sm:$0xff]
    %v3372 = vld [vmem:[%s3357 + $0x70] sm:$0xff]
    %v3373 = vld [vmem:[%s3357 + $0x78] sm:$0xff]
    %v3374 = vld [vmem:[%s3357 + $0x80] sm:$0xff]
    %v3375 = vld [vmem:[%s3357 + $0x88] sm:$0xff]
    %v3376 = vld [vmem:[%s3357 + $0x90] sm:$0xff]
    %v3377 = vld [vmem:[%s3357 + $0x98] sm:$0xff]
    %v3378 = vld [vmem:[%s3357 + $0xa0] sm:$0xff]
    %v3379 = vld [vmem:[%s3357 + $0xa8] sm:$0xff]
    %v3380 = vld [vmem:[%s3357 + $0xb0] sm:$0xff]
    %v3381 = vld [vmem:[%s3357 + $0xb8] sm:$0xff]
    %v3382 = vld [vmem:[%s3357 + $0xc0] sm:$0xff]
    %v3383 = vld [vmem:[%s3357 + $0xc8] sm:$0xff]
    %v3384 = vld [vmem:[%s3357 + $0xd0] sm:$0xff]
    %v3385 = vld [vmem:[%s3357 + $0xd8] sm:$0xff]
    %v3386 = vld [vmem:[%s3357 + $0xe0] sm:$0xff]
    %v3387 = vld [vmem:[%s3357 + $0xe8] sm:$0xff]
    %v3388 = vld [vmem:[%s3357 + $0xf0] sm:$0xff]
    %v3389 = vld [vmem:[%s3357 + $0xf8] sm:$0xff]
    %v3390 = vld [vmem:[%s3357 + $0x100] sm:$0xff]
    %v3391 = vld [vmem:[%s3357 + $0x108] sm:$0xff]
    %v3392 = vld [vmem:[%s3357 + $0x110] sm:$0xff]
    %v3393 = vld [vmem:[%s3357 + $0x118] sm:$0xff]
    %v3394 = vld [vmem:[%s3357 + $0x120] sm:$0xff]
    %v3395 = vld [vmem:[%s3357 + $0x128] sm:$0xff]
    %v3396 = vld [vmem:[%s3357 + $0x130] sm:$0xff]
    %v3397 = vld [vmem:[%s3357 + $0x138] sm:$0xff]
    %v3398 = vld [vmem:[%s3357 + $0x140] sm:$0xff]
    %v3399 = vld [vmem:[%s3357 + $0x148] sm:$0xff]
    %v3400 = vld [vmem:[%s3357 + $0x150] sm:$0xff]
    %v3401 = vld [vmem:[%s3357 + $0x158] sm:$0xff]
    %v3402 = vld [vmem:[%s3357 + $0x160] sm:$0xff]
    %v3403 = vld [vmem:[%s3357 + $0x168] sm:$0xff]
    %v3404 = vld [vmem:[%s3357 + $0x170] sm:$0xff]
    %v3405 = vld [vmem:[%s3357 + $0x178] sm:$0xff]
    %v3406 = vld [vmem:[%s3357 + $0x180] sm:$0xff]
    %v3407 = vld [vmem:[%s3357 + $0x188] sm:$0xff]
    %v3408 = vld [vmem:[%s3357 + $0x190] sm:$0xff]
    %v3409 = vld [vmem:[%s3357 + $0x198] sm:$0xff]
    %v3410 = vld [vmem:[%s3357 + $0x1a0] sm:$0xff]
    %v3411 = vld [vmem:[%s3357 + $0x1a8] sm:$0xff]
    %v3412 = vld [vmem:[%s3357 + $0x1b0] sm:$0xff]
    %v3413 = vld [vmem:[%s3357 + $0x1b8] sm:$0xff]
    %v3414 = vld [vmem:[%s3357 + $0x1c0] sm:$0xff]
    %v3415 = vld [vmem:[%s3357 + $0x1c8] sm:$0xff]
    %v3416 = vld [vmem:[%s3357 + $0x1d0] sm:$0xff]
    %v3417 = vld [vmem:[%s3357 + $0x1d8] sm:$0xff]
    %v3418 = vld [vmem:[%s3357 + $0x1e0] sm:$0xff]
    %v3419 = vld [vmem:[%s3357 + $0x1e8] sm:$0xff]
    %v3420 = vld [vmem:[%s3357 + $0x1f0] sm:$0xff]
    %v3421 = vld [vmem:[%s3357 + $0x1f8] sm:$0xff]
    %v3422 = vld [vmem:[%s3357 + $0x200] sm:$0xff]
    %v3423 = vld [vmem:[%s3357 + $0x208] sm:$0xff]
    %v3424 = vld [vmem:[%s3357 + $0x210] sm:$0xff]
    %v3425 = vld [vmem:[%s3357 + $0x218] sm:$0xff]
    %v3426 = vld [vmem:[%s3357 + $0x220] sm:$0xff]
    %v3427 = vld [vmem:[%s3357 + $0x228] sm:$0xff]
    %v3428 = vld [vmem:[%s3357 + $0x230] sm:$0xff]
    %v3429 = vld [vmem:[%s3357 + $0x238] sm:$0xff]
    %v3430 = vld [vmem:[%s3357 + $0x240] sm:$0xff]
    %v3431 = vld [vmem:[%s3357 + $0x248] sm:$0xff]
    %v3432 = vld [vmem:[%s3357 + $0x250] sm:$0xff]
    %v3433 = vld [vmem:[%s3357 + $0x258] sm:$0xff]
    %v3434 = vld [vmem:[%s3357 + $0x260] sm:$0xff]
    %v3435 = vld [vmem:[%s3357 + $0x268] sm:$0xff]
    %v3436 = vld [vmem:[%s3357 + $0x270] sm:$0xff]
    %v3437 = vld [vmem:[%s3357 + $0x278] sm:$0xff]
    %v3438 = vld [vmem:[%s3357 + $0x280] sm:$0xff]
    %v3439 = vld [vmem:[%s3357 + $0x288] sm:$0xff]
    %v3440 = vld [vmem:[%s3357 + $0x290] sm:$0xff]
    %v3441 = vld [vmem:[%s3357 + $0x298] sm:$0xff]
    %v3442 = vld [vmem:[%s3357 + $0x2a0] sm:$0xff]
    %v3443 = vld [vmem:[%s3357 + $0x2a8] sm:$0xff]
    %v3444 = vld [vmem:[%s3357 + $0x2b0] sm:$0xff]
    %v3445 = vld [vmem:[%s3357 + $0x2b8] sm:$0xff]
    %v3446 = vld [vmem:[%s3357 + $0x2c0] sm:$0xff]
    %v3447 = vld [vmem:[%s3357 + $0x2c8] sm:$0xff]
    %v3448 = vld [vmem:[%s3357 + $0x2d0] sm:$0xff]
    %v3449 = vld [vmem:[%s3357 + $0x2d8] sm:$0xff]
    %v3450 = vld [vmem:[%s3357 + $0x2e0] sm:$0xff]
    %v3451 = vld [vmem:[%s3357 + $0x2e8] sm:$0xff]
    %v3452 = vld [vmem:[%s3357 + $0x2f0] sm:$0xff]
    %v3453 = vld [vmem:[%s3357 + $0x2f8] sm:$0xff]
    %v3550 = vunpack.c.l.b16 %v3358
    %v3551 = vunpack.c.h.b16 %v3358
    %v3552 = vunpack.c.l.b16 %v3359
    %v3553 = vunpack.c.h.b16 %v3359
    %v3554 = vunpack.c.l.b16 %v3360
    %v3555 = vunpack.c.h.b16 %v3360
    %v3556 = vunpack.c.l.b16 %v3361
    %v3557 = vunpack.c.h.b16 %v3361
    %v3558 = vunpack.c.l.b16 %v3362
    %v3559 = vunpack.c.h.b16 %v3362
    %v3560 = vunpack.c.l.b16 %v3363
    %v3561 = vunpack.c.h.b16 %v3363
    %v3562 = vunpack.c.l.b16 %v3364
    %v3563 = vunpack.c.h.b16 %v3364
    %v3564 = vunpack.c.l.b16 %v3365
    %v3565 = vunpack.c.h.b16 %v3365
    %v3566 = vunpack.c.l.b16 %v3366
    %v3567 = vunpack.c.h.b16 %v3366
    %v3568 = vunpack.c.l.b16 %v3367
    %v3569 = vunpack.c.h.b16 %v3367
    %v3570 = vunpack.c.l.b16 %v3368
    %v3571 = vunpack.c.h.b16 %v3368
    %v3572 = vunpack.c.l.b16 %v3369
    %v3573 = vunpack.c.h.b16 %v3369
    %v3574 = vunpack.c.l.b16 %v3370
    %v3575 = vunpack.c.h.b16 %v3370
    %v3576 = vunpack.c.l.b16 %v3371
    %v3577 = vunpack.c.h.b16 %v3371
    %v3578 = vunpack.c.l.b16 %v3372
    %v3579 = vunpack.c.h.b16 %v3372
    %v3580 = vunpack.c.l.b16 %v3373
    %v3581 = vunpack.c.h.b16 %v3373
    %v3582 = vunpack.c.l.b16 %v3374
    %v3583 = vunpack.c.h.b16 %v3374
    %v3584 = vunpack.c.l.b16 %v3375
    %v3585 = vunpack.c.h.b16 %v3375
    %v3586 = vunpack.c.l.b16 %v3376
    %v3587 = vunpack.c.h.b16 %v3376
    %v3588 = vunpack.c.l.b16 %v3377
    %v3589 = vunpack.c.h.b16 %v3377
    %v3590 = vunpack.c.l.b16 %v3378
    %v3591 = vunpack.c.h.b16 %v3378
    %v3592 = vunpack.c.l.b16 %v3379
    %v3593 = vunpack.c.h.b16 %v3379
    %v3594 = vunpack.c.l.b16 %v3380
    %v3595 = vunpack.c.h.b16 %v3380
    %v3596 = vunpack.c.l.b16 %v3381
    %v3597 = vunpack.c.h.b16 %v3381
    %v3598 = vunpack.c.l.b16 %v3382
    %v3599 = vunpack.c.h.b16 %v3382
    %v3600 = vunpack.c.l.b16 %v3383
    %v3601 = vunpack.c.h.b16 %v3383
    %v3602 = vunpack.c.l.b16 %v3384
    %v3603 = vunpack.c.h.b16 %v3384
    %v3604 = vunpack.c.l.b16 %v3385
    %v3605 = vunpack.c.h.b16 %v3385
    %v3606 = vunpack.c.l.b16 %v3386
    %v3607 = vunpack.c.h.b16 %v3386
    %v3608 = vunpack.c.l.b16 %v3387
    %v3609 = vunpack.c.h.b16 %v3387
    %v3610 = vunpack.c.l.b16 %v3388
    %v3611 = vunpack.c.h.b16 %v3388
    %v3612 = vunpack.c.l.b16 %v3389
    %v3613 = vunpack.c.h.b16 %v3389
    %v3614 = vunpack.c.l.b16 %v3390
    %v3615 = vunpack.c.h.b16 %v3390
    %v3616 = vunpack.c.l.b16 %v3391
    %v3617 = vunpack.c.h.b16 %v3391
    %v3618 = vunpack.c.l.b16 %v3392
    %v3619 = vunpack.c.h.b16 %v3392
    %v3620 = vunpack.c.l.b16 %v3393
    %v3621 = vunpack.c.h.b16 %v3393
    %v3622 = vunpack.c.l.b16 %v3394
    %v3623 = vunpack.c.h.b16 %v3394
    %v3624 = vunpack.c.l.b16 %v3395
    %v3625 = vunpack.c.h.b16 %v3395
    %v3626 = vunpack.c.l.b16 %v3396
    %v3627 = vunpack.c.h.b16 %v3396
    %v3628 = vunpack.c.l.b16 %v3397
    %v3629 = vunpack.c.h.b16 %v3397
    %v3630 = vunpack.c.l.b16 %v3398
    %v3631 = vunpack.c.h.b16 %v3398
    %v3632 = vunpack.c.l.b16 %v3399
    %v3633 = vunpack.c.h.b16 %v3399
    %v3634 = vunpack.c.l.b16 %v3400
    %v3635 = vunpack.c.h.b16 %v3400
    %v3636 = vunpack.c.l.b16 %v3401
    %v3637 = vunpack.c.h.b16 %v3401
    %v3638 = vunpack.c.l.b16 %v3402
    %v3639 = vunpack.c.h.b16 %v3402
    %v3640 = vunpack.c.l.b16 %v3403
    %v3641 = vunpack.c.h.b16 %v3403
    %v3642 = vunpack.c.l.b16 %v3404
    %v3643 = vunpack.c.h.b16 %v3404
    %v3644 = vunpack.c.l.b16 %v3405
    %v3645 = vunpack.c.h.b16 %v3405
    %v3646 = vunpack.c.l.b16 %v3406
    %v3647 = vunpack.c.h.b16 %v3406
    %v3648 = vunpack.c.l.b16 %v3407
    %v3649 = vunpack.c.h.b16 %v3407
    %v3650 = vunpack.c.l.b16 %v3408
    %v3651 = vunpack.c.h.b16 %v3408
    %v3652 = vunpack.c.l.b16 %v3409
    %v3653 = vunpack.c.h.b16 %v3409
    %v3654 = vunpack.c.l.b16 %v3410
    %v3655 = vunpack.c.h.b16 %v3410
    %v3656 = vunpack.c.l.b16 %v3411
    %v3657 = vunpack.c.h.b16 %v3411
    %v3658 = vunpack.c.l.b16 %v3412
    %v3659 = vunpack.c.h.b16 %v3412
    %v3660 = vunpack.c.l.b16 %v3413
    %v3661 = vunpack.c.h.b16 %v3413
    %v3662 = vunpack.c.l.b16 %v3414
    %v3663 = vunpack.c.h.b16 %v3414
    %v3664 = vunpack.c.l.b16 %v3415
    %v3665 = vunpack.c.h.b16 %v3415
    %v3666 = vunpack.c.l.b16 %v3416
    %v3667 = vunpack.c.h.b16 %v3416
    %v3668 = vunpack.c.l.b16 %v3417
    %v3669 = vunpack.c.h.b16 %v3417
    %v3670 = vunpack.c.l.b16 %v3418
    %v3671 = vunpack.c.h.b16 %v3418
    %v3672 = vunpack.c.l.b16 %v3419
    %v3673 = vunpack.c.h.b16 %v3419
    %v3674 = vunpack.c.l.b16 %v3420
    %v3675 = vunpack.c.h.b16 %v3420
    %v3676 = vunpack.c.l.b16 %v3421
    %v3677 = vunpack.c.h.b16 %v3421
    %v3678 = vunpack.c.l.b16 %v3422
    %v3679 = vunpack.c.h.b16 %v3422
    %v3680 = vunpack.c.l.b16 %v3423
    %v3681 = vunpack.c.h.b16 %v3423
    %v3682 = vunpack.c.l.b16 %v3424
    %v3683 = vunpack.c.h.b16 %v3424
    %v3684 = vunpack.c.l.b16 %v3425
    %v3685 = vunpack.c.h.b16 %v3425
    %v3686 = vunpack.c.l.b16 %v3426
    %v3687 = vunpack.c.h.b16 %v3426
    %v3688 = vunpack.c.l.b16 %v3427
    %v3689 = vunpack.c.h.b16 %v3427
    %v3690 = vunpack.c.l.b16 %v3428
    %v3691 = vunpack.c.h.b16 %v3428
    %v3692 = vunpack.c.l.b16 %v3429
    %v3693 = vunpack.c.h.b16 %v3429
    %v3694 = vunpack.c.l.b16 %v3430
    %v3695 = vunpack.c.h.b16 %v3430
    %v3696 = vunpack.c.l.b16 %v3431
    %v3697 = vunpack.c.h.b16 %v3431
    %v3698 = vunpack.c.l.b16 %v3432
    %v3699 = vunpack.c.h.b16 %v3432
    %v3700 = vunpack.c.l.b16 %v3433
    %v3701 = vunpack.c.h.b16 %v3433
    %v3702 = vunpack.c.l.b16 %v3434
    %v3703 = vunpack.c.h.b16 %v3434
    %v3704 = vunpack.c.l.b16 %v3435
    %v3705 = vunpack.c.h.b16 %v3435
    %v3706 = vunpack.c.l.b16 %v3436
    %v3707 = vunpack.c.h.b16 %v3436
    %v3708 = vunpack.c.l.b16 %v3437
    %v3709 = vunpack.c.h.b16 %v3437
    %v3710 = vunpack.c.l.b16 %v3438
    %v3711 = vunpack.c.h.b16 %v3438
    %v3712 = vunpack.c.l.b16 %v3439
    %v3713 = vunpack.c.h.b16 %v3439
    %v3714 = vunpack.c.l.b16 %v3440
    %v3715 = vunpack.c.h.b16 %v3440
    %v3716 = vunpack.c.l.b16 %v3441
    %v3717 = vunpack.c.h.b16 %v3441
    %v3718 = vunpack.c.l.b16 %v3442
    %v3719 = vunpack.c.h.b16 %v3442
    %v3720 = vunpack.c.l.b16 %v3443
    %v3721 = vunpack.c.h.b16 %v3443
    %v3722 = vunpack.c.l.b16 %v3444
    %v3723 = vunpack.c.h.b16 %v3444
    %v3724 = vunpack.c.l.b16 %v3445
    %v3725 = vunpack.c.h.b16 %v3445
    %v3726 = vunpack.c.l.b16 %v3446
    %v3727 = vunpack.c.h.b16 %v3446
    %v3728 = vunpack.c.l.b16 %v3447
    %v3729 = vunpack.c.h.b16 %v3447
    %v3730 = vunpack.c.l.b16 %v3448
    %v3731 = vunpack.c.h.b16 %v3448
    %v3732 = vunpack.c.l.b16 %v3449
    %v3733 = vunpack.c.h.b16 %v3449
    %v3734 = vunpack.c.l.b16 %v3450
    %v3735 = vunpack.c.h.b16 %v3450
    %v3736 = vunpack.c.l.b16 %v3451
    %v3737 = vunpack.c.h.b16 %v3451
    %v3738 = vunpack.c.l.b16 %v3452
    %v3739 = vunpack.c.h.b16 %v3452
    %v3740 = vunpack.c.l.b16 %v3453
    %v3741 = vunpack.c.h.b16 %v3453
    %v3742 = vpack.c.b16 %v3554, %v3550
    %v3743 = vpack.c.b16 %v3555, %v3551
    %v3744 = vpack.c.b16 %v3556, %v3552
    %v3745 = vpack.c.b16 %v3557, %v3553
    %v3746 = vpack.c.b16 %v3562, %v3558
    %v3747 = vpack.c.b16 %v3563, %v3559
    %v3748 = vpack.c.b16 %v3564, %v3560
    %v3749 = vpack.c.b16 %v3565, %v3561
    %v3750 = vpack.c.b16 %v3570, %v3566
    %v3751 = vpack.c.b16 %v3571, %v3567
    %v3752 = vpack.c.b16 %v3572, %v3568
    %v3753 = vpack.c.b16 %v3573, %v3569
    %v3754 = vpack.c.b16 %v3578, %v3574
    %v3755 = vpack.c.b16 %v3579, %v3575
    %v3756 = vpack.c.b16 %v3580, %v3576
    %v3757 = vpack.c.b16 %v3581, %v3577
    %v3758 = vpack.c.b16 %v3586, %v3582
    %v3759 = vpack.c.b16 %v3587, %v3583
    %v3760 = vpack.c.b16 %v3588, %v3584
    %v3761 = vpack.c.b16 %v3589, %v3585
    %v3762 = vpack.c.b16 %v3594, %v3590
    %v3763 = vpack.c.b16 %v3595, %v3591
    %v3764 = vpack.c.b16 %v3596, %v3592
    %v3765 = vpack.c.b16 %v3597, %v3593
    %v3766 = vpack.c.b16 %v3602, %v3598
    %v3767 = vpack.c.b16 %v3603, %v3599
    %v3768 = vpack.c.b16 %v3604, %v3600
    %v3769 = vpack.c.b16 %v3605, %v3601
    %v3770 = vpack.c.b16 %v3610, %v3606
    %v3771 = vpack.c.b16 %v3611, %v3607
    %v3772 = vpack.c.b16 %v3612, %v3608
    %v3773 = vpack.c.b16 %v3613, %v3609
    %v3774 = vpack.c.b16 %v3618, %v3614
    %v3775 = vpack.c.b16 %v3619, %v3615
    %v3776 = vpack.c.b16 %v3620, %v3616
    %v3777 = vpack.c.b16 %v3621, %v3617
    %v3778 = vpack.c.b16 %v3626, %v3622
    %v3779 = vpack.c.b16 %v3627, %v3623
    %v3780 = vpack.c.b16 %v3628, %v3624
    %v3781 = vpack.c.b16 %v3629, %v3625
    %v3782 = vpack.c.b16 %v3634, %v3630
    %v3783 = vpack.c.b16 %v3635, %v3631
    %v3784 = vpack.c.b16 %v3636, %v3632
    %v3785 = vpack.c.b16 %v3637, %v3633
    %v3786 = vpack.c.b16 %v3642, %v3638
    %v3787 = vpack.c.b16 %v3643, %v3639
    %v3788 = vpack.c.b16 %v3644, %v3640
    %v3789 = vpack.c.b16 %v3645, %v3641
    %v3790 = vpack.c.b16 %v3650, %v3646
    %v3791 = vpack.c.b16 %v3651, %v3647
    %v3792 = vpack.c.b16 %v3652, %v3648
    %v3793 = vpack.c.b16 %v3653, %v3649
    %v3794 = vpack.c.b16 %v3658, %v3654
    %v3795 = vpack.c.b16 %v3659, %v3655
    %v3796 = vpack.c.b16 %v3660, %v3656
    %v3797 = vpack.c.b16 %v3661, %v3657
    %v3798 = vpack.c.b16 %v3666, %v3662
    %v3799 = vpack.c.b16 %v3667, %v3663
    %v3800 = vpack.c.b16 %v3668, %v3664
    %v3801 = vpack.c.b16 %v3669, %v3665
    %v3802 = vpack.c.b16 %v3674, %v3670
    %v3803 = vpack.c.b16 %v3675, %v3671
    %v3804 = vpack.c.b16 %v3676, %v3672
    %v3805 = vpack.c.b16 %v3677, %v3673
    %v3806 = vpack.c.b16 %v3682, %v3678
    %v3807 = vpack.c.b16 %v3683, %v3679
    %v3808 = vpack.c.b16 %v3684, %v3680
    %v3809 = vpack.c.b16 %v3685, %v3681
    %v3810 = vpack.c.b16 %v3690, %v3686
    %v3811 = vpack.c.b16 %v3691, %v3687
    %v3812 = vpack.c.b16 %v3692, %v3688
    %v3813 = vpack.c.b16 %v3693, %v3689
    %v3814 = vpack.c.b16 %v3698, %v3694
    %v3815 = vpack.c.b16 %v3699, %v3695
    %v3816 = vpack.c.b16 %v3700, %v3696
    %v3817 = vpack.c.b16 %v3701, %v3697
    %v3818 = vpack.c.b16 %v3706, %v3702
    %v3819 = vpack.c.b16 %v3707, %v3703
    %v3820 = vpack.c.b16 %v3708, %v3704
    %v3821 = vpack.c.b16 %v3709, %v3705
    %v3822 = vpack.c.b16 %v3714, %v3710
    %v3823 = vpack.c.b16 %v3715, %v3711
    %v3824 = vpack.c.b16 %v3716, %v3712
    %v3825 = vpack.c.b16 %v3717, %v3713
    %v3826 = vpack.c.b16 %v3722, %v3718
    %v3827 = vpack.c.b16 %v3723, %v3719
    %v3828 = vpack.c.b16 %v3724, %v3720
    %v3829 = vpack.c.b16 %v3725, %v3721
    %v3830 = vpack.c.b16 %v3730, %v3726
    %v3831 = vpack.c.b16 %v3731, %v3727
    %v3832 = vpack.c.b16 %v3732, %v3728
    %v3833 = vpack.c.b16 %v3733, %v3729
    %v3834 = vpack.c.b16 %v3738, %v3734
    %v3835 = vpack.c.b16 %v3739, %v3735
    %v3836 = vpack.c.b16 %v3740, %v3736
    %v3837 = vpack.c.b16 %v3741, %v3737
    %3934 = vmatprep.subr.bf16.mxu0 %v3743
    %3935 = vmatpush1.bf16.msra.mxu0 %v3742
    %3936 = vmatprep.subr.bf16.mxu0 %v3747
    %3937 = vmatpush1.bf16.msra.mxu0 %v3746
    %3938 = vmatprep.subr.bf16.mxu0 %v3751
    %3939 = vmatpush1.bf16.msra.mxu0 %v3750
    %3940 = vmatprep.subr.bf16.mxu0 %v3755
    %3941 = vmatpush1.bf16.msra.mxu0 %v3754
    %3942 = vmatprep.subr.bf16.mxu0 %v3759
    %3943 = vmatpush1.bf16.msra.mxu0 %v3758
    %3944 = vmatprep.subr.bf16.mxu0 %v3763
    %3945 = vmatpush1.bf16.msra.mxu0 %v3762
    %3946 = vmatprep.subr.bf16.mxu0 %v3767
    %3947 = vmatpush1.bf16.msra.mxu0 %v3766
    %3948 = vmatprep.subr.bf16.mxu0 %v3771
    %3949 = vmatpush1.bf16.msra.mxu0 %v3770
    %3950 = vmatprep.subr.bf16.mxu0 %v3775
    %3951 = vmatpush1.bf16.msra.mxu0 %v3774
    %3952 = vmatprep.subr.bf16.mxu0 %v3779
    %3953 = vmatpush1.bf16.msra.mxu0 %v3778
    %3954 = vmatprep.subr.bf16.mxu0 %v3783
    %3955 = vmatpush1.bf16.msra.mxu0 %v3782
    %3956 = vmatprep.subr.bf16.mxu0 %v3787
    %3957 = vmatpush1.bf16.msra.mxu0 %v3786
    %3958 = vmatprep.subr.bf16.mxu0 %v3791
    %3959 = vmatpush1.bf16.msra.mxu0 %v3790
    %3960 = vmatprep.subr.bf16.mxu0 %v3795
    %3961 = vmatpush1.bf16.msra.mxu0 %v3794
    %3962 = vmatprep.subr.bf16.mxu0 %v3799
    %3963 = vmatpush1.bf16.msra.mxu0 %v3798
    %3964 = vmatprep.subr.bf16.mxu0 %v3803
    %3965 = vmatpush1.bf16.msra.mxu0 %v3802
    %3966 = vmatprep.mubr.bf16.mxu0 %v3253
    %3967 = vmatmul.mubr.bf16.gmra.mrb[0].mxu0 %v3252
    %v3968 = vpop.f32.mrb[0].mxu0
    %v3969 = vadd.f32 0.0, %v3968
    %v3970 = vpop.f32.mrb[0].mxu0
    %v3971 = vadd.f32 0.0, %v3970
    %v3972 = vpop.f32.mrb[0].mxu0
    %v3973 = vadd.f32 0.0, %v3972
    %v3974 = vpop.f32.mrb[0].mxu0
    %v3975 = vadd.f32 0.0, %v3974
    %3976 = vmatprep.mubr.bf16.mxu0 %v3256
    %3977 = vmatmul.mubr.bf16.gmra.mrb[0].mxu0 %v3255
    %v3978 = vpop.f32.mrb[0].mxu0
    %v3979 = vadd.f32 0.0, %v3978
    %v3980 = vpop.f32.mrb[0].mxu0
    %v3981 = vadd.f32 0.0, %v3980
    %v3982 = vpop.f32.mrb[0].mxu0
    %v3983 = vadd.f32 0.0, %v3982
    %v3984 = vpop.f32.mrb[0].mxu0
    %v3985 = vadd.f32 0.0, %v3984
    %3986 = vmatprep.mubr.bf16.mxu0 %v3259
    %3987 = vmatmul.mubr.bf16.gmra.mrb[0].mxu0 %v3258
    %v3988 = vpop.f32.mrb[0].mxu0
    %v3989 = vadd.f32 0.0, %v3988
    %v3990 = vpop.f32.mrb[0].mxu0
    %v3991 = vadd.f32 0.0, %v3990
    %v3992 = vpop.f32.mrb[0].mxu0
    %v3993 = vpop.f32.mrb[0].mxu0
    %3994 = vdwg.mxu0
    %3995 = vmatprep.subr.bf16.mxu0 %v3807
    %3996 = vmatpush1.bf16.msra.mxu0 %v3806
    %3997 = vmatprep.subr.bf16.mxu0 %v3811
    %3998 = vmatpush1.bf16.msra.mxu0 %v3810
    %3999 = vmatprep.subr.bf16.mxu0 %v3815
    %4000 = vmatpush1.bf16.msra.mxu0 %v3814
    %4001 = vmatprep.subr.bf16.mxu0 %v3819
    %4002 = vmatpush1.bf16.msra.mxu0 %v3818
    %4003 = vmatprep.subr.bf16.mxu0 %v3823
    %4004 = vmatpush1.bf16.msra.mxu0 %v3822
    %4005 = vmatprep.subr.bf16.mxu0 %v3827
    %4006 = vmatpush1.bf16.msra.mxu0 %v3826
    %4007 = vmatprep.subr.bf16.mxu0 %v3831
    %4008 = vmatpush1.bf16.msra.mxu0 %v3830
    %4009 = vmatprep.subr.bf16.mxu0 %v3835
    %4010 = vmatpush1.bf16.msra.mxu0 %v3834
    %4011 = vmatprep.subr.bf16.mxu0 0
    %4012 = vmatpush1.bf16.msra.mxu0 0
    %4013 = vmatprep.subr.bf16.mxu0 0
    %4014 = vmatpush1.bf16.msra.mxu0 0
    %4015 = vmatprep.subr.bf16.mxu0 0
    %4016 = vmatpush1.bf16.msra.mxu0 0
    %4017 = vmatprep.subr.bf16.mxu0 0
    %4018 = vmatpush1.bf16.msra.mxu0 0
    %4019 = vmatprep.subr.bf16.mxu0 0
    %4020 = vmatpush1.bf16.msra.mxu0 0
    %4021 = vmatprep.subr.bf16.mxu0 0
    %4022 = vmatpush1.bf16.msra.mxu0 0
    %4023 = vmatprep.subr.bf16.mxu0 0
    %4024 = vmatpush1.bf16.msra.mxu0 0
    %4025 = vmatprep.subr.bf16.mxu0 0
    %4026 = vmatpush1.bf16.msra.mxu0 0
    %4027 = vmatprep.mubr.bf16.mxu0 0
    %4028 = vmatmul.mubr.bf16.gmra.mrb[0].mxu0 %v3254
    %v4029 = vpop.f32.mrb[0].mxu0
    %v4030 = vadd.f32 %v3969, %v4029
    %v4031 = vpop.f32.mrb[0].mxu0
    %v4032 = vadd.f32 %v3971, %v4031
    %v4033 = vpop.f32.mrb[0].mxu0
    %v4034 = vadd.f32 %v3973, %v4033
    %v4035 = vpop.f32.mrb[0].mxu0
    %v4036 = vadd.f32 %v3975, %v4035
    %4037 = vmatprep.mubr.bf16.mxu0 0
    %4038 = vmatmul.mubr.bf16.gmra.mrb[0].mxu0 %v3257
    %v4039 = vpop.f32.mrb[0].mxu0
    %v4040 = vadd.f32 %v3979, %v4039
    %v4041 = vpop.f32.mrb[0].mxu0
    %v4042 = vadd.f32 %v3981, %v4041
    %v4043 = vpop.f32.mrb[0].mxu0
    %v4044 = vadd.f32 %v3983, %v4043
    %v4045 = vpop.f32.mrb[0].mxu0
    %v4046 = vadd.f32 %v3985, %v4045
    %4047 = vmatprep.mubr.bf16.mxu0 0
    %4048 = vmatmul.mubr.bf16.gmra.mrb[0].mxu0 %v3260
    %v4049 = vpop.f32.mrb[0].mxu0
    %v4050 = vadd.f32 %v3989, %v4049
    %v4051 = vpop.f32.mrb[0].mxu0
    %v4052 = vadd.f32 %v3991, %v4051
    %v4053 = vpop.f32.mrb[0].mxu0
    %v4054 = vpop.f32.mrb[0].mxu0
    %4055 = vdwg.mxu0
    %4056 = vmatprep.subr.bf16.mxu0 %v3745
    %4057 = vmatpush1.bf16.msra.mxu0 %v3744
    %4058 = vmatprep.subr.bf16.mxu0 %v3749
    %4059 = vmatpush1.bf16.msra.mxu0 %v3748
    %4060 = vmatprep.subr.bf16.mxu0 %v3753
    %4061 = vmatpush1.bf16.msra.mxu0 %v3752
    %4062 = vmatprep.subr.bf16.mxu0 %v3757
    %4063 = vmatpush1.bf16.msra.mxu0 %v3756
    %4064 = vmatprep.subr.bf16.mxu0 %v3761
    %4065 = vmatpush1.bf16.msra.mxu0 %v3760
    %4066 = vmatprep.subr.bf16.mxu0 %v3765
    %4067 = vmatpush1.bf16.msra.mxu0 %v3764
    %4068 = vmatprep.subr.bf16.mxu0 %v3769
    %4069 = vmatpush1.bf16.msra.mxu0 %v3768
    %4070 = vmatprep.subr.bf16.mxu0 %v3773
    %4071 = vmatpush1.bf16.msra.mxu0 %v3772
    %4072 = vmatprep.subr.bf16.mxu0 %v3777
    %4073 = vmatpush1.bf16.msra.mxu0 %v3776
    %4074 = vmatprep.subr.bf16.mxu0 %v3781
    %4075 = vmatpush1.bf16.msra.mxu0 %v3780
    %4076 = vmatprep.subr.bf16.mxu0 %v3785
    %4077 = vmatpush1.bf16.msra.mxu0 %v3784
    %4078 = vmatprep.subr.bf16.mxu0 %v3789
    %4079 = vmatpush1.bf16.msra.mxu0 %v3788
    %4080 = vmatprep.subr.bf16.mxu0 %v3793
    %4081 = vmatpush1.bf16.msra.mxu0 %v3792
    %4082 = vmatprep.subr.bf16.mxu0 %v3797
    %4083 = vmatpush1.bf16.msra.mxu0 %v3796
    %4084 = vmatprep.subr.bf16.mxu0 %v3801
    %4085 = vmatpush1.bf16.msra.mxu0 %v3800
    %4086 = vmatprep.subr.bf16.mxu0 %v3805
    %4087 = vmatpush1.bf16.msra.mxu0 %v3804
    %4088 = vmatprep.mubr.bf16.mxu0 %v3253
    %4089 = vmatmul.mubr.bf16.gmra.mrb[0].mxu0 %v3252
    %v4090 = vpop.f32.mrb[0].mxu0
    %v4091 = vadd.f32 0.0, %v4090
    %v4092 = vpop.f32.mrb[0].mxu0
    %v4093 = vadd.f32 0.0, %v4092
    %v4094 = vpop.f32.mrb[0].mxu0
    %v4095 = vadd.f32 0.0, %v4094
    %v4096 = vpop.f32.mrb[0].mxu0
    %v4097 = vadd.f32 0.0, %v4096
    %4098 = vmatprep.mubr.bf16.mxu0 %v3256
    %4099 = vmatmul.mubr.bf16.gmra.mrb[0].mxu0 %v3255
    %v4100 = vpop.f32.mrb[0].mxu0
    %v4101 = vadd.f32 0.0, %v4100
    %v4102 = vpop.f32.mrb[0].mxu0
    %v4103 = vadd.f32 0.0, %v4102
    %v4104 = vpop.f32.mrb[0].mxu0
    %v4105 = vadd.f32 0.0, %v4104
    %v4106 = vpop.f32.mrb[0].mxu0
    %v4107 = vadd.f32 0.0, %v4106
    %4108 = vmatprep.mubr.bf16.mxu0 %v3259
    %4109 = vmatmul.mubr.bf16.gmra.mrb[0].mxu0 %v3258
    %v4110 = vpop.f32.mrb[0].mxu0
    %v4111 = vadd.f32 0.0, %v4110
    %v4112 = vpop.f32.mrb[0].mxu0
    %v4113 = vadd.f32 0.0, %v4112
    %v4114 = vpop.f32.mrb[0].mxu0
    %v4115 = vpop.f32.mrb[0].mxu0
    %4116 = vdwg.mxu0
    %4117 = vmatprep.subr.bf16.mxu0 %v3809
    %4118 = vmatpush1.bf16.msra.mxu0 %v3808
    %4119 = vmatprep.subr.bf16.mxu0 %v3813
    %4120 = vmatpush1.bf16.msra.mxu0 %v3812
    %4121 = vmatprep.subr.bf16.mxu0 %v3817
    %4122 = vmatpush1.bf16.msra.mxu0 %v3816
    %4123 = vmatprep.subr.bf16.mxu0 %v3821
    %4124 = vmatpush1.bf16.msra.mxu0 %v3820
    %4125 = vmatprep.subr.bf16.mxu0 %v3825
    %4126 = vmatpush1.bf16.msra.mxu0 %v3824
    %4127 = vmatprep.subr.bf16.mxu0 %v3829
    %4128 = vmatpush1.bf16.msra.mxu0 %v3828
    %4129 = vmatprep.subr.bf16.mxu0 %v3833
    %4130 = vmatpush1.bf16.msra.mxu0 %v3832
    %4131 = vmatprep.subr.bf16.mxu0 %v3837
    %4132 = vmatpush1.bf16.msra.mxu0 %v3836
    %4133 = vmatprep.subr.bf16.mxu0 0
    %4134 = vmatpush1.bf16.msra.mxu0 0
    %4135 = vmatprep.subr.bf16.mxu0 0
    %4136 = vmatpush1.bf16.msra.mxu0 0
    %4137 = vmatprep.subr.bf16.mxu0 0
    %4138 = vmatpush1.bf16.msra.mxu0 0
    %4139 = vmatprep.subr.bf16.mxu0 0
    %4140 = vmatpush1.bf16.msra.mxu0 0
    %4141 = vmatprep.subr.bf16.mxu0 0
    %4142 = vmatpush1.bf16.msra.mxu0 0
    %4143 = vmatprep.subr.bf16.mxu0 0
    %4144 = vmatpush1.bf16.msra.mxu0 0
    %4145 = vmatprep.subr.bf16.mxu0 0
    %4146 = vmatpush1.bf16.msra.mxu0 0
    %4147 = vmatprep.subr.bf16.mxu0 0
    %4148 = vmatpush1.bf16.msra.mxu0 0
    %4149 = vmatprep.mubr.bf16.mxu0 0
    %4150 = vmatmul.mubr.bf16.gmra.mrb[0].mxu0 %v3254
    %v4151 = vpop.f32.mrb[0].mxu0
    %v4152 = vadd.f32 %v4091, %v4151
    %v4153 = vpop.f32.mrb[0].mxu0
    %v4154 = vadd.f32 %v4093, %v4153
    %v4155 = vpop.f32.mrb[0].mxu0
    %v4156 = vadd.f32 %v4095, %v4155
    %v4157 = vpop.f32.mrb[0].mxu0
    %v4158 = vadd.f32 %v4097, %v4157
    %4159 = vmatprep.mubr.bf16.mxu0 0
    %4160 = vmatmul.mubr.bf16.gmra.mrb[0].mxu0 %v3257
    %v4161 = vpop.f32.mrb[0].mxu0
    %v4162 = vadd.f32 %v4101, %v4161
    %v4163 = vpop.f32.mrb[0].mxu0
    %v4164 = vadd.f32 %v4103, %v4163
    %v4165 = vpop.f32.mrb[0].mxu0
    %v4166 = vadd.f32 %v4105, %v4165
    %v4167 = vpop.f32.mrb[0].mxu0
    %v4168 = vadd.f32 %v4107, %v4167
    %4169 = vmatprep.mubr.bf16.mxu0 0
    %4170 = vmatmul.mubr.bf16.gmra.mrb[0].mxu0 %v3260
    %v4171 = vpop.f32.mrb[0].mxu0
    %v4172 = vadd.f32 %v4111, %v4171
    %v4173 = vpop.f32.mrb[0].mxu0
    %v4174 = vadd.f32 %v4113, %v4173
    %v4175 = vpop.f32.mrb[0].mxu0
    %v4176 = vpop.f32.mrb[0].mxu0
    %4177 = vdwg.mxu0
    %v4274 = vunpack.c.l.b16 %v3261
    %v4275 = vunpack.c.h.b16 %v3261
    %v4276 = vunpack.c.l.b16 %v3262
    %v4277 = vunpack.c.h.b16 %v3262
    %v4278 = vunpack.c.l.b16 %v3263
    %v4279 = vunpack.c.h.b16 %v3263
    %v4280 = vunpack.c.l.b16 %v3264
    %v4281 = vunpack.c.h.b16 %v3264
    %v4282 = vunpack.c.l.b16 %v3265
    %v4283 = vunpack.c.h.b16 %v3265
    %v4284 = vunpack.c.l.b16 %v3266
    %v4285 = vunpack.c.h.b16 %v3266
    %v4286 = vunpack.c.l.b16 %v3267
    %v4287 = vunpack.c.h.b16 %v3267
    %v4288 = vunpack.c.l.b16 %v3268
    %v4289 = vunpack.c.h.b16 %v3268
    %v4290 = vunpack.c.l.b16 %v3269
    %v4291 = vunpack.c.h.b16 %v3269
    %v4292 = vunpack.c.l.b16 %v3270
    %v4293 = vunpack.c.h.b16 %v3270
    %v4294 = vunpack.c.l.b16 %v3271
    %v4295 = vunpack.c.h.b16 %v3271
    %v4296 = vunpack.c.l.b16 %v3272
    %v4297 = vunpack.c.h.b16 %v3272
    %v4298 = vunpack.c.l.b16 %v3273
    %v4299 = vunpack.c.h.b16 %v3273
    %v4300 = vunpack.c.l.b16 %v3274
    %v4301 = vunpack.c.h.b16 %v3274
    %v4302 = vunpack.c.l.b16 %v3275
    %v4303 = vunpack.c.h.b16 %v3275
    %v4304 = vunpack.c.l.b16 %v3276
    %v4305 = vunpack.c.h.b16 %v3276
    %v4306 = vunpack.c.l.b16 %v3277
    %v4307 = vunpack.c.h.b16 %v3277
    %v4308 = vunpack.c.l.b16 %v3278
    %v4309 = vunpack.c.h.b16 %v3278
    %v4310 = vunpack.c.l.b16 %v3279
    %v4311 = vunpack.c.h.b16 %v3279
    %v4312 = vunpack.c.l.b16 %v3280
    %v4313 = vunpack.c.h.b16 %v3280
    %v4314 = vunpack.c.l.b16 %v3281
    %v4315 = vunpack.c.h.b16 %v3281
    %v4316 = vunpack.c.l.b16 %v3282
    %v4317 = vunpack.c.h.b16 %v3282
    %v4318 = vunpack.c.l.b16 %v3283
    %v4319 = vunpack.c.h.b16 %v3283
    %v4320 = vunpack.c.l.b16 %v3284
    %v4321 = vunpack.c.h.b16 %v3284
    %v4322 = vunpack.c.l.b16 %v3285
    %v4323 = vunpack.c.h.b16 %v3285
    %v4324 = vunpack.c.l.b16 %v3286
    %v4325 = vunpack.c.h.b16 %v3286
    %v4326 = vunpack.c.l.b16 %v3287
    %v4327 = vunpack.c.h.b16 %v3287
    %v4328 = vunpack.c.l.b16 %v3288
    %v4329 = vunpack.c.h.b16 %v3288
    %v4330 = vunpack.c.l.b16 %v3289
    %v4331 = vunpack.c.h.b16 %v3289
    %v4332 = vunpack.c.l.b16 %v3290
    %v4333 = vunpack.c.h.b16 %v3290
    %v4334 = vunpack.c.l.b16 %v3291
    %v4335 = vunpack.c.h.b16 %v3291
    %v4336 = vunpack.c.l.b16 %v3292
    %v4337 = vunpack.c.h.b16 %v3292
    %v4338 = vunpack.c.l.b16 %v3293
    %v4339 = vunpack.c.h.b16 %v3293
    %v4340 = vunpack.c.l.b16 %v3294
    %v4341 = vunpack.c.h.b16 %v3294
    %v4342 = vunpack.c.l.b16 %v3295
    %v4343 = vunpack.c.h.b16 %v3295
    %v4344 = vunpack.c.l.b16 %v3296
    %v4345 = vunpack.c.h.b16 %v3296
    %v4346 = vunpack.c.l.b16 %v3297
    %v4347 = vunpack.c.h.b16 %v3297
    %v4348 = vunpack.c.l.b16 %v3298
    %v4349 = vunpack.c.h.b16 %v3298
    %v4350 = vunpack.c.l.b16 %v3299
    %v4351 = vunpack.c.h.b16 %v3299
    %v4352 = vunpack.c.l.b16 %v3300
    %v4353 = vunpack.c.h.b16 %v3300
    %v4354 = vunpack.c.l.b16 %v3301
    %v4355 = vunpack.c.h.b16 %v3301
    %v4356 = vunpack.c.l.b16 %v3302
    %v4357 = vunpack.c.h.b16 %v3302
    %v4358 = vunpack.c.l.b16 %v3303
    %v4359 = vunpack.c.h.b16 %v3303
    %v4360 = vunpack.c.l.b16 %v3304
    %v4361 = vunpack.c.h.b16 %v3304
    %v4362 = vunpack.c.l.b16 %v3305
    %v4363 = vunpack.c.h.b16 %v3305
    %v4364 = vunpack.c.l.b16 %v3306
    %v4365 = vunpack.c.h.b16 %v3306
    %v4366 = vunpack.c.l.b16 %v3307
    %v4367 = vunpack.c.h.b16 %v3307
    %v4368 = vunpack.c.l.b16 %v3308
    %v4369 = vunpack.c.h.b16 %v3308
    %v4370 = vunpack.c.l.b16 %v3309
    %v4371 = vunpack.c.h.b16 %v3309
    %v4372 = vunpack.c.l.b16 %v3310
    %v4373 = vunpack.c.h.b16 %v3310
    %v4374 = vunpack.c.l.b16 %v3311
    %v4375 = vunpack.c.h.b16 %v3311
    %v4376 = vunpack.c.l.b16 %v3312
    %v4377 = vunpack.c.h.b16 %v3312
    %v4378 = vunpack.c.l.b16 %v3313
    %v4379 = vunpack.c.h.b16 %v3313
    %v4380 = vunpack.c.l.b16 %v3314
    %v4381 = vunpack.c.h.b16 %v3314
    %v4382 = vunpack.c.l.b16 %v3315
    %v4383 = vunpack.c.h.b16 %v3315
    %v4384 = vunpack.c.l.b16 %v3316
    %v4385 = vunpack.c.h.b16 %v3316
    %v4386 = vunpack.c.l.b16 %v3317
    %v4387 = vunpack.c.h.b16 %v3317
    %v4388 = vunpack.c.l.b16 %v3318
    %v4389 = vunpack.c.h.b16 %v3318
    %v4390 = vunpack.c.l.b16 %v3319
    %v4391 = vunpack.c.h.b16 %v3319
    %v4392 = vunpack.c.l.b16 %v3320
    %v4393 = vunpack.c.h.b16 %v3320
    %v4394 = vunpack.c.l.b16 %v3321
    %v4395 = vunpack.c.h.b16 %v3321
    %v4396 = vunpack.c.l.b16 %v3322
    %v4397 = vunpack.c.h.b16 %v3322
    %v4398 = vunpack.c.l.b16 %v3323
    %v4399 = vunpack.c.h.b16 %v3323
    %v4400 = vunpack.c.l.b16 %v3324
    %v4401 = vunpack.c.h.b16 %v3324
    %v4402 = vunpack.c.l.b16 %v3325
    %v4403 = vunpack.c.h.b16 %v3325
    %v4404 = vunpack.c.l.b16 %v3326
    %v4405 = vunpack.c.h.b16 %v3326
    %v4406 = vunpack.c.l.b16 %v3327
    %v4407 = vunpack.c.h.b16 %v3327
    %v4408 = vunpack.c.l.b16 %v3328
    %v4409 = vunpack.c.h.b16 %v3328
    %v4410 = vunpack.c.l.b16 %v3329
    %v4411 = vunpack.c.h.b16 %v3329
    %v4412 = vunpack.c.l.b16 %v3330
    %v4413 = vunpack.c.h.b16 %v3330
    %v4414 = vunpack.c.l.b16 %v3331
    %v4415 = vunpack.c.h.b16 %v3331
    %v4416 = vunpack.c.l.b16 %v3332
    %v4417 = vunpack.c.h.b16 %v3332
    %v4418 = vunpack.c.l.b16 %v3333
    %v4419 = vunpack.c.h.b16 %v3333
    %v4420 = vunpack.c.l.b16 %v3334
    %v4421 = vunpack.c.h.b16 %v3334
    %v4422 = vunpack.c.l.b16 %v3335
    %v4423 = vunpack.c.h.b16 %v3335
    %v4424 = vunpack.c.l.b16 %v3336
    %v4425 = vunpack.c.h.b16 %v3336
    %v4426 = vunpack.c.l.b16 %v3337
    %v4427 = vunpack.c.h.b16 %v3337
    %v4428 = vunpack.c.l.b16 %v3338
    %v4429 = vunpack.c.h.b16 %v3338
    %v4430 = vunpack.c.l.b16 %v3339
    %v4431 = vunpack.c.h.b16 %v3339
    %v4432 = vunpack.c.l.b16 %v3340
    %v4433 = vunpack.c.h.b16 %v3340
    %v4434 = vunpack.c.l.b16 %v3341
    %v4435 = vunpack.c.h.b16 %v3341
    %v4436 = vunpack.c.l.b16 %v3342
    %v4437 = vunpack.c.h.b16 %v3342
    %v4438 = vunpack.c.l.b16 %v3343
    %v4439 = vunpack.c.h.b16 %v3343
    %v4440 = vunpack.c.l.b16 %v3344
    %v4441 = vunpack.c.h.b16 %v3344
    %v4442 = vunpack.c.l.b16 %v3345
    %v4443 = vunpack.c.h.b16 %v3345
    %v4444 = vunpack.c.l.b16 %v3346
    %v4445 = vunpack.c.h.b16 %v3346
    %v4446 = vunpack.c.l.b16 %v3347
    %v4447 = vunpack.c.h.b16 %v3347
    %v4448 = vunpack.c.l.b16 %v3348
    %v4449 = vunpack.c.h.b16 %v3348
    %v4450 = vunpack.c.l.b16 %v3349
    %v4451 = vunpack.c.h.b16 %v3349
    %v4452 = vunpack.c.l.b16 %v3350
    %v4453 = vunpack.c.h.b16 %v3350
    %v4454 = vunpack.c.l.b16 %v3351
    %v4455 = vunpack.c.h.b16 %v3351
    %v4456 = vunpack.c.l.b16 %v3352
    %v4457 = vunpack.c.h.b16 %v3352
    %v4458 = vunpack.c.l.b16 %v3353
    %v4459 = vunpack.c.h.b16 %v3353
    %v4460 = vunpack.c.l.b16 %v3354
    %v4461 = vunpack.c.h.b16 %v3354
    %v4462 = vunpack.c.l.b16 %v3355
    %v4463 = vunpack.c.h.b16 %v3355
    %v4464 = vunpack.c.l.b16 %v3356
    %v4465 = vunpack.c.h.b16 %v3356
    %v4466 = vpack.c.b16 %v4278, %v4274
    %v4467 = vpack.c.b16 %v4279, %v4275
    %v4468 = vpack.c.b16 %v4280, %v4276
    %v4469 = vpack.c.b16 %v4281, %v4277
    %v4470 = vpack.c.b16 %v4286, %v4282
    %v4471 = vpack.c.b16 %v4287, %v4283
    %v4472 = vpack.c.b16 %v4288, %v4284
    %v4473 = vpack.c.b16 %v4289, %v4285
    %v4474 = vpack.c.b16 %v4294, %v4290
    %v4475 = vpack.c.b16 %v4295, %v4291
    %v4476 = vpack.c.b16 %v4296, %v4292
    %v4477 = vpack.c.b16 %v4297, %v4293
    %v4478 = vpack.c.b16 %v4302, %v4298
    %v4479 = vpack.c.b16 %v4303, %v4299
    %v4480 = vpack.c.b16 %v4304, %v4300
    %v4481 = vpack.c.b16 %v4305, %v4301
    %v4482 = vpack.c.b16 %v4310, %v4306
    %v4483 = vpack.c.b16 %v4311, %v4307
    %v4484 = vpack.c.b16 %v4312, %v4308
    %v4485 = vpack.c.b16 %v4313, %v4309
    %v4486 = vpack.c.b16 %v4318, %v4314
    %v4487 = vpack.c.b16 %v4319, %v4315
    %v4488 = vpack.c.b16 %v4320, %v4316
    %v4489 = vpack.c.b16 %v4321, %v4317
    %v4490 = vpack.c.b16 %v4326, %v4322
    %v4491 = vpack.c.b16 %v4327, %v4323
    %v4492 = vpack.c.b16 %v4328, %v4324
    %v4493 = vpack.c.b16 %v4329, %v4325
    %v4494 = vpack.c.b16 %v4334, %v4330
    %v4495 = vpack.c.b16 %v4335, %v4331
    %v4496 = vpack.c.b16 %v4336, %v4332
    %v4497 = vpack.c.b16 %v4337, %v4333
    %v4498 = vpack.c.b16 %v4342, %v4338
    %v4499 = vpack.c.b16 %v4343, %v4339
    %v4500 = vpack.c.b16 %v4344, %v4340
    %v4501 = vpack.c.b16 %v4345, %v4341
    %v4502 = vpack.c.b16 %v4350, %v4346
    %v4503 = vpack.c.b16 %v4351, %v4347
    %v4504 = vpack.c.b16 %v4352, %v4348
    %v4505 = vpack.c.b16 %v4353, %v4349
    %v4506 = vpack.c.b16 %v4358, %v4354
    %v4507 = vpack.c.b16 %v4359, %v4355
    %v4508 = vpack.c.b16 %v4360, %v4356
    %v4509 = vpack.c.b16 %v4361, %v4357
    %v4510 = vpack.c.b16 %v4366, %v4362
    %v4511 = vpack.c.b16 %v4367, %v4363
    %v4512 = vpack.c.b16 %v4368, %v4364
    %v4513 = vpack.c.b16 %v4369, %v4365
    %v4514 = vpack.c.b16 %v4374, %v4370
    %v4515 = vpack.c.b16 %v4375, %v4371
    %v4516 = vpack.c.b16 %v4376, %v4372
    %v4517 = vpack.c.b16 %v4377, %v4373
    %v4518 = vpack.c.b16 %v4382, %v4378
    %v4519 = vpack.c.b16 %v4383, %v4379
    %v4520 = vpack.c.b16 %v4384, %v4380
    %v4521 = vpack.c.b16 %v4385, %v4381
    %v4522 = vpack.c.b16 %v4390, %v4386
    %v4523 = vpack.c.b16 %v4391, %v4387
    %v4524 = vpack.c.b16 %v4392, %v4388
    %v4525 = vpack.c.b16 %v4393, %v4389
    %v4526 = vpack.c.b16 %v4398, %v4394
    %v4527 = vpack.c.b16 %v4399, %v4395
    %v4528 = vpack.c.b16 %v4400, %v4396
    %v4529 = vpack.c.b16 %v4401, %v4397
    %v4530 = vpack.c.b16 %v4406, %v4402
    %v4531 = vpack.c.b16 %v4407, %v4403
    %v4532 = vpack.c.b16 %v4408, %v4404
    %v4533 = vpack.c.b16 %v4409, %v4405
    %v4534 = vpack.c.b16 %v4414, %v4410
    %v4535 = vpack.c.b16 %v4415, %v4411
    %v4536 = vpack.c.b16 %v4416, %v4412
    %v4537 = vpack.c.b16 %v4417, %v4413
    %v4538 = vpack.c.b16 %v4422, %v4418
    %v4539 = vpack.c.b16 %v4423, %v4419
    %v4540 = vpack.c.b16 %v4424, %v4420
    %v4541 = vpack.c.b16 %v4425, %v4421
    %v4542 = vpack.c.b16 %v4430, %v4426
    %v4543 = vpack.c.b16 %v4431, %v4427
    %v4544 = vpack.c.b16 %v4432, %v4428
    %v4545 = vpack.c.b16 %v4433, %v4429
    %v4546 = vpack.c.b16 %v4438, %v4434
    %v4547 = vpack.c.b16 %v4439, %v4435
    %v4548 = vpack.c.b16 %v4440, %v4436
    %v4549 = vpack.c.b16 %v4441, %v4437
    %v4550 = vpack.c.b16 %v4446, %v4442
    %v4551 = vpack.c.b16 %v4447, %v4443
    %v4552 = vpack.c.b16 %v4448, %v4444
    %v4553 = vpack.c.b16 %v4449, %v4445
    %v4554 = vpack.c.b16 %v4454, %v4450
    %v4555 = vpack.c.b16 %v4455, %v4451
    %v4556 = vpack.c.b16 %v4456, %v4452
    %v4557 = vpack.c.b16 %v4457, %v4453
    %v4558 = vpack.c.b16 %v4462, %v4458
    %v4559 = vpack.c.b16 %v4463, %v4459
    %v4560 = vpack.c.b16 %v4464, %v4460
    %v4561 = vpack.c.b16 %v4465, %v4461
    %4658 = vmatprep.subr.bf16.mxu0 %v4467
    %4659 = vmatpush1.bf16.msra.mxu0 %v4466
    %4660 = vmatprep.subr.bf16.mxu0 %v4471
    %4661 = vmatpush1.bf16.msra.mxu0 %v4470
    %4662 = vmatprep.subr.bf16.mxu0 %v4475
    %4663 = vmatpush1.bf16.msra.mxu0 %v4474
    %4664 = vmatprep.subr.bf16.mxu0 %v4479
    %4665 = vmatpush1.bf16.msra.mxu0 %v4478
    %4666 = vmatprep.subr.bf16.mxu0 %v4483
    %4667 = vmatpush1.bf16.msra.mxu0 %v4482
    %4668 = vmatprep.subr.bf16.mxu0 %v4487
    %4669 = vmatpush1.bf16.msra.mxu0 %v4486
    %4670 = vmatprep.subr.bf16.mxu0 %v4491
    %4671 = vmatpush1.bf16.msra.mxu0 %v4490
    %4672 = vmatprep.subr.bf16.mxu0 %v4495
    %4673 = vmatpush1.bf16.msra.mxu0 %v4494
    %4674 = vmatprep.subr.bf16.mxu0 %v4499
    %4675 = vmatpush1.bf16.msra.mxu0 %v4498
    %4676 = vmatprep.subr.bf16.mxu0 %v4503
    %4677 = vmatpush1.bf16.msra.mxu0 %v4502
    %4678 = vmatprep.subr.bf16.mxu0 %v4507
    %4679 = vmatpush1.bf16.msra.mxu0 %v4506
    %4680 = vmatprep.subr.bf16.mxu0 %v4511
    %4681 = vmatpush1.bf16.msra.mxu0 %v4510
    %4682 = vmatprep.subr.bf16.mxu0 %v4515
    %4683 = vmatpush1.bf16.msra.mxu0 %v4514
    %4684 = vmatprep.subr.bf16.mxu0 %v4519
    %4685 = vmatpush1.bf16.msra.mxu0 %v4518
    %4686 = vmatprep.subr.bf16.mxu0 %v4523
    %4687 = vmatpush1.bf16.msra.mxu0 %v4522
    %4688 = vmatprep.subr.bf16.mxu0 %v4527
    %4689 = vmatpush1.bf16.msra.mxu0 %v4526
    %4690 = vmatprep.mubr.bf16.mxu0 %v1942
    %4691 = vmatmul.mubr.bf16.gmra.mrb[0].mxu0 %v1941
    %v4692 = vpop.f32.mrb[0].mxu0
    %v4693 = vadd.f32 %v4030, %v4692
    %v4694 = vpop.f32.mrb[0].mxu0
    %v4695 = vadd.f32 %v4032, %v4694
    %v4696 = vpop.f32.mrb[0].mxu0
    %v4697 = vadd.f32 %v4034, %v4696
    %v4698 = vpop.f32.mrb[0].mxu0
    %v4699 = vadd.f32 %v4036, %v4698
    %4700 = vmatprep.mubr.bf16.mxu0 %v1945
    %4701 = vmatmul.mubr.bf16.gmra.mrb[0].mxu0 %v1944
    %v4702 = vpop.f32.mrb[0].mxu0
    %v4703 = vadd.f32 %v4040, %v4702
    %v4704 = vpop.f32.mrb[0].mxu0
    %v4705 = vadd.f32 %v4042, %v4704
    %v4706 = vpop.f32.mrb[0].mxu0
    %v4707 = vadd.f32 %v4044, %v4706
    %v4708 = vpop.f32.mrb[0].mxu0
    %v4709 = vadd.f32 %v4046, %v4708
    %4710 = vmatprep.mubr.bf16.mxu0 %v1948
    %4711 = vmatmul.mubr.bf16.gmra.mrb[0].mxu0 %v1947
    %v4712 = vpop.f32.mrb[0].mxu0
    %v4713 = vadd.f32 %v4050, %v4712
    %v4714 = vpop.f32.mrb[0].mxu0
    %v4715 = vadd.f32 %v4052, %v4714
    %v4716 = vpop.f32.mrb[0].mxu0
    %v4717 = vpop.f32.mrb[0].mxu0
    %4718 = vdwg.mxu0
    %4719 = vmatprep.subr.bf16.mxu0 %v4531
    %4720 = vmatpush1.bf16.msra.mxu0 %v4530
    %4721 = vmatprep.subr.bf16.mxu0 %v4535
    %4722 = vmatpush1.bf16.msra.mxu0 %v4534
    %4723 = vmatprep.subr.bf16.mxu0 %v4539
    %4724 = vmatpush1.bf16.msra.mxu0 %v4538
    %4725 = vmatprep.subr.bf16.mxu0 %v4543
    %4726 = vmatpush1.bf16.msra.mxu0 %v4542
    %4727 = vmatprep.subr.bf16.mxu0 %v4547
    %4728 = vmatpush1.bf16.msra.mxu0 %v4546
    %4729 = vmatprep.subr.bf16.mxu0 %v4551
    %4730 = vmatpush1.bf16.msra.mxu0 %v4550
    %4731 = vmatprep.subr.bf16.mxu0 %v4555
    %4732 = vmatpush1.bf16.msra.mxu0 %v4554
    %4733 = vmatprep.subr.bf16.mxu0 %v4559
    %4734 = vmatpush1.bf16.msra.mxu0 %v4558
    %4735 = vmatprep.subr.bf16.mxu0 0
    %4736 = vmatpush1.bf16.msra.mxu0 0
    %4737 = vmatprep.subr.bf16.mxu0 0
    %4738 = vmatpush1.bf16.msra.mxu0 0
    %4739 = vmatprep.subr.bf16.mxu0 0
    %4740 = vmatpush1.bf16.msra.mxu0 0
    %4741 = vmatprep.subr.bf16.mxu0 0
    %4742 = vmatpush1.bf16.msra.mxu0 0
    %4743 = vmatprep.subr.bf16.mxu0 0
    %4744 = vmatpush1.bf16.msra.mxu0 0
    %4745 = vmatprep.subr.bf16.mxu0 0
    %4746 = vmatpush1.bf16.msra.mxu0 0
    %4747 = vmatprep.subr.bf16.mxu0 0
    %4748 = vmatpush1.bf16.msra.mxu0 0
    %4749 = vmatprep.subr.bf16.mxu0 0
    %4750 = vmatpush1.bf16.msra.mxu0 0
    %4751 = vmatprep.mubr.bf16.mxu0 0
    %4752 = vmatmul.mubr.bf16.gmra.mrb[0].mxu0 %v1943
    %v4753 = vpop.f32.mrb[0].mxu0
    %v4754 = vadd.f32 %v4693, %v4753
    %v4755 = vpop.f32.mrb[0].mxu0
    %v4756 = vadd.f32 %v4695, %v4755
    %v4757 = vpop.f32.mrb[0].mxu0
    %v4758 = vadd.f32 %v4697, %v4757
    %v4759 = vpop.f32.mrb[0].mxu0
    %v4760 = vadd.f32 %v4699, %v4759
    %4761 = vmatprep.mubr.bf16.mxu0 0
    %4762 = vmatmul.mubr.bf16.gmra.mrb[0].mxu0 %v1946
    %v4763 = vpop.f32.mrb[0].mxu0
    %v4764 = vadd.f32 %v4703, %v4763
    %v4765 = vpop.f32.mrb[0].mxu0
    %v4766 = vadd.f32 %v4705, %v4765
    %v4767 = vpop.f32.mrb[0].mxu0
    %v4768 = vadd.f32 %v4707, %v4767
    %v4769 = vpop.f32.mrb[0].mxu0
    %v4770 = vadd.f32 %v4709, %v4769
    %4771 = vmatprep.mubr.bf16.mxu0 0
    %4772 = vmatmul.mubr.bf16.gmra.mrb[0].mxu0 %v1949
    %v4773 = vpop.f32.mrb[0].mxu0
    %v4774 = vadd.f32 %v4713, %v4773
    %v4775 = vpop.f32.mrb[0].mxu0
    %v4776 = vadd.f32 %v4715, %v4775
    %v4777 = vpop.f32.mrb[0].mxu0
    %v4778 = vpop.f32.mrb[0].mxu0
    %4779 = vdwg.mxu0
    %4780 = vmatprep.subr.bf16.mxu0 %v4469
    %4781 = vmatpush1.bf16.msra.mxu0 %v4468
    %4782 = vmatprep.subr.bf16.mxu0 %v4473
    %4783 = vmatpush1.bf16.msra.mxu0 %v4472
    %4784 = vmatprep.subr.bf16.mxu0 %v4477
    %4785 = vmatpush1.bf16.msra.mxu0 %v4476
    %4786 = vmatprep.subr.bf16.mxu0 %v4481
    %4787 = vmatpush1.bf16.msra.mxu0 %v4480
    %4788 = vmatprep.subr.bf16.mxu0 %v4485
    %4789 = vmatpush1.bf16.msra.mxu0 %v4484
    %4790 = vmatprep.subr.bf16.mxu0 %v4489
    %4791 = vmatpush1.bf16.msra.mxu0 %v4488
    %4792 = vmatprep.subr.bf16.mxu0 %v4493
    %4793 = vmatpush1.bf16.msra.mxu0 %v4492
    %4794 = vmatprep.subr.bf16.mxu0 %v4497
    %4795 = vmatpush1.bf16.msra.mxu0 %v4496
    %4796 = vmatprep.subr.bf16.mxu0 %v4501
    %4797 = vmatpush1.bf16.msra.mxu0 %v4500
    %4798 = vmatprep.subr.bf16.mxu0 %v4505
    %4799 = vmatpush1.bf16.msra.mxu0 %v4504
    %4800 = vmatprep.subr.bf16.mxu0 %v4509
    %4801 = vmatpush1.bf16.msra.mxu0 %v4508
    %4802 = vmatprep.subr.bf16.mxu0 %v4513
    %4803 = vmatpush1.bf16.msra.mxu0 %v4512
    %4804 = vmatprep.subr.bf16.mxu0 %v4517
    %4805 = vmatpush1.bf16.msra.mxu0 %v4516
    %4806 = vmatprep.subr.bf16.mxu0 %v4521
    %4807 = vmatpush1.bf16.msra.mxu0 %v4520
    %4808 = vmatprep.subr.bf16.mxu0 %v4525
    %4809 = vmatpush1.bf16.msra.mxu0 %v4524
    %4810 = vmatprep.subr.bf16.mxu0 %v4529
    %4811 = vmatpush1.bf16.msra.mxu0 %v4528
    %4812 = vmatprep.mubr.bf16.mxu0 %v1942
    %4813 = vmatmul.mubr.bf16.gmra.mrb[0].mxu0 %v1941
    %v4814 = vpop.f32.mrb[0].mxu0
    %v4815 = vadd.f32 %v4152, %v4814
    %v4816 = vpop.f32.mrb[0].mxu0
    %v4817 = vadd.f32 %v4154, %v4816
    %v4818 = vpop.f32.mrb[0].mxu0
    %v4819 = vadd.f32 %v4156, %v4818
    %v4820 = vpop.f32.mrb[0].mxu0
    %v4821 = vadd.f32 %v4158, %v4820
    %4822 = vmatprep.mubr.bf16.mxu0 %v1945
    %4823 = vmatmul.mubr.bf16.gmra.mrb[0].mxu0 %v1944
    %v4824 = vpop.f32.mrb[0].mxu0
    %v4825 = vadd.f32 %v4162, %v4824
    %v4826 = vpop.f32.mrb[0].mxu0
    %v4827 = vadd.f32 %v4164, %v4826
    %v4828 = vpop.f32.mrb[0].mxu0
    %v4829 = vadd.f32 %v4166, %v4828
    %v4830 = vpop.f32.mrb[0].mxu0
    %v4831 = vadd.f32 %v4168, %v4830
    %4832 = vmatprep.mubr.bf16.mxu0 %v1948
    %4833 = vmatmul.mubr.bf16.gmra.mrb[0].mxu0 %v1947
    %v4834 = vpop.f32.mrb[0].mxu0
    %v4835 = vadd.f32 %v4172, %v4834
    %v4836 = vpop.f32.mrb[0].mxu0
    %v4837 = vadd.f32 %v4174, %v4836
    %v4838 = vpop.f32.mrb[0].mxu0
    %v4839 = vpop.f32.mrb[0].mxu0
    %4840 = vdwg.mxu0
    %4841 = vmatprep.subr.bf16.mxu0 %v4533
    %4842 = vmatpush1.bf16.msra.mxu0 %v4532
    %4843 = vmatprep.subr.bf16.mxu0 %v4537
    %4844 = vmatpush1.bf16.msra.mxu0 %v4536
    %4845 = vmatprep.subr.bf16.mxu0 %v4541
    %4846 = vmatpush1.bf16.msra.mxu0 %v4540
    %4847 = vmatprep.subr.bf16.mxu0 %v4545
    %4848 = vmatpush1.bf16.msra.mxu0 %v4544
    %4849 = vmatprep.subr.bf16.mxu0 %v4549
    %4850 = vmatpush1.bf16.msra.mxu0 %v4548
    %4851 = vmatprep.subr.bf16.mxu0 %v4553
    %4852 = vmatpush1.bf16.msra.mxu0 %v4552
    %4853 = vmatprep.subr.bf16.mxu0 %v4557
    %4854 = vmatpush1.bf16.msra.mxu0 %v4556
    %4855 = vmatprep.subr.bf16.mxu0 %v4561
    %4856 = vmatpush1.bf16.msra.mxu0 %v4560
    %4857 = vmatprep.subr.bf16.mxu0 0
    %4858 = vmatpush1.bf16.msra.mxu0 0
    %4859 = vmatprep.subr.bf16.mxu0 0
    %4860 = vmatpush1.bf16.msra.mxu0 0
    %4861 = vmatprep.subr.bf16.mxu0 0
    %4862 = vmatpush1.bf16.msra.mxu0 0
    %4863 = vmatprep.subr.bf16.mxu0 0
    %4864 = vmatpush1.bf16.msra.mxu0 0
    %4865 = vmatprep.subr.bf16.mxu0 0
    %4866 = vmatpush1.bf16.msra.mxu0 0
    %4867 = vmatprep.subr.bf16.mxu0 0
    %4868 = vmatpush1.bf16.msra.mxu0 0
    %4869 = vmatprep.subr.bf16.mxu0 0
    %4870 = vmatpush1.bf16.msra.mxu0 0
    %4871 = vmatprep.subr.bf16.mxu0 0
    %4872 = vmatpush1.bf16.msra.mxu0 0
    %4873 = vmatprep.mubr.bf16.mxu0 0
    %4874 = vmatmul.mubr.bf16.gmra.mrb[0].mxu0 %v1943
    %v4875 = vpop.f32.mrb[0].mxu0
    %v4876 = vadd.f32 %v4815, %v4875
    %v4877 = vpop.f32.mrb[0].mxu0
    %v4878 = vadd.f32 %v4817, %v4877
    %v4879 = vpop.f32.mrb[0].mxu0
    %v4880 = vadd.f32 %v4819, %v4879
    %v4881 = vpop.f32.mrb[0].mxu0
    %v4882 = vadd.f32 %v4821, %v4881
    %4883 = vmatprep.mubr.bf16.mxu0 0
    %4884 = vmatmul.mubr.bf16.gmra.mrb[0].mxu0 %v1946
    %v4885 = vpop.f32.mrb[0].mxu0
    %v4886 = vadd.f32 %v4825, %v4885
    %v4887 = vpop.f32.mrb[0].mxu0
    %v4888 = vadd.f32 %v4827, %v4887
    %v4889 = vpop.f32.mrb[0].mxu0
    %v4890 = vadd.f32 %v4829, %v4889
    %v4891 = vpop.f32.mrb[0].mxu0
    %v4892 = vadd.f32 %v4831, %v4891
    %4893 = vmatprep.mubr.bf16.mxu0 0
    %4894 = vmatmul.mubr.bf16.gmra.mrb[0].mxu0 %v1949
    %v4895 = vpop.f32.mrb[0].mxu0
    %v4896 = vadd.f32 %v4835, %v4895
    %v4897 = vpop.f32.mrb[0].mxu0
    %v4898 = vadd.f32 %v4837, %v4897
    %v4899 = vpop.f32.mrb[0].mxu0
    %v4900 = vpop.f32.mrb[0].mxu0
    %4901 = vdwg.mxu0
    %s4902 = scalar_lea.vmem [#allocation6], 1536
    %v4903 = vld [vmem:[%s4902] sm:$0xff]
    %v4904 = vld [vmem:[%s4902 + $0x8] sm:$0xff]
    %v4905 = vld [vmem:[%s4902 + $0x10] sm:$0xff]
    %v4906 = vld [vmem:[%s4902 + $0x18] sm:$0xff]
    %v4907 = vld [vmem:[%s4902 + $0x20] sm:$0xff]
    %v4908 = vld [vmem:[%s4902 + $0x28] sm:$0xff]
    %v4909 = vld [vmem:[%s4902 + $0x30] sm:$0xff]
    %v4910 = vld [vmem:[%s4902 + $0x38] sm:$0xff]
    %v4911 = vld [vmem:[%s4902 + $0x40] sm:$0xff]
    %v4912 = vld [vmem:[%s4902 + $0x48] sm:$0xff]
    %v4913 = vld [vmem:[%s4902 + $0x50] sm:$0xff]
    %v4914 = vld [vmem:[%s4902 + $0x58] sm:$0xff]
    %v4915 = vld [vmem:[%s4902 + $0x60] sm:$0xff]
    %v4916 = vld [vmem:[%s4902 + $0x68] sm:$0xff]
    %v4917 = vld [vmem:[%s4902 + $0x70] sm:$0xff]
    %v4918 = vld [vmem:[%s4902 + $0x78] sm:$0xff]
    %v4919 = vld [vmem:[%s4902 + $0x80] sm:$0xff]
    %v4920 = vld [vmem:[%s4902 + $0x88] sm:$0xff]
    %v4921 = vld [vmem:[%s4902 + $0x90] sm:$0xff]
    %v4922 = vld [vmem:[%s4902 + $0x98] sm:$0xff]
    %v4923 = vld [vmem:[%s4902 + $0xa0] sm:$0xff]
    %v4924 = vld [vmem:[%s4902 + $0xa8] sm:$0xff]
    %v4925 = vld [vmem:[%s4902 + $0xb0] sm:$0xff]
    %v4926 = vld [vmem:[%s4902 + $0xb8] sm:$0xff]
    %v4927 = vld [vmem:[%s4902 + $0xc0] sm:$0xff]
    %v4928 = vld [vmem:[%s4902 + $0xc8] sm:$0xff]
    %v4929 = vld [vmem:[%s4902 + $0xd0] sm:$0xff]
    %v4930 = vld [vmem:[%s4902 + $0xd8] sm:$0xff]
    %v4931 = vld [vmem:[%s4902 + $0xe0] sm:$0xff]
    %v4932 = vld [vmem:[%s4902 + $0xe8] sm:$0xff]
    %v4933 = vld [vmem:[%s4902 + $0xf0] sm:$0xff]
    %v4934 = vld [vmem:[%s4902 + $0xf8] sm:$0xff]
    %v4935 = vld [vmem:[%s4902 + $0x100] sm:$0xff]
    %v4936 = vld [vmem:[%s4902 + $0x108] sm:$0xff]
    %v4937 = vld [vmem:[%s4902 + $0x110] sm:$0xff]
    %v4938 = vld [vmem:[%s4902 + $0x118] sm:$0xff]
    %v4939 = vld [vmem:[%s4902 + $0x120] sm:$0xff]
    %v4940 = vld [vmem:[%s4902 + $0x128] sm:$0xff]
    %v4941 = vld [vmem:[%s4902 + $0x130] sm:$0xff]
    %v4942 = vld [vmem:[%s4902 + $0x138] sm:$0xff]
    %v4943 = vld [vmem:[%s4902 + $0x140] sm:$0xff]
    %v4944 = vld [vmem:[%s4902 + $0x148] sm:$0xff]
    %v4945 = vld [vmem:[%s4902 + $0x150] sm:$0xff]
    %v4946 = vld [vmem:[%s4902 + $0x158] sm:$0xff]
    %v4947 = vld [vmem:[%s4902 + $0x160] sm:$0xff]
    %v4948 = vld [vmem:[%s4902 + $0x168] sm:$0xff]
    %v4949 = vld [vmem:[%s4902 + $0x170] sm:$0xff]
    %v4950 = vld [vmem:[%s4902 + $0x178] sm:$0xff]
    %v4951 = vld [vmem:[%s4902 + $0x180] sm:$0xff]
    %v4952 = vld [vmem:[%s4902 + $0x188] sm:$0xff]
    %v4953 = vld [vmem:[%s4902 + $0x190] sm:$0xff]
    %v4954 = vld [vmem:[%s4902 + $0x198] sm:$0xff]
    %v4955 = vld [vmem:[%s4902 + $0x1a0] sm:$0xff]
    %v4956 = vld [vmem:[%s4902 + $0x1a8] sm:$0xff]
    %v4957 = vld [vmem:[%s4902 + $0x1b0] sm:$0xff]
    %v4958 = vld [vmem:[%s4902 + $0x1b8] sm:$0xff]
    %v4959 = vld [vmem:[%s4902 + $0x1c0] sm:$0xff]
    %v4960 = vld [vmem:[%s4902 + $0x1c8] sm:$0xff]
    %v4961 = vld [vmem:[%s4902 + $0x1d0] sm:$0xff]
    %v4962 = vld [vmem:[%s4902 + $0x1d8] sm:$0xff]
    %v4963 = vld [vmem:[%s4902 + $0x1e0] sm:$0xff]
    %v4964 = vld [vmem:[%s4902 + $0x1e8] sm:$0xff]
    %v4965 = vld [vmem:[%s4902 + $0x1f0] sm:$0xff]
    %v4966 = vld [vmem:[%s4902 + $0x1f8] sm:$0xff]
    %v4967 = vld [vmem:[%s4902 + $0x200] sm:$0xff]
    %v4968 = vld [vmem:[%s4902 + $0x208] sm:$0xff]
    %v4969 = vld [vmem:[%s4902 + $0x210] sm:$0xff]
    %v4970 = vld [vmem:[%s4902 + $0x218] sm:$0xff]
    %v4971 = vld [vmem:[%s4902 + $0x220] sm:$0xff]
    %v4972 = vld [vmem:[%s4902 + $0x228] sm:$0xff]
    %v4973 = vld [vmem:[%s4902 + $0x230] sm:$0xff]
    %v4974 = vld [vmem:[%s4902 + $0x238] sm:$0xff]
    %v4975 = vld [vmem:[%s4902 + $0x240] sm:$0xff]
    %v4976 = vld [vmem:[%s4902 + $0x248] sm:$0xff]
    %v4977 = vld [vmem:[%s4902 + $0x250] sm:$0xff]
    %v4978 = vld [vmem:[%s4902 + $0x258] sm:$0xff]
    %v4979 = vld [vmem:[%s4902 + $0x260] sm:$0xff]
    %v4980 = vld [vmem:[%s4902 + $0x268] sm:$0xff]
    %v4981 = vld [vmem:[%s4902 + $0x270] sm:$0xff]
    %v4982 = vld [vmem:[%s4902 + $0x278] sm:$0xff]
    %v4983 = vld [vmem:[%s4902 + $0x280] sm:$0xff]
    %v4984 = vld [vmem:[%s4902 + $0x288] sm:$0xff]
    %v4985 = vld [vmem:[%s4902 + $0x290] sm:$0xff]
    %v4986 = vld [vmem:[%s4902 + $0x298] sm:$0xff]
    %v4987 = vld [vmem:[%s4902 + $0x2a0] sm:$0xff]
    %v4988 = vld [vmem:[%s4902 + $0x2a8] sm:$0xff]
    %v4989 = vld [vmem:[%s4902 + $0x2b0] sm:$0xff]
    %v4990 = vld [vmem:[%s4902 + $0x2b8] sm:$0xff]
    %v4991 = vld [vmem:[%s4902 + $0x2c0] sm:$0xff]
    %v4992 = vld [vmem:[%s4902 + $0x2c8] sm:$0xff]
    %v4993 = vld [vmem:[%s4902 + $0x2d0] sm:$0xff]
    %v4994 = vld [vmem:[%s4902 + $0x2d8] sm:$0xff]
    %v4995 = vld [vmem:[%s4902 + $0x2e0] sm:$0xff]
    %v4996 = vld [vmem:[%s4902 + $0x2e8] sm:$0xff]
    %v4997 = vld [vmem:[%s4902 + $0x2f0] sm:$0xff]
    %v4998 = vld [vmem:[%s4902 + $0x2f8] sm:$0xff]
    %vm5008 = vcmask 1043456
    %v5009 = vrot.slane %v1941, 4
    %v5010 = vrot.slane %v1944, 4
    %v5011 = vsel %vm5008, %v5009, %v5010
    %v5012 = vrot.slane %v1942, 4
    %v5013 = vrot.slane %v1945, 4
    %v5014 = vsel %vm5008, %v5012, %v5013
    %v5015 = vrot.slane %v1943, 4
    %v5016 = vrot.slane %v1946, 4
    %v5017 = vsel %vm5008, %v5015, %v5016
    %v5018 = vrot.slane %v1947, 4
    %v5019 = vsel %vm5008, %v5010, %v5018
    %v5020 = vrot.slane %v1948, 4
    %v5021 = vsel %vm5008, %v5013, %v5020
    %v5022 = vrot.slane %v1949, 4
    %v5023 = vsel %vm5008, %v5016, %v5022
    %v5129 = vunpack.c.l.b16 %v4903
    %v5130 = vunpack.c.h.b16 %v4903
    %v5131 = vunpack.c.l.b16 %v4904
    %v5132 = vunpack.c.h.b16 %v4904
    %v5133 = vunpack.c.l.b16 %v4905
    %v5134 = vunpack.c.h.b16 %v4905
    %v5135 = vunpack.c.l.b16 %v4906
    %v5136 = vunpack.c.h.b16 %v4906
    %v5137 = vunpack.c.l.b16 %v4907
    %v5138 = vunpack.c.h.b16 %v4907
    %v5139 = vunpack.c.l.b16 %v4908
    %v5140 = vunpack.c.h.b16 %v4908
    %v5141 = vunpack.c.l.b16 %v4909
    %v5142 = vunpack.c.h.b16 %v4909
    %v5143 = vunpack.c.l.b16 %v4910
    %v5144 = vunpack.c.h.b16 %v4910
    %v5145 = vunpack.c.l.b16 %v4911
    %v5146 = vunpack.c.h.b16 %v4911
    %v5147 = vunpack.c.l.b16 %v4912
    %v5148 = vunpack.c.h.b16 %v4912
    %v5149 = vunpack.c.l.b16 %v4913
    %v5150 = vunpack.c.h.b16 %v4913
    %v5151 = vunpack.c.l.b16 %v4914
    %v5152 = vunpack.c.h.b16 %v4914
    %v5153 = vunpack.c.l.b16 %v4915
    %v5154 = vunpack.c.h.b16 %v4915
    %v5155 = vunpack.c.l.b16 %v4916
    %v5156 = vunpack.c.h.b16 %v4916
    %v5157 = vunpack.c.l.b16 %v4917
    %v5158 = vunpack.c.h.b16 %v4917
    %v5159 = vunpack.c.l.b16 %v4918
    %v5160 = vunpack.c.h.b16 %v4918
    %v5161 = vunpack.c.l.b16 %v4919
    %v5162 = vunpack.c.h.b16 %v4919
    %v5163 = vunpack.c.l.b16 %v4920
    %v5164 = vunpack.c.h.b16 %v4920
    %v5165 = vunpack.c.l.b16 %v4921
    %v5166 = vunpack.c.h.b16 %v4921
    %v5167 = vunpack.c.l.b16 %v4922
    %v5168 = vunpack.c.h.b16 %v4922
    %v5169 = vunpack.c.l.b16 %v4923
    %v5170 = vunpack.c.h.b16 %v4923
    %v5171 = vunpack.c.l.b16 %v4924
    %v5172 = vunpack.c.h.b16 %v4924
    %v5173 = vunpack.c.l.b16 %v4925
    %v5174 = vunpack.c.h.b16 %v4925
    %v5175 = vunpack.c.l.b16 %v4926
    %v5176 = vunpack.c.h.b16 %v4926
    %v5177 = vunpack.c.l.b16 %v4927
    %v5178 = vunpack.c.h.b16 %v4927
    %v5179 = vunpack.c.l.b16 %v4928
    %v5180 = vunpack.c.h.b16 %v4928
    %v5181 = vunpack.c.l.b16 %v4929
    %v5182 = vunpack.c.h.b16 %v4929
    %v5183 = vunpack.c.l.b16 %v4930
    %v5184 = vunpack.c.h.b16 %v4930
    %v5185 = vunpack.c.l.b16 %v4931
    %v5186 = vunpack.c.h.b16 %v4931
    %v5187 = vunpack.c.l.b16 %v4932
    %v5188 = vunpack.c.h.b16 %v4932
    %v5189 = vunpack.c.l.b16 %v4933
    %v5190 = vunpack.c.h.b16 %v4933
    %v5191 = vunpack.c.l.b16 %v4934
    %v5192 = vunpack.c.h.b16 %v4934
    %v5193 = vunpack.c.l.b16 %v4935
    %v5194 = vunpack.c.h.b16 %v4935
    %v5195 = vunpack.c.l.b16 %v4936
    %v5196 = vunpack.c.h.b16 %v4936
    %v5197 = vunpack.c.l.b16 %v4937
    %v5198 = vunpack.c.h.b16 %v4937
    %v5199 = vunpack.c.l.b16 %v4938
    %v5200 = vunpack.c.h.b16 %v4938
    %v5201 = vunpack.c.l.b16 %v4939
    %v5202 = vunpack.c.h.b16 %v4939
    %v5203 = vunpack.c.l.b16 %v4940
    %v5204 = vunpack.c.h.b16 %v4940
    %v5205 = vunpack.c.l.b16 %v4941
    %v5206 = vunpack.c.h.b16 %v4941
    %v5207 = vunpack.c.l.b16 %v4942
    %v5208 = vunpack.c.h.b16 %v4942
    %v5209 = vunpack.c.l.b16 %v4943
    %v5210 = vunpack.c.h.b16 %v4943
    %v5211 = vunpack.c.l.b16 %v4944
    %v5212 = vunpack.c.h.b16 %v4944
    %v5213 = vunpack.c.l.b16 %v4945
    %v5214 = vunpack.c.h.b16 %v4945
    %v5215 = vunpack.c.l.b16 %v4946
    %v5216 = vunpack.c.h.b16 %v4946
    %v5217 = vunpack.c.l.b16 %v4947
    %v5218 = vunpack.c.h.b16 %v4947
    %v5219 = vunpack.c.l.b16 %v4948
    %v5220 = vunpack.c.h.b16 %v4948
    %v5221 = vunpack.c.l.b16 %v4949
    %v5222 = vunpack.c.h.b16 %v4949
    %v5223 = vunpack.c.l.b16 %v4950
    %v5224 = vunpack.c.h.b16 %v4950
    %v5225 = vunpack.c.l.b16 %v4951
    %v5226 = vunpack.c.h.b16 %v4951
    %v5227 = vunpack.c.l.b16 %v4952
    %v5228 = vunpack.c.h.b16 %v4952
    %v5229 = vunpack.c.l.b16 %v4953
    %v5230 = vunpack.c.h.b16 %v4953
    %v5231 = vunpack.c.l.b16 %v4954
    %v5232 = vunpack.c.h.b16 %v4954
    %v5233 = vunpack.c.l.b16 %v4955
    %v5234 = vunpack.c.h.b16 %v4955
    %v5235 = vunpack.c.l.b16 %v4956
    %v5236 = vunpack.c.h.b16 %v4956
    %v5237 = vunpack.c.l.b16 %v4957
    %v5238 = vunpack.c.h.b16 %v4957
    %v5239 = vunpack.c.l.b16 %v4958
    %v5240 = vunpack.c.h.b16 %v4958
    %v5241 = vunpack.c.l.b16 %v4959
    %v5242 = vunpack.c.h.b16 %v4959
    %v5243 = vunpack.c.l.b16 %v4960
    %v5244 = vunpack.c.h.b16 %v4960
    %v5245 = vunpack.c.l.b16 %v4961
    %v5246 = vunpack.c.h.b16 %v4961
    %v5247 = vunpack.c.l.b16 %v4962
    %v5248 = vunpack.c.h.b16 %v4962
    %v5249 = vunpack.c.l.b16 %v4963
    %v5250 = vunpack.c.h.b16 %v4963
    %v5251 = vunpack.c.l.b16 %v4964
    %v5252 = vunpack.c.h.b16 %v4964
    %v5253 = vunpack.c.l.b16 %v4965
    %v5254 = vunpack.c.h.b16 %v4965
    %v5255 = vunpack.c.l.b16 %v4966
    %v5256 = vunpack.c.h.b16 %v4966
    %v5257 = vunpack.c.l.b16 %v4967
    %v5258 = vunpack.c.h.b16 %v4967
    %v5259 = vunpack.c.l.b16 %v4968
    %v5260 = vunpack.c.h.b16 %v4968
    %v5261 = vunpack.c.l.b16 %v4969
    %v5262 = vunpack.c.h.b16 %v4969
    %v5263 = vunpack.c.l.b16 %v4970
    %v5264 = vunpack.c.h.b16 %v4970
    %v5265 = vunpack.c.l.b16 %v4971
    %v5266 = vunpack.c.h.b16 %v4971
    %v5267 = vunpack.c.l.b16 %v4972
    %v5268 = vunpack.c.h.b16 %v4972
    %v5269 = vunpack.c.l.b16 %v4973
    %v5270 = vunpack.c.h.b16 %v4973
    %v5271 = vunpack.c.l.b16 %v4974
    %v5272 = vunpack.c.h.b16 %v4974
    %v5273 = vunpack.c.l.b16 %v4975
    %v5274 = vunpack.c.h.b16 %v4975
    %v5275 = vunpack.c.l.b16 %v4976
    %v5276 = vunpack.c.h.b16 %v4976
    %v5277 = vunpack.c.l.b16 %v4977
    %v5278 = vunpack.c.h.b16 %v4977
    %v5279 = vunpack.c.l.b16 %v4978
    %v5280 = vunpack.c.h.b16 %v4978
    %v5281 = vunpack.c.l.b16 %v4979
    %v5282 = vunpack.c.h.b16 %v4979
    %v5283 = vunpack.c.l.b16 %v4980
    %v5284 = vunpack.c.h.b16 %v4980
    %v5285 = vunpack.c.l.b16 %v4981
    %v5286 = vunpack.c.h.b16 %v4981
    %v5287 = vunpack.c.l.b16 %v4982
    %v5288 = vunpack.c.h.b16 %v4982
    %v5289 = vunpack.c.l.b16 %v4983
    %v5290 = vunpack.c.h.b16 %v4983
    %v5291 = vunpack.c.l.b16 %v4984
    %v5292 = vunpack.c.h.b16 %v4984
    %v5293 = vunpack.c.l.b16 %v4985
    %v5294 = vunpack.c.h.b16 %v4985
    %v5295 = vunpack.c.l.b16 %v4986
    %v5296 = vunpack.c.h.b16 %v4986
    %v5297 = vunpack.c.l.b16 %v4987
    %v5298 = vunpack.c.h.b16 %v4987
    %v5299 = vunpack.c.l.b16 %v4988
    %v5300 = vunpack.c.h.b16 %v4988
    %v5301 = vunpack.c.l.b16 %v4989
    %v5302 = vunpack.c.h.b16 %v4989
    %v5303 = vunpack.c.l.b16 %v4990
    %v5304 = vunpack.c.h.b16 %v4990
    %v5305 = vunpack.c.l.b16 %v4991
    %v5306 = vunpack.c.h.b16 %v4991
    %v5307 = vunpack.c.l.b16 %v4992
    %v5308 = vunpack.c.h.b16 %v4992
    %v5309 = vunpack.c.l.b16 %v4993
    %v5310 = vunpack.c.h.b16 %v4993
    %v5311 = vunpack.c.l.b16 %v4994
    %v5312 = vunpack.c.h.b16 %v4994
    %v5313 = vunpack.c.l.b16 %v4995
    %v5314 = vunpack.c.h.b16 %v4995
    %v5315 = vunpack.c.l.b16 %v4996
    %v5316 = vunpack.c.h.b16 %v4996
    %v5317 = vunpack.c.l.b16 %v4997
    %v5318 = vunpack.c.h.b16 %v4997
    %v5319 = vunpack.c.l.b16 %v4998
    %v5320 = vunpack.c.h.b16 %v4998
    %v5321 = vpack.c.b16 %v5133, %v5129
    %v5322 = vpack.c.b16 %v5134, %v5130
    %v5323 = vpack.c.b16 %v5135, %v5131
    %v5324 = vpack.c.b16 %v5136, %v5132
    %v5325 = vpack.c.b16 %v5141, %v5137
    %v5326 = vpack.c.b16 %v5142, %v5138
    %v5327 = vpack.c.b16 %v5143, %v5139
    %v5328 = vpack.c.b16 %v5144, %v5140
    %v5329 = vpack.c.b16 %v5149, %v5145
    %v5330 = vpack.c.b16 %v5150, %v5146
    %v5331 = vpack.c.b16 %v5151, %v5147
    %v5332 = vpack.c.b16 %v5152, %v5148
    %v5333 = vpack.c.b16 %v5157, %v5153
    %v5334 = vpack.c.b16 %v5158, %v5154
    %v5335 = vpack.c.b16 %v5159, %v5155
    %v5336 = vpack.c.b16 %v5160, %v5156
    %v5337 = vpack.c.b16 %v5165, %v5161
    %v5338 = vpack.c.b16 %v5166, %v5162
    %v5339 = vpack.c.b16 %v5167, %v5163
    %v5340 = vpack.c.b16 %v5168, %v5164
    %v5341 = vpack.c.b16 %v5173, %v5169
    %v5342 = vpack.c.b16 %v5174, %v5170
    %v5343 = vpack.c.b16 %v5175, %v5171
    %v5344 = vpack.c.b16 %v5176, %v5172
    %v5345 = vpack.c.b16 %v5181, %v5177
    %v5346 = vpack.c.b16 %v5182, %v5178
    %v5347 = vpack.c.b16 %v5183, %v5179
    %v5348 = vpack.c.b16 %v5184, %v5180
    %v5349 = vpack.c.b16 %v5189, %v5185
    %v5350 = vpack.c.b16 %v5190, %v5186
    %v5351 = vpack.c.b16 %v5191, %v5187
    %v5352 = vpack.c.b16 %v5192, %v5188
    %v5353 = vpack.c.b16 %v5197, %v5193
    %v5354 = vpack.c.b16 %v5198, %v5194
    %v5355 = vpack.c.b16 %v5199, %v5195
    %v5356 = vpack.c.b16 %v5200, %v5196
    %v5357 = vpack.c.b16 %v5205, %v5201
    %v5358 = vpack.c.b16 %v5206, %v5202
    %v5359 = vpack.c.b16 %v5207, %v5203
    %v5360 = vpack.c.b16 %v5208, %v5204
    %v5361 = vpack.c.b16 %v5213, %v5209
    %v5362 = vpack.c.b16 %v5214, %v5210
    %v5363 = vpack.c.b16 %v5215, %v5211
    %v5364 = vpack.c.b16 %v5216, %v5212
    %v5365 = vpack.c.b16 %v5221, %v5217
    %v5366 = vpack.c.b16 %v5222, %v5218
    %v5367 = vpack.c.b16 %v5223, %v5219
    %v5368 = vpack.c.b16 %v5224, %v5220
    %v5369 = vpack.c.b16 %v5229, %v5225
    %v5370 = vpack.c.b16 %v5230, %v5226
    %v5371 = vpack.c.b16 %v5231, %v5227
    %v5372 = vpack.c.b16 %v5232, %v5228
    %v5373 = vpack.c.b16 %v5237, %v5233
    %v5374 = vpack.c.b16 %v5238, %v5234
    %v5375 = vpack.c.b16 %v5239, %v5235
    %v5376 = vpack.c.b16 %v5240, %v5236
    %v5377 = vpack.c.b16 %v5245, %v5241
    %v5378 = vpack.c.b16 %v5246, %v5242
    %v5379 = vpack.c.b16 %v5247, %v5243
    %v5380 = vpack.c.b16 %v5248, %v5244
    %v5381 = vpack.c.b16 %v5253, %v5249
    %v5382 = vpack.c.b16 %v5254, %v5250
    %v5383 = vpack.c.b16 %v5255, %v5251
    %v5384 = vpack.c.b16 %v5256, %v5252
    %v5385 = vpack.c.b16 %v5261, %v5257
    %v5386 = vpack.c.b16 %v5262, %v5258
    %v5387 = vpack.c.b16 %v5263, %v5259
    %v5388 = vpack.c.b16 %v5264, %v5260
    %v5389 = vpack.c.b16 %v5269, %v5265
    %v5390 = vpack.c.b16 %v5270, %v5266
    %v5391 = vpack.c.b16 %v5271, %v5267
    %v5392 = vpack.c.b16 %v5272, %v5268
    %v5393 = vpack.c.b16 %v5277, %v5273
    %v5394 = vpack.c.b16 %v5278, %v5274
    %v5395 = vpack.c.b16 %v5279, %v5275
    %v5396 = vpack.c.b16 %v5280, %v5276
    %v5397 = vpack.c.b16 %v5285, %v5281
    %v5398 = vpack.c.b16 %v5286, %v5282
    %v5399 = vpack.c.b16 %v5287, %v5283
    %v5400 = vpack.c.b16 %v5288, %v5284
    %v5401 = vpack.c.b16 %v5293, %v5289
    %v5402 = vpack.c.b16 %v5294, %v5290
    %v5403 = vpack.c.b16 %v5295, %v5291
    %v5404 = vpack.c.b16 %v5296, %v5292
    %v5405 = vpack.c.b16 %v5301, %v5297
    %v5406 = vpack.c.b16 %v5302, %v5298
    %v5407 = vpack.c.b16 %v5303, %v5299
    %v5408 = vpack.c.b16 %v5304, %v5300
    %v5409 = vpack.c.b16 %v5309, %v5305
    %v5410 = vpack.c.b16 %v5310, %v5306
    %v5411 = vpack.c.b16 %v5311, %v5307
    %v5412 = vpack.c.b16 %v5312, %v5308
    %v5413 = vpack.c.b16 %v5317, %v5313
    %v5414 = vpack.c.b16 %v5318, %v5314
    %v5415 = vpack.c.b16 %v5319, %v5315
    %v5416 = vpack.c.b16 %v5320, %v5316
    %5513 = vmatprep.subr.bf16.mxu0 %v5322
    %5514 = vmatpush1.bf16.msra.mxu0 %v5321
    %5515 = vmatprep.subr.bf16.mxu0 %v5326
    %5516 = vmatpush1.bf16.msra.mxu0 %v5325
    %5517 = vmatprep.subr.bf16.mxu0 %v5330
    %5518 = vmatpush1.bf16.msra.mxu0 %v5329
    %5519 = vmatprep.subr.bf16.mxu0 %v5334
    %5520 = vmatpush1.bf16.msra.mxu0 %v5333
    %5521 = vmatprep.subr.bf16.mxu0 %v5338
    %5522 = vmatpush1.bf16.msra.mxu0 %v5337
    %5523 = vmatprep.subr.bf16.mxu0 %v5342
    %5524 = vmatpush1.bf16.msra.mxu0 %v5341
    %5525 = vmatprep.subr.bf16.mxu0 %v5346
    %5526 = vmatpush1.bf16.msra.mxu0 %v5345
    %5527 = vmatprep.subr.bf16.mxu0 %v5350
    %5528 = vmatpush1.bf16.msra.mxu0 %v5349
    %5529 = vmatprep.subr.bf16.mxu0 %v5354
    %5530 = vmatpush1.bf16.msra.mxu0 %v5353
    %5531 = vmatprep.subr.bf16.mxu0 %v5358
    %5532 = vmatpush1.bf16.msra.mxu0 %v5357
    %5533 = vmatprep.subr.bf16.mxu0 %v5362
    %5534 = vmatpush1.bf16.msra.mxu0 %v5361
    %5535 = vmatprep.subr.bf16.mxu0 %v5366
    %5536 = vmatpush1.bf16.msra.mxu0 %v5365
    %5537 = vmatprep.subr.bf16.mxu0 %v5370
    %5538 = vmatpush1.bf16.msra.mxu0 %v5369
    %5539 = vmatprep.subr.bf16.mxu0 %v5374
    %5540 = vmatpush1.bf16.msra.mxu0 %v5373
    %5541 = vmatprep.subr.bf16.mxu0 %v5378
    %5542 = vmatpush1.bf16.msra.mxu0 %v5377
    %5543 = vmatprep.subr.bf16.mxu0 %v5382
    %5544 = vmatpush1.bf16.msra.mxu0 %v5381
    %5545 = vmatprep.mubr.bf16.mxu0 %v5014
    %5546 = vmatmul.mubr.bf16.gmra.mrb[0].mxu0 %v5011
    %v5547 = vpop.f32.mrb[0].mxu0
    %v5548 = vadd.f32 0.0, %v5547
    %v5549 = vpop.f32.mrb[0].mxu0
    %v5550 = vadd.f32 0.0, %v5549
    %v5551 = vpop.f32.mrb[0].mxu0
    %v5552 = vadd.f32 0.0, %v5551
    %v5553 = vpop.f32.mrb[0].mxu0
    %v5554 = vadd.f32 0.0, %v5553
    %5555 = vmatprep.mubr.bf16.mxu0 %v5021
    %5556 = vmatmul.mubr.bf16.gmra.mrb[0].mxu0 %v5019
    %v5557 = vpop.f32.mrb[0].mxu0
    %v5558 = vadd.f32 0.0, %v5557
    %v5559 = vpop.f32.mrb[0].mxu0
    %v5560 = vadd.f32 0.0, %v5559
    %v5561 = vpop.f32.mrb[0].mxu0
    %v5562 = vadd.f32 0.0, %v5561
    %v5563 = vpop.f32.mrb[0].mxu0
    %v5564 = vadd.f32 0.0, %v5563
    %5565 = vmatprep.mubr.bf16.mxu0 %v5020
    %5566 = vmatmul.mubr.bf16.gmra.mrb[0].mxu0 %v5018
    %v5567 = vpop.f32.mrb[0].mxu0
    %v5568 = vadd.f32 0.0, %v5567
    %v5569 = vpop.f32.mrb[0].mxu0
    %v5570 = vadd.f32 0.0, %v5569
    %v5571 = vpop.f32.mrb[0].mxu0
    %v5572 = vpop.f32.mrb[0].mxu0
    %5573 = vdwg.mxu0
    %5574 = vmatprep.subr.bf16.mxu0 %v5386
    %5575 = vmatpush1.bf16.msra.mxu0 %v5385
    %5576 = vmatprep.subr.bf16.mxu0 %v5390
    %5577 = vmatpush1.bf16.msra.mxu0 %v5389
    %5578 = vmatprep.subr.bf16.mxu0 %v5394
    %5579 = vmatpush1.bf16.msra.mxu0 %v5393
    %5580 = vmatprep.subr.bf16.mxu0 %v5398
    %5581 = vmatpush1.bf16.msra.mxu0 %v5397
    %5582 = vmatprep.subr.bf16.mxu0 %v5402
    %5583 = vmatpush1.bf16.msra.mxu0 %v5401
    %5584 = vmatprep.subr.bf16.mxu0 %v5406
    %5585 = vmatpush1.bf16.msra.mxu0 %v5405
    %5586 = vmatprep.subr.bf16.mxu0 %v5410
    %5587 = vmatpush1.bf16.msra.mxu0 %v5409
    %5588 = vmatprep.subr.bf16.mxu0 %v5414
    %5589 = vmatpush1.bf16.msra.mxu0 %v5413
    %5590 = vmatprep.subr.bf16.mxu0 0
    %5591 = vmatpush1.bf16.msra.mxu0 0
    %5592 = vmatprep.subr.bf16.mxu0 0
    %5593 = vmatpush1.bf16.msra.mxu0 0
    %5594 = vmatprep.subr.bf16.mxu0 0
    %5595 = vmatpush1.bf16.msra.mxu0 0
    %5596 = vmatprep.subr.bf16.mxu0 0
    %5597 = vmatpush1.bf16.msra.mxu0 0
    %5598 = vmatprep.subr.bf16.mxu0 0
    %5599 = vmatpush1.bf16.msra.mxu0 0
    %5600 = vmatprep.subr.bf16.mxu0 0
    %5601 = vmatpush1.bf16.msra.mxu0 0
    %5602 = vmatprep.subr.bf16.mxu0 0
    %5603 = vmatpush1.bf16.msra.mxu0 0
    %5604 = vmatprep.subr.bf16.mxu0 0
    %5605 = vmatpush1.bf16.msra.mxu0 0
    %5606 = vmatprep.mubr.bf16.mxu0 0
    %5607 = vmatmul.mubr.bf16.gmra.mrb[0].mxu0 %v5017
    %v5608 = vpop.f32.mrb[0].mxu0
    %v5609 = vadd.f32 %v5548, %v5608
    %v5610 = vpop.f32.mrb[0].mxu0
    %v5611 = vadd.f32 %v5550, %v5610
    %v5612 = vpop.f32.mrb[0].mxu0
    %v5613 = vadd.f32 %v5552, %v5612
    %v5614 = vpop.f32.mrb[0].mxu0
    %v5615 = vadd.f32 %v5554, %v5614
    %5616 = vmatprep.mubr.bf16.mxu0 0
    %5617 = vmatmul.mubr.bf16.gmra.mrb[0].mxu0 %v5023
    %v5618 = vpop.f32.mrb[0].mxu0
    %v5619 = vadd.f32 %v5558, %v5618
    %v5620 = vpop.f32.mrb[0].mxu0
    %v5621 = vadd.f32 %v5560, %v5620
    %v5622 = vpop.f32.mrb[0].mxu0
    %v5623 = vadd.f32 %v5562, %v5622
    %v5624 = vpop.f32.mrb[0].mxu0
    %v5625 = vadd.f32 %v5564, %v5624
    %5626 = vmatprep.mubr.bf16.mxu0 0
    %5627 = vmatmul.mubr.bf16.gmra.mrb[0].mxu0 %v5022
    %v5628 = vpop.f32.mrb[0].mxu0
    %v5629 = vadd.f32 %v5568, %v5628
    %v5630 = vpop.f32.mrb[0].mxu0
    %v5631 = vadd.f32 %v5570, %v5630
    %v5632 = vpop.f32.mrb[0].mxu0
    %v5633 = vpop.f32.mrb[0].mxu0
    %5634 = vdwg.mxu0
    %5635 = vmatprep.subr.bf16.mxu0 %v5324
    %5636 = vmatpush1.bf16.msra.mxu0 %v5323
    %5637 = vmatprep.subr.bf16.mxu0 %v5328
    %5638 = vmatpush1.bf16.msra.mxu0 %v5327
    %5639 = vmatprep.subr.bf16.mxu0 %v5332
    %5640 = vmatpush1.bf16.msra.mxu0 %v5331
    %5641 = vmatprep.subr.bf16.mxu0 %v5336
    %5642 = vmatpush1.bf16.msra.mxu0 %v5335
    %5643 = vmatprep.subr.bf16.mxu0 %v5340
    %5644 = vmatpush1.bf16.msra.mxu0 %v5339
    %5645 = vmatprep.subr.bf16.mxu0 %v5344
    %5646 = vmatpush1.bf16.msra.mxu0 %v5343
    %5647 = vmatprep.subr.bf16.mxu0 %v5348
    %5648 = vmatpush1.bf16.msra.mxu0 %v5347
    %5649 = vmatprep.subr.bf16.mxu0 %v5352
    %5650 = vmatpush1.bf16.msra.mxu0 %v5351
    %5651 = vmatprep.subr.bf16.mxu0 %v5356
    %5652 = vmatpush1.bf16.msra.mxu0 %v5355
    %5653 = vmatprep.subr.bf16.mxu0 %v5360
    %5654 = vmatpush1.bf16.msra.mxu0 %v5359
    %5655 = vmatprep.subr.bf16.mxu0 %v5364
    %5656 = vmatpush1.bf16.msra.mxu0 %v5363
    %5657 = vmatprep.subr.bf16.mxu0 %v5368
    %5658 = vmatpush1.bf16.msra.mxu0 %v5367
    %5659 = vmatprep.subr.bf16.mxu0 %v5372
    %5660 = vmatpush1.bf16.msra.mxu0 %v5371
    %5661 = vmatprep.subr.bf16.mxu0 %v5376
    %5662 = vmatpush1.bf16.msra.mxu0 %v5375
    %5663 = vmatprep.subr.bf16.mxu0 %v5380
    %5664 = vmatpush1.bf16.msra.mxu0 %v5379
    %5665 = vmatprep.subr.bf16.mxu0 %v5384
    %5666 = vmatpush1.bf16.msra.mxu0 %v5383
    %5667 = vmatprep.mubr.bf16.mxu0 %v5014
    %5668 = vmatmul.mubr.bf16.gmra.mrb[0].mxu0 %v5011
    %v5669 = vpop.f32.mrb[0].mxu0
    %v5670 = vadd.f32 0.0, %v5669
    %v5671 = vpop.f32.mrb[0].mxu0
    %v5672 = vadd.f32 0.0, %v5671
    %v5673 = vpop.f32.mrb[0].mxu0
    %v5674 = vadd.f32 0.0, %v5673
    %v5675 = vpop.f32.mrb[0].mxu0
    %v5676 = vadd.f32 0.0, %v5675
    %5677 = vmatprep.mubr.bf16.mxu0 %v5021
    %5678 = vmatmul.mubr.bf16.gmra.mrb[0].mxu0 %v5019
    %v5679 = vpop.f32.mrb[0].mxu0
    %v5680 = vadd.f32 0.0, %v5679
    %v5681 = vpop.f32.mrb[0].mxu0
    %v5682 = vadd.f32 0.0, %v5681
    %v5683 = vpop.f32.mrb[0].mxu0
    %v5684 = vadd.f32 0.0, %v5683
    %v5685 = vpop.f32.mrb[0].mxu0
    %v5686 = vadd.f32 0.0, %v5685
    %5687 = vmatprep.mubr.bf16.mxu0 %v5020
    %5688 = vmatmul.mubr.bf16.gmra.mrb[0].mxu0 %v5018
    %v5689 = vpop.f32.mrb[0].mxu0
    %v5690 = vadd.f32 0.0, %v5689
    %v5691 = vpop.f32.mrb[0].mxu0
    %v5692 = vadd.f32 0.0, %v5691
    %v5693 = vpop.f32.mrb[0].mxu0
    %v5694 = vpop.f32.mrb[0].mxu0
    %5695 = vdwg.mxu0
    %5696 = vmatprep.subr.bf16.mxu0 %v5388
    %5697 = vmatpush1.bf16.msra.mxu0 %v5387
    %5698 = vmatprep.subr.bf16.mxu0 %v5392
    %5699 = vmatpush1.bf16.msra.mxu0 %v5391
    %5700 = vmatprep.subr.bf16.mxu0 %v5396
    %5701 = vmatpush1.bf16.msra.mxu0 %v5395
    %5702 = vmatprep.subr.bf16.mxu0 %v5400
    %5703 = vmatpush1.bf16.msra.mxu0 %v5399
    %5704 = vmatprep.subr.bf16.mxu0 %v5404
    %5705 = vmatpush1.bf16.msra.mxu0 %v5403
    %5706 = vmatprep.subr.bf16.mxu0 %v5408
    %5707 = vmatpush1.bf16.msra.mxu0 %v5407
    %5708 = vmatprep.subr.bf16.mxu0 %v5412
    %5709 = vmatpush1.bf16.msra.mxu0 %v5411
    %5710 = vmatprep.subr.bf16.mxu0 %v5416
    %5711 = vmatpush1.bf16.msra.mxu0 %v5415
    %5712 = vmatprep.subr.bf16.mxu0 0
    %5713 = vmatpush1.bf16.msra.mxu0 0
    %5714 = vmatprep.subr.bf16.mxu0 0
    %5715 = vmatpush1.bf16.msra.mxu0 0
    %5716 = vmatprep.subr.bf16.mxu0 0
    %5717 = vmatpush1.bf16.msra.mxu0 0
    %5718 = vmatprep.subr.bf16.mxu0 0
    %5719 = vmatpush1.bf16.msra.mxu0 0
    %5720 = vmatprep.subr.bf16.mxu0 0
    %5721 = vmatpush1.bf16.msra.mxu0 0
    %5722 = vmatprep.subr.bf16.mxu0 0
    %5723 = vmatpush1.bf16.msra.mxu0 0
    %5724 = vmatprep.subr.bf16.mxu0 0
    %5725 = vmatpush1.bf16.msra.mxu0 0
    %5726 = vmatprep.subr.bf16.mxu0 0
    %5727 = vmatpush1.bf16.msra.mxu0 0
    %5728 = vmatprep.mubr.bf16.mxu0 0
    %5729 = vmatmul.mubr.bf16.gmra.mrb[0].mxu0 %v5017
    %v5730 = vpop.f32.mrb[0].mxu0
    %v5731 = vadd.f32 %v5670, %v5730
    %v5732 = vpop.f32.mrb[0].mxu0
    %v5733 = vadd.f32 %v5672, %v5732
    %v5734 = vpop.f32.mrb[0].mxu0
    %v5735 = vadd.f32 %v5674, %v5734
    %v5736 = vpop.f32.mrb[0].mxu0
    %v5737 = vadd.f32 %v5676, %v5736
    %5738 = vmatprep.mubr.bf16.mxu0 0
    %5739 = vmatmul.mubr.bf16.gmra.mrb[0].mxu0 %v5023
    %v5740 = vpop.f32.mrb[0].mxu0
    %v5741 = vadd.f32 %v5680, %v5740
    %v5742 = vpop.f32.mrb[0].mxu0
    %v5743 = vadd.f32 %v5682, %v5742
    %v5744 = vpop.f32.mrb[0].mxu0
    %v5745 = vadd.f32 %v5684, %v5744
    %v5746 = vpop.f32.mrb[0].mxu0
    %v5747 = vadd.f32 %v5686, %v5746
    %5748 = vmatprep.mubr.bf16.mxu0 0
    %5749 = vmatmul.mubr.bf16.gmra.mrb[0].mxu0 %v5022
    %v5750 = vpop.f32.mrb[0].mxu0
    %v5751 = vadd.f32 %v5690, %v5750
    %v5752 = vpop.f32.mrb[0].mxu0
    %v5753 = vadd.f32 %v5692, %v5752
    %v5754 = vpop.f32.mrb[0].mxu0
    %v5755 = vpop.f32.mrb[0].mxu0
    %5756 = vdwg.mxu0
    %v5757 = vadd.f32 %v4754, %v5609
    %v5758 = vadd.f32 %v4756, %v5611
    %v5759 = vadd.f32 %v4876, %v5731
    %v5760 = vadd.f32 %v4878, %v5733
    %v5761 = vadd.f32 %v4758, %v5613
    %v5762 = vadd.f32 %v4760, %v5615
    %v5763 = vadd.f32 %v4880, %v5735
    %v5764 = vadd.f32 %v4882, %v5737
    %v5765 = vadd.f32 %v4764, %v5619
    %v5766 = vadd.f32 %v4766, %v5621
    %v5767 = vadd.f32 %v4886, %v5741
    %v5768 = vadd.f32 %v4888, %v5743
    %v5769 = vadd.f32 %v4768, %v5623
    %v5770 = vadd.f32 %v4770, %v5625
    %v5771 = vadd.f32 %v4890, %v5745
    %v5772 = vadd.f32 %v4892, %v5747
    %v5773 = vadd.f32 %v4774, %v5629
    %v5774 = vadd.f32 %v4776, %v5631
    %v5775 = vadd.f32 %v4896, %v5751
    %v5776 = vadd.f32 %v4898, %v5753
    %v5777 = vmax.f32 %v5757, %v5759
    %v5778 = vmax.f32 %v5758, %v5760
    %v5779 = vmax.f32 %v5761, %v5763
    %v5780 = vmax.f32 %v5762, %v5764
    %v5781 = vmax.f32 %v5765, %v5767
    %v5782 = vmax.f32 %v5766, %v5768
    %v5783 = vmax.f32 %v5769, %v5771
    %v5784 = vmax.f32 %v5770, %v5772
    %v5785 = vmax.f32 %v5773, %v5775
    %v5786 = vmax.f32 %v5774, %v5776
    %5787 = vmatprep.subr.bf16.mxu0 %v3743
    %5788 = vmatpush1.bf16.msra.mxu0 %v3742
    %5789 = vmatprep.subr.bf16.mxu0 %v3747
    %5790 = vmatpush1.bf16.msra.mxu0 %v3746
    %5791 = vmatprep.subr.bf16.mxu0 %v3751
    %5792 = vmatpush1.bf16.msra.mxu0 %v3750
    %5793 = vmatprep.subr.bf16.mxu0 %v3755
    %5794 = vmatpush1.bf16.msra.mxu0 %v3754
    %5795 = vmatprep.subr.bf16.mxu0 %v3759
    %5796 = vmatpush1.bf16.msra.mxu0 %v3758
    %5797 = vmatprep.subr.bf16.mxu0 %v3763
    %5798 = vmatpush1.bf16.msra.mxu0 %v3762
    %5799 = vmatprep.subr.bf16.mxu0 %v3767
    %5800 = vmatpush1.bf16.msra.mxu0 %v3766
    %5801 = vmatprep.subr.bf16.mxu0 %v3771
    %5802 = vmatpush1.bf16.msra.mxu0 %v3770
    %5803 = vmatprep.subr.bf16.mxu0 %v3775
    %5804 = vmatpush1.bf16.msra.mxu0 %v3774
    %5805 = vmatprep.subr.bf16.mxu0 %v3779
    %5806 = vmatpush1.bf16.msra.mxu0 %v3778
    %5807 = vmatprep.subr.bf16.mxu0 %v3783
    %5808 = vmatpush1.bf16.msra.mxu0 %v3782
    %5809 = vmatprep.subr.bf16.mxu0 %v3787
    %5810 = vmatpush1.bf16.msra.mxu0 %v3786
    %5811 = vmatprep.subr.bf16.mxu0 %v3791
    %5812 = vmatpush1.bf16.msra.mxu0 %v3790
    %5813 = vmatprep.subr.bf16.mxu0 %v3795
    %5814 = vmatpush1.bf16.msra.mxu0 %v3794
    %5815 = vmatprep.subr.bf16.mxu0 %v3799
    %5816 = vmatpush1.bf16.msra.mxu0 %v3798
    %5817 = vmatprep.subr.bf16.mxu0 %v3803
    %5818 = vmatpush1.bf16.msra.mxu0 %v3802
    %5819 = vmatprep.mubr.bf16.mxu0 %v5014
    %5820 = vmatmul.mubr.bf16.gmra.mrb[0].mxu0 %v5011
    %v5821 = vpop.f32.mrb[0].mxu0
    %v5822 = vadd.f32 0.0, %v5821
    %v5823 = vpop.f32.mrb[0].mxu0
    %v5824 = vadd.f32 0.0, %v5823
    %v5825 = vpop.f32.mrb[0].mxu0
    %v5826 = vadd.f32 0.0, %v5825
    %v5827 = vpop.f32.mrb[0].mxu0
    %v5828 = vadd.f32 0.0, %v5827
    %5829 = vmatprep.mubr.bf16.mxu0 %v5021
    %5830 = vmatmul.mubr.bf16.gmra.mrb[0].mxu0 %v5019
    %v5831 = vpop.f32.mrb[0].mxu0
    %v5832 = vadd.f32 0.0, %v5831
    %v5833 = vpop.f32.mrb[0].mxu0
    %v5834 = vadd.f32 0.0, %v5833
    %v5835 = vpop.f32.mrb[0].mxu0
    %v5836 = vadd.f32 0.0, %v5835
    %v5837 = vpop.f32.mrb[0].mxu0
    %v5838 = vadd.f32 0.0, %v5837
    %5839 = vmatprep.mubr.bf16.mxu0 %v5020
    %5840 = vmatmul.mubr.bf16.gmra.mrb[0].mxu0 %v5018
    %v5841 = vpop.f32.mrb[0].mxu0
    %v5842 = vadd.f32 0.0, %v5841
    %v5843 = vpop.f32.mrb[0].mxu0
    %v5844 = vadd.f32 0.0, %v5843
    %v5845 = vpop.f32.mrb[0].mxu0
    %v5846 = vpop.f32.mrb[0].mxu0
    %5847 = vdwg.mxu0
    %5848 = vmatprep.subr.bf16.mxu0 %v3807
    %5849 = vmatpush1.bf16.msra.mxu0 %v3806
    %5850 = vmatprep.subr.bf16.mxu0 %v3811
    %5851 = vmatpush1.bf16.msra.mxu0 %v3810
    %5852 = vmatprep.subr.bf16.mxu0 %v3815
    %5853 = vmatpush1.bf16.msra.mxu0 %v3814
    %5854 = vmatprep.subr.bf16.mxu0 %v3819
    %5855 = vmatpush1.bf16.msra.mxu0 %v3818
    %5856 = vmatprep.subr.bf16.mxu0 %v3823
    %5857 = vmatpush1.bf16.msra.mxu0 %v3822
    %5858 = vmatprep.subr.bf16.mxu0 %v3827
    %5859 = vmatpush1.bf16.msra.mxu0 %v3826
    %5860 = vmatprep.subr.bf16.mxu0 %v3831
    %5861 = vmatpush1.bf16.msra.mxu0 %v3830
    %5862 = vmatprep.subr.bf16.mxu0 %v3835
    %5863 = vmatpush1.bf16.msra.mxu0 %v3834
    %5864 = vmatprep.subr.bf16.mxu0 0
    %5865 = vmatpush1.bf16.msra.mxu0 0
    %5866 = vmatprep.subr.bf16.mxu0 0
    %5867 = vmatpush1.bf16.msra.mxu0 0
    %5868 = vmatprep.subr.bf16.mxu0 0
    %5869 = vmatpush1.bf16.msra.mxu0 0
    %5870 = vmatprep.subr.bf16.mxu0 0
    %5871 = vmatpush1.bf16.msra.mxu0 0
    %5872 = vmatprep.subr.bf16.mxu0 0
    %5873 = vmatpush1.bf16.msra.mxu0 0
    %5874 = vmatprep.subr.bf16.mxu0 0
    %5875 = vmatpush1.bf16.msra.mxu0 0
    %5876 = vmatprep.subr.bf16.mxu0 0
    %5877 = vmatpush1.bf16.msra.mxu0 0
    %5878 = vmatprep.subr.bf16.mxu0 0
    %5879 = vmatpush1.bf16.msra.mxu0 0
    %5880 = vmatprep.mubr.bf16.mxu0 0
    %5881 = vmatmul.mubr.bf16.gmra.mrb[0].mxu0 %v5017
    %v5882 = vpop.f32.mrb[0].mxu0
    %v5883 = vadd.f32 %v5822, %v5882
    %v5884 = vpop.f32.mrb[0].mxu0
    %v5885 = vadd.f32 %v5824, %v5884
    %v5886 = vpop.f32.mrb[0].mxu0
    %v5887 = vadd.f32 %v5826, %v5886
    %v5888 = vpop.f32.mrb[0].mxu0
    %v5889 = vadd.f32 %v5828, %v5888
    %5890 = vmatprep.mubr.bf16.mxu0 0
    %5891 = vmatmul.mubr.bf16.gmra.mrb[0].mxu0 %v5023
    %v5892 = vpop.f32.mrb[0].mxu0
    %v5893 = vadd.f32 %v5832, %v5892
    %v5894 = vpop.f32.mrb[0].mxu0
    %v5895 = vadd.f32 %v5834, %v5894
    %v5896 = vpop.f32.mrb[0].mxu0
    %v5897 = vadd.f32 %v5836, %v5896
    %v5898 = vpop.f32.mrb[0].mxu0
    %v5899 = vadd.f32 %v5838, %v5898
    %5900 = vmatprep.mubr.bf16.mxu0 0
    %5901 = vmatmul.mubr.bf16.gmra.mrb[0].mxu0 %v5022
    %v5902 = vpop.f32.mrb[0].mxu0
    %v5903 = vadd.f32 %v5842, %v5902
    %v5904 = vpop.f32.mrb[0].mxu0
    %v5905 = vadd.f32 %v5844, %v5904
    %v5906 = vpop.f32.mrb[0].mxu0
    %v5907 = vpop.f32.mrb[0].mxu0
    %5908 = vdwg.mxu0
    %5909 = vmatprep.subr.bf16.mxu0 %v3745
    %5910 = vmatpush1.bf16.msra.mxu0 %v3744
    %5911 = vmatprep.subr.bf16.mxu0 %v3749
    %5912 = vmatpush1.bf16.msra.mxu0 %v3748
    %5913 = vmatprep.subr.bf16.mxu0 %v3753
    %5914 = vmatpush1.bf16.msra.mxu0 %v3752
    %5915 = vmatprep.subr.bf16.mxu0 %v3757
    %5916 = vmatpush1.bf16.msra.mxu0 %v3756
    %5917 = vmatprep.subr.bf16.mxu0 %v3761
    %5918 = vmatpush1.bf16.msra.mxu0 %v3760
    %5919 = vmatprep.subr.bf16.mxu0 %v3765
    %5920 = vmatpush1.bf16.msra.mxu0 %v3764
    %5921 = vmatprep.subr.bf16.mxu0 %v3769
    %5922 = vmatpush1.bf16.msra.mxu0 %v3768
    %5923 = vmatprep.subr.bf16.mxu0 %v3773
    %5924 = vmatpush1.bf16.msra.mxu0 %v3772
    %5925 = vmatprep.subr.bf16.mxu0 %v3777
    %5926 = vmatpush1.bf16.msra.mxu0 %v3776
    %5927 = vmatprep.subr.bf16.mxu0 %v3781
    %5928 = vmatpush1.bf16.msra.mxu0 %v3780
    %5929 = vmatprep.subr.bf16.mxu0 %v3785
    %5930 = vmatpush1.bf16.msra.mxu0 %v3784
    %5931 = vmatprep.subr.bf16.mxu0 %v3789
    %5932 = vmatpush1.bf16.msra.mxu0 %v3788
    %5933 = vmatprep.subr.bf16.mxu0 %v3793
    %5934 = vmatpush1.bf16.msra.mxu0 %v3792
    %5935 = vmatprep.subr.bf16.mxu0 %v3797
    %5936 = vmatpush1.bf16.msra.mxu0 %v3796
    %5937 = vmatprep.subr.bf16.mxu0 %v3801
    %5938 = vmatpush1.bf16.msra.mxu0 %v3800
    %5939 = vmatprep.subr.bf16.mxu0 %v3805
    %5940 = vmatpush1.bf16.msra.mxu0 %v3804
    %5941 = vmatprep.mubr.bf16.mxu0 %v5014
    %5942 = vmatmul.mubr.bf16.gmra.mrb[0].mxu0 %v5011
    %v5943 = vpop.f32.mrb[0].mxu0
    %v5944 = vadd.f32 0.0, %v5943
    %v5945 = vpop.f32.mrb[0].mxu0
    %v5946 = vadd.f32 0.0, %v5945
    %v5947 = vpop.f32.mrb[0].mxu0
    %v5948 = vadd.f32 0.0, %v5947
    %v5949 = vpop.f32.mrb[0].mxu0
    %v5950 = vadd.f32 0.0, %v5949
    %5951 = vmatprep.mubr.bf16.mxu0 %v5021
    %5952 = vmatmul.mubr.bf16.gmra.mrb[0].mxu0 %v5019
    %v5953 = vpop.f32.mrb[0].mxu0
    %v5954 = vadd.f32 0.0, %v5953
    %v5955 = vpop.f32.mrb[0].mxu0
    %v5956 = vadd.f32 0.0, %v5955
    %v5957 = vpop.f32.mrb[0].mxu0
    %v5958 = vadd.f32 0.0, %v5957
    %v5959 = vpop.f32.mrb[0].mxu0
    %v5960 = vadd.f32 0.0, %v5959
    %5961 = vmatprep.mubr.bf16.mxu0 %v5020
    %5962 = vmatmul.mubr.bf16.gmra.mrb[0].mxu0 %v5018
    %v5963 = vpop.f32.mrb[0].mxu0
    %v5964 = vadd.f32 0.0, %v5963
    %v5965 = vpop.f32.mrb[0].mxu0
    %v5966 = vadd.f32 0.0, %v5965
    %v5967 = vpop.f32.mrb[0].mxu0
    %v5968 = vpop.f32.mrb[0].mxu0
    %5969 = vdwg.mxu0
    %5970 = vmatprep.subr.bf16.mxu0 %v3809
    %5971 = vmatpush1.bf16.msra.mxu0 %v3808
    %5972 = vmatprep.subr.bf16.mxu0 %v3813
    %5973 = vmatpush1.bf16.msra.mxu0 %v3812
    %5974 = vmatprep.subr.bf16.mxu0 %v3817
    %5975 = vmatpush1.bf16.msra.mxu0 %v3816
    %5976 = vmatprep.subr.bf16.mxu0 %v3821
    %5977 = vmatpush1.bf16.msra.mxu0 %v3820
    %5978 = vmatprep.subr.bf16.mxu0 %v3825
    %5979 = vmatpush1.bf16.msra.mxu0 %v3824
    %5980 = vmatprep.subr.bf16.mxu0 %v3829
    %5981 = vmatpush1.bf16.msra.mxu0 %v3828
    %5982 = vmatprep.subr.bf16.mxu0 %v3833
    %5983 = vmatpush1.bf16.msra.mxu0 %v3832
    %5984 = vmatprep.subr.bf16.mxu0 %v3837
    %5985 = vmatpush1.bf16.msra.mxu0 %v3836
    %5986 = vmatprep.subr.bf16.mxu0 0
    %5987 = vmatpush1.bf16.msra.mxu0 0
    %5988 = vmatprep.subr.bf16.mxu0 0
    %5989 = vmatpush1.bf16.msra.mxu0 0
    %5990 = vmatprep.subr.bf16.mxu0 0
    %5991 = vmatpush1.bf16.msra.mxu0 0
    %5992 = vmatprep.subr.bf16.mxu0 0
    %5993 = vmatpush1.bf16.msra.mxu0 0
    %5994 = vmatprep.subr.bf16.mxu0 0
    %5995 = vmatpush1.bf16.msra.mxu0 0
    %5996 = vmatprep.subr.bf16.mxu0 0
    %5997 = vmatpush1.bf16.msra.mxu0 0
    %5998 = vmatprep.subr.bf16.mxu0 0
    %5999 = vmatpush1.bf16.msra.mxu0 0
    %6000 = vmatprep.subr.bf16.mxu0 0
    %6001 = vmatpush1.bf16.msra.mxu0 0
    %6002 = vmatprep.mubr.bf16.mxu0 0
    %6003 = vmatmul.mubr.bf16.gmra.mrb[0].mxu0 %v5017
    %v6004 = vpop.f32.mrb[0].mxu0
    %v6005 = vadd.f32 %v5944, %v6004
    %v6006 = vpop.f32.mrb[0].mxu0
    %v6007 = vadd.f32 %v5946, %v6006
    %v6008 = vpop.f32.mrb[0].mxu0
    %v6009 = vadd.f32 %v5948, %v6008
    %v6010 = vpop.f32.mrb[0].mxu0
    %v6011 = vadd.f32 %v5950, %v6010
    %6012 = vmatprep.mubr.bf16.mxu0 0
    %6013 = vmatmul.mubr.bf16.gmra.mrb[0].mxu0 %v5023
    %v6014 = vpop.f32.mrb[0].mxu0
    %v6015 = vadd.f32 %v5954, %v6014
    %v6016 = vpop.f32.mrb[0].mxu0
    %v6017 = vadd.f32 %v5956, %v6016
    %v6018 = vpop.f32.mrb[0].mxu0
    %v6019 = vadd.f32 %v5958, %v6018
    %v6020 = vpop.f32.mrb[0].mxu0
    %v6021 = vadd.f32 %v5960, %v6020
    %6022 = vmatprep.mubr.bf16.mxu0 0
    %6023 = vmatmul.mubr.bf16.gmra.mrb[0].mxu0 %v5022
    %v6024 = vpop.f32.mrb[0].mxu0
    %v6025 = vadd.f32 %v5964, %v6024
    %v6026 = vpop.f32.mrb[0].mxu0
    %v6027 = vadd.f32 %v5966, %v6026
    %v6028 = vpop.f32.mrb[0].mxu0
    %v6029 = vpop.f32.mrb[0].mxu0
    %6030 = vdwg.mxu0
    %6031 = vmatprep.subr.bf16.mxu0 %v4467
    %6032 = vmatpush1.bf16.msra.mxu0 %v4466
    %6033 = vmatprep.subr.bf16.mxu0 %v4471
    %6034 = vmatpush1.bf16.msra.mxu0 %v4470
    %6035 = vmatprep.subr.bf16.mxu0 %v4475
    %6036 = vmatpush1.bf16.msra.mxu0 %v4474
    %6037 = vmatprep.subr.bf16.mxu0 %v4479
    %6038 = vmatpush1.bf16.msra.mxu0 %v4478
    %6039 = vmatprep.subr.bf16.mxu0 %v4483
    %6040 = vmatpush1.bf16.msra.mxu0 %v4482
    %6041 = vmatprep.subr.bf16.mxu0 %v4487
    %6042 = vmatpush1.bf16.msra.mxu0 %v4486
    %6043 = vmatprep.subr.bf16.mxu0 %v4491
    %6044 = vmatpush1.bf16.msra.mxu0 %v4490
    %6045 = vmatprep.subr.bf16.mxu0 %v4495
    %6046 = vmatpush1.bf16.msra.mxu0 %v4494
    %6047 = vmatprep.subr.bf16.mxu0 %v4499
    %6048 = vmatpush1.bf16.msra.mxu0 %v4498
    %6049 = vmatprep.subr.bf16.mxu0 %v4503
    %6050 = vmatpush1.bf16.msra.mxu0 %v4502
    %6051 = vmatprep.subr.bf16.mxu0 %v4507
    %6052 = vmatpush1.bf16.msra.mxu0 %v4506
    %6053 = vmatprep.subr.bf16.mxu0 %v4511
    %6054 = vmatpush1.bf16.msra.mxu0 %v4510
    %6055 = vmatprep.subr.bf16.mxu0 %v4515
    %6056 = vmatpush1.bf16.msra.mxu0 %v4514
    %6057 = vmatprep.subr.bf16.mxu0 %v4519
    %6058 = vmatpush1.bf16.msra.mxu0 %v4518
    %6059 = vmatprep.subr.bf16.mxu0 %v4523
    %6060 = vmatpush1.bf16.msra.mxu0 %v4522
    %6061 = vmatprep.subr.bf16.mxu0 %v4527
    %6062 = vmatpush1.bf16.msra.mxu0 %v4526
    %6063 = vmatprep.mubr.bf16.mxu0 %v3253
    %6064 = vmatmul.mubr.bf16.gmra.mrb[0].mxu0 %v3252
    %v6065 = vpop.f32.mrb[0].mxu0
    %v6066 = vadd.f32 %v5883, %v6065
    %v6067 = vpop.f32.mrb[0].mxu0
    %v6068 = vadd.f32 %v5885, %v6067
    %v6069 = vpop.f32.mrb[0].mxu0
    %v6070 = vadd.f32 %v5887, %v6069
    %v6071 = vpop.f32.mrb[0].mxu0
    %v6072 = vadd.f32 %v5889, %v6071
    %6073 = vmatprep.mubr.bf16.mxu0 %v3256
    %6074 = vmatmul.mubr.bf16.gmra.mrb[0].mxu0 %v3255
    %v6075 = vpop.f32.mrb[0].mxu0
    %v6076 = vadd.f32 %v5893, %v6075
    %v6077 = vpop.f32.mrb[0].mxu0
    %v6078 = vadd.f32 %v5895, %v6077
    %v6079 = vpop.f32.mrb[0].mxu0
    %v6080 = vadd.f32 %v5897, %v6079
    %v6081 = vpop.f32.mrb[0].mxu0
    %v6082 = vadd.f32 %v5899, %v6081
    %6083 = vmatprep.mubr.bf16.mxu0 %v3259
    %6084 = vmatmul.mubr.bf16.gmra.mrb[0].mxu0 %v3258
    %v6085 = vpop.f32.mrb[0].mxu0
    %v6086 = vadd.f32 %v5903, %v6085
    %v6087 = vpop.f32.mrb[0].mxu0
    %v6088 = vadd.f32 %v5905, %v6087
    %v6089 = vpop.f32.mrb[0].mxu0
    %v6090 = vpop.f32.mrb[0].mxu0
    %6091 = vdwg.mxu0
    %6092 = vmatprep.subr.bf16.mxu0 %v4531
    %6093 = vmatpush1.bf16.msra.mxu0 %v4530
    %6094 = vmatprep.subr.bf16.mxu0 %v4535
    %6095 = vmatpush1.bf16.msra.mxu0 %v4534
    %6096 = vmatprep.subr.bf16.mxu0 %v4539
    %6097 = vmatpush1.bf16.msra.mxu0 %v4538
    %6098 = vmatprep.subr.bf16.mxu0 %v4543
    %6099 = vmatpush1.bf16.msra.mxu0 %v4542
    %6100 = vmatprep.subr.bf16.mxu0 %v4547
    %6101 = vmatpush1.bf16.msra.mxu0 %v4546
    %6102 = vmatprep.subr.bf16.mxu0 %v4551
    %6103 = vmatpush1.bf16.msra.mxu0 %v4550
    %6104 = vmatprep.subr.bf16.mxu0 %v4555
    %6105 = vmatpush1.bf16.msra.mxu0 %v4554
    %6106 = vmatprep.subr.bf16.mxu0 %v4559
    %6107 = vmatpush1.bf16.msra.mxu0 %v4558
    %6108 = vmatprep.subr.bf16.mxu0 0
    %6109 = vmatpush1.bf16.msra.mxu0 0
    %6110 = vmatprep.subr.bf16.mxu0 0
    %6111 = vmatpush1.bf16.msra.mxu0 0
    %6112 = vmatprep.subr.bf16.mxu0 0
    %6113 = vmatpush1.bf16.msra.mxu0 0
    %6114 = vmatprep.subr.bf16.mxu0 0
    %6115 = vmatpush1.bf16.msra.mxu0 0
    %6116 = vmatprep.subr.bf16.mxu0 0
    %6117 = vmatpush1.bf16.msra.mxu0 0
    %6118 = vmatprep.subr.bf16.mxu0 0
    %6119 = vmatpush1.bf16.msra.mxu0 0
    %6120 = vmatprep.subr.bf16.mxu0 0
    %6121 = vmatpush1.bf16.msra.mxu0 0
    %6122 = vmatprep.subr.bf16.mxu0 0
    %6123 = vmatpush1.bf16.msra.mxu0 0
    %6124 = vmatprep.mubr.bf16.mxu0 0
    %6125 = vmatmul.mubr.bf16.gmra.mrb[0].mxu0 %v3254
    %v6126 = vpop.f32.mrb[0].mxu0
    %v6127 = vadd.f32 %v6066, %v6126
    %v6128 = vpop.f32.mrb[0].mxu0
    %v6129 = vadd.f32 %v6068, %v6128
    %v6130 = vpop.f32.mrb[0].mxu0
    %v6131 = vadd.f32 %v6070, %v6130
    %v6132 = vpop.f32.mrb[0].mxu0
    %v6133 = vadd.f32 %v6072, %v6132
    %6134 = vmatprep.mubr.bf16.mxu0 0
    %6135 = vmatmul.mubr.bf16.gmra.mrb[0].mxu0 %v3257
    %v6136 = vpop.f32.mrb[0].mxu0
    %v6137 = vadd.f32 %v6076, %v6136
    %v6138 = vpop.f32.mrb[0].mxu0
    %v6139 = vadd.f32 %v6078, %v6138
    %v6140 = vpop.f32.mrb[0].mxu0
    %v6141 = vadd.f32 %v6080, %v6140
    %v6142 = vpop.f32.mrb[0].mxu0
    %v6143 = vadd.f32 %v6082, %v6142
    %6144 = vmatprep.mubr.bf16.mxu0 0
    %6145 = vmatmul.mubr.bf16.gmra.mrb[0].mxu0 %v3260
    %v6146 = vpop.f32.mrb[0].mxu0
    %v6147 = vadd.f32 %v6086, %v6146
    %v6148 = vpop.f32.mrb[0].mxu0
    %v6149 = vadd.f32 %v6088, %v6148
    %v6150 = vpop.f32.mrb[0].mxu0
    %v6151 = vpop.f32.mrb[0].mxu0
    %6152 = vdwg.mxu0
    %6153 = vmatprep.subr.bf16.mxu0 %v4469
    %6154 = vmatpush1.bf16.msra.mxu0 %v4468
    %6155 = vmatprep.subr.bf16.mxu0 %v4473
    %6156 = vmatpush1.bf16.msra.mxu0 %v4472
    %6157 = vmatprep.subr.bf16.mxu0 %v4477
    %6158 = vmatpush1.bf16.msra.mxu0 %v4476
    %6159 = vmatprep.subr.bf16.mxu0 %v4481
    %6160 = vmatpush1.bf16.msra.mxu0 %v4480
    %6161 = vmatprep.subr.bf16.mxu0 %v4485
    %6162 = vmatpush1.bf16.msra.mxu0 %v4484
    %6163 = vmatprep.subr.bf16.mxu0 %v4489
    %6164 = vmatpush1.bf16.msra.mxu0 %v4488
    %6165 = vmatprep.subr.bf16.mxu0 %v4493
    %6166 = vmatpush1.bf16.msra.mxu0 %v4492
    %6167 = vmatprep.subr.bf16.mxu0 %v4497
    %6168 = vmatpush1.bf16.msra.mxu0 %v4496
    %6169 = vmatprep.subr.bf16.mxu0 %v4501
    %6170 = vmatpush1.bf16.msra.mxu0 %v4500
    %6171 = vmatprep.subr.bf16.mxu0 %v4505
    %6172 = vmatpush1.bf16.msra.mxu0 %v4504
    %6173 = vmatprep.subr.bf16.mxu0 %v4509
    %6174 = vmatpush1.bf16.msra.mxu0 %v4508
    %6175 = vmatprep.subr.bf16.mxu0 %v4513
    %6176 = vmatpush1.bf16.msra.mxu0 %v4512
    %6177 = vmatprep.subr.bf16.mxu0 %v4517
    %6178 = vmatpush1.bf16.msra.mxu0 %v4516
    %6179 = vmatprep.subr.bf16.mxu0 %v4521
    %6180 = vmatpush1.bf16.msra.mxu0 %v4520
    %6181 = vmatprep.subr.bf16.mxu0 %v4525
    %6182 = vmatpush1.bf16.msra.mxu0 %v4524
    %6183 = vmatprep.subr.bf16.mxu0 %v4529
    %6184 = vmatpush1.bf16.msra.mxu0 %v4528
    %6185 = vmatprep.mubr.bf16.mxu0 %v3253
    %6186 = vmatmul.mubr.bf16.gmra.mrb[0].mxu0 %v3252
    %v6187 = vpop.f32.mrb[0].mxu0
    %v6188 = vadd.f32 %v6005, %v6187
    %v6189 = vpop.f32.mrb[0].mxu0
    %v6190 = vadd.f32 %v6007, %v6189
    %v6191 = vpop.f32.mrb[0].mxu0
    %v6192 = vadd.f32 %v6009, %v6191
    %v6193 = vpop.f32.mrb[0].mxu0
    %v6194 = vadd.f32 %v6011, %v6193
    %6195 = vmatprep.mubr.bf16.mxu0 %v3256
    %6196 = vmatmul.mubr.bf16.gmra.mrb[0].mxu0 %v3255
    %v6197 = vpop.f32.mrb[0].mxu0
    %v6198 = vadd.f32 %v6015, %v6197
    %v6199 = vpop.f32.mrb[0].mxu0
    %v6200 = vadd.f32 %v6017, %v6199
    %v6201 = vpop.f32.mrb[0].mxu0
    %v6202 = vadd.f32 %v6019, %v6201
    %v6203 = vpop.f32.mrb[0].mxu0
    %v6204 = vadd.f32 %v6021, %v6203
    %6205 = vmatprep.mubr.bf16.mxu0 %v3259
    %6206 = vmatmul.mubr.bf16.gmra.mrb[0].mxu0 %v3258
    %v6207 = vpop.f32.mrb[0].mxu0
    %v6208 = vadd.f32 %v6025, %v6207
    %v6209 = vpop.f32.mrb[0].mxu0
    %v6210 = vadd.f32 %v6027, %v6209
    %v6211 = vpop.f32.mrb[0].mxu0
    %v6212 = vpop.f32.mrb[0].mxu0
    %6213 = vdwg.mxu0
    %6214 = vmatprep.subr.bf16.mxu0 %v4533
    %6215 = vmatpush1.bf16.msra.mxu0 %v4532
    %6216 = vmatprep.subr.bf16.mxu0 %v4537
    %6217 = vmatpush1.bf16.msra.mxu0 %v4536
    %6218 = vmatprep.subr.bf16.mxu0 %v4541
    %6219 = vmatpush1.bf16.msra.mxu0 %v4540
    %6220 = vmatprep.subr.bf16.mxu0 %v4545
    %6221 = vmatpush1.bf16.msra.mxu0 %v4544
    %6222 = vmatprep.subr.bf16.mxu0 %v4549
    %6223 = vmatpush1.bf16.msra.mxu0 %v4548
    %6224 = vmatprep.subr.bf16.mxu0 %v4553
    %6225 = vmatpush1.bf16.msra.mxu0 %v4552
    %6226 = vmatprep.subr.bf16.mxu0 %v4557
    %6227 = vmatpush1.bf16.msra.mxu0 %v4556
    %6228 = vmatprep.subr.bf16.mxu0 %v4561
    %6229 = vmatpush1.bf16.msra.mxu0 %v4560
    %6230 = vmatprep.subr.bf16.mxu0 0
    %6231 = vmatpush1.bf16.msra.mxu0 0
    %6232 = vmatprep.subr.bf16.mxu0 0
    %6233 = vmatpush1.bf16.msra.mxu0 0
    %6234 = vmatprep.subr.bf16.mxu0 0
    %6235 = vmatpush1.bf16.msra.mxu0 0
    %6236 = vmatprep.subr.bf16.mxu0 0
    %6237 = vmatpush1.bf16.msra.mxu0 0
    %6238 = vmatprep.subr.bf16.mxu0 0
    %6239 = vmatpush1.bf16.msra.mxu0 0
    %6240 = vmatprep.subr.bf16.mxu0 0
    %6241 = vmatpush1.bf16.msra.mxu0 0
    %6242 = vmatprep.subr.bf16.mxu0 0
    %6243 = vmatpush1.bf16.msra.mxu0 0
    %6244 = vmatprep.subr.bf16.mxu0 0
    %6245 = vmatpush1.bf16.msra.mxu0 0
    %6246 = vmatprep.mubr.bf16.mxu0 0
    %6247 = vmatmul.mubr.bf16.gmra.mrb[0].mxu0 %v3254
    %v6248 = vpop.f32.mrb[0].mxu0
    %v6249 = vadd.f32 %v6188, %v6248
    %v6250 = vpop.f32.mrb[0].mxu0
    %v6251 = vadd.f32 %v6190, %v6250
    %v6252 = vpop.f32.mrb[0].mxu0
    %v6253 = vadd.f32 %v6192, %v6252
    %v6254 = vpop.f32.mrb[0].mxu0
    %v6255 = vadd.f32 %v6194, %v6254
    %6256 = vmatprep.mubr.bf16.mxu0 0
    %6257 = vmatmul.mubr.bf16.gmra.mrb[0].mxu0 %v3257
    %v6258 = vpop.f32.mrb[0].mxu0
    %v6259 = vadd.f32 %v6198, %v6258
    %v6260 = vpop.f32.mrb[0].mxu0
    %v6261 = vadd.f32 %v6200, %v6260
    %v6262 = vpop.f32.mrb[0].mxu0
    %v6263 = vadd.f32 %v6202, %v6262
    %v6264 = vpop.f32.mrb[0].mxu0
    %v6265 = vadd.f32 %v6204, %v6264
    %6266 = vmatprep.mubr.bf16.mxu0 0
    %6267 = vmatmul.mubr.bf16.gmra.mrb[0].mxu0 %v3260
    %v6268 = vpop.f32.mrb[0].mxu0
    %v6269 = vadd.f32 %v6208, %v6268
    %v6270 = vpop.f32.mrb[0].mxu0
    %v6271 = vadd.f32 %v6210, %v6270
    %v6272 = vpop.f32.mrb[0].mxu0
    %v6273 = vpop.f32.mrb[0].mxu0
    %6274 = vdwg.mxu0
    %v6284 = vrot.slane %v3252, 4
    %v6285 = vrot.slane %v3255, 4
    %v6286 = vsel %vm5008, %v6284, %v6285
    %v6287 = vrot.slane %v3253, 4
    %v6288 = vrot.slane %v3256, 4
    %v6289 = vsel %vm5008, %v6287, %v6288
    %v6290 = vrot.slane %v3254, 4
    %v6291 = vrot.slane %v3257, 4
    %v6292 = vsel %vm5008, %v6290, %v6291
    %v6293 = vrot.slane %v3258, 4
    %v6294 = vsel %vm5008, %v6285, %v6293
    %v6295 = vrot.slane %v3259, 4
    %v6296 = vsel %vm5008, %v6288, %v6295
    %v6297 = vrot.slane %v3260, 4
    %v6298 = vsel %vm5008, %v6291, %v6297
    %6308 = vmatprep.subr.bf16.mxu0 %v5322
    %6309 = vmatpush1.bf16.msra.mxu0 %v5321
    %6310 = vmatprep.subr.bf16.mxu0 %v5326
    %6311 = vmatpush1.bf16.msra.mxu0 %v5325
    %6312 = vmatprep.subr.bf16.mxu0 %v5330
    %6313 = vmatpush1.bf16.msra.mxu0 %v5329
    %6314 = vmatprep.subr.bf16.mxu0 %v5334
    %6315 = vmatpush1.bf16.msra.mxu0 %v5333
    %6316 = vmatprep.subr.bf16.mxu0 %v5338
    %6317 = vmatpush1.bf16.msra.mxu0 %v5337
    %6318 = vmatprep.subr.bf16.mxu0 %v5342
    %6319 = vmatpush1.bf16.msra.mxu0 %v5341
    %6320 = vmatprep.subr.bf16.mxu0 %v5346
    %6321 = vmatpush1.bf16.msra.mxu0 %v5345
    %6322 = vmatprep.subr.bf16.mxu0 %v5350
    %6323 = vmatpush1.bf16.msra.mxu0 %v5349
    %6324 = vmatprep.subr.bf16.mxu0 %v5354
    %6325 = vmatpush1.bf16.msra.mxu0 %v5353
    %6326 = vmatprep.subr.bf16.mxu0 %v5358
    %6327 = vmatpush1.bf16.msra.mxu0 %v5357
    %6328 = vmatprep.subr.bf16.mxu0 %v5362
    %6329 = vmatpush1.bf16.msra.mxu0 %v5361
    %6330 = vmatprep.subr.bf16.mxu0 %v5366
    %6331 = vmatpush1.bf16.msra.mxu0 %v5365
    %6332 = vmatprep.subr.bf16.mxu0 %v5370
    %6333 = vmatpush1.bf16.msra.mxu0 %v5369
    %6334 = vmatprep.subr.bf16.mxu0 %v5374
    %6335 = vmatpush1.bf16.msra.mxu0 %v5373
    %6336 = vmatprep.subr.bf16.mxu0 %v5378
    %6337 = vmatpush1.bf16.msra.mxu0 %v5377
    %6338 = vmatprep.subr.bf16.mxu0 %v5382
    %6339 = vmatpush1.bf16.msra.mxu0 %v5381
    %6340 = vmatprep.mubr.bf16.mxu0 %v6289
    %6341 = vmatmul.mubr.bf16.gmra.mrb[0].mxu0 %v6286
    %v6342 = vpop.f32.mrb[0].mxu0
    %v6343 = vadd.f32 0.0, %v6342
    %v6344 = vpop.f32.mrb[0].mxu0
    %v6345 = vadd.f32 0.0, %v6344
    %v6346 = vpop.f32.mrb[0].mxu0
    %v6347 = vadd.f32 0.0, %v6346
    %v6348 = vpop.f32.mrb[0].mxu0
    %v6349 = vadd.f32 0.0, %v6348
    %6350 = vmatprep.mubr.bf16.mxu0 %v6296
    %6351 = vmatmul.mubr.bf16.gmra.mrb[0].mxu0 %v6294
    %v6352 = vpop.f32.mrb[0].mxu0
    %v6353 = vadd.f32 0.0, %v6352
    %v6354 = vpop.f32.mrb[0].mxu0
    %v6355 = vadd.f32 0.0, %v6354
    %v6356 = vpop.f32.mrb[0].mxu0
    %v6357 = vadd.f32 0.0, %v6356
    %v6358 = vpop.f32.mrb[0].mxu0
    %v6359 = vadd.f32 0.0, %v6358
    %6360 = vmatprep.mubr.bf16.mxu0 %v6295
    %6361 = vmatmul.mubr.bf16.gmra.mrb[0].mxu0 %v6293
    %v6362 = vpop.f32.mrb[0].mxu0
    %v6363 = vadd.f32 0.0, %v6362
    %v6364 = vpop.f32.mrb[0].mxu0
    %v6365 = vadd.f32 0.0, %v6364
    %v6366 = vpop.f32.mrb[0].mxu0
    %v6367 = vpop.f32.mrb[0].mxu0
    %6368 = vdwg.mxu0
    %6369 = vmatprep.subr.bf16.mxu0 %v5386
    %6370 = vmatpush1.bf16.msra.mxu0 %v5385
    %6371 = vmatprep.subr.bf16.mxu0 %v5390
    %6372 = vmatpush1.bf16.msra.mxu0 %v5389
    %6373 = vmatprep.subr.bf16.mxu0 %v5394
    %6374 = vmatpush1.bf16.msra.mxu0 %v5393
    %6375 = vmatprep.subr.bf16.mxu0 %v5398
    %6376 = vmatpush1.bf16.msra.mxu0 %v5397
    %6377 = vmatprep.subr.bf16.mxu0 %v5402
    %6378 = vmatpush1.bf16.msra.mxu0 %v5401
    %6379 = vmatprep.subr.bf16.mxu0 %v5406
    %6380 = vmatpush1.bf16.msra.mxu0 %v5405
    %6381 = vmatprep.subr.bf16.mxu0 %v5410
    %6382 = vmatpush1.bf16.msra.mxu0 %v5409
    %6383 = vmatprep.subr.bf16.mxu0 %v5414
    %6384 = vmatpush1.bf16.msra.mxu0 %v5413
    %6385 = vmatprep.subr.bf16.mxu0 0
    %6386 = vmatpush1.bf16.msra.mxu0 0
    %6387 = vmatprep.subr.bf16.mxu0 0
    %6388 = vmatpush1.bf16.msra.mxu0 0
    %6389 = vmatprep.subr.bf16.mxu0 0
    %6390 = vmatpush1.bf16.msra.mxu0 0
    %6391 = vmatprep.subr.bf16.mxu0 0
    %6392 = vmatpush1.bf16.msra.mxu0 0
    %6393 = vmatprep.subr.bf16.mxu0 0
    %6394 = vmatpush1.bf16.msra.mxu0 0
    %6395 = vmatprep.subr.bf16.mxu0 0
    %6396 = vmatpush1.bf16.msra.mxu0 0
    %6397 = vmatprep.subr.bf16.mxu0 0
    %6398 = vmatpush1.bf16.msra.mxu0 0
    %6399 = vmatprep.subr.bf16.mxu0 0
    %6400 = vmatpush1.bf16.msra.mxu0 0
    %6401 = vmatprep.mubr.bf16.mxu0 0
    %6402 = vmatmul.mubr.bf16.gmra.mrb[0].mxu0 %v6292
    %v6403 = vpop.f32.mrb[0].mxu0
    %v6404 = vadd.f32 %v6343, %v6403
    %v6405 = vpop.f32.mrb[0].mxu0
    %v6406 = vadd.f32 %v6345, %v6405
    %v6407 = vpop.f32.mrb[0].mxu0
    %v6408 = vadd.f32 %v6347, %v6407
    %v6409 = vpop.f32.mrb[0].mxu0
    %v6410 = vadd.f32 %v6349, %v6409
    %6411 = vmatprep.mubr.bf16.mxu0 0
    %6412 = vmatmul.mubr.bf16.gmra.mrb[0].mxu0 %v6298
    %v6413 = vpop.f32.mrb[0].mxu0
    %v6414 = vadd.f32 %v6353, %v6413
    %v6415 = vpop.f32.mrb[0].mxu0
    %v6416 = vadd.f32 %v6355, %v6415
    %v6417 = vpop.f32.mrb[0].mxu0
    %v6418 = vadd.f32 %v6357, %v6417
    %v6419 = vpop.f32.mrb[0].mxu0
    %v6420 = vadd.f32 %v6359, %v6419
    %6421 = vmatprep.mubr.bf16.mxu0 0
    %6422 = vmatmul.mubr.bf16.gmra.mrb[0].mxu0 %v6297
    %v6423 = vpop.f32.mrb[0].mxu0
    %v6424 = vadd.f32 %v6363, %v6423
    %v6425 = vpop.f32.mrb[0].mxu0
    %v6426 = vadd.f32 %v6365, %v6425
    %v6427 = vpop.f32.mrb[0].mxu0
    %v6428 = vpop.f32.mrb[0].mxu0
    %6429 = vdwg.mxu0
    %6430 = vmatprep.subr.bf16.mxu0 %v5324
    %6431 = vmatpush1.bf16.msra.mxu0 %v5323
    %6432 = vmatprep.subr.bf16.mxu0 %v5328
    %6433 = vmatpush1.bf16.msra.mxu0 %v5327
    %6434 = vmatprep.subr.bf16.mxu0 %v5332
    %6435 = vmatpush1.bf16.msra.mxu0 %v5331
    %6436 = vmatprep.subr.bf16.mxu0 %v5336
    %6437 = vmatpush1.bf16.msra.mxu0 %v5335
    %6438 = vmatprep.subr.bf16.mxu0 %v5340
    %6439 = vmatpush1.bf16.msra.mxu0 %v5339
    %6440 = vmatprep.subr.bf16.mxu0 %v5344
    %6441 = vmatpush1.bf16.msra.mxu0 %v5343
    %6442 = vmatprep.subr.bf16.mxu0 %v5348
    %6443 = vmatpush1.bf16.msra.mxu0 %v5347
    %6444 = vmatprep.subr.bf16.mxu0 %v5352
    %6445 = vmatpush1.bf16.msra.mxu0 %v5351
    %6446 = vmatprep.subr.bf16.mxu0 %v5356
    %6447 = vmatpush1.bf16.msra.mxu0 %v5355
    %6448 = vmatprep.subr.bf16.mxu0 %v5360
    %6449 = vmatpush1.bf16.msra.mxu0 %v5359
    %6450 = vmatprep.subr.bf16.mxu0 %v5364
    %6451 = vmatpush1.bf16.msra.mxu0 %v5363
    %6452 = vmatprep.subr.bf16.mxu0 %v5368
    %6453 = vmatpush1.bf16.msra.mxu0 %v5367
    %6454 = vmatprep.subr.bf16.mxu0 %v5372
    %6455 = vmatpush1.bf16.msra.mxu0 %v5371
    %6456 = vmatprep.subr.bf16.mxu0 %v5376
    %6457 = vmatpush1.bf16.msra.mxu0 %v5375
    %6458 = vmatprep.subr.bf16.mxu0 %v5380
    %6459 = vmatpush1.bf16.msra.mxu0 %v5379
    %6460 = vmatprep.subr.bf16.mxu0 %v5384
    %6461 = vmatpush1.bf16.msra.mxu0 %v5383
    %6462 = vmatprep.mubr.bf16.mxu0 %v6289
    %6463 = vmatmul.mubr.bf16.gmra.mrb[0].mxu0 %v6286
    %v6464 = vpop.f32.mrb[0].mxu0
    %v6465 = vadd.f32 0.0, %v6464
    %v6466 = vpop.f32.mrb[0].mxu0
    %v6467 = vadd.f32 0.0, %v6466
    %v6468 = vpop.f32.mrb[0].mxu0
    %v6469 = vadd.f32 0.0, %v6468
    %v6470 = vpop.f32.mrb[0].mxu0
    %v6471 = vadd.f32 0.0, %v6470
    %6472 = vmatprep.mubr.bf16.mxu0 %v6296
    %6473 = vmatmul.mubr.bf16.gmra.mrb[0].mxu0 %v6294
    %v6474 = vpop.f32.mrb[0].mxu0
    %v6475 = vadd.f32 0.0, %v6474
    %v6476 = vpop.f32.mrb[0].mxu0
    %v6477 = vadd.f32 0.0, %v6476
    %v6478 = vpop.f32.mrb[0].mxu0
    %v6479 = vadd.f32 0.0, %v6478
    %v6480 = vpop.f32.mrb[0].mxu0
    %v6481 = vadd.f32 0.0, %v6480
    %6482 = vmatprep.mubr.bf16.mxu0 %v6295
    %6483 = vmatmul.mubr.bf16.gmra.mrb[0].mxu0 %v6293
    %v6484 = vpop.f32.mrb[0].mxu0
    %v6485 = vadd.f32 0.0, %v6484
    %v6486 = vpop.f32.mrb[0].mxu0
    %v6487 = vadd.f32 0.0, %v6486
    %v6488 = vpop.f32.mrb[0].mxu0
    %v6489 = vpop.f32.mrb[0].mxu0
    %6490 = vdwg.mxu0
    %6491 = vmatprep.subr.bf16.mxu0 %v5388
    %6492 = vmatpush1.bf16.msra.mxu0 %v5387
    %6493 = vmatprep.subr.bf16.mxu0 %v5392
    %6494 = vmatpush1.bf16.msra.mxu0 %v5391
    %6495 = vmatprep.subr.bf16.mxu0 %v5396
    %6496 = vmatpush1.bf16.msra.mxu0 %v5395
    %6497 = vmatprep.subr.bf16.mxu0 %v5400
    %6498 = vmatpush1.bf16.msra.mxu0 %v5399
    %6499 = vmatprep.subr.bf16.mxu0 %v5404
    %6500 = vmatpush1.bf16.msra.mxu0 %v5403
    %6501 = vmatprep.subr.bf16.mxu0 %v5408
    %6502 = vmatpush1.bf16.msra.mxu0 %v5407
    %6503 = vmatprep.subr.bf16.mxu0 %v5412
    %6504 = vmatpush1.bf16.msra.mxu0 %v5411
    %6505 = vmatprep.subr.bf16.mxu0 %v5416
    %6506 = vmatpush1.bf16.msra.mxu0 %v5415
    %6507 = vmatprep.subr.bf16.mxu0 0
    %6508 = vmatpush1.bf16.msra.mxu0 0
    %6509 = vmatprep.subr.bf16.mxu0 0
    %6510 = vmatpush1.bf16.msra.mxu0 0
    %6511 = vmatprep.subr.bf16.mxu0 0
    %6512 = vmatpush1.bf16.msra.mxu0 0
    %6513 = vmatprep.subr.bf16.mxu0 0
    %6514 = vmatpush1.bf16.msra.mxu0 0
    %6515 = vmatprep.subr.bf16.mxu0 0
    %6516 = vmatpush1.bf16.msra.mxu0 0
    %6517 = vmatprep.subr.bf16.mxu0 0
    %6518 = vmatpush1.bf16.msra.mxu0 0
    %6519 = vmatprep.subr.bf16.mxu0 0
    %6520 = vmatpush1.bf16.msra.mxu0 0
    %6521 = vmatprep.subr.bf16.mxu0 0
    %6522 = vmatpush1.bf16.msra.mxu0 0
    %6523 = vmatprep.mubr.bf16.mxu0 0
    %6524 = vmatmul.mubr.bf16.gmra.mrb[0].mxu0 %v6292
    %v6525 = vpop.f32.mrb[0].mxu0
    %v6526 = vadd.f32 %v6465, %v6525
    %v6527 = vpop.f32.mrb[0].mxu0
    %v6528 = vadd.f32 %v6467, %v6527
    %v6529 = vpop.f32.mrb[0].mxu0
    %v6530 = vadd.f32 %v6469, %v6529
    %v6531 = vpop.f32.mrb[0].mxu0
    %v6532 = vadd.f32 %v6471, %v6531
    %6533 = vmatprep.mubr.bf16.mxu0 0
    %6534 = vmatmul.mubr.bf16.gmra.mrb[0].mxu0 %v6298
    %v6535 = vpop.f32.mrb[0].mxu0
    %v6536 = vadd.f32 %v6475, %v6535
    %v6537 = vpop.f32.mrb[0].mxu0
    %v6538 = vadd.f32 %v6477, %v6537
    %v6539 = vpop.f32.mrb[0].mxu0
    %v6540 = vadd.f32 %v6479, %v6539
    %v6541 = vpop.f32.mrb[0].mxu0
    %v6542 = vadd.f32 %v6481, %v6541
    %6543 = vmatprep.mubr.bf16.mxu0 0
    %6544 = vmatmul.mubr.bf16.gmra.mrb[0].mxu0 %v6297
    %v6545 = vpop.f32.mrb[0].mxu0
    %v6546 = vadd.f32 %v6485, %v6545
    %v6547 = vpop.f32.mrb[0].mxu0
    %v6548 = vadd.f32 %v6487, %v6547
    %v6549 = vpop.f32.mrb[0].mxu0
    %v6550 = vpop.f32.mrb[0].mxu0
    %6551 = vdwg.mxu0
    %v6552 = vadd.f32 %v6127, %v6404
    %v6553 = vadd.f32 %v6129, %v6406
    %v6554 = vadd.f32 %v6249, %v6526
    %v6555 = vadd.f32 %v6251, %v6528
    %v6556 = vadd.f32 %v6131, %v6408
    %v6557 = vadd.f32 %v6133, %v6410
    %v6558 = vadd.f32 %v6253, %v6530
    %v6559 = vadd.f32 %v6255, %v6532
    %v6560 = vadd.f32 %v6137, %v6414
    %v6561 = vadd.f32 %v6139, %v6416
    %v6562 = vadd.f32 %v6259, %v6536
    %v6563 = vadd.f32 %v6261, %v6538
    %v6564 = vadd.f32 %v6141, %v6418
    %v6565 = vadd.f32 %v6143, %v6420
    %v6566 = vadd.f32 %v6263, %v6540
    %v6567 = vadd.f32 %v6265, %v6542
    %v6568 = vadd.f32 %v6147, %v6424
    %v6569 = vadd.f32 %v6149, %v6426
    %v6570 = vadd.f32 %v6269, %v6546
    %v6571 = vadd.f32 %v6271, %v6548
    %v6572 = vmax.f32 %v6552, %v6554
    %v6573 = vmax.f32 %v6553, %v6555
    %v6574 = vmax.f32 %v6556, %v6558
    %v6575 = vmax.f32 %v6557, %v6559
    %v6576 = vmax.f32 %v6560, %v6562
    %v6577 = vmax.f32 %v6561, %v6563
    %v6578 = vmax.f32 %v6564, %v6566
    %v6579 = vmax.f32 %v6565, %v6567
    %v6580 = vmax.f32 %v6568, %v6570
    %v6581 = vmax.f32 %v6569, %v6571
    %v6582 = vmax.f32 %v5777, %v6572
    %v6583 = vmax.f32 %v5778, %v6573
    %v6584 = vmax.f32 %v5779, %v6574
    %v6585 = vmax.f32 %v5780, %v6575
    %v6586 = vmax.f32 %v5781, %v6576
    %v6587 = vmax.f32 %v5782, %v6577
    %v6588 = vmax.f32 %v5783, %v6578
    %v6589 = vmax.f32 %v5784, %v6579
    %v6590 = vmax.f32 %v5785, %v6580
    %v6591 = vmax.f32 %v5786, %v6581
    %v6592 = vld [vmem:[#allocation7] sm:$0x3]
    %v6594 = vlaneseq
    %v6595 = vshrl.u32 %v6594, 7
    %v6596 = vsub.s32 0, %v6595
    %v6597 = vrot.slane %v6592, %v6596
    %v6598 = vlaneseq
    %v6599 = vshrl.u32 %v6598, 7
    %v6600 = vsub.s32 1, %v6599
    %v6601 = vrot.slane %v6592, %v6600
    %v6604 = vadd.f32 %v6582, %v6597
    %v6605 = vadd.f32 %v6583, %v6601
    %v6606 = vadd.f32 %v6584, %v6597
    %v6607 = vadd.f32 %v6585, %v6601
    %v6608 = vadd.f32 %v6586, %v6597
    %v6609 = vadd.f32 %v6587, %v6601
    %v6610 = vadd.f32 %v6588, %v6597
    %v6611 = vadd.f32 %v6589, %v6601
    %v6612 = vadd.f32 %v6590, %v6597
    %v6613 = vadd.f32 %v6591, %v6601
    %v6614 = vpack.c.bf16 %v6606, %v6604
    %v6615 = vpack.c.bf16 %v6607, %v6605
    %v6616 = vpack.c.bf16 %v6610, %v6608
    %v6617 = vpack.c.bf16 %v6611, %v6609
    %v6618 = vpack.c.bf16 %v6612, %v6612
    %v6619 = vpack.c.bf16 %v6613, %v6613
    %v6620 = vld [vmem:[#allocation9] sm:$0xf]
    %v6621 = vld [vmem:[#allocation9 + $0x4] sm:$0xf]
    %v6622 = vld [vmem:[#allocation9 + $0x8] sm:$0xf]
    %v6623 = vld [vmem:[#allocation9 + $0xc] sm:$0xf]
    %v6624 = vld [vmem:[#allocation9 + $0x10] sm:$0xf]
    %v6625 = vld [vmem:[#allocation9 + $0x14] sm:$0xf]
    %v6626 = vld [vmem:[#allocation9 + $0x18] sm:$0xf]
    %v6627 = vld [vmem:[#allocation9 + $0x1c] sm:$0xf]
    %v6628 = vld [vmem:[#allocation9 + $0x20] sm:$0xf]
    %v6629 = vld [vmem:[#allocation9 + $0x24] sm:$0xf]
    %v6630 = vld [vmem:[#allocation9 + $0x28] sm:$0xf]
    %v6631 = vld [vmem:[#allocation9 + $0x2c] sm:$0xf]
    %v6632 = vld [vmem:[#allocation9 + $0x30] sm:$0xf]
    %v6633 = vld [vmem:[#allocation9 + $0x34] sm:$0xf]
    %v6634 = vld [vmem:[#allocation9 + $0x38] sm:$0xf]
    %v6635 = vld [vmem:[#allocation9 + $0x3c] sm:$0xf]
    %v6636 = vld [vmem:[#allocation9 + $0x40] sm:$0xf]
    %v6637 = vld [vmem:[#allocation9 + $0x44] sm:$0xf]
    %v6638 = vld [vmem:[#allocation9 + $0x48] sm:$0xf]
    %v6639 = vld [vmem:[#allocation9 + $0x4c] sm:$0xf]
    %v6640 = vld [vmem:[#allocation9 + $0x50] sm:$0xf]
    %v6641 = vld [vmem:[#allocation9 + $0x54] sm:$0xf]
    %v6642 = vld [vmem:[#allocation9 + $0x58] sm:$0xf]
    %v6643 = vld [vmem:[#allocation9 + $0x5c] sm:$0xf]
    %v6644 = vld [vmem:[#allocation9 + $0x60] sm:$0xf]
    %v6645 = vld [vmem:[#allocation9 + $0x64] sm:$0xf]
    %v6646 = vld [vmem:[#allocation9 + $0x68] sm:$0xf]
    %v6647 = vld [vmem:[#allocation9 + $0x6c] sm:$0xf]
    %v6648 = vld [vmem:[#allocation9 + $0x70] sm:$0xf]
    %v6649 = vld [vmem:[#allocation9 + $0x74] sm:$0xf]
    %v6650 = vld [vmem:[#allocation9 + $0x78] sm:$0xf]
    %v6651 = vld [vmem:[#allocation9 + $0x7c] sm:$0xf]
    %s6652 = scalar_lea.vmem [#allocation9], 128
    %v6653 = vld [vmem:[%s6652] sm:$0xf]
    %v6654 = vld [vmem:[%s6652 + $0x4] sm:$0xf]
    %v6655 = vld [vmem:[%s6652 + $0x8] sm:$0xf]
    %v6656 = vld [vmem:[%s6652 + $0xc] sm:$0xf]
    %v6657 = vld [vmem:[%s6652 + $0x10] sm:$0xf]
    %v6658 = vld [vmem:[%s6652 + $0x14] sm:$0xf]
    %v6659 = vld [vmem:[%s6652 + $0x18] sm:$0xf]
    %v6660 = vld [vmem:[%s6652 + $0x1c] sm:$0xf]
    %v6661 = vld [vmem:[%s6652 + $0x20] sm:$0xf]
    %v6662 = vld [vmem:[%s6652 + $0x24] sm:$0xf]
    %v6663 = vld [vmem:[%s6652 + $0x28] sm:$0xf]
    %v6664 = vld [vmem:[%s6652 + $0x2c] sm:$0xf]
    %v6665 = vld [vmem:[%s6652 + $0x30] sm:$0xf]
    %v6666 = vld [vmem:[%s6652 + $0x34] sm:$0xf]
    %v6667 = vld [vmem:[%s6652 + $0x38] sm:$0xf]
    %v6668 = vld [vmem:[%s6652 + $0x3c] sm:$0xf]
    %v6669 = vld [vmem:[%s6652 + $0x40] sm:$0xf]
    %v6670 = vld [vmem:[%s6652 + $0x44] sm:$0xf]
    %v6671 = vld [vmem:[%s6652 + $0x48] sm:$0xf]
    %v6672 = vld [vmem:[%s6652 + $0x4c] sm:$0xf]
    %v6673 = vld [vmem:[%s6652 + $0x50] sm:$0xf]
    %v6674 = vld [vmem:[%s6652 + $0x54] sm:$0xf]
    %v6675 = vld [vmem:[%s6652 + $0x58] sm:$0xf]
    %v6676 = vld [vmem:[%s6652 + $0x5c] sm:$0xf]
    %v6677 = vld [vmem:[%s6652 + $0x60] sm:$0xf]
    %v6678 = vld [vmem:[%s6652 + $0x64] sm:$0xf]
    %v6679 = vld [vmem:[%s6652 + $0x68] sm:$0xf]
    %v6680 = vld [vmem:[%s6652 + $0x6c] sm:$0xf]
    %v6681 = vld [vmem:[%s6652 + $0x70] sm:$0xf]
    %v6682 = vld [vmem:[%s6652 + $0x74] sm:$0xf]
    %v6683 = vld [vmem:[%s6652 + $0x78] sm:$0xf]
    %v6684 = vld [vmem:[%s6652 + $0x7c] sm:$0xf]
    %v6687 = vrot.slane %v6614, 4
    %v6688 = vrot.slane %v6615, 4
    %v6723 = vunpack.c.l.b16 %v6653
    %v6724 = vunpack.c.l.b16 %v6654
    %v6725 = vunpack.c.l.b16 %v6655
    %v6726 = vunpack.c.l.b16 %v6656
    %v6727 = vunpack.c.l.b16 %v6657
    %v6728 = vunpack.c.l.b16 %v6658
    %v6729 = vunpack.c.l.b16 %v6659
    %v6730 = vunpack.c.l.b16 %v6660
    %v6731 = vunpack.c.l.b16 %v6661
    %v6732 = vunpack.c.l.b16 %v6662
    %v6733 = vunpack.c.l.b16 %v6663
    %v6734 = vunpack.c.l.b16 %v6664
    %v6735 = vunpack.c.l.b16 %v6665
    %v6736 = vunpack.c.l.b16 %v6666
    %v6737 = vunpack.c.l.b16 %v6667
    %v6738 = vunpack.c.l.b16 %v6668
    %v6739 = vunpack.c.l.b16 %v6669
    %v6740 = vunpack.c.l.b16 %v6670
    %v6741 = vunpack.c.l.b16 %v6671
    %v6742 = vunpack.c.l.b16 %v6672
    %v6743 = vunpack.c.l.b16 %v6673
    %v6744 = vunpack.c.l.b16 %v6674
    %v6745 = vunpack.c.l.b16 %v6675
    %v6746 = vunpack.c.l.b16 %v6676
    %v6747 = vunpack.c.l.b16 %v6677
    %v6748 = vunpack.c.l.b16 %v6678
    %v6749 = vunpack.c.l.b16 %v6679
    %v6750 = vunpack.c.l.b16 %v6680
    %v6751 = vunpack.c.l.b16 %v6681
    %v6752 = vunpack.c.l.b16 %v6682
    %v6753 = vunpack.c.l.b16 %v6683
    %v6754 = vunpack.c.l.b16 %v6684
    %v6755 = vpack.c.b16 %v6724, %v6723
    %v6756 = vpack.c.b16 %v6726, %v6725
    %v6757 = vpack.c.b16 %v6728, %v6727
    %v6758 = vpack.c.b16 %v6730, %v6729
    %v6759 = vpack.c.b16 %v6732, %v6731
    %v6760 = vpack.c.b16 %v6734, %v6733
    %v6761 = vpack.c.b16 %v6736, %v6735
    %v6762 = vpack.c.b16 %v6738, %v6737
    %v6763 = vpack.c.b16 %v6740, %v6739
    %v6764 = vpack.c.b16 %v6742, %v6741
    %v6765 = vpack.c.b16 %v6744, %v6743
    %v6766 = vpack.c.b16 %v6746, %v6745
    %v6767 = vpack.c.b16 %v6748, %v6747
    %v6768 = vpack.c.b16 %v6750, %v6749
    %v6769 = vpack.c.b16 %v6752, %v6751
    %v6770 = vpack.c.b16 %v6754, %v6753
    %6787 = vmatprep.subr.bf16.mxu0 0
    %6788 = vmatpush1.bf16.msra.mxu0 %v6755
    %6789 = vmatprep.subr.bf16.mxu0 0
    %6790 = vmatpush1.bf16.msra.mxu0 %v6756
    %6791 = vmatprep.subr.bf16.mxu0 0
    %6792 = vmatpush1.bf16.msra.mxu0 %v6757
    %6793 = vmatprep.subr.bf16.mxu0 0
    %6794 = vmatpush1.bf16.msra.mxu0 %v6758
    %6795 = vmatprep.subr.bf16.mxu0 0
    %6796 = vmatpush1.bf16.msra.mxu0 %v6759
    %6797 = vmatprep.subr.bf16.mxu0 0
    %6798 = vmatpush1.bf16.msra.mxu0 %v6760
    %6799 = vmatprep.subr.bf16.mxu0 0
    %6800 = vmatpush1.bf16.msra.mxu0 %v6761
    %6801 = vmatprep.subr.bf16.mxu0 0
    %6802 = vmatpush1.bf16.msra.mxu0 %v6762
    %6803 = vmatprep.subr.bf16.mxu0 0
    %6804 = vmatpush1.bf16.msra.mxu0 %v6763
    %6805 = vmatprep.subr.bf16.mxu0 0
    %6806 = vmatpush1.bf16.msra.mxu0 %v6764
    %6807 = vmatprep.subr.bf16.mxu0 0
    %6808 = vmatpush1.bf16.msra.mxu0 %v6765
    %6809 = vmatprep.subr.bf16.mxu0 0
    %6810 = vmatpush1.bf16.msra.mxu0 %v6766
    %6811 = vmatprep.subr.bf16.mxu0 0
    %6812 = vmatpush1.bf16.msra.mxu0 %v6767
    %6813 = vmatprep.subr.bf16.mxu0 0
    %6814 = vmatpush1.bf16.msra.mxu0 %v6768
    %6815 = vmatprep.subr.bf16.mxu0 0
    %6816 = vmatpush1.bf16.msra.mxu0 %v6769
    %6817 = vmatprep.subr.bf16.mxu0 0
    %6818 = vmatpush1.bf16.msra.mxu0 %v6770
    %6819 = vmatprep.mubr.bf16.mxu0 %v6688
    %6820 = vmatmul.mubr.bf16.gmra.mrb[0].mxu0 %v6687
    %v6821 = vpop.f32.mrb[0].mxu0
    %v6822 = vadd.f32 0.0, %v6821
    %v6823 = vpop.f32.mrb[0].mxu0
    %v6824 = vpop.f32.mrb[0].mxu0
    %v6825 = vpop.f32.mrb[0].mxu0
    %6826 = vdwg.mxu0
    %v6859 = vunpack.c.l.b16 %v6620
    %v6860 = vunpack.c.l.b16 %v6621
    %v6861 = vunpack.c.l.b16 %v6622
    %v6862 = vunpack.c.l.b16 %v6623
    %v6863 = vunpack.c.l.b16 %v6624
    %v6864 = vunpack.c.l.b16 %v6625
    %v6865 = vunpack.c.l.b16 %v6626
    %v6866 = vunpack.c.l.b16 %v6627
    %v6867 = vunpack.c.l.b16 %v6628
    %v6868 = vunpack.c.l.b16 %v6629
    %v6869 = vunpack.c.l.b16 %v6630
    %v6870 = vunpack.c.l.b16 %v6631
    %v6871 = vunpack.c.l.b16 %v6632
    %v6872 = vunpack.c.l.b16 %v6633
    %v6873 = vunpack.c.l.b16 %v6634
    %v6874 = vunpack.c.l.b16 %v6635
    %v6875 = vunpack.c.l.b16 %v6636
    %v6876 = vunpack.c.l.b16 %v6637
    %v6877 = vunpack.c.l.b16 %v6638
    %v6878 = vunpack.c.l.b16 %v6639
    %v6879 = vunpack.c.l.b16 %v6640
    %v6880 = vunpack.c.l.b16 %v6641
    %v6881 = vunpack.c.l.b16 %v6642
    %v6882 = vunpack.c.l.b16 %v6643
    %v6883 = vunpack.c.l.b16 %v6644
    %v6884 = vunpack.c.l.b16 %v6645
    %v6885 = vunpack.c.l.b16 %v6646
    %v6886 = vunpack.c.l.b16 %v6647
    %v6887 = vunpack.c.l.b16 %v6648
    %v6888 = vunpack.c.l.b16 %v6649
    %v6889 = vunpack.c.l.b16 %v6650
    %v6890 = vunpack.c.l.b16 %v6651
    %v6891 = vpack.c.b16 %v6860, %v6859
    %v6892 = vpack.c.b16 %v6862, %v6861
    %v6893 = vpack.c.b16 %v6864, %v6863
    %v6894 = vpack.c.b16 %v6866, %v6865
    %v6895 = vpack.c.b16 %v6868, %v6867
    %v6896 = vpack.c.b16 %v6870, %v6869
    %v6897 = vpack.c.b16 %v6872, %v6871
    %v6898 = vpack.c.b16 %v6874, %v6873
    %v6899 = vpack.c.b16 %v6876, %v6875
    %v6900 = vpack.c.b16 %v6878, %v6877
    %v6901 = vpack.c.b16 %v6880, %v6879
    %v6902 = vpack.c.b16 %v6882, %v6881
    %v6903 = vpack.c.b16 %v6884, %v6883
    %v6904 = vpack.c.b16 %v6886, %v6885
    %v6905 = vpack.c.b16 %v6888, %v6887
    %v6906 = vpack.c.b16 %v6890, %v6889
    %6923 = vmatprep.subr.bf16.mxu0 0
    %6924 = vmatpush1.bf16.msra.mxu0 %v6891
    %6925 = vmatprep.subr.bf16.mxu0 0
    %6926 = vmatpush1.bf16.msra.mxu0 %v6892
    %6927 = vmatprep.subr.bf16.mxu0 0
    %6928 = vmatpush1.bf16.msra.mxu0 %v6893
    %6929 = vmatprep.subr.bf16.mxu0 0
    %6930 = vmatpush1.bf16.msra.mxu0 %v6894
    %6931 = vmatprep.subr.bf16.mxu0 0
    %6932 = vmatpush1.bf16.msra.mxu0 %v6895
    %6933 = vmatprep.subr.bf16.mxu0 0
    %6934 = vmatpush1.bf16.msra.mxu0 %v6896
    %6935 = vmatprep.subr.bf16.mxu0 0
    %6936 = vmatpush1.bf16.msra.mxu0 %v6897
    %6937 = vmatprep.subr.bf16.mxu0 0
    %6938 = vmatpush1.bf16.msra.mxu0 %v6898
    %6939 = vmatprep.subr.bf16.mxu0 0
    %6940 = vmatpush1.bf16.msra.mxu0 %v6899
    %6941 = vmatprep.subr.bf16.mxu0 0
    %6942 = vmatpush1.bf16.msra.mxu0 %v6900
    %6943 = vmatprep.subr.bf16.mxu0 0
    %6944 = vmatpush1.bf16.msra.mxu0 %v6901
    %6945 = vmatprep.subr.bf16.mxu0 0
    %6946 = vmatpush1.bf16.msra.mxu0 %v6902
    %6947 = vmatprep.subr.bf16.mxu0 0
    %6948 = vmatpush1.bf16.msra.mxu0 %v6903
    %6949 = vmatprep.subr.bf16.mxu0 0
    %6950 = vmatpush1.bf16.msra.mxu0 %v6904
    %6951 = vmatprep.subr.bf16.mxu0 0
    %6952 = vmatpush1.bf16.msra.mxu0 %v6905
    %6953 = vmatprep.subr.bf16.mxu0 0
    %6954 = vmatpush1.bf16.msra.mxu0 %v6906
    %6955 = vmatprep.mubr.bf16.mxu0 %v6615
    %6956 = vmatmul.mubr.bf16.gmra.mrb[0].mxu0 %v6614
    %v6957 = vpop.f32.mrb[0].mxu0
    %v6958 = vadd.f32 %v6822, %v6957
    %v6959 = vpop.f32.mrb[0].mxu0
    %v6960 = vpop.f32.mrb[0].mxu0
    %v6961 = vpop.f32.mrb[0].mxu0
    %6962 = vdwg.mxu0
    %s6963 = scalar_lea.vmem [#allocation9], 256
    %v6964 = vld [vmem:[%s6963] sm:$0xf]
    %v6965 = vld [vmem:[%s6963 + $0x4] sm:$0xf]
    %v6966 = vld [vmem:[%s6963 + $0x8] sm:$0xf]
    %v6967 = vld [vmem:[%s6963 + $0xc] sm:$0xf]
    %v6968 = vld [vmem:[%s6963 + $0x10] sm:$0xf]
    %v6969 = vld [vmem:[%s6963 + $0x14] sm:$0xf]
    %v6970 = vld [vmem:[%s6963 + $0x18] sm:$0xf]
    %v6971 = vld [vmem:[%s6963 + $0x1c] sm:$0xf]
    %v6972 = vld [vmem:[%s6963 + $0x20] sm:$0xf]
    %v6973 = vld [vmem:[%s6963 + $0x24] sm:$0xf]
    %v6974 = vld [vmem:[%s6963 + $0x28] sm:$0xf]
    %v6975 = vld [vmem:[%s6963 + $0x2c] sm:$0xf]
    %v6976 = vld [vmem:[%s6963 + $0x30] sm:$0xf]
    %v6977 = vld [vmem:[%s6963 + $0x34] sm:$0xf]
    %v6978 = vld [vmem:[%s6963 + $0x38] sm:$0xf]
    %v6979 = vld [vmem:[%s6963 + $0x3c] sm:$0xf]
    %v6980 = vld [vmem:[%s6963 + $0x40] sm:$0xf]
    %v6981 = vld [vmem:[%s6963 + $0x44] sm:$0xf]
    %v6982 = vld [vmem:[%s6963 + $0x48] sm:$0xf]
    %v6983 = vld [vmem:[%s6963 + $0x4c] sm:$0xf]
    %v6984 = vld [vmem:[%s6963 + $0x50] sm:$0xf]
    %v6985 = vld [vmem:[%s6963 + $0x54] sm:$0xf]
    %v6986 = vld [vmem:[%s6963 + $0x58] sm:$0xf]
    %v6987 = vld [vmem:[%s6963 + $0x5c] sm:$0xf]
    %v6988 = vld [vmem:[%s6963 + $0x60] sm:$0xf]
    %v6989 = vld [vmem:[%s6963 + $0x64] sm:$0xf]
    %v6990 = vld [vmem:[%s6963 + $0x68] sm:$0xf]
    %v6991 = vld [vmem:[%s6963 + $0x6c] sm:$0xf]
    %v6992 = vld [vmem:[%s6963 + $0x70] sm:$0xf]
    %v6993 = vld [vmem:[%s6963 + $0x74] sm:$0xf]
    %v6994 = vld [vmem:[%s6963 + $0x78] sm:$0xf]
    %v6995 = vld [vmem:[%s6963 + $0x7c] sm:$0xf]
    %v7028 = vunpack.c.l.b16 %v6964
    %v7029 = vunpack.c.l.b16 %v6965
    %v7030 = vunpack.c.l.b16 %v6966
    %v7031 = vunpack.c.l.b16 %v6967
    %v7032 = vunpack.c.l.b16 %v6968
    %v7033 = vunpack.c.l.b16 %v6969
    %v7034 = vunpack.c.l.b16 %v6970
    %v7035 = vunpack.c.l.b16 %v6971
    %v7036 = vunpack.c.l.b16 %v6972
    %v7037 = vunpack.c.l.b16 %v6973
    %v7038 = vunpack.c.l.b16 %v6974
    %v7039 = vunpack.c.l.b16 %v6975
    %v7040 = vunpack.c.l.b16 %v6976
    %v7041 = vunpack.c.l.b16 %v6977
    %v7042 = vunpack.c.l.b16 %v6978
    %v7043 = vunpack.c.l.b16 %v6979
    %v7044 = vunpack.c.l.b16 %v6980
    %v7045 = vunpack.c.l.b16 %v6981
    %v7046 = vunpack.c.l.b16 %v6982
    %v7047 = vunpack.c.l.b16 %v6983
    %v7048 = vunpack.c.l.b16 %v6984
    %v7049 = vunpack.c.l.b16 %v6985
    %v7050 = vunpack.c.l.b16 %v6986
    %v7051 = vunpack.c.l.b16 %v6987
    %v7052 = vunpack.c.l.b16 %v6988
    %v7053 = vunpack.c.l.b16 %v6989
    %v7054 = vunpack.c.l.b16 %v6990
    %v7055 = vunpack.c.l.b16 %v6991
    %v7056 = vunpack.c.l.b16 %v6992
    %v7057 = vunpack.c.l.b16 %v6993
    %v7058 = vunpack.c.l.b16 %v6994
    %v7059 = vunpack.c.l.b16 %v6995
    %v7060 = vpack.c.b16 %v7029, %v7028
    %v7061 = vpack.c.b16 %v7031, %v7030
    %v7062 = vpack.c.b16 %v7033, %v7032
    %v7063 = vpack.c.b16 %v7035, %v7034
    %v7064 = vpack.c.b16 %v7037, %v7036
    %v7065 = vpack.c.b16 %v7039, %v7038
    %v7066 = vpack.c.b16 %v7041, %v7040
    %v7067 = vpack.c.b16 %v7043, %v7042
    %v7068 = vpack.c.b16 %v7045, %v7044
    %v7069 = vpack.c.b16 %v7047, %v7046
    %v7070 = vpack.c.b16 %v7049, %v7048
    %v7071 = vpack.c.b16 %v7051, %v7050
    %v7072 = vpack.c.b16 %v7053, %v7052
    %v7073 = vpack.c.b16 %v7055, %v7054
    %v7074 = vpack.c.b16 %v7057, %v7056
    %v7075 = vpack.c.b16 %v7059, %v7058
    %7092 = vmatprep.subr.bf16.mxu0 0
    %7093 = vmatpush1.bf16.msra.mxu0 %v7060
    %7094 = vmatprep.subr.bf16.mxu0 0
    %7095 = vmatpush1.bf16.msra.mxu0 %v7061
    %7096 = vmatprep.subr.bf16.mxu0 0
    %7097 = vmatpush1.bf16.msra.mxu0 %v7062
    %7098 = vmatprep.subr.bf16.mxu0 0
    %7099 = vmatpush1.bf16.msra.mxu0 %v7063
    %7100 = vmatprep.subr.bf16.mxu0 0
    %7101 = vmatpush1.bf16.msra.mxu0 %v7064
    %7102 = vmatprep.subr.bf16.mxu0 0
    %7103 = vmatpush1.bf16.msra.mxu0 %v7065
    %7104 = vmatprep.subr.bf16.mxu0 0
    %7105 = vmatpush1.bf16.msra.mxu0 %v7066
    %7106 = vmatprep.subr.bf16.mxu0 0
    %7107 = vmatpush1.bf16.msra.mxu0 %v7067
    %7108 = vmatprep.subr.bf16.mxu0 0
    %7109 = vmatpush1.bf16.msra.mxu0 %v7068
    %7110 = vmatprep.subr.bf16.mxu0 0
    %7111 = vmatpush1.bf16.msra.mxu0 %v7069
    %7112 = vmatprep.subr.bf16.mxu0 0
    %7113 = vmatpush1.bf16.msra.mxu0 %v7070
    %7114 = vmatprep.subr.bf16.mxu0 0
    %7115 = vmatpush1.bf16.msra.mxu0 %v7071
    %7116 = vmatprep.subr.bf16.mxu0 0
    %7117 = vmatpush1.bf16.msra.mxu0 %v7072
    %7118 = vmatprep.subr.bf16.mxu0 0
    %7119 = vmatpush1.bf16.msra.mxu0 %v7073
    %7120 = vmatprep.subr.bf16.mxu0 0
    %7121 = vmatpush1.bf16.msra.mxu0 %v7074
    %7122 = vmatprep.subr.bf16.mxu0 0
    %7123 = vmatpush1.bf16.msra.mxu0 %v7075
    %7124 = vmatprep.mubr.bf16.mxu0 %v6617
    %7125 = vmatmul.mubr.bf16.gmra.mrb[0].mxu0 %v6616
    %v7126 = vpop.f32.mrb[0].mxu0
    %v7127 = vadd.f32 0.0, %v7126
    %v7128 = vpop.f32.mrb[0].mxu0
    %v7129 = vpop.f32.mrb[0].mxu0
    %v7130 = vpop.f32.mrb[0].mxu0
    %7131 = vdwg.mxu0
    %v7132 = vadd.f32 %v6958, %v7127
    %s7133 = scalar_lea.vmem [#allocation9], 384
    %v7134 = vld [vmem:[%s7133] sm:$0xf]
    %v7135 = vld [vmem:[%s7133 + $0x4] sm:$0xf]
    %v7136 = vld [vmem:[%s7133 + $0x8] sm:$0xf]
    %v7137 = vld [vmem:[%s7133 + $0xc] sm:$0xf]
    %v7138 = vld [vmem:[%s7133 + $0x10] sm:$0xf]
    %v7139 = vld [vmem:[%s7133 + $0x14] sm:$0xf]
    %v7140 = vld [vmem:[%s7133 + $0x18] sm:$0xf]
    %v7141 = vld [vmem:[%s7133 + $0x1c] sm:$0xf]
    %v7142 = vld [vmem:[%s7133 + $0x20] sm:$0xf]
    %v7143 = vld [vmem:[%s7133 + $0x24] sm:$0xf]
    %v7144 = vld [vmem:[%s7133 + $0x28] sm:$0xf]
    %v7145 = vld [vmem:[%s7133 + $0x2c] sm:$0xf]
    %v7146 = vld [vmem:[%s7133 + $0x30] sm:$0xf]
    %v7147 = vld [vmem:[%s7133 + $0x34] sm:$0xf]
    %v7148 = vld [vmem:[%s7133 + $0x38] sm:$0xf]
    %v7149 = vld [vmem:[%s7133 + $0x3c] sm:$0xf]
    %v7150 = vld [vmem:[%s7133 + $0x40] sm:$0xf]
    %v7151 = vld [vmem:[%s7133 + $0x44] sm:$0xf]
    %v7152 = vld [vmem:[%s7133 + $0x48] sm:$0xf]
    %v7153 = vld [vmem:[%s7133 + $0x4c] sm:$0xf]
    %v7154 = vld [vmem:[%s7133 + $0x50] sm:$0xf]
    %v7155 = vld [vmem:[%s7133 + $0x54] sm:$0xf]
    %v7156 = vld [vmem:[%s7133 + $0x58] sm:$0xf]
    %v7157 = vld [vmem:[%s7133 + $0x5c] sm:$0xf]
    %v7158 = vld [vmem:[%s7133 + $0x60] sm:$0xf]
    %v7159 = vld [vmem:[%s7133 + $0x64] sm:$0xf]
    %v7160 = vld [vmem:[%s7133 + $0x68] sm:$0xf]
    %v7161 = vld [vmem:[%s7133 + $0x6c] sm:$0xf]
    %v7162 = vld [vmem:[%s7133 + $0x70] sm:$0xf]
    %v7163 = vld [vmem:[%s7133 + $0x74] sm:$0xf]
    %v7164 = vld [vmem:[%s7133 + $0x78] sm:$0xf]
    %v7165 = vld [vmem:[%s7133 + $0x7c] sm:$0xf]
    %v7168 = vrot.slane %v6616, 4
    %v7169 = vrot.slane %v6617, 4
    %v7204 = vunpack.c.l.b16 %v7134
    %v7205 = vunpack.c.l.b16 %v7135
    %v7206 = vunpack.c.l.b16 %v7136
    %v7207 = vunpack.c.l.b16 %v7137
    %v7208 = vunpack.c.l.b16 %v7138
    %v7209 = vunpack.c.l.b16 %v7139
    %v7210 = vunpack.c.l.b16 %v7140
    %v7211 = vunpack.c.l.b16 %v7141
    %v7212 = vunpack.c.l.b16 %v7142
    %v7213 = vunpack.c.l.b16 %v7143
    %v7214 = vunpack.c.l.b16 %v7144
    %v7215 = vunpack.c.l.b16 %v7145
    %v7216 = vunpack.c.l.b16 %v7146
    %v7217 = vunpack.c.l.b16 %v7147
    %v7218 = vunpack.c.l.b16 %v7148
    %v7219 = vunpack.c.l.b16 %v7149
    %v7220 = vunpack.c.l.b16 %v7150
    %v7221 = vunpack.c.l.b16 %v7151
    %v7222 = vunpack.c.l.b16 %v7152
    %v7223 = vunpack.c.l.b16 %v7153
    %v7224 = vunpack.c.l.b16 %v7154
    %v7225 = vunpack.c.l.b16 %v7155
    %v7226 = vunpack.c.l.b16 %v7156
    %v7227 = vunpack.c.l.b16 %v7157
    %v7228 = vunpack.c.l.b16 %v7158
    %v7229 = vunpack.c.l.b16 %v7159
    %v7230 = vunpack.c.l.b16 %v7160
    %v7231 = vunpack.c.l.b16 %v7161
    %v7232 = vunpack.c.l.b16 %v7162
    %v7233 = vunpack.c.l.b16 %v7163
    %v7234 = vunpack.c.l.b16 %v7164
    %v7235 = vunpack.c.l.b16 %v7165
    %v7236 = vpack.c.b16 %v7205, %v7204
    %v7237 = vpack.c.b16 %v7207, %v7206
    %v7238 = vpack.c.b16 %v7209, %v7208
    %v7239 = vpack.c.b16 %v7211, %v7210
    %v7240 = vpack.c.b16 %v7213, %v7212
    %v7241 = vpack.c.b16 %v7215, %v7214
    %v7242 = vpack.c.b16 %v7217, %v7216
    %v7243 = vpack.c.b16 %v7219, %v7218
    %v7244 = vpack.c.b16 %v7221, %v7220
    %v7245 = vpack.c.b16 %v7223, %v7222
    %v7246 = vpack.c.b16 %v7225, %v7224
    %v7247 = vpack.c.b16 %v7227, %v7226
    %v7248 = vpack.c.b16 %v7229, %v7228
    %v7249 = vpack.c.b16 %v7231, %v7230
    %v7250 = vpack.c.b16 %v7233, %v7232
    %v7251 = vpack.c.b16 %v7235, %v7234
    %7268 = vmatprep.subr.bf16.mxu0 0
    %7269 = vmatpush1.bf16.msra.mxu0 %v7236
    %7270 = vmatprep.subr.bf16.mxu0 0
    %7271 = vmatpush1.bf16.msra.mxu0 %v7237
    %7272 = vmatprep.subr.bf16.mxu0 0
    %7273 = vmatpush1.bf16.msra.mxu0 %v7238
    %7274 = vmatprep.subr.bf16.mxu0 0
    %7275 = vmatpush1.bf16.msra.mxu0 %v7239
    %7276 = vmatprep.subr.bf16.mxu0 0
    %7277 = vmatpush1.bf16.msra.mxu0 %v7240
    %7278 = vmatprep.subr.bf16.mxu0 0
    %7279 = vmatpush1.bf16.msra.mxu0 %v7241
    %7280 = vmatprep.subr.bf16.mxu0 0
    %7281 = vmatpush1.bf16.msra.mxu0 %v7242
    %7282 = vmatprep.subr.bf16.mxu0 0
    %7283 = vmatpush1.bf16.msra.mxu0 %v7243
    %7284 = vmatprep.subr.bf16.mxu0 0
    %7285 = vmatpush1.bf16.msra.mxu0 %v7244
    %7286 = vmatprep.subr.bf16.mxu0 0
    %7287 = vmatpush1.bf16.msra.mxu0 %v7245
    %7288 = vmatprep.subr.bf16.mxu0 0
    %7289 = vmatpush1.bf16.msra.mxu0 %v7246
    %7290 = vmatprep.subr.bf16.mxu0 0
    %7291 = vmatpush1.bf16.msra.mxu0 %v7247
    %7292 = vmatprep.subr.bf16.mxu0 0
    %7293 = vmatpush1.bf16.msra.mxu0 %v7248
    %7294 = vmatprep.subr.bf16.mxu0 0
    %7295 = vmatpush1.bf16.msra.mxu0 %v7249
    %7296 = vmatprep.subr.bf16.mxu0 0
    %7297 = vmatpush1.bf16.msra.mxu0 %v7250
    %7298 = vmatprep.subr.bf16.mxu0 0
    %7299 = vmatpush1.bf16.msra.mxu0 %v7251
    %7300 = vmatprep.mubr.bf16.mxu0 %v7169
    %7301 = vmatmul.mubr.bf16.gmra.mrb[0].mxu0 %v7168
    %v7302 = vpop.f32.mrb[0].mxu0
    %v7303 = vadd.f32 0.0, %v7302
    %v7304 = vpop.f32.mrb[0].mxu0
    %v7305 = vpop.f32.mrb[0].mxu0
    %v7306 = vpop.f32.mrb[0].mxu0
    %7307 = vdwg.mxu0
    %v7308 = vadd.f32 %v7132, %v7303
    %s7309 = scalar_lea.vmem [#allocation9], 512
    %v7310 = vld [vmem:[%s7309] sm:$0xf]
    %v7311 = vld [vmem:[%s7309 + $0x4] sm:$0xf]
    %v7312 = vld [vmem:[%s7309 + $0x8] sm:$0xf]
    %v7313 = vld [vmem:[%s7309 + $0xc] sm:$0xf]
    %v7314 = vld [vmem:[%s7309 + $0x10] sm:$0xf]
    %v7315 = vld [vmem:[%s7309 + $0x14] sm:$0xf]
    %v7316 = vld [vmem:[%s7309 + $0x18] sm:$0xf]
    %v7317 = vld [vmem:[%s7309 + $0x1c] sm:$0xf]
    %v7318 = vld [vmem:[%s7309 + $0x20] sm:$0xf]
    %v7319 = vld [vmem:[%s7309 + $0x24] sm:$0xf]
    %v7320 = vld [vmem:[%s7309 + $0x28] sm:$0xf]
    %v7321 = vld [vmem:[%s7309 + $0x2c] sm:$0xf]
    %v7322 = vld [vmem:[%s7309 + $0x30] sm:$0xf]
    %v7323 = vld [vmem:[%s7309 + $0x34] sm:$0xf]
    %v7324 = vld [vmem:[%s7309 + $0x38] sm:$0xf]
    %v7325 = vld [vmem:[%s7309 + $0x3c] sm:$0xf]
    %v7326 = vld [vmem:[%s7309 + $0x40] sm:$0xf]
    %v7327 = vld [vmem:[%s7309 + $0x44] sm:$0xf]
    %v7328 = vld [vmem:[%s7309 + $0x48] sm:$0xf]
    %v7329 = vld [vmem:[%s7309 + $0x4c] sm:$0xf]
    %v7330 = vld [vmem:[%s7309 + $0x50] sm:$0xf]
    %v7331 = vld [vmem:[%s7309 + $0x54] sm:$0xf]
    %v7332 = vld [vmem:[%s7309 + $0x58] sm:$0xf]
    %v7333 = vld [vmem:[%s7309 + $0x5c] sm:$0xf]
    %v7334 = vld [vmem:[%s7309 + $0x60] sm:$0xf]
    %v7335 = vld [vmem:[%s7309 + $0x64] sm:$0xf]
    %v7336 = vld [vmem:[%s7309 + $0x68] sm:$0xf]
    %v7337 = vld [vmem:[%s7309 + $0x6c] sm:$0xf]
    %v7338 = vld [vmem:[%s7309 + $0x70] sm:$0xf]
    %v7339 = vld [vmem:[%s7309 + $0x74] sm:$0xf]
    %v7340 = vld [vmem:[%s7309 + $0x78] sm:$0xf]
    %v7341 = vld [vmem:[%s7309 + $0x7c] sm:$0xf]
    %v7374 = vunpack.c.l.b16 %v7310
    %v7375 = vunpack.c.l.b16 %v7311
    %v7376 = vunpack.c.l.b16 %v7312
    %v7377 = vunpack.c.l.b16 %v7313
    %v7378 = vunpack.c.l.b16 %v7314
    %v7379 = vunpack.c.l.b16 %v7315
    %v7380 = vunpack.c.l.b16 %v7316
    %v7381 = vunpack.c.l.b16 %v7317
    %v7382 = vunpack.c.l.b16 %v7318
    %v7383 = vunpack.c.l.b16 %v7319
    %v7384 = vunpack.c.l.b16 %v7320
    %v7385 = vunpack.c.l.b16 %v7321
    %v7386 = vunpack.c.l.b16 %v7322
    %v7387 = vunpack.c.l.b16 %v7323
    %v7388 = vunpack.c.l.b16 %v7324
    %v7389 = vunpack.c.l.b16 %v7325
    %v7390 = vunpack.c.l.b16 %v7326
    %v7391 = vunpack.c.l.b16 %v7327
    %v7392 = vunpack.c.l.b16 %v7328
    %v7393 = vunpack.c.l.b16 %v7329
    %v7394 = vunpack.c.l.b16 %v7330
    %v7395 = vunpack.c.l.b16 %v7331
    %v7396 = vunpack.c.l.b16 %v7332
    %v7397 = vunpack.c.l.b16 %v7333
    %v7398 = vunpack.c.l.b16 %v7334
    %v7399 = vunpack.c.l.b16 %v7335
    %v7400 = vunpack.c.l.b16 %v7336
    %v7401 = vunpack.c.l.b16 %v7337
    %v7402 = vunpack.c.l.b16 %v7338
    %v7403 = vunpack.c.l.b16 %v7339
    %v7404 = vunpack.c.l.b16 %v7340
    %v7405 = vunpack.c.l.b16 %v7341
    %v7406 = vpack.c.b16 %v7375, %v7374
    %v7407 = vpack.c.b16 %v7377, %v7376
    %v7408 = vpack.c.b16 %v7379, %v7378
    %v7409 = vpack.c.b16 %v7381, %v7380
    %v7410 = vpack.c.b16 %v7383, %v7382
    %v7411 = vpack.c.b16 %v7385, %v7384
    %v7412 = vpack.c.b16 %v7387, %v7386
    %v7413 = vpack.c.b16 %v7389, %v7388
    %v7414 = vpack.c.b16 %v7391, %v7390
    %v7415 = vpack.c.b16 %v7393, %v7392
    %v7416 = vpack.c.b16 %v7395, %v7394
    %v7417 = vpack.c.b16 %v7397, %v7396
    %v7418 = vpack.c.b16 %v7399, %v7398
    %v7419 = vpack.c.b16 %v7401, %v7400
    %v7420 = vpack.c.b16 %v7403, %v7402
    %v7421 = vpack.c.b16 %v7405, %v7404
    %7438 = vmatprep.subr.bf16.mxu0 0
    %7439 = vmatpush1.bf16.msra.mxu0 %v7406
    %7440 = vmatprep.subr.bf16.mxu0 0
    %7441 = vmatpush1.bf16.msra.mxu0 %v7407
    %7442 = vmatprep.subr.bf16.mxu0 0
    %7443 = vmatpush1.bf16.msra.mxu0 %v7408
    %7444 = vmatprep.subr.bf16.mxu0 0
    %7445 = vmatpush1.bf16.msra.mxu0 %v7409
    %7446 = vmatprep.subr.bf16.mxu0 0
    %7447 = vmatpush1.bf16.msra.mxu0 %v7410
    %7448 = vmatprep.subr.bf16.mxu0 0
    %7449 = vmatpush1.bf16.msra.mxu0 %v7411
    %7450 = vmatprep.subr.bf16.mxu0 0
    %7451 = vmatpush1.bf16.msra.mxu0 %v7412
    %7452 = vmatprep.subr.bf16.mxu0 0
    %7453 = vmatpush1.bf16.msra.mxu0 %v7413
    %7454 = vmatprep.subr.bf16.mxu0 0
    %7455 = vmatpush1.bf16.msra.mxu0 %v7414
    %7456 = vmatprep.subr.bf16.mxu0 0
    %7457 = vmatpush1.bf16.msra.mxu0 %v7415
    %7458 = vmatprep.subr.bf16.mxu0 0
    %7459 = vmatpush1.bf16.msra.mxu0 %v7416
    %7460 = vmatprep.subr.bf16.mxu0 0
    %7461 = vmatpush1.bf16.msra.mxu0 %v7417
    %7462 = vmatprep.subr.bf16.mxu0 0
    %7463 = vmatpush1.bf16.msra.mxu0 %v7418
    %7464 = vmatprep.subr.bf16.mxu0 0
    %7465 = vmatpush1.bf16.msra.mxu0 %v7419
    %7466 = vmatprep.subr.bf16.mxu0 0
    %7467 = vmatpush1.bf16.msra.mxu0 %v7420
    %7468 = vmatprep.subr.bf16.mxu0 0
    %7469 = vmatpush1.bf16.msra.mxu0 %v7421
    %7470 = vmatprep.mubr.bf16.mxu0 %v6619
    %7471 = vmatmul.mubr.bf16.gmra.mrb[0].mxu0 %v6618
    %v7472 = vpop.f32.mrb[0].mxu0
    %v7473 = vadd.f32 0.0, %v7472
    %v7474 = vpop.f32.mrb[0].mxu0
    %v7475 = vpop.f32.mrb[0].mxu0
    %v7476 = vpop.f32.mrb[0].mxu0
    %7477 = vdwg.mxu0
    %v7478 = vadd.f32 %v7308, %v7473
    %v7479 = vld [vmem:[#allocation10] sm:$0x1]
    %v7481 = vlaneseq
    %v7482 = vshrl.u32 %v7481, 7
    %v7483 = vsub.s32 0, %v7482
    %v7484 = vrot.slane %v7479, %v7483
    %v7486 = vadd.f32 %v7478, %v7484
    %7487 = vst [vmem:[%s7] sm:$0xff] %v7486
    // Predicated region
    $region54: #{net_forward.1} parent=1 // pred_check
      _
    $region55: #{net_forward.1} parent=1 // pred_check_branch
      %7489 = sbr.rel (0) target = $region57
    $region56: #{net_forward.1} parent=1 // pred_region
      _
    $region57: #{net_forward.1} parent=1 // pred_fallthru
      _
    // Predicated region
    $region58: #{net_forward.1} parent=1 // pred_check
      _
    $region59: #{net_forward.1} parent=1 // pred_check_branch
      %7491 = sbr.rel (0) target = $region61
    $region60: #{net_forward.1} parent=1 // pred_region
      _
    $region61: #{net_forward.1} parent=1 // pred_fallthru
      _
    %7492 = vsyncpa [#allocation3], 1
    %7493 = vsyncpa [#allocation5], 1
    %7494 = vsyncpa [#allocation8], 1
    %7495 = vsyncpa [#allocation11], 1

</llo_original>
